<compile_context>
chip_gen: v7x
topology: tpu7x:2x2x1
jax: 0.10.0
libtpu: 0.0.40
codegen_flags: <defaults>
</compile_context>

<pallas_src>
import functools

import jax
import jax.numpy as jnp
from jax.experimental import pallas as pl
from jax.experimental.pallas import tpu as pltpu


MATMUL_DTYPE = jnp.bfloat16   # MXU input dtype (f32 accumulation everywhere)
ACT_DTYPE = jnp.bfloat16      # HBM storage dtype for inter-kernel activations
T_BLK_CAP = 16                # max time steps per grid step


# ---------------------------------------------------------------------------
# small static helpers (run at trace / setup time)
# ---------------------------------------------------------------------------
def _round_up(x, m):
    return (x + m - 1) // m * m


def _largest_divisor(total, cap):
    best = 1
    for t in range(1, min(total, cap) + 1):
        if total % t == 0:
            best = t
    return best


def _pick_tile(total, unit, cap):
    """Largest multiple of `unit` that divides `total` and is <= cap."""
    best = unit
    t = unit
    while t <= min(total, cap):
        if total % t == 0:
            best = t
        t += unit
    return best


# ---------------------------------------------------------------------------
# Kernel 1: fused multi-layer Elman RNN.
#   grid = (batch_blocks, time_blocks); hidden state (n_layers, Bblk, F) lives
#   in VMEM scratch and is carried across the (arbitrary) time axis.
#   h_t^l = tanh(x_t^l @ W_ih^l + h_{t-1}^l @ W_hh^l + b^l),
#   x_t^0 = emb_t, x_t^l = h_t^{l-1}
# ---------------------------------------------------------------------------
def rnn_stack_kernel(x_ref, h0_ref, wih_ref, whh_ref, b_ref,
                     out_ref, hT_ref, h_scratch):
    t_idx = pl.program_id(1)

    @pl.when(t_idx == 0)
    def _():
        h_scratch[...] = h0_ref[...]

    n_layers = h_scratch.shape[0]
    t_blk = out_ref.shape[0]
    cdt = wih_ref.dtype

    def step(t, carry):
        x = x_ref[t]                                    # (Bblk, F) bf16
        for l in range(n_layers):                       # static layer unroll
            h_prev = h_scratch[l]                       # (Bblk, F) f32
            pre = (jnp.dot(x.astype(cdt), wih_ref[l],
                           preferred_element_type=jnp.float32)
                   + jnp.dot(h_prev.astype(cdt), whh_ref[l],
                             preferred_element_type=jnp.float32)
                   + b_ref[l])
            x = jnp.tanh(pre)                           # f32 elementwise
            h_scratch[l] = x
        out_ref[t] = x.astype(out_ref.dtype)            # last layer's output
        return carry

    jax.lax.fori_loop(0, t_blk, step, 0, unroll=True)

    # Final hidden state: only the last time block holds h_T; constant output
    # block index over the time axis -> single HBM writeback per batch block.
    @pl.when(t_idx == pl.num_programs(1) - 1)
    def _():
        hT_ref[...] = h_scratch[...]


def rnn_stack(x, h0, wih_stack, whh_stack, b_stack):
    """x: (S, Bp, F) bf16, h0: (L, Bp, F) f32, w*: (L, F, F) bf16, b: (L, 1, F) f32."""
    S, Bp, F = x.shape
    L = h0.shape[0]

    t_blk = _largest_divisor(S, T_BLK_CAP)
    nt = S // t_blk
    # Split the batch across megacore TensorCores when large enough (keep
    # bf16 sublane tiling: each half must stay a multiple of 16).
    b_blk = Bp // 2 if (Bp >= 32 and Bp % 32 == 0) else Bp
    nb = Bp // b_blk

    out, h_t = pl.pallas_call(
        rnn_stack_kernel,
        out_shape=(jax.ShapeDtypeStruct((S, Bp, F), ACT_DTYPE),
                   jax.ShapeDtypeStruct((L, Bp, F), jnp.float32)),
        grid_spec=pltpu.PrefetchScalarGridSpec(
            num_scalar_prefetch=0,
            grid=(nb, nt),
            in_specs=[
                pl.BlockSpec((t_blk, b_blk, F), lambda b, t: (t, b, 0)),  # x
                pl.BlockSpec((L, b_blk, F), lambda b, t: (0, b, 0)),      # h0
                pl.BlockSpec((L, F, F), lambda b, t: (0, 0, 0)),          # W_ih stack
                pl.BlockSpec((L, F, F), lambda b, t: (0, 0, 0)),          # W_hh stack
                pl.BlockSpec((L, 1, F), lambda b, t: (0, 0, 0)),          # bias stack
            ],
            out_specs=[
                pl.BlockSpec((t_blk, b_blk, F), lambda b, t: (t, b, 0)),  # outputs
                pl.BlockSpec((L, b_blk, F), lambda b, t: (0, b, 0)),      # final h
            ],
            scratch_shapes=[pltpu.VMEM((L, b_blk, F), jnp.float32)],
        ),
        compiler_params=pltpu.CompilerParams(
            dimension_semantics=("parallel", "arbitrary")),
    )(x, h0, wih_stack, whh_stack, b_stack)
    return out, h_t


# ---------------------------------------------------------------------------
# Kernel 2: pooling linear layer, tiled over (N, V), with online logsumexp.
# Produces the logits tiles and a per-row logsumexp (N, 1).
# ---------------------------------------------------------------------------
def pool_logits_lse_kernel(x_ref, w_ref, b_ref, logits_ref, lse_ref, m_s, l_s):
    j = pl.program_id(1)

    @pl.when(j == 0)
    def _():
        m_s[...] = jnp.full_like(m_s, -jnp.inf)
        l_s[...] = jnp.zeros_like(l_s)

    logits = (jnp.dot(x_ref[...].astype(w_ref.dtype), w_ref[...],
                      preferred_element_type=jnp.float32)
              + b_ref[...])                                   # (tn, tv) f32
    logits_ref[...] = logits

    m_prev = m_s[...]
    m_new = jnp.maximum(m_prev, jnp.max(logits, axis=-1, keepdims=True))
    l_new = (l_s[...] * jnp.exp(m_prev - m_new)
             + jnp.sum(jnp.exp(logits - m_new), axis=-1, keepdims=True))
    m_s[...] = m_new
    l_s[...] = l_new

    # Constant block index over j -> single writeback with the full-row lse.
    @pl.when(j == pl.num_programs(1) - 1)
    def _():
        lse_ref[...] = m_new + jnp.log(l_new)


def pool_logits_lse(x, w, b):
    """x: (N, F) bf16, w: (F, Vp) bf16, b: (1, Vp) f32 -> logits (N, Vp), lse (N, 1)."""
    N, F = x.shape
    Vp = w.shape[1]
    tn = _pick_tile(N, 16, 512)        # 16-sublane multiple (bf16 x input)
    tv = _pick_tile(Vp, 128, 512)
    return pl.pallas_call(
        pool_logits_lse_kernel,
        out_shape=(jax.ShapeDtypeStruct((N, Vp), jnp.float32),
                   jax.ShapeDtypeStruct((N, 1), jnp.float32)),
        grid_spec=pltpu.PrefetchScalarGridSpec(
            num_scalar_prefetch=0,
            grid=(N // tn, Vp // tv),
            in_specs=[
                pl.BlockSpec((tn, F), lambda i, j: (i, 0)),
                pl.BlockSpec((F, tv), lambda i, j: (0, j)),
                pl.BlockSpec((1, tv), lambda i, j: (0, j)),
            ],
            out_specs=[
                pl.BlockSpec((tn, tv), lambda i, j: (i, j)),
                pl.BlockSpec((tn, 1), lambda i, j: (i, 0)),
            ],
            scratch_shapes=[pltpu.VMEM((tn, 1), jnp.float32),
                            pltpu.VMEM((tn, 1), jnp.float32)],
        ),
        compiler_params=pltpu.CompilerParams(
            dimension_semantics=("parallel", "arbitrary")),
    )(x, w, b)


# ---------------------------------------------------------------------------
# Kernel 3: log-softmax normalization  out = logits - lse  (elementwise, tiled,
# in-place on the logits buffer via input_output_aliases).
# ---------------------------------------------------------------------------
def logsoftmax_normalize_kernel(logits_ref, lse_ref, o_ref):
    o_ref[...] = logits_ref[...] - lse_ref[...]


def logsoftmax_normalize(logits, lse):
    N, Vp = logits.shape
    tn = _pick_tile(N, 8, 512)
    tv = _pick_tile(Vp, 128, 512)
    return pl.pallas_call(
        logsoftmax_normalize_kernel,
        out_shape=jax.ShapeDtypeStruct((N, Vp), jnp.float32),
        grid_spec=pltpu.PrefetchScalarGridSpec(
            num_scalar_prefetch=0,
            grid=(N // tn, Vp // tv),
            in_specs=[
                pl.BlockSpec((tn, tv), lambda i, j: (i, j)),
                pl.BlockSpec((tn, 1), lambda i, j: (i, 0)),
            ],
            out_specs=pl.BlockSpec((tn, tv), lambda i, j: (i, j)),
        ),
        input_output_aliases={0: 0},     # normalize logits in place
        compiler_params=pltpu.CompilerParams(
            dimension_semantics=("parallel", "parallel")),
    )(logits, lse)


# ---------------------------------------------------------------------------
# Parameter preparation: pad to (8/16, 128)-aligned shapes, stack layers,
# pre-sum biases, cast matmul weights / embedding table to bf16.
# ---------------------------------------------------------------------------
def prepare_params(params, n_layers, emb_dim, n_hidden, vocab_size):
    F = _round_up(max(emb_dim, n_hidden), 128)      # shared padded feature width
    Vp = _round_up(vocab_size, 128)

    emb_p = (jnp.zeros((vocab_size, F), jnp.float32)
             .at[:, :emb_dim].set(params["emb"])
             .astype(ACT_DTYPE))

    wih_blocks, whh_blocks, b_blocks = [], [], []
    for l in range(n_layers):
        in_dim = emb_dim if l == 0 else n_hidden
        wih = jnp.zeros((F, F), jnp.float32).at[:in_dim, :n_hidden].set(
            params[f"w_ih_{l}"])
        whh = jnp.zeros((F, F), jnp.float32).at[:n_hidden, :n_hidden].set(
            params[f"w_hh_{l}"])
        wih_blocks.append(wih)
        whh_blocks.append(whh)
        b = jnp.zeros((1, F), jnp.float32).at[:, :n_hidden].set(
            params[f"b_ih_{l}"] + params[f"b_hh_{l}"])
        b_blocks.append(b)
    wih_stack = jnp.stack(wih_blocks, axis=0).astype(MATMUL_DTYPE)  # (L, F, F)
    whh_stack = jnp.stack(whh_blocks, axis=0).astype(MATMUL_DTYPE)  # (L, F, F)
    b_stack = jnp.stack(b_blocks, axis=0)                           # (L, 1, F) f32

    pool_w = (jnp.zeros((F, Vp), jnp.float32)
              .at[:n_hidden, :vocab_size].set(params["pool_w"])
              .astype(MATMUL_DTYPE))
    # Padded vocab columns get a huge negative bias so exp() contributes ~0.
    pool_b = (jnp.full((1, Vp), -1e30, jnp.float32)
              .at[:, :vocab_size].set(params["pool_b"]))

    return dict(emb=emb_p, wih_stack=wih_stack, whh_stack=whh_stack,
                b_stack=b_stack, pool_w=pool_w, pool_b=pool_b)


# ---------------------------------------------------------------------------
# Full model forward (glue in plain JAX: embedding gather, padding, slicing).
# Dropout is identity (eval mode).
# ---------------------------------------------------------------------------
@functools.partial(jax.jit, static_argnames=("n_layers", "n_hidden", "vocab_size"))
def rnn_model_forward(tokens, hidden, prep, *, n_layers, n_hidden, vocab_size):
    S, B = tokens.shape
    F = prep["emb"].shape[1]
    Vp = prep["pool_w"].shape[1]
    Bp = _round_up(B, 16)       # 16 sublanes so bf16 activation blocks tile cleanly

    tok_p = jnp.pad(tokens, ((0, 0), (0, Bp - B)))
    emb = jnp.take(prep["emb"], tok_p, axis=0)               # (S, Bp, F) bf16 gather

    h0 = jnp.zeros((n_layers, Bp, F), jnp.float32)
    h0 = h0.at[:, :B, :n_hidden].set(hidden)

    rnn_out, h_t = rnn_stack(emb, h0, prep["wih_stack"], prep["whh_stack"],
                             prep["b_stack"])

    flat = rnn_out.reshape(S * Bp, F)                         # bf16
    logits, lse = pool_logits_lse(flat, prep["pool_w"], prep["pool_b"])
    logp_full = logsoftmax_normalize(logits, lse)             # (S*Bp, Vp) in place

    log_probs = (logp_full.reshape(S, Bp, Vp)[:, :B, :vocab_size]
                 .reshape(S * B, vocab_size))
    new_hidden = h_t[:, :B, :n_hidden]
    return log_probs, new_hidden


# ---------------------------------------------------------------------------
# Parameter init (matches RNNModel.init_weights / nn.RNN defaults; RNN weights
# stored pre-transposed as (in_feat, hidden)).
# ---------------------------------------------------------------------------
def init_params(key, vocab_size, emb_dim, n_hidden, n_layers):
    params = {}
    keys = jax.random.split(key, 2 + 4 * n_layers)
    initrange = 0.1
    params["emb"] = jax.random.uniform(
        keys[0], (vocab_size, emb_dim), jnp.float32, -initrange, initrange)
    params["pool_w"] = jax.random.uniform(
        keys[1], (n_hidden, vocab_size), jnp.float32, -initrange, initrange)
    params["pool_b"] = jnp.zeros((1, vocab_size), jnp.float32)

    stdv = 1.0 / float(n_hidden) ** 0.5
    k = 2
    for layer in range(n_layers):
        in_dim = emb_dim if layer == 0 else n_hidden
        params[f"w_ih_{layer}"] = jax.random.uniform(
            keys[k], (in_dim, n_hidden), jnp.float32, -stdv, stdv); k += 1
        params[f"w_hh_{layer}"] = jax.random.uniform(
            keys[k], (n_hidden, n_hidden), jnp.float32, -stdv, stdv); k += 1
        params[f"b_ih_{layer}"] = jax.random.uniform(
            keys[k], (1, n_hidden), jnp.float32, -stdv, stdv); k += 1
        params[f"b_hh_{layer}"] = jax.random.uniform(
            keys[k], (1, n_hidden), jnp.float32, -stdv, stdv); k += 1
    return params


# ---------------------------------------------------------------------------
# Pure-JAX reference (mirrors the bf16 matmul-input casts / f32 accumulation).
# ---------------------------------------------------------------------------
def reference_forward(tokens, hidden0, params, *, n_layers):
    x = jnp.take(params["emb"], tokens, axis=0)              # (S, B, E)
    finals = []
    for l in range(n_layers):
        w = jnp.concatenate([params[f"w_ih_{l}"], params[f"w_hh_{l}"]],
                            axis=0).astype(MATMUL_DTYPE)
        b = params[f"b_ih_{l}"] + params[f"b_hh_{l}"]
        h = hidden0[l]
        outs = []
        for t in range(x.shape[0]):
            xh = jnp.concatenate([x[t], h], axis=-1).astype(MATMUL_DTYPE)
            h = jnp.tanh(jnp.dot(xh, w, preferred_element_type=jnp.float32) + b)
            outs.append(h)
        x = jnp.stack(outs, axis=0)
        finals.append(h)
    new_hidden = jnp.stack(finals, axis=0)
    flat = x.reshape(-1, x.shape[-1])
    logits = (jnp.dot(flat.astype(MATMUL_DTYPE),
                      params["pool_w"].astype(MATMUL_DTYPE),
                      preferred_element_type=jnp.float32)
              + params["pool_b"])
    return jax.nn.log_softmax(logits, axis=-1), new_hidden


if __name__ == "__main__":
    vocab_size = 100
    emb_dim = 48
    n_hidden = 96
    n_layers = 2
    seq_len = 24
    batch = 4

    root = jax.random.PRNGKey(0)
    k_param, k_tok = jax.random.split(root)

    params = init_params(k_param, vocab_size, emb_dim, n_hidden, n_layers)
    prep = prepare_params(params, n_layers, emb_dim, n_hidden, vocab_size)
    tokens = jax.random.randint(k_tok, (seq_len, batch), 0, vocab_size,
                                dtype=jnp.int32)
    hidden0 = jnp.zeros((n_layers, batch, n_hidden), jnp.float32)   # init_hidden

    log_probs, new_hidden = rnn_model_forward(
        tokens, hidden0, prep,
        n_layers=n_layers, n_hidden=n_hidden, vocab_size=vocab_size)
    jax.block_until_ready((log_probs, new_hidden))

    assert log_probs.shape == (seq_len * batch, vocab_size)
    assert new_hidden.shape == (n_layers, batch, n_hidden)
    # rows of log_probs must exp-sum to ~1
    assert jnp.allclose(jnp.exp(log_probs).sum(axis=-1), 1.0, atol=1e-4)

    # compare against a pure-JAX reference with matching bf16 matmul casts
    ref_lp, ref_h = reference_forward(tokens, hidden0, params, n_layers=n_layers)
    assert jnp.allclose(log_probs, ref_lp, atol=2e-2, rtol=2e-2), \
        float(jnp.max(jnp.abs(log_probs - ref_lp)))
    assert jnp.allclose(new_hidden, ref_h, atol=2e-2, rtol=2e-2), \
        float(jnp.max(jnp.abs(new_hidden - ref_h)))

    print("KERNEL_OK")
</pallas_src>

<mosaic_0001>
module attributes {stable_mosaic.version = 11 : i64} {
  func.func @pool_logits_lse_kernel(%arg0: i32, %arg1: i32, %arg2: memref<384x128xbf16, #tpu.memory_space<vmem>>, %arg3: memref<128x128xbf16, #tpu.memory_space<vmem>>, %arg4: memref<1x128xf32, #tpu.memory_space<vmem>>, %arg5: memref<384x128xf32, #tpu.memory_space<vmem>>, %arg6: memref<384x1xf32, #tpu.memory_space<vmem>>, %arg7: memref<384x1xf32, #tpu.memory_space<vmem>>, %arg8: memref<384x1xf32, #tpu.memory_space<vmem>>) attributes {dimension_semantics = [#tpu.dimension_semantics<parallel>, #tpu.dimension_semantics<arbitrary>], iteration_bounds = array<i64: 1, 1>, scalar_prefetch = 0 : i64, scratch_operands = 2 : i64, tpu.core_type = #tpu.core_type<tc>, window_params = [{transform_indices = @transform_0, window_bounds = array<i64: 384, 128>}, {transform_indices = @transform_1, window_bounds = array<i64: 128, 128>}, {transform_indices = @transform_2, window_bounds = array<i64: 1, 128>}, {transform_indices = @transform_3, window_bounds = array<i64: 384, 128>}, {transform_indices = @transform_4, window_bounds = array<i64: 384, 1>}]} {
    %c0_i32 = arith.constant 0 : i32
    %0 = arith.cmpi eq, %arg1, %c0_i32 : i32
    %1 = arith.extui %0 : i1 to i32
    %c0_i32_0 = arith.constant 0 : i32
    %2 = arith.cmpi ne, %1, %c0_i32_0 : i32
    scf.if %2 {
      %cst_20 = arith.constant 0xFF800000 : f32
      %29 = vector.broadcast %cst_20 : f32 to vector<384x1xf32>
      %c0_21 = arith.constant 0 : index
      %c0_22 = arith.constant 0 : index
      %30 = vector.load %arg7[%c0_21, %c0_22] : memref<384x1xf32, #tpu.memory_space<vmem>>, vector<384x1xf32>
      tpu.vector_store %arg7[%c0_21, %c0_22], %29 {strides = array<i32>} : memref<384x1xf32, #tpu.memory_space<vmem>>, vector<384x1xf32>,
      %cst_23 = arith.constant 0.000000e+00 : f32
      %31 = vector.broadcast %cst_23 : f32 to vector<384x1xf32>
      %c0_24 = arith.constant 0 : index
      %c0_25 = arith.constant 0 : index
      %32 = vector.load %arg8[%c0_24, %c0_25] : memref<384x1xf32, #tpu.memory_space<vmem>>, vector<384x1xf32>
      tpu.vector_store %arg8[%c0_24, %c0_25], %31 {strides = array<i32>} : memref<384x1xf32, #tpu.memory_space<vmem>>, vector<384x1xf32>,
    } else {
    }
    %c0 = arith.constant 0 : index
    %c0_1 = arith.constant 0 : index
    %3 = vector.load %arg2[%c0, %c0_1] : memref<384x128xbf16, #tpu.memory_space<vmem>>, vector<384x128xbf16>
    %c0_2 = arith.constant 0 : index
    %c0_3 = arith.constant 0 : index
    %4 = vector.load %arg3[%c0_2, %c0_3] : memref<128x128xbf16, #tpu.memory_space<vmem>>, vector<128x128xbf16>
    %cst = arith.constant dense<0.000000e+00> : vector<384x128xf32>
    %5 = tpu.matmul %3, %4, %cst {dimension_numbers = #tpu.dot_dimension_numbers<[1], [0], [0], [1], [0, 0, 1, 1], [], []>} : vector<384x128xbf16>, vector<128x128xbf16>, vector<384x128xf32> -> vector<384x128xf32>
    %c0_4 = arith.constant 0 : index
    %c0_5 = arith.constant 0 : index
    %6 = vector.load %arg4[%c0_4, %c0_5] : memref<1x128xf32, #tpu.memory_space<vmem>>, vector<1x128xf32>
    %7 = vector.broadcast %6 : vector<1x128xf32> to vector<384x128xf32>
    %8 = arith.addf %5, %7 : vector<384x128xf32>
    %c0_6 = arith.constant 0 : index
    %c0_7 = arith.constant 0 : index
    %9 = vector.load %arg5[%c0_6, %c0_7] : memref<384x128xf32, #tpu.memory_space<vmem>>, vector<384x128xf32>
    tpu.vector_store %arg5[%c0_6, %c0_7], %8 {strides = array<i32>} : memref<384x128xf32, #tpu.memory_space<vmem>>, vector<384x128xf32>,
    %c0_8 = arith.constant 0 : index
    %c0_9 = arith.constant 0 : index
    %10 = vector.load %arg7[%c0_8, %c0_9] : memref<384x1xf32, #tpu.memory_space<vmem>>, vector<384x1xf32>
    %cst_10 = arith.constant dense<0xFF800000> : vector<384xf32>
    %11 = vector.multi_reduction <maximumf>, %8, %cst_10 [1] : vector<384x128xf32> to vector<384xf32>
    %12 = vector.shape_cast %11 : vector<384xf32> to vector<384x1xf32>
    %13 = arith.maximumf %10, %12 : vector<384x1xf32>
    %c0_11 = arith.constant 0 : index
    %c0_12 = arith.constant 0 : index
    %14 = vector.load %arg8[%c0_11, %c0_12] : memref<384x1xf32, #tpu.memory_space<vmem>>, vector<384x1xf32>
    %15 = arith.subf %10, %13 : vector<384x1xf32>
    %16 = math.exp %15 : vector<384x1xf32>
    %17 = arith.mulf %14, %16 : vector<384x1xf32>
    %18 = vector.broadcast %13 : vector<384x1xf32> to vector<384x128xf32>
    %19 = arith.subf %8, %18 : vector<384x128xf32>
    %20 = math.exp %19 : vector<384x128xf32>
    %cst_13 = arith.constant dense<0.000000e+00> : vector<384xf32>
    %21 = vector.multi_reduction <add>, %20, %cst_13 [1] : vector<384x128xf32> to vector<384xf32>
    %22 = vector.shape_cast %21 : vector<384xf32> to vector<384x1xf32>
    %23 = arith.addf %17, %22 : vector<384x1xf32>
    %c0_14 = arith.constant 0 : index
    %c0_15 = arith.constant 0 : index
    %24 = vector.load %arg7[%c0_14, %c0_15] : memref<384x1xf32, #tpu.memory_space<vmem>>, vector<384x1xf32>
    tpu.vector_store %arg7[%c0_14, %c0_15], %13 {strides = array<i32>} : memref<384x1xf32, #tpu.memory_space<vmem>>, vector<384x1xf32>,
    %c0_16 = arith.constant 0 : index
    %c0_17 = arith.constant 0 : index
    %25 = vector.load %arg8[%c0_16, %c0_17] : memref<384x1xf32, #tpu.memory_space<vmem>>, vector<384x1xf32>
    tpu.vector_store %arg8[%c0_16, %c0_17], %23 {strides = array<i32>} : memref<384x1xf32, #tpu.memory_space<vmem>>, vector<384x1xf32>,
    %c0_i32_18 = arith.constant 0 : i32
    %26 = arith.cmpi eq, %arg1, %c0_i32_18 : i32
    %27 = arith.extui %26 : i1 to i32
    %c0_i32_19 = arith.constant 0 : i32
    %28 = arith.cmpi ne, %27, %c0_i32_19 : i32
    scf.if %28 {
      %29 = math.log %23 : vector<384x1xf32>
      %30 = arith.addf %13, %29 : vector<384x1xf32>
      %c0_20 = arith.constant 0 : index
      %c0_21 = arith.constant 0 : index
      %31 = vector.load %arg6[%c0_20, %c0_21] : memref<384x1xf32, #tpu.memory_space<vmem>>, vector<384x1xf32>
      tpu.vector_store %arg6[%c0_20, %c0_21], %30 {strides = array<i32>} : memref<384x1xf32, #tpu.memory_space<vmem>>, vector<384x1xf32>,
    } else {
    }
    return
  }
  func.func @transform_0(%arg0: i32, %arg1: i32) -> (i32, i32) {
    %c0_i32 = arith.constant 0 : i32
    %c0_i32_0 = arith.constant 0 : i32
    return %arg0, %c0_i32 : i32, i32
  }
  func.func @transform_1(%arg0: i32, %arg1: i32) -> (i32, i32) {
    %c0_i32 = arith.constant 0 : i32
    %c0_i32_0 = arith.constant 0 : i32
    return %c0_i32, %arg1 : i32, i32
  }
  func.func @transform_2(%arg0: i32, %arg1: i32) -> (i32, i32) {
    %c0_i32 = arith.constant 0 : i32
    %c0_i32_0 = arith.constant 0 : i32
    return %c0_i32, %arg1 : i32, i32
  }
  func.func @transform_3(%arg0: i32, %arg1: i32) -> (i32, i32) {
    %c0_i32 = arith.constant 0 : i32
    return %arg0, %arg1 : i32, i32
  }
  func.func @transform_4(%arg0: i32, %arg1: i32) -> (i32, i32) {
    %c0_i32 = arith.constant 0 : i32
    %c0_i32_0 = arith.constant 0 : i32
    return %arg0, %c0_i32 : i32, i32
  }
}

module attributes {stable_mosaic.version = 11 : i64} {
  func.func @logsoftmax_normalize_kernel(%arg0: i32, %arg1: i32, %arg2: memref<384x128xf32, #tpu.memory_space<vmem>>, %arg3: memref<384x1xf32, #tpu.memory_space<vmem>>, %arg4: memref<384x128xf32, #tpu.memory_space<vmem>>) attributes {dimension_semantics = [#tpu.dimension_semantics<parallel>, #tpu.dimension_semantics<parallel>], iteration_bounds = array<i64: 1, 1>, scalar_prefetch = 0 : i64, scratch_operands = 0 : i64, tpu.core_type = #tpu.core_type<tc>, window_params = [{transform_indices = @transform_0, window_bounds = array<i64: 384, 128>}, {transform_indices = @transform_1, window_bounds = array<i64: 384, 1>}, {transform_indices = @transform_2, window_bounds = array<i64: 384, 128>}]} {
    %c0 = arith.constant 0 : index
    %c0_0 = arith.constant 0 : index
    %0 = vector.load %arg2[%c0, %c0_0] : memref<384x128xf32, #tpu.memory_space<vmem>>, vector<384x128xf32>
    %c0_1 = arith.constant 0 : index
    %c0_2 = arith.constant 0 : index
    %1 = vector.load %arg3[%c0_1, %c0_2] : memref<384x1xf32, #tpu.memory_space<vmem>>, vector<384x1xf32>
    %2 = vector.broadcast %1 : vector<384x1xf32> to vector<384x128xf32>
    %3 = arith.subf %0, %2 : vector<384x128xf32>
    %c0_3 = arith.constant 0 : index
    %c0_4 = arith.constant 0 : index
    %4 = vector.load %arg4[%c0_3, %c0_4] : memref<384x128xf32, #tpu.memory_space<vmem>>, vector<384x128xf32>
    tpu.vector_store %arg4[%c0_3, %c0_4], %3 {strides = array<i32>} : memref<384x128xf32, #tpu.memory_space<vmem>>, vector<384x128xf32>,
    return
  }
  func.func @transform_0(%arg0: i32, %arg1: i32) -> (i32, i32) {
    %c0_i32 = arith.constant 0 : i32
    return %arg0, %arg1 : i32, i32
  }
  func.func @transform_1(%arg0: i32, %arg1: i32) -> (i32, i32) {
    %c0_i32 = arith.constant 0 : i32
    %c0_i32_0 = arith.constant 0 : i32
    return %arg0, %c0_i32 : i32, i32
  }
  func.func @transform_2(%arg0: i32, %arg1: i32) -> (i32, i32) {
    %c0_i32 = arith.constant 0 : i32
    return %arg0, %arg1 : i32, i32
  }
}

module attributes {stable_mosaic.version = 11 : i64} {
  func.func @rnn_stack_kernel(%arg0: i32, %arg1: i32, %arg2: memref<12x16x128xbf16, #tpu.memory_space<vmem>>, %arg3: memref<2x16x128xf32, #tpu.memory_space<vmem>>, %arg4: memref<2x128x128xbf16, #tpu.memory_space<vmem>>, %arg5: memref<2x128x128xbf16, #tpu.memory_space<vmem>>, %arg6: memref<2x1x128xf32, #tpu.memory_space<vmem>>, %arg7: memref<12x16x128xbf16, #tpu.memory_space<vmem>>, %arg8: memref<2x16x128xf32, #tpu.memory_space<vmem>>, %arg9: memref<2x16x128xf32, #tpu.memory_space<vmem>>) attributes {dimension_semantics = [#tpu.dimension_semantics<parallel>, #tpu.dimension_semantics<arbitrary>], iteration_bounds = array<i64: 1, 2>, scalar_prefetch = 0 : i64, scratch_operands = 1 : i64, tpu.core_type = #tpu.core_type<tc>, window_params = [{transform_indices = @transform_0, window_bounds = array<i64: 12, 16, 128>}, {transform_indices = @transform_1, window_bounds = array<i64: 2, 16, 128>}, {pipeline_mode = #tpu.pipeline_mode<synchronous>, transform_indices = @transform_2, window_bounds = array<i64: 2, 128, 128>}, {pipeline_mode = #tpu.pipeline_mode<synchronous>, transform_indices = @transform_3, window_bounds = array<i64: 2, 128, 128>}, {pipeline_mode = #tpu.pipeline_mode<synchronous>, transform_indices = @transform_4, window_bounds = array<i64: 2, 1, 128>}, {transform_indices = @transform_5, window_bounds = array<i64: 12, 16, 128>}, {transform_indices = @transform_6, window_bounds = array<i64: 2, 16, 128>}]} {
    %c0_i32 = arith.constant 0 : i32
    %0 = arith.cmpi eq, %arg1, %c0_i32 : i32
    %1 = arith.extui %0 : i1 to i32
    %c0_i32_0 = arith.constant 0 : i32
    %2 = arith.cmpi ne, %1, %c0_i32_0 : i32
    scf.if %2 {
      %c0_457 = arith.constant 0 : index
      %c0_458 = arith.constant 0 : index
      %c0_459 = arith.constant 0 : index
      %546 = vector.load %arg3[%c0_457, %c0_458, %c0_459] : memref<2x16x128xf32, #tpu.memory_space<vmem>>, vector<2x16x128xf32>
      %c0_460 = arith.constant 0 : index
      %c0_461 = arith.constant 0 : index
      %c0_462 = arith.constant 0 : index
      %547 = vector.load %arg9[%c0_460, %c0_461, %c0_462] : memref<2x16x128xf32, #tpu.memory_space<vmem>>, vector<2x16x128xf32>
      tpu.vector_store %arg9[%c0_460, %c0_461, %c0_462], %546 {strides = array<i32>} : memref<2x16x128xf32, #tpu.memory_space<vmem>>, vector<2x16x128xf32>,
    } else {
    }
    %c0_i32_1 = arith.constant 0 : i32
    %3 = arith.index_cast %c0_i32_1 : i32 to index
    %c0 = arith.constant 0 : index
    %c0_2 = arith.constant 0 : index
    %4 = vector.load %arg2[%3, %c0, %c0_2] : memref<12x16x128xbf16, #tpu.memory_space<vmem>>, vector<1x16x128xbf16>
    %5 = vector.shape_cast %4 : vector<1x16x128xbf16> to vector<16x128xbf16>
    %c0_3 = arith.constant 0 : index
    %c0_4 = arith.constant 0 : index
    %c0_5 = arith.constant 0 : index
    %6 = vector.load %arg9[%c0_3, %c0_4, %c0_5] : memref<2x16x128xf32, #tpu.memory_space<vmem>>, vector<1x16x128xf32>
    %7 = vector.shape_cast %6 : vector<1x16x128xf32> to vector<16x128xf32>
    %c0_6 = arith.constant 0 : index
    %c0_7 = arith.constant 0 : index
    %c0_8 = arith.constant 0 : index
    %8 = vector.load %arg4[%c0_6, %c0_7, %c0_8] : memref<2x128x128xbf16, #tpu.memory_space<vmem>>, vector<1x128x128xbf16>
    %9 = vector.shape_cast %8 : vector<1x128x128xbf16> to vector<128x128xbf16>
    %cst = arith.constant dense<0.000000e+00> : vector<16x128xf32>
    %10 = tpu.matmul %5, %9, %cst {dimension_numbers = #tpu.dot_dimension_numbers<[1], [0], [0], [1], [0, 0, 1, 1], [], []>} : vector<16x128xbf16>, vector<128x128xbf16>, vector<16x128xf32> -> vector<16x128xf32>
    %11 = arith.truncf %7 : vector<16x128xf32> to vector<16x128xbf16>
    %c0_9 = arith.constant 0 : index
    %c0_10 = arith.constant 0 : index
    %c0_11 = arith.constant 0 : index
    %12 = vector.load %arg5[%c0_9, %c0_10, %c0_11] : memref<2x128x128xbf16, #tpu.memory_space<vmem>>, vector<1x128x128xbf16>
    %13 = vector.shape_cast %12 : vector<1x128x128xbf16> to vector<128x128xbf16>
    %cst_12 = arith.constant dense<0.000000e+00> : vector<16x128xf32>
    %14 = tpu.matmul %11, %13, %cst_12 {dimension_numbers = #tpu.dot_dimension_numbers<[1], [0], [0], [1], [0, 0, 1, 1], [], []>} : vector<16x128xbf16>, vector<128x128xbf16>, vector<16x128xf32> -> vector<16x128xf32>
    %15 = arith.addf %10, %14 : vector<16x128xf32>
    %c0_13 = arith.constant 0 : index
    %c0_14 = arith.constant 0 : index
    %c0_15 = arith.constant 0 : index
    %16 = vector.load %arg6[%c0_13, %c0_14, %c0_15] : memref<2x1x128xf32, #tpu.memory_space<vmem>>, vector<1x1x128xf32>
    %17 = vector.shape_cast %16 : vector<1x1x128xf32> to vector<1x128xf32>
    %18 = vector.broadcast %17 : vector<1x128xf32> to vector<16x128xf32>
    %19 = arith.addf %15, %18 : vector<16x128xf32>
    %20 = math.tanh %19 : vector<16x128xf32>
    %c0_16 = arith.constant 0 : index
    %c0_17 = arith.constant 0 : index
    %c0_18 = arith.constant 0 : index
    %21 = vector.load %arg9[%c0_16, %c0_17, %c0_18] : memref<2x16x128xf32, #tpu.memory_space<vmem>>, vector<1x16x128xf32>
    %22 = vector.shape_cast %21 : vector<1x16x128xf32> to vector<16x128xf32>
    %23 = vector.shape_cast %20 : vector<16x128xf32> to vector<1x16x128xf32>
    tpu.vector_store %arg9[%c0_16, %c0_17, %c0_18], %23 {strides = array<i32>} : memref<2x16x128xf32, #tpu.memory_space<vmem>>, vector<1x16x128xf32>,
    %c1 = arith.constant 1 : index
    %c0_19 = arith.constant 0 : index
    %c0_20 = arith.constant 0 : index
    %24 = vector.load %arg9[%c1, %c0_19, %c0_20] : memref<2x16x128xf32, #tpu.memory_space<vmem>>, vector<1x16x128xf32>
    %25 = vector.shape_cast %24 : vector<1x16x128xf32> to vector<16x128xf32>
    %26 = arith.truncf %20 : vector<16x128xf32> to vector<16x128xbf16>
    %c1_21 = arith.constant 1 : index
    %c0_22 = arith.constant 0 : index
    %c0_23 = arith.constant 0 : index
    %27 = vector.load %arg4[%c1_21, %c0_22, %c0_23] : memref<2x128x128xbf16, #tpu.memory_space<vmem>>, vector<1x128x128xbf16>
    %28 = vector.shape_cast %27 : vector<1x128x128xbf16> to vector<128x128xbf16>
    %cst_24 = arith.constant dense<0.000000e+00> : vector<16x128xf32>
    %29 = tpu.matmul %26, %28, %cst_24 {dimension_numbers = #tpu.dot_dimension_numbers<[1], [0], [0], [1], [0, 0, 1, 1], [], []>} : vector<16x128xbf16>, vector<128x128xbf16>, vector<16x128xf32> -> vector<16x128xf32>
    %30 = arith.truncf %25 : vector<16x128xf32> to vector<16x128xbf16>
    %c1_25 = arith.constant 1 : index
    %c0_26 = arith.constant 0 : index
    %c0_27 = arith.constant 0 : index
    %31 = vector.load %arg5[%c1_25, %c0_26, %c0_27] : memref<2x128x128xbf16, #tpu.memory_space<vmem>>, vector<1x128x128xbf16>
    %32 = vector.shape_cast %31 : vector<1x128x128xbf16> to vector<128x128xbf16>
    %cst_28 = arith.constant dense<0.000000e+00> : vector<16x128xf32>
    %33 = tpu.matmul %30, %32, %cst_28 {dimension_numbers = #tpu.dot_dimension_numbers<[1], [0], [0], [1], [0, 0, 1, 1], [], []>} : vector<16x128xbf16>, vector<128x128xbf16>, vector<16x128xf32> -> vector<16x128xf32>
    %34 = arith.addf %29, %33 : vector<16x128xf32>
    %c1_29 = arith.constant 1 : index
    %c0_30 = arith.constant 0 : index
    %c0_31 = arith.constant 0 : index
    %35 = vector.load %arg6[%c1_29, %c0_30, %c0_31] : memref<2x1x128xf32, #tpu.memory_space<vmem>>, vector<1x1x128xf32>
    %36 = vector.shape_cast %35 : vector<1x1x128xf32> to vector<1x128xf32>
    %37 = vector.broadcast %36 : vector<1x128xf32> to vector<16x128xf32>
    %38 = arith.addf %34, %37 : vector<16x128xf32>
    %39 = math.tanh %38 : vector<16x128xf32>
    %c1_32 = arith.constant 1 : index
    %c0_33 = arith.constant 0 : index
    %c0_34 = arith.constant 0 : index
    %40 = vector.load %arg9[%c1_32, %c0_33, %c0_34] : memref<2x16x128xf32, #tpu.memory_space<vmem>>, vector<1x16x128xf32>
    %41 = vector.shape_cast %40 : vector<1x16x128xf32> to vector<16x128xf32>
    %42 = vector.shape_cast %39 : vector<16x128xf32> to vector<1x16x128xf32>
    tpu.vector_store %arg9[%c1_32, %c0_33, %c0_34], %42 {strides = array<i32>} : memref<2x16x128xf32, #tpu.memory_space<vmem>>, vector<1x16x128xf32>,
    %43 = arith.truncf %39 : vector<16x128xf32> to vector<16x128xbf16>
    %44 = arith.index_cast %c0_i32_1 : i32 to index
    %c0_35 = arith.constant 0 : index
    %c0_36 = arith.constant 0 : index
    %45 = vector.load %arg7[%44, %c0_35, %c0_36] : memref<12x16x128xbf16, #tpu.memory_space<vmem>>, vector<1x16x128xbf16>
    %46 = vector.shape_cast %45 : vector<1x16x128xbf16> to vector<16x128xbf16>
    %47 = vector.shape_cast %43 : vector<16x128xbf16> to vector<1x16x128xbf16>
    tpu.vector_store %arg7[%44, %c0_35, %c0_36], %47 {strides = array<i32>} : memref<12x16x128xbf16, #tpu.memory_space<vmem>>, vector<1x16x128xbf16>,
    %c1_i32 = arith.constant 1 : i32
    %48 = arith.index_cast %c1_i32 : i32 to index
    %c0_37 = arith.constant 0 : index
    %c0_38 = arith.constant 0 : index
    %49 = vector.load %arg2[%48, %c0_37, %c0_38] : memref<12x16x128xbf16, #tpu.memory_space<vmem>>, vector<1x16x128xbf16>
    %50 = vector.shape_cast %49 : vector<1x16x128xbf16> to vector<16x128xbf16>
    %c0_39 = arith.constant 0 : index
    %c0_40 = arith.constant 0 : index
    %c0_41 = arith.constant 0 : index
    %51 = vector.load %arg9[%c0_39, %c0_40, %c0_41] : memref<2x16x128xf32, #tpu.memory_space<vmem>>, vector<1x16x128xf32>
    %52 = vector.shape_cast %51 : vector<1x16x128xf32> to vector<16x128xf32>
    %c0_42 = arith.constant 0 : index
    %c0_43 = arith.constant 0 : index
    %c0_44 = arith.constant 0 : index
    %53 = vector.load %arg4[%c0_42, %c0_43, %c0_44] : memref<2x128x128xbf16, #tpu.memory_space<vmem>>, vector<1x128x128xbf16>
    %54 = vector.shape_cast %53 : vector<1x128x128xbf16> to vector<128x128xbf16>
    %cst_45 = arith.constant dense<0.000000e+00> : vector<16x128xf32>
    %55 = tpu.matmul %50, %54, %cst_45 {dimension_numbers = #tpu.dot_dimension_numbers<[1], [0], [0], [1], [0, 0, 1, 1], [], []>} : vector<16x128xbf16>, vector<128x128xbf16>, vector<16x128xf32> -> vector<16x128xf32>
    %56 = arith.truncf %52 : vector<16x128xf32> to vector<16x128xbf16>
    %c0_46 = arith.constant 0 : index
    %c0_47 = arith.constant 0 : index
    %c0_48 = arith.constant 0 : index
    %57 = vector.load %arg5[%c0_46, %c0_47, %c0_48] : memref<2x128x128xbf16, #tpu.memory_space<vmem>>, vector<1x128x128xbf16>
    %58 = vector.shape_cast %57 : vector<1x128x128xbf16> to vector<128x128xbf16>
    %cst_49 = arith.constant dense<0.000000e+00> : vector<16x128xf32>
    %59 = tpu.matmul %56, %58, %cst_49 {dimension_numbers = #tpu.dot_dimension_numbers<[1], [0], [0], [1], [0, 0, 1, 1], [], []>} : vector<16x128xbf16>, vector<128x128xbf16>, vector<16x128xf32> -> vector<16x128xf32>
    %60 = arith.addf %55, %59 : vector<16x128xf32>
    %c0_50 = arith.constant 0 : index
    %c0_51 = arith.constant 0 : index
    %c0_52 = arith.constant 0 : index
    %61 = vector.load %arg6[%c0_50, %c0_51, %c0_52] : memref<2x1x128xf32, #tpu.memory_space<vmem>>, vector<1x1x128xf32>
    %62 = vector.shape_cast %61 : vector<1x1x128xf32> to vector<1x128xf32>
    %63 = vector.broadcast %62 : vector<1x128xf32> to vector<16x128xf32>
    %64 = arith.addf %60, %63 : vector<16x128xf32>
    %65 = math.tanh %64 : vector<16x128xf32>
    %c0_53 = arith.constant 0 : index
    %c0_54 = arith.constant 0 : index
    %c0_55 = arith.constant 0 : index
    %66 = vector.load %arg9[%c0_53, %c0_54, %c0_55] : memref<2x16x128xf32, #tpu.memory_space<vmem>>, vector<1x16x128xf32>
    %67 = vector.shape_cast %66 : vector<1x16x128xf32> to vector<16x128xf32>
    %68 = vector.shape_cast %65 : vector<16x128xf32> to vector<1x16x128xf32>
    tpu.vector_store %arg9[%c0_53, %c0_54, %c0_55], %68 {strides = array<i32>} : memref<2x16x128xf32, #tpu.memory_space<vmem>>, vector<1x16x128xf32>,
    %c1_56 = arith.constant 1 : index
    %c0_57 = arith.constant 0 : index
    %c0_58 = arith.constant 0 : index
    %69 = vector.load %arg9[%c1_56, %c0_57, %c0_58] : memref<2x16x128xf32, #tpu.memory_space<vmem>>, vector<1x16x128xf32>
    %70 = vector.shape_cast %69 : vector<1x16x128xf32> to vector<16x128xf32>
    %71 = arith.truncf %65 : vector<16x128xf32> to vector<16x128xbf16>
    %c1_59 = arith.constant 1 : index
    %c0_60 = arith.constant 0 : index
    %c0_61 = arith.constant 0 : index
    %72 = vector.load %arg4[%c1_59, %c0_60, %c0_61] : memref<2x128x128xbf16, #tpu.memory_space<vmem>>, vector<1x128x128xbf16>
    %73 = vector.shape_cast %72 : vector<1x128x128xbf16> to vector<128x128xbf16>
    %cst_62 = arith.constant dense<0.000000e+00> : vector<16x128xf32>
    %74 = tpu.matmul %71, %73, %cst_62 {dimension_numbers = #tpu.dot_dimension_numbers<[1], [0], [0], [1], [0, 0, 1, 1], [], []>} : vector<16x128xbf16>, vector<128x128xbf16>, vector<16x128xf32> -> vector<16x128xf32>
    %75 = arith.truncf %70 : vector<16x128xf32> to vector<16x128xbf16>
    %c1_63 = arith.constant 1 : index
    %c0_64 = arith.constant 0 : index
    %c0_65 = arith.constant 0 : index
    %76 = vector.load %arg5[%c1_63, %c0_64, %c0_65] : memref<2x128x128xbf16, #tpu.memory_space<vmem>>, vector<1x128x128xbf16>
    %77 = vector.shape_cast %76 : vector<1x128x128xbf16> to vector<128x128xbf16>
    %cst_66 = arith.constant dense<0.000000e+00> : vector<16x128xf32>
    %78 = tpu.matmul %75, %77, %cst_66 {dimension_numbers = #tpu.dot_dimension_numbers<[1], [0], [0], [1], [0, 0, 1, 1], [], []>} : vector<16x128xbf16>, vector<128x128xbf16>, vector<16x128xf32> -> vector<16x128xf32>
    %79 = arith.addf %74, %78 : vector<16x128xf32>
    %c1_67 = arith.constant 1 : index
    %c0_68 = arith.constant 0 : index
    %c0_69 = arith.constant 0 : index
    %80 = vector.load %arg6[%c1_67, %c0_68, %c0_69] : memref<2x1x128xf32, #tpu.memory_space<vmem>>, vector<1x1x128xf32>
    %81 = vector.shape_cast %80 : vector<1x1x128xf32> to vector<1x128xf32>
    %82 = vector.broadcast %81 : vector<1x128xf32> to vector<16x128xf32>
    %83 = arith.addf %79, %82 : vector<16x128xf32>
    %84 = math.tanh %83 : vector<16x128xf32>
    %c1_70 = arith.constant 1 : index
    %c0_71 = arith.constant 0 : index
    %c0_72 = arith.constant 0 : index
    %85 = vector.load %arg9[%c1_70, %c0_71, %c0_72] : memref<2x16x128xf32, #tpu.memory_space<vmem>>, vector<1x16x128xf32>
    %86 = vector.shape_cast %85 : vector<1x16x128xf32> to vector<16x128xf32>
    %87 = vector.shape_cast %84 : vector<16x128xf32> to vector<1x16x128xf32>
    tpu.vector_store %arg9[%c1_70, %c0_71, %c0_72], %87 {strides = array<i32>} : memref<2x16x128xf32, #tpu.memory_space<vmem>>, vector<1x16x128xf32>,
    %88 = arith.truncf %84 : vector<16x128xf32> to vector<16x128xbf16>
    %89 = arith.index_cast %c1_i32 : i32 to index
    %c0_73 = arith.constant 0 : index
    %c0_74 = arith.constant 0 : index
    %90 = vector.load %arg7[%89, %c0_73, %c0_74] : memref<12x16x128xbf16, #tpu.memory_space<vmem>>, vector<1x16x128xbf16>
    %91 = vector.shape_cast %90 : vector<1x16x128xbf16> to vector<16x128xbf16>
    %92 = vector.shape_cast %88 : vector<16x128xbf16> to vector<1x16x128xbf16>
    tpu.vector_store %arg7[%89, %c0_73, %c0_74], %92 {strides = array<i32>} : memref<12x16x128xbf16, #tpu.memory_space<vmem>>, vector<1x16x128xbf16>,
    %c2_i32 = arith.constant 2 : i32
    %93 = arith.index_cast %c2_i32 : i32 to index
    %c0_75 = arith.constant 0 : index
    %c0_76 = arith.constant 0 : index
    %94 = vector.load %arg2[%93, %c0_75, %c0_76] : memref<12x16x128xbf16, #tpu.memory_space<vmem>>, vector<1x16x128xbf16>
    %95 = vector.shape_cast %94 : vector<1x16x128xbf16> to vector<16x128xbf16>
    %c0_77 = arith.constant 0 : index
    %c0_78 = arith.constant 0 : index
    %c0_79 = arith.constant 0 : index
    %96 = vector.load %arg9[%c0_77, %c0_78, %c0_79] : memref<2x16x128xf32, #tpu.memory_space<vmem>>, vector<1x16x128xf32>
    %97 = vector.shape_cast %96 : vector<1x16x128xf32> to vector<16x128xf32>
    %c0_80 = arith.constant 0 : index
    %c0_81 = arith.constant 0 : index
    %c0_82 = arith.constant 0 : index
    %98 = vector.load %arg4[%c0_80, %c0_81, %c0_82] : memref<2x128x128xbf16, #tpu.memory_space<vmem>>, vector<1x128x128xbf16>
    %99 = vector.shape_cast %98 : vector<1x128x128xbf16> to vector<128x128xbf16>
    %cst_83 = arith.constant dense<0.000000e+00> : vector<16x128xf32>
    %100 = tpu.matmul %95, %99, %cst_83 {dimension_numbers = #tpu.dot_dimension_numbers<[1], [0], [0], [1], [0, 0, 1, 1], [], []>} : vector<16x128xbf16>, vector<128x128xbf16>, vector<16x128xf32> -> vector<16x128xf32>
    %101 = arith.truncf %97 : vector<16x128xf32> to vector<16x128xbf16>
    %c0_84 = arith.constant 0 : index
    %c0_85 = arith.constant 0 : index
    %c0_86 = arith.constant 0 : index
    %102 = vector.load %arg5[%c0_84, %c0_85, %c0_86] : memref<2x128x128xbf16, #tpu.memory_space<vmem>>, vector<1x128x128xbf16>
    %103 = vector.shape_cast %102 : vector<1x128x128xbf16> to vector<128x128xbf16>
    %cst_87 = arith.constant dense<0.000000e+00> : vector<16x128xf32>
    %104 = tpu.matmul %101, %103, %cst_87 {dimension_numbers = #tpu.dot_dimension_numbers<[1], [0], [0], [1], [0, 0, 1, 1], [], []>} : vector<16x128xbf16>, vector<128x128xbf16>, vector<16x128xf32> -> vector<16x128xf32>
    %105 = arith.addf %100, %104 : vector<16x128xf32>
    %c0_88 = arith.constant 0 : index
    %c0_89 = arith.constant 0 : index
    %c0_90 = arith.constant 0 : index
    %106 = vector.load %arg6[%c0_88, %c0_89, %c0_90] : memref<2x1x128xf32, #tpu.memory_space<vmem>>, vector<1x1x128xf32>
    %107 = vector.shape_cast %106 : vector<1x1x128xf32> to vector<1x128xf32>
    %108 = vector.broadcast %107 : vector<1x128xf32> to vector<16x128xf32>
    %109 = arith.addf %105, %108 : vector<16x128xf32>
    %110 = math.tanh %109 : vector<16x128xf32>
    %c0_91 = arith.constant 0 : index
    %c0_92 = arith.constant 0 : index
    %c0_93 = arith.constant 0 : index
    %111 = vector.load %arg9[%c0_91, %c0_92, %c0_93] : memref<2x16x128xf32, #tpu.memory_space<vmem>>, vector<1x16x128xf32>
    %112 = vector.shape_cast %111 : vector<1x16x128xf32> to vector<16x128xf32>
    %113 = vector.shape_cast %110 : vector<16x128xf32> to vector<1x16x128xf32>
    tpu.vector_store %arg9[%c0_91, %c0_92, %c0_93], %113 {strides = array<i32>} : memref<2x16x128xf32, #tpu.memory_space<vmem>>, vector<1x16x128xf32>,
    %c1_94 = arith.constant 1 : index
    %c0_95 = arith.constant 0 : index
    %c0_96 = arith.constant 0 : index
    %114 = vector.load %arg9[%c1_94, %c0_95, %c0_96] : memref<2x16x128xf32, #tpu.memory_space<vmem>>, vector<1x16x128xf32>
    %115 = vector.shape_cast %114 : vector<1x16x128xf32> to vector<16x128xf32>
    %116 = arith.truncf %110 : vector<16x128xf32> to vector<16x128xbf16>
    %c1_97 = arith.constant 1 : index
    %c0_98 = arith.constant 0 : index
    %c0_99 = arith.constant 0 : index
    %117 = vector.load %arg4[%c1_97, %c0_98, %c0_99] : memref<2x128x128xbf16, #tpu.memory_space<vmem>>, vector<1x128x128xbf16>
    %118 = vector.shape_cast %117 : vector<1x128x128xbf16> to vector<128x128xbf16>
    %cst_100 = arith.constant dense<0.000000e+00> : vector<16x128xf32>
    %119 = tpu.matmul %116, %118, %cst_100 {dimension_numbers = #tpu.dot_dimension_numbers<[1], [0], [0], [1], [0, 0, 1, 1], [], []>} : vector<16x128xbf16>, vector<128x128xbf16>, vector<16x128xf32> -> vector<16x128xf32>
    %120 = arith.truncf %115 : vector<16x128xf32> to vector<16x128xbf16>
    %c1_101 = arith.constant 1 : index
    %c0_102 = arith.constant 0 : index
    %c0_103 = arith.constant 0 : index
    %121 = vector.load %arg5[%c1_101, %c0_102, %c0_103] : memref<2x128x128xbf16, #tpu.memory_space<vmem>>, vector<1x128x128xbf16>
    %122 = vector.shape_cast %121 : vector<1x128x128xbf16> to vector<128x128xbf16>
    %cst_104 = arith.constant dense<0.000000e+00> : vector<16x128xf32>
    %123 = tpu.matmul %120, %122, %cst_104 {dimension_numbers = #tpu.dot_dimension_numbers<[1], [0], [0], [1], [0, 0, 1, 1], [], []>} : vector<16x128xbf16>, vector<128x128xbf16>, vector<16x128xf32> -> vector<16x128xf32>
    %124 = arith.addf %119, %123 : vector<16x128xf32>
    %c1_105 = arith.constant 1 : index
    %c0_106 = arith.constant 0 : index
    %c0_107 = arith.constant 0 : index
    %125 = vector.load %arg6[%c1_105, %c0_106, %c0_107] : memref<2x1x128xf32, #tpu.memory_space<vmem>>, vector<1x1x128xf32>
    %126 = vector.shape_cast %125 : vector<1x1x128xf32> to vector<1x128xf32>
    %127 = vector.broadcast %126 : vector<1x128xf32> to vector<16x128xf32>
    %128 = arith.addf %124, %127 : vector<16x128xf32>
    %129 = math.tanh %128 : vector<16x128xf32>
    %c1_108 = arith.constant 1 : index
    %c0_109 = arith.constant 0 : index
    %c0_110 = arith.constant 0 : index
    %130 = vector.load %arg9[%c1_108, %c0_109, %c0_110] : memref<2x16x128xf32, #tpu.memory_space<vmem>>, vector<1x16x128xf32>
    %131 = vector.shape_cast %130 : vector<1x16x128xf32> to vector<16x128xf32>
    %132 = vector.shape_cast %129 : vector<16x128xf32> to vector<1x16x128xf32>
    tpu.vector_store %arg9[%c1_108, %c0_109, %c0_110], %132 {strides = array<i32>} : memref<2x16x128xf32, #tpu.memory_space<vmem>>, vector<1x16x128xf32>,
    %133 = arith.truncf %129 : vector<16x128xf32> to vector<16x128xbf16>
    %134 = arith.index_cast %c2_i32 : i32 to index
    %c0_111 = arith.constant 0 : index
    %c0_112 = arith.constant 0 : index
    %135 = vector.load %arg7[%134, %c0_111, %c0_112] : memref<12x16x128xbf16, #tpu.memory_space<vmem>>, vector<1x16x128xbf16>
    %136 = vector.shape_cast %135 : vector<1x16x128xbf16> to vector<16x128xbf16>
    %137 = vector.shape_cast %133 : vector<16x128xbf16> to vector<1x16x128xbf16>
    tpu.vector_store %arg7[%134, %c0_111, %c0_112], %137 {strides = array<i32>} : memref<12x16x128xbf16, #tpu.memory_space<vmem>>, vector<1x16x128xbf16>,
    %c3_i32 = arith.constant 3 : i32
    %138 = arith.index_cast %c3_i32 : i32 to index
    %c0_113 = arith.constant 0 : index
    %c0_114 = arith.constant 0 : index
    %139 = vector.load %arg2[%138, %c0_113, %c0_114] : memref<12x16x128xbf16, #tpu.memory_space<vmem>>, vector<1x16x128xbf16>
    %140 = vector.shape_cast %139 : vector<1x16x128xbf16> to vector<16x128xbf16>
    %c0_115 = arith.constant 0 : index
    %c0_116 = arith.constant 0 : index
    %c0_117 = arith.constant 0 : index
    %141 = vector.load %arg9[%c0_115, %c0_116, %c0_117] : memref<2x16x128xf32, #tpu.memory_space<vmem>>, vector<1x16x128xf32>
    %142 = vector.shape_cast %141 : vector<1x16x128xf32> to vector<16x128xf32>
    %c0_118 = arith.constant 0 : index
    %c0_119 = arith.constant 0 : index
    %c0_120 = arith.constant 0 : index
    %143 = vector.load %arg4[%c0_118, %c0_119, %c0_120] : memref<2x128x128xbf16, #tpu.memory_space<vmem>>, vector<1x128x128xbf16>
    %144 = vector.shape_cast %143 : vector<1x128x128xbf16> to vector<128x128xbf16>
    %cst_121 = arith.constant dense<0.000000e+00> : vector<16x128xf32>
    %145 = tpu.matmul %140, %144, %cst_121 {dimension_numbers = #tpu.dot_dimension_numbers<[1], [0], [0], [1], [0, 0, 1, 1], [], []>} : vector<16x128xbf16>, vector<128x128xbf16>, vector<16x128xf32> -> vector<16x128xf32>
    %146 = arith.truncf %142 : vector<16x128xf32> to vector<16x128xbf16>
    %c0_122 = arith.constant 0 : index
    %c0_123 = arith.constant 0 : index
    %c0_124 = arith.constant 0 : index
    %147 = vector.load %arg5[%c0_122, %c0_123, %c0_124] : memref<2x128x128xbf16, #tpu.memory_space<vmem>>, vector<1x128x128xbf16>
    %148 = vector.shape_cast %147 : vector<1x128x128xbf16> to vector<128x128xbf16>
    %cst_125 = arith.constant dense<0.000000e+00> : vector<16x128xf32>
    %149 = tpu.matmul %146, %148, %cst_125 {dimension_numbers = #tpu.dot_dimension_numbers<[1], [0], [0], [1], [0, 0, 1, 1], [], []>} : vector<16x128xbf16>, vector<128x128xbf16>, vector<16x128xf32> -> vector<16x128xf32>
    %150 = arith.addf %145, %149 : vector<16x128xf32>
    %c0_126 = arith.constant 0 : index
    %c0_127 = arith.constant 0 : index
    %c0_128 = arith.constant 0 : index
    %151 = vector.load %arg6[%c0_126, %c0_127, %c0_128] : memref<2x1x128xf32, #tpu.memory_space<vmem>>, vector<1x1x128xf32>
    %152 = vector.shape_cast %151 : vector<1x1x128xf32> to vector<1x128xf32>
    %153 = vector.broadcast %152 : vector<1x128xf32> to vector<16x128xf32>
    %154 = arith.addf %150, %153 : vector<16x128xf32>
    %155 = math.tanh %154 : vector<16x128xf32>
    %c0_129 = arith.constant 0 : index
    %c0_130 = arith.constant 0 : index
    %c0_131 = arith.constant 0 : index
    %156 = vector.load %arg9[%c0_129, %c0_130, %c0_131] : memref<2x16x128xf32, #tpu.memory_space<vmem>>, vector<1x16x128xf32>
    %157 = vector.shape_cast %156 : vector<1x16x128xf32> to vector<16x128xf32>
    %158 = vector.shape_cast %155 : vector<16x128xf32> to vector<1x16x128xf32>
    tpu.vector_store %arg9[%c0_129, %c0_130, %c0_131], %158 {strides = array<i32>} : memref<2x16x128xf32, #tpu.memory_space<vmem>>, vector<1x16x128xf32>,
    %c1_132 = arith.constant 1 : index
    %c0_133 = arith.constant 0 : index
    %c0_134 = arith.constant 0 : index
    %159 = vector.load %arg9[%c1_132, %c0_133, %c0_134] : memref<2x16x128xf32, #tpu.memory_space<vmem>>, vector<1x16x128xf32>
    %160 = vector.shape_cast %159 : vector<1x16x128xf32> to vector<16x128xf32>
    %161 = arith.truncf %155 : vector<16x128xf32> to vector<16x128xbf16>
    %c1_135 = arith.constant 1 : index
    %c0_136 = arith.constant 0 : index
    %c0_137 = arith.constant 0 : index
    %162 = vector.load %arg4[%c1_135, %c0_136, %c0_137] : memref<2x128x128xbf16, #tpu.memory_space<vmem>>, vector<1x128x128xbf16>
    %163 = vector.shape_cast %162 : vector<1x128x128xbf16> to vector<128x128xbf16>
    %cst_138 = arith.constant dense<0.000000e+00> : vector<16x128xf32>
    %164 = tpu.matmul %161, %163, %cst_138 {dimension_numbers = #tpu.dot_dimension_numbers<[1], [0], [0], [1], [0, 0, 1, 1], [], []>} : vector<16x128xbf16>, vector<128x128xbf16>, vector<16x128xf32> -> vector<16x128xf32>
    %165 = arith.truncf %160 : vector<16x128xf32> to vector<16x128xbf16>
    %c1_139 = arith.constant 1 : index
    %c0_140 = arith.constant 0 : index
    %c0_141 = arith.constant 0 : index
    %166 = vector.load %arg5[%c1_139, %c0_140, %c0_141] : memref<2x128x128xbf16, #tpu.memory_space<vmem>>, vector<1x128x128xbf16>
    %167 = vector.shape_cast %166 : vector<1x128x128xbf16> to vector<128x128xbf16>
    %cst_142 = arith.constant dense<0.000000e+00> : vector<16x128xf32>
    %168 = tpu.matmul %165, %167, %cst_142 {dimension_numbers = #tpu.dot_dimension_numbers<[1], [0], [0], [1], [0, 0, 1, 1], [], []>} : vector<16x128xbf16>, vector<128x128xbf16>, vector<16x128xf32> -> vector<16x128xf32>
    %169 = arith.addf %164, %168 : vector<16x128xf32>
    %c1_143 = arith.constant 1 : index
    %c0_144 = arith.constant 0 : index
    %c0_145 = arith.constant 0 : index
    %170 = vector.load %arg6[%c1_143, %c0_144, %c0_145] : memref<2x1x128xf32, #tpu.memory_space<vmem>>, vector<1x1x128xf32>
    %171 = vector.shape_cast %170 : vector<1x1x128xf32> to vector<1x128xf32>
    %172 = vector.broadcast %171 : vector<1x128xf32> to vector<16x128xf32>
    %173 = arith.addf %169, %172 : vector<16x128xf32>
    %174 = math.tanh %173 : vector<16x128xf32>
    %c1_146 = arith.constant 1 : index
    %c0_147 = arith.constant 0 : index
    %c0_148 = arith.constant 0 : index
    %175 = vector.load %arg9[%c1_146, %c0_147, %c0_148] : memref<2x16x128xf32, #tpu.memory_space<vmem>>, vector<1x16x128xf32>
    %176 = vector.shape_cast %175 : vector<1x16x128xf32> to vector<16x128xf32>
    %177 = vector.shape_cast %174 : vector<16x128xf32> to vector<1x16x128xf32>
    tpu.vector_store %arg9[%c1_146, %c0_147, %c0_148], %177 {strides = array<i32>} : memref<2x16x128xf32, #tpu.memory_space<vmem>>, vector<1x16x128xf32>,
    %178 = arith.truncf %174 : vector<16x128xf32> to vector<16x128xbf16>
    %179 = arith.index_cast %c3_i32 : i32 to index
    %c0_149 = arith.constant 0 : index
    %c0_150 = arith.constant 0 : index
    %180 = vector.load %arg7[%179, %c0_149, %c0_150] : memref<12x16x128xbf16, #tpu.memory_space<vmem>>, vector<1x16x128xbf16>
    %181 = vector.shape_cast %180 : vector<1x16x128xbf16> to vector<16x128xbf16>
    %182 = vector.shape_cast %178 : vector<16x128xbf16> to vector<1x16x128xbf16>
    tpu.vector_store %arg7[%179, %c0_149, %c0_150], %182 {strides = array<i32>} : memref<12x16x128xbf16, #tpu.memory_space<vmem>>, vector<1x16x128xbf16>,
    %c4_i32 = arith.constant 4 : i32
    %183 = arith.index_cast %c4_i32 : i32 to index
    %c0_151 = arith.constant 0 : index
    %c0_152 = arith.constant 0 : index
    %184 = vector.load %arg2[%183, %c0_151, %c0_152] : memref<12x16x128xbf16, #tpu.memory_space<vmem>>, vector<1x16x128xbf16>
    %185 = vector.shape_cast %184 : vector<1x16x128xbf16> to vector<16x128xbf16>
    %c0_153 = arith.constant 0 : index
    %c0_154 = arith.constant 0 : index
    %c0_155 = arith.constant 0 : index
    %186 = vector.load %arg9[%c0_153, %c0_154, %c0_155] : memref<2x16x128xf32, #tpu.memory_space<vmem>>, vector<1x16x128xf32>
    %187 = vector.shape_cast %186 : vector<1x16x128xf32> to vector<16x128xf32>
    %c0_156 = arith.constant 0 : index
    %c0_157 = arith.constant 0 : index
    %c0_158 = arith.constant 0 : index
    %188 = vector.load %arg4[%c0_156, %c0_157, %c0_158] : memref<2x128x128xbf16, #tpu.memory_space<vmem>>, vector<1x128x128xbf16>
    %189 = vector.shape_cast %188 : vector<1x128x128xbf16> to vector<128x128xbf16>
    %cst_159 = arith.constant dense<0.000000e+00> : vector<16x128xf32>
    %190 = tpu.matmul %185, %189, %cst_159 {dimension_numbers = #tpu.dot_dimension_numbers<[1], [0], [0], [1], [0, 0, 1, 1], [], []>} : vector<16x128xbf16>, vector<128x128xbf16>, vector<16x128xf32> -> vector<16x128xf32>
    %191 = arith.truncf %187 : vector<16x128xf32> to vector<16x128xbf16>
    %c0_160 = arith.constant 0 : index
    %c0_161 = arith.constant 0 : index
    %c0_162 = arith.constant 0 : index
    %192 = vector.load %arg5[%c0_160, %c0_161, %c0_162] : memref<2x128x128xbf16, #tpu.memory_space<vmem>>, vector<1x128x128xbf16>
    %193 = vector.shape_cast %192 : vector<1x128x128xbf16> to vector<128x128xbf16>
    %cst_163 = arith.constant dense<0.000000e+00> : vector<16x128xf32>
    %194 = tpu.matmul %191, %193, %cst_163 {dimension_numbers = #tpu.dot_dimension_numbers<[1], [0], [0], [1], [0, 0, 1, 1], [], []>} : vector<16x128xbf16>, vector<128x128xbf16>, vector<16x128xf32> -> vector<16x128xf32>
    %195 = arith.addf %190, %194 : vector<16x128xf32>
    %c0_164 = arith.constant 0 : index
    %c0_165 = arith.constant 0 : index
    %c0_166 = arith.constant 0 : index
    %196 = vector.load %arg6[%c0_164, %c0_165, %c0_166] : memref<2x1x128xf32, #tpu.memory_space<vmem>>, vector<1x1x128xf32>
    %197 = vector.shape_cast %196 : vector<1x1x128xf32> to vector<1x128xf32>
    %198 = vector.broadcast %197 : vector<1x128xf32> to vector<16x128xf32>
    %199 = arith.addf %195, %198 : vector<16x128xf32>
    %200 = math.tanh %199 : vector<16x128xf32>
    %c0_167 = arith.constant 0 : index
    %c0_168 = arith.constant 0 : index
    %c0_169 = arith.constant 0 : index
    %201 = vector.load %arg9[%c0_167, %c0_168, %c0_169] : memref<2x16x128xf32, #tpu.memory_space<vmem>>, vector<1x16x128xf32>
    %202 = vector.shape_cast %201 : vector<1x16x128xf32> to vector<16x128xf32>
    %203 = vector.shape_cast %200 : vector<16x128xf32> to vector<1x16x128xf32>
    tpu.vector_store %arg9[%c0_167, %c0_168, %c0_169], %203 {strides = array<i32>} : memref<2x16x128xf32, #tpu.memory_space<vmem>>, vector<1x16x128xf32>,
    %c1_170 = arith.constant 1 : index
    %c0_171 = arith.constant 0 : index
    %c0_172 = arith.constant 0 : index
    %204 = vector.load %arg9[%c1_170, %c0_171, %c0_172] : memref<2x16x128xf32, #tpu.memory_space<vmem>>, vector<1x16x128xf32>
    %205 = vector.shape_cast %204 : vector<1x16x128xf32> to vector<16x128xf32>
    %206 = arith.truncf %200 : vector<16x128xf32> to vector<16x128xbf16>
    %c1_173 = arith.constant 1 : index
    %c0_174 = arith.constant 0 : index
    %c0_175 = arith.constant 0 : index
    %207 = vector.load %arg4[%c1_173, %c0_174, %c0_175] : memref<2x128x128xbf16, #tpu.memory_space<vmem>>, vector<1x128x128xbf16>
    %208 = vector.shape_cast %207 : vector<1x128x128xbf16> to vector<128x128xbf16>
    %cst_176 = arith.constant dense<0.000000e+00> : vector<16x128xf32>
    %209 = tpu.matmul %206, %208, %cst_176 {dimension_numbers = #tpu.dot_dimension_numbers<[1], [0], [0], [1], [0, 0, 1, 1], [], []>} : vector<16x128xbf16>, vector<128x128xbf16>, vector<16x128xf32> -> vector<16x128xf32>
    %210 = arith.truncf %205 : vector<16x128xf32> to vector<16x128xbf16>
    %c1_177 = arith.constant 1 : index
    %c0_178 = arith.constant 0 : index
    %c0_179 = arith.constant 0 : index
    %211 = vector.load %arg5[%c1_177, %c0_178, %c0_179] : memref<2x128x128xbf16, #tpu.memory_space<vmem>>, vector<1x128x128xbf16>
    %212 = vector.shape_cast %211 : vector<1x128x128xbf16> to vector<128x128xbf16>
    %cst_180 = arith.constant dense<0.000000e+00> : vector<16x128xf32>
    %213 = tpu.matmul %210, %212, %cst_180 {dimension_numbers = #tpu.dot_dimension_numbers<[1], [0], [0], [1], [0, 0, 1, 1], [], []>} : vector<16x128xbf16>, vector<128x128xbf16>, vector<16x128xf32> -> vector<16x128xf32>
    %214 = arith.addf %209, %213 : vector<16x128xf32>
    %c1_181 = arith.constant 1 : index
    %c0_182 = arith.constant 0 : index
    %c0_183 = arith.constant 0 : index
    %215 = vector.load %arg6[%c1_181, %c0_182, %c0_183] : memref<2x1x128xf32, #tpu.memory_space<vmem>>, vector<1x1x128xf32>
    %216 = vector.shape_cast %215 : vector<1x1x128xf32> to vector<1x128xf32>
    %217 = vector.broadcast %216 : vector<1x128xf32> to vector<16x128xf32>
    %218 = arith.addf %214, %217 : vector<16x128xf32>
    %219 = math.tanh %218 : vector<16x128xf32>
    %c1_184 = arith.constant 1 : index
    %c0_185 = arith.constant 0 : index
    %c0_186 = arith.constant 0 : index
    %220 = vector.load %arg9[%c1_184, %c0_185, %c0_186] : memref<2x16x128xf32, #tpu.memory_space<vmem>>, vector<1x16x128xf32>
    %221 = vector.shape_cast %220 : vector<1x16x128xf32> to vector<16x128xf32>
    %222 = vector.shape_cast %219 : vector<16x128xf32> to vector<1x16x128xf32>
    tpu.vector_store %arg9[%c1_184, %c0_185, %c0_186], %222 {strides = array<i32>} : memref<2x16x128xf32, #tpu.memory_space<vmem>>, vector<1x16x128xf32>,
    %223 = arith.truncf %219 : vector<16x128xf32> to vector<16x128xbf16>
    %224 = arith.index_cast %c4_i32 : i32 to index
    %c0_187 = arith.constant 0 : index
    %c0_188 = arith.constant 0 : index
    %225 = vector.load %arg7[%224, %c0_187, %c0_188] : memref<12x16x128xbf16, #tpu.memory_space<vmem>>, vector<1x16x128xbf16>
    %226 = vector.shape_cast %225 : vector<1x16x128xbf16> to vector<16x128xbf16>
    %227 = vector.shape_cast %223 : vector<16x128xbf16> to vector<1x16x128xbf16>
    tpu.vector_store %arg7[%224, %c0_187, %c0_188], %227 {strides = array<i32>} : memref<12x16x128xbf16, #tpu.memory_space<vmem>>, vector<1x16x128xbf16>,
    %c5_i32 = arith.constant 5 : i32
    %228 = arith.index_cast %c5_i32 : i32 to index
    %c0_189 = arith.constant 0 : index
    %c0_190 = arith.constant 0 : index
    %229 = vector.load %arg2[%228, %c0_189, %c0_190] : memref<12x16x128xbf16, #tpu.memory_space<vmem>>, vector<1x16x128xbf16>
    %230 = vector.shape_cast %229 : vector<1x16x128xbf16> to vector<16x128xbf16>
    %c0_191 = arith.constant 0 : index
    %c0_192 = arith.constant 0 : index
    %c0_193 = arith.constant 0 : index
    %231 = vector.load %arg9[%c0_191, %c0_192, %c0_193] : memref<2x16x128xf32, #tpu.memory_space<vmem>>, vector<1x16x128xf32>
    %232 = vector.shape_cast %231 : vector<1x16x128xf32> to vector<16x128xf32>
    %c0_194 = arith.constant 0 : index
    %c0_195 = arith.constant 0 : index
    %c0_196 = arith.constant 0 : index
    %233 = vector.load %arg4[%c0_194, %c0_195, %c0_196] : memref<2x128x128xbf16, #tpu.memory_space<vmem>>, vector<1x128x128xbf16>
    %234 = vector.shape_cast %233 : vector<1x128x128xbf16> to vector<128x128xbf16>
    %cst_197 = arith.constant dense<0.000000e+00> : vector<16x128xf32>
    %235 = tpu.matmul %230, %234, %cst_197 {dimension_numbers = #tpu.dot_dimension_numbers<[1], [0], [0], [1], [0, 0, 1, 1], [], []>} : vector<16x128xbf16>, vector<128x128xbf16>, vector<16x128xf32> -> vector<16x128xf32>
    %236 = arith.truncf %232 : vector<16x128xf32> to vector<16x128xbf16>
    %c0_198 = arith.constant 0 : index
    %c0_199 = arith.constant 0 : index
    %c0_200 = arith.constant 0 : index
    %237 = vector.load %arg5[%c0_198, %c0_199, %c0_200] : memref<2x128x128xbf16, #tpu.memory_space<vmem>>, vector<1x128x128xbf16>
    %238 = vector.shape_cast %237 : vector<1x128x128xbf16> to vector<128x128xbf16>
    %cst_201 = arith.constant dense<0.000000e+00> : vector<16x128xf32>
    %239 = tpu.matmul %236, %238, %cst_201 {dimension_numbers = #tpu.dot_dimension_numbers<[1], [0], [0], [1], [0, 0, 1, 1], [], []>} : vector<16x128xbf16>, vector<128x128xbf16>, vector<16x128xf32> -> vector<16x128xf32>
    %240 = arith.addf %235, %239 : vector<16x128xf32>
    %c0_202 = arith.constant 0 : index
    %c0_203 = arith.constant 0 : index
    %c0_204 = arith.constant 0 : index
    %241 = vector.load %arg6[%c0_202, %c0_203, %c0_204] : memref<2x1x128xf32, #tpu.memory_space<vmem>>, vector<1x1x128xf32>
    %242 = vector.shape_cast %241 : vector<1x1x128xf32> to vector<1x128xf32>
    %243 = vector.broadcast %242 : vector<1x128xf32> to vector<16x128xf32>
    %244 = arith.addf %240, %243 : vector<16x128xf32>
    %245 = math.tanh %244 : vector<16x128xf32>
    %c0_205 = arith.constant 0 : index
    %c0_206 = arith.constant 0 : index
    %c0_207 = arith.constant 0 : index
    %246 = vector.load %arg9[%c0_205, %c0_206, %c0_207] : memref<2x16x128xf32, #tpu.memory_space<vmem>>, vector<1x16x128xf32>
    %247 = vector.shape_cast %246 : vector<1x16x128xf32> to vector<16x128xf32>
    %248 = vector.shape_cast %245 : vector<16x128xf32> to vector<1x16x128xf32>
    tpu.vector_store %arg9[%c0_205, %c0_206, %c0_207], %248 {strides = array<i32>} : memref<2x16x128xf32, #tpu.memory_space<vmem>>, vector<1x16x128xf32>,
    %c1_208 = arith.constant 1 : index
    %c0_209 = arith.constant 0 : index
    %c0_210 = arith.constant 0 : index
    %249 = vector.load %arg9[%c1_208, %c0_209, %c0_210] : memref<2x16x128xf32, #tpu.memory_space<vmem>>, vector<1x16x128xf32>
    %250 = vector.shape_cast %249 : vector<1x16x128xf32> to vector<16x128xf32>
    %251 = arith.truncf %245 : vector<16x128xf32> to vector<16x128xbf16>
    %c1_211 = arith.constant 1 : index
    %c0_212 = arith.constant 0 : index
    %c0_213 = arith.constant 0 : index
    %252 = vector.load %arg4[%c1_211, %c0_212, %c0_213] : memref<2x128x128xbf16, #tpu.memory_space<vmem>>, vector<1x128x128xbf16>
    %253 = vector.shape_cast %252 : vector<1x128x128xbf16> to vector<128x128xbf16>
    %cst_214 = arith.constant dense<0.000000e+00> : vector<16x128xf32>
    %254 = tpu.matmul %251, %253, %cst_214 {dimension_numbers = #tpu.dot_dimension_numbers<[1], [0], [0], [1], [0, 0, 1, 1], [], []>} : vector<16x128xbf16>, vector<128x128xbf16>, vector<16x128xf32> -> vector<16x128xf32>
    %255 = arith.truncf %250 : vector<16x128xf32> to vector<16x128xbf16>
    %c1_215 = arith.constant 1 : index
    %c0_216 = arith.constant 0 : index
    %c0_217 = arith.constant 0 : index
    %256 = vector.load %arg5[%c1_215, %c0_216, %c0_217] : memref<2x128x128xbf16, #tpu.memory_space<vmem>>, vector<1x128x128xbf16>
    %257 = vector.shape_cast %256 : vector<1x128x128xbf16> to vector<128x128xbf16>
    %cst_218 = arith.constant dense<0.000000e+00> : vector<16x128xf32>
    %258 = tpu.matmul %255, %257, %cst_218 {dimension_numbers = #tpu.dot_dimension_numbers<[1], [0], [0], [1], [0, 0, 1, 1], [], []>} : vector<16x128xbf16>, vector<128x128xbf16>, vector<16x128xf32> -> vector<16x128xf32>
    %259 = arith.addf %254, %258 : vector<16x128xf32>
    %c1_219 = arith.constant 1 : index
    %c0_220 = arith.constant 0 : index
    %c0_221 = arith.constant 0 : index
    %260 = vector.load %arg6[%c1_219, %c0_220, %c0_221] : memref<2x1x128xf32, #tpu.memory_space<vmem>>, vector<1x1x128xf32>
    %261 = vector.shape_cast %260 : vector<1x1x128xf32> to vector<1x128xf32>
    %262 = vector.broadcast %261 : vector<1x128xf32> to vector<16x128xf32>
    %263 = arith.addf %259, %262 : vector<16x128xf32>
    %264 = math.tanh %263 : vector<16x128xf32>
    %c1_222 = arith.constant 1 : index
    %c0_223 = arith.constant 0 : index
    %c0_224 = arith.constant 0 : index
    %265 = vector.load %arg9[%c1_222, %c0_223, %c0_224] : memref<2x16x128xf32, #tpu.memory_space<vmem>>, vector<1x16x128xf32>
    %266 = vector.shape_cast %265 : vector<1x16x128xf32> to vector<16x128xf32>
    %267 = vector.shape_cast %264 : vector<16x128xf32> to vector<1x16x128xf32>
    tpu.vector_store %arg9[%c1_222, %c0_223, %c0_224], %267 {strides = array<i32>} : memref<2x16x128xf32, #tpu.memory_space<vmem>>, vector<1x16x128xf32>,
    %268 = arith.truncf %264 : vector<16x128xf32> to vector<16x128xbf16>
    %269 = arith.index_cast %c5_i32 : i32 to index
    %c0_225 = arith.constant 0 : index
    %c0_226 = arith.constant 0 : index
    %270 = vector.load %arg7[%269, %c0_225, %c0_226] : memref<12x16x128xbf16, #tpu.memory_space<vmem>>, vector<1x16x128xbf16>
    %271 = vector.shape_cast %270 : vector<1x16x128xbf16> to vector<16x128xbf16>
    %272 = vector.shape_cast %268 : vector<16x128xbf16> to vector<1x16x128xbf16>
    tpu.vector_store %arg7[%269, %c0_225, %c0_226], %272 {strides = array<i32>} : memref<12x16x128xbf16, #tpu.memory_space<vmem>>, vector<1x16x128xbf16>,
    %c6_i32 = arith.constant 6 : i32
    %273 = arith.index_cast %c6_i32 : i32 to index
    %c0_227 = arith.constant 0 : index
    %c0_228 = arith.constant 0 : index
    %274 = vector.load %arg2[%273, %c0_227, %c0_228] : memref<12x16x128xbf16, #tpu.memory_space<vmem>>, vector<1x16x128xbf16>
    %275 = vector.shape_cast %274 : vector<1x16x128xbf16> to vector<16x128xbf16>
    %c0_229 = arith.constant 0 : index
    %c0_230 = arith.constant 0 : index
    %c0_231 = arith.constant 0 : index
    %276 = vector.load %arg9[%c0_229, %c0_230, %c0_231] : memref<2x16x128xf32, #tpu.memory_space<vmem>>, vector<1x16x128xf32>
    %277 = vector.shape_cast %276 : vector<1x16x128xf32> to vector<16x128xf32>
    %c0_232 = arith.constant 0 : index
    %c0_233 = arith.constant 0 : index
    %c0_234 = arith.constant 0 : index
    %278 = vector.load %arg4[%c0_232, %c0_233, %c0_234] : memref<2x128x128xbf16, #tpu.memory_space<vmem>>, vector<1x128x128xbf16>
    %279 = vector.shape_cast %278 : vector<1x128x128xbf16> to vector<128x128xbf16>
    %cst_235 = arith.constant dense<0.000000e+00> : vector<16x128xf32>
    %280 = tpu.matmul %275, %279, %cst_235 {dimension_numbers = #tpu.dot_dimension_numbers<[1], [0], [0], [1], [0, 0, 1, 1], [], []>} : vector<16x128xbf16>, vector<128x128xbf16>, vector<16x128xf32> -> vector<16x128xf32>
    %281 = arith.truncf %277 : vector<16x128xf32> to vector<16x128xbf16>
    %c0_236 = arith.constant 0 : index
    %c0_237 = arith.constant 0 : index
    %c0_238 = arith.constant 0 : index
    %282 = vector.load %arg5[%c0_236, %c0_237, %c0_238] : memref<2x128x128xbf16, #tpu.memory_space<vmem>>, vector<1x128x128xbf16>
    %283 = vector.shape_cast %282 : vector<1x128x128xbf16> to vector<128x128xbf16>
    %cst_239 = arith.constant dense<0.000000e+00> : vector<16x128xf32>
    %284 = tpu.matmul %281, %283, %cst_239 {dimension_numbers = #tpu.dot_dimension_numbers<[1], [0], [0], [1], [0, 0, 1, 1], [], []>} : vector<16x128xbf16>, vector<128x128xbf16>, vector<16x128xf32> -> vector<16x128xf32>
    %285 = arith.addf %280, %284 : vector<16x128xf32>
    %c0_240 = arith.constant 0 : index
    %c0_241 = arith.constant 0 : index
    %c0_242 = arith.constant 0 : index
    %286 = vector.load %arg6[%c0_240, %c0_241, %c0_242] : memref<2x1x128xf32, #tpu.memory_space<vmem>>, vector<1x1x128xf32>
    %287 = vector.shape_cast %286 : vector<1x1x128xf32> to vector<1x128xf32>
    %288 = vector.broadcast %287 : vector<1x128xf32> to vector<16x128xf32>
    %289 = arith.addf %285, %288 : vector<16x128xf32>
    %290 = math.tanh %289 : vector<16x128xf32>
    %c0_243 = arith.constant 0 : index
    %c0_244 = arith.constant 0 : index
    %c0_245 = arith.constant 0 : index
    %291 = vector.load %arg9[%c0_243, %c0_244, %c0_245] : memref<2x16x128xf32, #tpu.memory_space<vmem>>, vector<1x16x128xf32>
    %292 = vector.shape_cast %291 : vector<1x16x128xf32> to vector<16x128xf32>
    %293 = vector.shape_cast %290 : vector<16x128xf32> to vector<1x16x128xf32>
    tpu.vector_store %arg9[%c0_243, %c0_244, %c0_245], %293 {strides = array<i32>} : memref<2x16x128xf32, #tpu.memory_space<vmem>>, vector<1x16x128xf32>,
    %c1_246 = arith.constant 1 : index
    %c0_247 = arith.constant 0 : index
    %c0_248 = arith.constant 0 : index
    %294 = vector.load %arg9[%c1_246, %c0_247, %c0_248] : memref<2x16x128xf32, #tpu.memory_space<vmem>>, vector<1x16x128xf32>
    %295 = vector.shape_cast %294 : vector<1x16x128xf32> to vector<16x128xf32>
    %296 = arith.truncf %290 : vector<16x128xf32> to vector<16x128xbf16>
    %c1_249 = arith.constant 1 : index
    %c0_250 = arith.constant 0 : index
    %c0_251 = arith.constant 0 : index
    %297 = vector.load %arg4[%c1_249, %c0_250, %c0_251] : memref<2x128x128xbf16, #tpu.memory_space<vmem>>, vector<1x128x128xbf16>
    %298 = vector.shape_cast %297 : vector<1x128x128xbf16> to vector<128x128xbf16>
    %cst_252 = arith.constant dense<0.000000e+00> : vector<16x128xf32>
    %299 = tpu.matmul %296, %298, %cst_252 {dimension_numbers = #tpu.dot_dimension_numbers<[1], [0], [0], [1], [0, 0, 1, 1], [], []>} : vector<16x128xbf16>, vector<128x128xbf16>, vector<16x128xf32> -> vector<16x128xf32>
    %300 = arith.truncf %295 : vector<16x128xf32> to vector<16x128xbf16>
    %c1_253 = arith.constant 1 : index
    %c0_254 = arith.constant 0 : index
    %c0_255 = arith.constant 0 : index
    %301 = vector.load %arg5[%c1_253, %c0_254, %c0_255] : memref<2x128x128xbf16, #tpu.memory_space<vmem>>, vector<1x128x128xbf16>
    %302 = vector.shape_cast %301 : vector<1x128x128xbf16> to vector<128x128xbf16>
    %cst_256 = arith.constant dense<0.000000e+00> : vector<16x128xf32>
    %303 = tpu.matmul %300, %302, %cst_256 {dimension_numbers = #tpu.dot_dimension_numbers<[1], [0], [0], [1], [0, 0, 1, 1], [], []>} : vector<16x128xbf16>, vector<128x128xbf16>, vector<16x128xf32> -> vector<16x128xf32>
    %304 = arith.addf %299, %303 : vector<16x128xf32>
    %c1_257 = arith.constant 1 : index
    %c0_258 = arith.constant 0 : index
    %c0_259 = arith.constant 0 : index
    %305 = vector.load %arg6[%c1_257, %c0_258, %c0_259] : memref<2x1x128xf32, #tpu.memory_space<vmem>>, vector<1x1x128xf32>
    %306 = vector.shape_cast %305 : vector<1x1x128xf32> to vector<1x128xf32>
    %307 = vector.broadcast %306 : vector<1x128xf32> to vector<16x128xf32>
    %308 = arith.addf %304, %307 : vector<16x128xf32>
    %309 = math.tanh %308 : vector<16x128xf32>
    %c1_260 = arith.constant 1 : index
    %c0_261 = arith.constant 0 : index
    %c0_262 = arith.constant 0 : index
    %310 = vector.load %arg9[%c1_260, %c0_261, %c0_262] : memref<2x16x128xf32, #tpu.memory_space<vmem>>, vector<1x16x128xf32>
    %311 = vector.shape_cast %310 : vector<1x16x128xf32> to vector<16x128xf32>
    %312 = vector.shape_cast %309 : vector<16x128xf32> to vector<1x16x128xf32>
    tpu.vector_store %arg9[%c1_260, %c0_261, %c0_262], %312 {strides = array<i32>} : memref<2x16x128xf32, #tpu.memory_space<vmem>>, vector<1x16x128xf32>,
    %313 = arith.truncf %309 : vector<16x128xf32> to vector<16x128xbf16>
    %314 = arith.index_cast %c6_i32 : i32 to index
    %c0_263 = arith.constant 0 : index
    %c0_264 = arith.constant 0 : index
    %315 = vector.load %arg7[%314, %c0_263, %c0_264] : memref<12x16x128xbf16, #tpu.memory_space<vmem>>, vector<1x16x128xbf16>
    %316 = vector.shape_cast %315 : vector<1x16x128xbf16> to vector<16x128xbf16>
    %317 = vector.shape_cast %313 : vector<16x128xbf16> to vector<1x16x128xbf16>
    tpu.vector_store %arg7[%314, %c0_263, %c0_264], %317 {strides = array<i32>} : memref<12x16x128xbf16, #tpu.memory_space<vmem>>, vector<1x16x128xbf16>,
    %c7_i32 = arith.constant 7 : i32
    %318 = arith.index_cast %c7_i32 : i32 to index
    %c0_265 = arith.constant 0 : index
    %c0_266 = arith.constant 0 : index
    %319 = vector.load %arg2[%318, %c0_265, %c0_266] : memref<12x16x128xbf16, #tpu.memory_space<vmem>>, vector<1x16x128xbf16>
    %320 = vector.shape_cast %319 : vector<1x16x128xbf16> to vector<16x128xbf16>
    %c0_267 = arith.constant 0 : index
    %c0_268 = arith.constant 0 : index
    %c0_269 = arith.constant 0 : index
    %321 = vector.load %arg9[%c0_267, %c0_268, %c0_269] : memref<2x16x128xf32, #tpu.memory_space<vmem>>, vector<1x16x128xf32>
    %322 = vector.shape_cast %321 : vector<1x16x128xf32> to vector<16x128xf32>
    %c0_270 = arith.constant 0 : index
    %c0_271 = arith.constant 0 : index
    %c0_272 = arith.constant 0 : index
    %323 = vector.load %arg4[%c0_270, %c0_271, %c0_272] : memref<2x128x128xbf16, #tpu.memory_space<vmem>>, vector<1x128x128xbf16>
    %324 = vector.shape_cast %323 : vector<1x128x128xbf16> to vector<128x128xbf16>
    %cst_273 = arith.constant dense<0.000000e+00> : vector<16x128xf32>
    %325 = tpu.matmul %320, %324, %cst_273 {dimension_numbers = #tpu.dot_dimension_numbers<[1], [0], [0], [1], [0, 0, 1, 1], [], []>} : vector<16x128xbf16>, vector<128x128xbf16>, vector<16x128xf32> -> vector<16x128xf32>
    %326 = arith.truncf %322 : vector<16x128xf32> to vector<16x128xbf16>
    %c0_274 = arith.constant 0 : index
    %c0_275 = arith.constant 0 : index
    %c0_276 = arith.constant 0 : index
    %327 = vector.load %arg5[%c0_274, %c0_275, %c0_276] : memref<2x128x128xbf16, #tpu.memory_space<vmem>>, vector<1x128x128xbf16>
    %328 = vector.shape_cast %327 : vector<1x128x128xbf16> to vector<128x128xbf16>
    %cst_277 = arith.constant dense<0.000000e+00> : vector<16x128xf32>
    %329 = tpu.matmul %326, %328, %cst_277 {dimension_numbers = #tpu.dot_dimension_numbers<[1], [0], [0], [1], [0, 0, 1, 1], [], []>} : vector<16x128xbf16>, vector<128x128xbf16>, vector<16x128xf32> -> vector<16x128xf32>
    %330 = arith.addf %325, %329 : vector<16x128xf32>
    %c0_278 = arith.constant 0 : index
    %c0_279 = arith.constant 0 : index
    %c0_280 = arith.constant 0 : index
    %331 = vector.load %arg6[%c0_278, %c0_279, %c0_280] : memref<2x1x128xf32, #tpu.memory_space<vmem>>, vector<1x1x128xf32>
    %332 = vector.shape_cast %331 : vector<1x1x128xf32> to vector<1x128xf32>
    %333 = vector.broadcast %332 : vector<1x128xf32> to vector<16x128xf32>
    %334 = arith.addf %330, %333 : vector<16x128xf32>
    %335 = math.tanh %334 : vector<16x128xf32>
    %c0_281 = arith.constant 0 : index
    %c0_282 = arith.constant 0 : index
    %c0_283 = arith.constant 0 : index
    %336 = vector.load %arg9[%c0_281, %c0_282, %c0_283] : memref<2x16x128xf32, #tpu.memory_space<vmem>>, vector<1x16x128xf32>
    %337 = vector.shape_cast %336 : vector<1x16x128xf32> to vector<16x128xf32>
    %338 = vector.shape_cast %335 : vector<16x128xf32> to vector<1x16x128xf32>
    tpu.vector_store %arg9[%c0_281, %c0_282, %c0_283], %338 {strides = array<i32>} : memref<2x16x128xf32, #tpu.memory_space<vmem>>, vector<1x16x128xf32>,
    %c1_284 = arith.constant 1 : index
    %c0_285 = arith.constant 0 : index
    %c0_286 = arith.constant 0 : index
    %339 = vector.load %arg9[%c1_284, %c0_285, %c0_286] : memref<2x16x128xf32, #tpu.memory_space<vmem>>, vector<1x16x128xf32>
    %340 = vector.shape_cast %339 : vector<1x16x128xf32> to vector<16x128xf32>
    %341 = arith.truncf %335 : vector<16x128xf32> to vector<16x128xbf16>
    %c1_287 = arith.constant 1 : index
    %c0_288 = arith.constant 0 : index
    %c0_289 = arith.constant 0 : index
    %342 = vector.load %arg4[%c1_287, %c0_288, %c0_289] : memref<2x128x128xbf16, #tpu.memory_space<vmem>>, vector<1x128x128xbf16>
    %343 = vector.shape_cast %342 : vector<1x128x128xbf16> to vector<128x128xbf16>
    %cst_290 = arith.constant dense<0.000000e+00> : vector<16x128xf32>
    %344 = tpu.matmul %341, %343, %cst_290 {dimension_numbers = #tpu.dot_dimension_numbers<[1], [0], [0], [1], [0, 0, 1, 1], [], []>} : vector<16x128xbf16>, vector<128x128xbf16>, vector<16x128xf32> -> vector<16x128xf32>
    %345 = arith.truncf %340 : vector<16x128xf32> to vector<16x128xbf16>
    %c1_291 = arith.constant 1 : index
    %c0_292 = arith.constant 0 : index
    %c0_293 = arith.constant 0 : index
    %346 = vector.load %arg5[%c1_291, %c0_292, %c0_293] : memref<2x128x128xbf16, #tpu.memory_space<vmem>>, vector<1x128x128xbf16>
    %347 = vector.shape_cast %346 : vector<1x128x128xbf16> to vector<128x128xbf16>
    %cst_294 = arith.constant dense<0.000000e+00> : vector<16x128xf32>
    %348 = tpu.matmul %345, %347, %cst_294 {dimension_numbers = #tpu.dot_dimension_numbers<[1], [0], [0], [1], [0, 0, 1, 1], [], []>} : vector<16x128xbf16>, vector<128x128xbf16>, vector<16x128xf32> -> vector<16x128xf32>
    %349 = arith.addf %344, %348 : vector<16x128xf32>
    %c1_295 = arith.constant 1 : index
    %c0_296 = arith.constant 0 : index
    %c0_297 = arith.constant 0 : index
    %350 = vector.load %arg6[%c1_295, %c0_296, %c0_297] : memref<2x1x128xf32, #tpu.memory_space<vmem>>, vector<1x1x128xf32>
    %351 = vector.shape_cast %350 : vector<1x1x128xf32> to vector<1x128xf32>
    %352 = vector.broadcast %351 : vector<1x128xf32> to vector<16x128xf32>
    %353 = arith.addf %349, %352 : vector<16x128xf32>
    %354 = math.tanh %353 : vector<16x128xf32>
    %c1_298 = arith.constant 1 : index
    %c0_299 = arith.constant 0 : index
    %c0_300 = arith.constant 0 : index
    %355 = vector.load %arg9[%c1_298, %c0_299, %c0_300] : memref<2x16x128xf32, #tpu.memory_space<vmem>>, vector<1x16x128xf32>
    %356 = vector.shape_cast %355 : vector<1x16x128xf32> to vector<16x128xf32>
    %357 = vector.shape_cast %354 : vector<16x128xf32> to vector<1x16x128xf32>
    tpu.vector_store %arg9[%c1_298, %c0_299, %c0_300], %357 {strides = array<i32>} : memref<2x16x128xf32, #tpu.memory_space<vmem>>, vector<1x16x128xf32>,
    %358 = arith.truncf %354 : vector<16x128xf32> to vector<16x128xbf16>
    %359 = arith.index_cast %c7_i32 : i32 to index
    %c0_301 = arith.constant 0 : index
    %c0_302 = arith.constant 0 : index
    %360 = vector.load %arg7[%359, %c0_301, %c0_302] : memref<12x16x128xbf16, #tpu.memory_space<vmem>>, vector<1x16x128xbf16>
    %361 = vector.shape_cast %360 : vector<1x16x128xbf16> to vector<16x128xbf16>
    %362 = vector.shape_cast %358 : vector<16x128xbf16> to vector<1x16x128xbf16>
    tpu.vector_store %arg7[%359, %c0_301, %c0_302], %362 {strides = array<i32>} : memref<12x16x128xbf16, #tpu.memory_space<vmem>>, vector<1x16x128xbf16>,
    %c8_i32 = arith.constant 8 : i32
    %363 = arith.index_cast %c8_i32 : i32 to index
    %c0_303 = arith.constant 0 : index
    %c0_304 = arith.constant 0 : index
    %364 = vector.load %arg2[%363, %c0_303, %c0_304] : memref<12x16x128xbf16, #tpu.memory_space<vmem>>, vector<1x16x128xbf16>
    %365 = vector.shape_cast %364 : vector<1x16x128xbf16> to vector<16x128xbf16>
    %c0_305 = arith.constant 0 : index
    %c0_306 = arith.constant 0 : index
    %c0_307 = arith.constant 0 : index
    %366 = vector.load %arg9[%c0_305, %c0_306, %c0_307] : memref<2x16x128xf32, #tpu.memory_space<vmem>>, vector<1x16x128xf32>
    %367 = vector.shape_cast %366 : vector<1x16x128xf32> to vector<16x128xf32>
    %c0_308 = arith.constant 0 : index
    %c0_309 = arith.constant 0 : index
    %c0_310 = arith.constant 0 : index
    %368 = vector.load %arg4[%c0_308, %c0_309, %c0_310] : memref<2x128x128xbf16, #tpu.memory_space<vmem>>, vector<1x128x128xbf16>
    %369 = vector.shape_cast %368 : vector<1x128x128xbf16> to vector<128x128xbf16>
    %cst_311 = arith.constant dense<0.000000e+00> : vector<16x128xf32>
    %370 = tpu.matmul %365, %369, %cst_311 {dimension_numbers = #tpu.dot_dimension_numbers<[1], [0], [0], [1], [0, 0, 1, 1], [], []>} : vector<16x128xbf16>, vector<128x128xbf16>, vector<16x128xf32> -> vector<16x128xf32>
    %371 = arith.truncf %367 : vector<16x128xf32> to vector<16x128xbf16>
    %c0_312 = arith.constant 0 : index
    %c0_313 = arith.constant 0 : index
    %c0_314 = arith.constant 0 : index
    %372 = vector.load %arg5[%c0_312, %c0_313, %c0_314] : memref<2x128x128xbf16, #tpu.memory_space<vmem>>, vector<1x128x128xbf16>
    %373 = vector.shape_cast %372 : vector<1x128x128xbf16> to vector<128x128xbf16>
    %cst_315 = arith.constant dense<0.000000e+00> : vector<16x128xf32>
    %374 = tpu.matmul %371, %373, %cst_315 {dimension_numbers = #tpu.dot_dimension_numbers<[1], [0], [0], [1], [0, 0, 1, 1], [], []>} : vector<16x128xbf16>, vector<128x128xbf16>, vector<16x128xf32> -> vector<16x128xf32>
    %375 = arith.addf %370, %374 : vector<16x128xf32>
    %c0_316 = arith.constant 0 : index
    %c0_317 = arith.constant 0 : index
    %c0_318 = arith.constant 0 : index
    %376 = vector.load %arg6[%c0_316, %c0_317, %c0_318] : memref<2x1x128xf32, #tpu.memory_space<vmem>>, vector<1x1x128xf32>
    %377 = vector.shape_cast %376 : vector<1x1x128xf32> to vector<1x128xf32>
    %378 = vector.broadcast %377 : vector<1x128xf32> to vector<16x128xf32>
    %379 = arith.addf %375, %378 : vector<16x128xf32>
    %380 = math.tanh %379 : vector<16x128xf32>
    %c0_319 = arith.constant 0 : index
    %c0_320 = arith.constant 0 : index
    %c0_321 = arith.constant 0 : index
    %381 = vector.load %arg9[%c0_319, %c0_320, %c0_321] : memref<2x16x128xf32, #tpu.memory_space<vmem>>, vector<1x16x128xf32>
    %382 = vector.shape_cast %381 : vector<1x16x128xf32> to vector<16x128xf32>
    %383 = vector.shape_cast %380 : vector<16x128xf32> to vector<1x16x128xf32>
    tpu.vector_store %arg9[%c0_319, %c0_320, %c0_321], %383 {strides = array<i32>} : memref<2x16x128xf32, #tpu.memory_space<vmem>>, vector<1x16x128xf32>,
    %c1_322 = arith.constant 1 : index
    %c0_323 = arith.constant 0 : index
    %c0_324 = arith.constant 0 : index
    %384 = vector.load %arg9[%c1_322, %c0_323, %c0_324] : memref<2x16x128xf32, #tpu.memory_space<vmem>>, vector<1x16x128xf32>
    %385 = vector.shape_cast %384 : vector<1x16x128xf32> to vector<16x128xf32>
    %386 = arith.truncf %380 : vector<16x128xf32> to vector<16x128xbf16>
    %c1_325 = arith.constant 1 : index
    %c0_326 = arith.constant 0 : index
    %c0_327 = arith.constant 0 : index
    %387 = vector.load %arg4[%c1_325, %c0_326, %c0_327] : memref<2x128x128xbf16, #tpu.memory_space<vmem>>, vector<1x128x128xbf16>
    %388 = vector.shape_cast %387 : vector<1x128x128xbf16> to vector<128x128xbf16>
    %cst_328 = arith.constant dense<0.000000e+00> : vector<16x128xf32>
    %389 = tpu.matmul %386, %388, %cst_328 {dimension_numbers = #tpu.dot_dimension_numbers<[1], [0], [0], [1], [0, 0, 1, 1], [], []>} : vector<16x128xbf16>, vector<128x128xbf16>, vector<16x128xf32> -> vector<16x128xf32>
    %390 = arith.truncf %385 : vector<16x128xf32> to vector<16x128xbf16>
    %c1_329 = arith.constant 1 : index
    %c0_330 = arith.constant 0 : index
    %c0_331 = arith.constant 0 : index
    %391 = vector.load %arg5[%c1_329, %c0_330, %c0_331] : memref<2x128x128xbf16, #tpu.memory_space<vmem>>, vector<1x128x128xbf16>
    %392 = vector.shape_cast %391 : vector<1x128x128xbf16> to vector<128x128xbf16>
    %cst_332 = arith.constant dense<0.000000e+00> : vector<16x128xf32>
    %393 = tpu.matmul %390, %392, %cst_332 {dimension_numbers = #tpu.dot_dimension_numbers<[1], [0], [0], [1], [0, 0, 1, 1], [], []>} : vector<16x128xbf16>, vector<128x128xbf16>, vector<16x128xf32> -> vector<16x128xf32>
    %394 = arith.addf %389, %393 : vector<16x128xf32>
    %c1_333 = arith.constant 1 : index
    %c0_334 = arith.constant 0 : index
    %c0_335 = arith.constant 0 : index
    %395 = vector.load %arg6[%c1_333, %c0_334, %c0_335] : memref<2x1x128xf32, #tpu.memory_space<vmem>>, vector<1x1x128xf32>
    %396 = vector.shape_cast %395 : vector<1x1x128xf32> to vector<1x128xf32>
    %397 = vector.broadcast %396 : vector<1x128xf32> to vector<16x128xf32>
    %398 = arith.addf %394, %397 : vector<16x128xf32>
    %399 = math.tanh %398 : vector<16x128xf32>
    %c1_336 = arith.constant 1 : index
    %c0_337 = arith.constant 0 : index
    %c0_338 = arith.constant 0 : index
    %400 = vector.load %arg9[%c1_336, %c0_337, %c0_338] : memref<2x16x128xf32, #tpu.memory_space<vmem>>, vector<1x16x128xf32>
    %401 = vector.shape_cast %400 : vector<1x16x128xf32> to vector<16x128xf32>
    %402 = vector.shape_cast %399 : vector<16x128xf32> to vector<1x16x128xf32>
    tpu.vector_store %arg9[%c1_336, %c0_337, %c0_338], %402 {strides = array<i32>} : memref<2x16x128xf32, #tpu.memory_space<vmem>>, vector<1x16x128xf32>,
    %403 = arith.truncf %399 : vector<16x128xf32> to vector<16x128xbf16>
    %404 = arith.index_cast %c8_i32 : i32 to index
    %c0_339 = arith.constant 0 : index
    %c0_340 = arith.constant 0 : index
    %405 = vector.load %arg7[%404, %c0_339, %c0_340] : memref<12x16x128xbf16, #tpu.memory_space<vmem>>, vector<1x16x128xbf16>
    %406 = vector.shape_cast %405 : vector<1x16x128xbf16> to vector<16x128xbf16>
    %407 = vector.shape_cast %403 : vector<16x128xbf16> to vector<1x16x128xbf16>
    tpu.vector_store %arg7[%404, %c0_339, %c0_340], %407 {strides = array<i32>} : memref<12x16x128xbf16, #tpu.memory_space<vmem>>, vector<1x16x128xbf16>,
    %c9_i32 = arith.constant 9 : i32
    %408 = arith.index_cast %c9_i32 : i32 to index
    %c0_341 = arith.constant 0 : index
    %c0_342 = arith.constant 0 : index
    %409 = vector.load %arg2[%408, %c0_341, %c0_342] : memref<12x16x128xbf16, #tpu.memory_space<vmem>>, vector<1x16x128xbf16>
    %410 = vector.shape_cast %409 : vector<1x16x128xbf16> to vector<16x128xbf16>
    %c0_343 = arith.constant 0 : index
    %c0_344 = arith.constant 0 : index
    %c0_345 = arith.constant 0 : index
    %411 = vector.load %arg9[%c0_343, %c0_344, %c0_345] : memref<2x16x128xf32, #tpu.memory_space<vmem>>, vector<1x16x128xf32>
    %412 = vector.shape_cast %411 : vector<1x16x128xf32> to vector<16x128xf32>
    %c0_346 = arith.constant 0 : index
    %c0_347 = arith.constant 0 : index
    %c0_348 = arith.constant 0 : index
    %413 = vector.load %arg4[%c0_346, %c0_347, %c0_348] : memref<2x128x128xbf16, #tpu.memory_space<vmem>>, vector<1x128x128xbf16>
    %414 = vector.shape_cast %413 : vector<1x128x128xbf16> to vector<128x128xbf16>
    %cst_349 = arith.constant dense<0.000000e+00> : vector<16x128xf32>
    %415 = tpu.matmul %410, %414, %cst_349 {dimension_numbers = #tpu.dot_dimension_numbers<[1], [0], [0], [1], [0, 0, 1, 1], [], []>} : vector<16x128xbf16>, vector<128x128xbf16>, vector<16x128xf32> -> vector<16x128xf32>
    %416 = arith.truncf %412 : vector<16x128xf32> to vector<16x128xbf16>
    %c0_350 = arith.constant 0 : index
    %c0_351 = arith.constant 0 : index
    %c0_352 = arith.constant 0 : index
    %417 = vector.load %arg5[%c0_350, %c0_351, %c0_352] : memref<2x128x128xbf16, #tpu.memory_space<vmem>>, vector<1x128x128xbf16>
    %418 = vector.shape_cast %417 : vector<1x128x128xbf16> to vector<128x128xbf16>
    %cst_353 = arith.constant dense<0.000000e+00> : vector<16x128xf32>
    %419 = tpu.matmul %416, %418, %cst_353 {dimension_numbers = #tpu.dot_dimension_numbers<[1], [0], [0], [1], [0, 0, 1, 1], [], []>} : vector<16x128xbf16>, vector<128x128xbf16>, vector<16x128xf32> -> vector<16x128xf32>
    %420 = arith.addf %415, %419 : vector<16x128xf32>
    %c0_354 = arith.constant 0 : index
    %c0_355 = arith.constant 0 : index
    %c0_356 = arith.constant 0 : index
    %421 = vector.load %arg6[%c0_354, %c0_355, %c0_356] : memref<2x1x128xf32, #tpu.memory_space<vmem>>, vector<1x1x128xf32>
    %422 = vector.shape_cast %421 : vector<1x1x128xf32> to vector<1x128xf32>
    %423 = vector.broadcast %422 : vector<1x128xf32> to vector<16x128xf32>
    %424 = arith.addf %420, %423 : vector<16x128xf32>
    %425 = math.tanh %424 : vector<16x128xf32>
    %c0_357 = arith.constant 0 : index
    %c0_358 = arith.constant 0 : index
    %c0_359 = arith.constant 0 : index
    %426 = vector.load %arg9[%c0_357, %c0_358, %c0_359] : memref<2x16x128xf32, #tpu.memory_space<vmem>>, vector<1x16x128xf32>
    %427 = vector.shape_cast %426 : vector<1x16x128xf32> to vector<16x128xf32>
    %428 = vector.shape_cast %425 : vector<16x128xf32> to vector<1x16x128xf32>
    tpu.vector_store %arg9[%c0_357, %c0_358, %c0_359], %428 {strides = array<i32>} : memref<2x16x128xf32, #tpu.memory_space<vmem>>, vector<1x16x128xf32>,
    %c1_360 = arith.constant 1 : index
    %c0_361 = arith.constant 0 : index
    %c0_362 = arith.constant 0 : index
    %429 = vector.load %arg9[%c1_360, %c0_361, %c0_362] : memref<2x16x128xf32, #tpu.memory_space<vmem>>, vector<1x16x128xf32>
    %430 = vector.shape_cast %429 : vector<1x16x128xf32> to vector<16x128xf32>
    %431 = arith.truncf %425 : vector<16x128xf32> to vector<16x128xbf16>
    %c1_363 = arith.constant 1 : index
    %c0_364 = arith.constant 0 : index
    %c0_365 = arith.constant 0 : index
    %432 = vector.load %arg4[%c1_363, %c0_364, %c0_365] : memref<2x128x128xbf16, #tpu.memory_space<vmem>>, vector<1x128x128xbf16>
    %433 = vector.shape_cast %432 : vector<1x128x128xbf16> to vector<128x128xbf16>
    %cst_366 = arith.constant dense<0.000000e+00> : vector<16x128xf32>
    %434 = tpu.matmul %431, %433, %cst_366 {dimension_numbers = #tpu.dot_dimension_numbers<[1], [0], [0], [1], [0, 0, 1, 1], [], []>} : vector<16x128xbf16>, vector<128x128xbf16>, vector<16x128xf32> -> vector<16x128xf32>
    %435 = arith.truncf %430 : vector<16x128xf32> to vector<16x128xbf16>
    %c1_367 = arith.constant 1 : index
    %c0_368 = arith.constant 0 : index
    %c0_369 = arith.constant 0 : index
    %436 = vector.load %arg5[%c1_367, %c0_368, %c0_369] : memref<2x128x128xbf16, #tpu.memory_space<vmem>>, vector<1x128x128xbf16>
    %437 = vector.shape_cast %436 : vector<1x128x128xbf16> to vector<128x128xbf16>
    %cst_370 = arith.constant dense<0.000000e+00> : vector<16x128xf32>
    %438 = tpu.matmul %435, %437, %cst_370 {dimension_numbers = #tpu.dot_dimension_numbers<[1], [0], [0], [1], [0, 0, 1, 1], [], []>} : vector<16x128xbf16>, vector<128x128xbf16>, vector<16x128xf32> -> vector<16x128xf32>
    %439 = arith.addf %434, %438 : vector<16x128xf32>
    %c1_371 = arith.constant 1 : index
    %c0_372 = arith.constant 0 : index
    %c0_373 = arith.constant 0 : index
    %440 = vector.load %arg6[%c1_371, %c0_372, %c0_373] : memref<2x1x128xf32, #tpu.memory_space<vmem>>, vector<1x1x128xf32>
    %441 = vector.shape_cast %440 : vector<1x1x128xf32> to vector<1x128xf32>
    %442 = vector.broadcast %441 : vector<1x128xf32> to vector<16x128xf32>
    %443 = arith.addf %439, %442 : vector<16x128xf32>
    %444 = math.tanh %443 : vector<16x128xf32>
    %c1_374 = arith.constant 1 : index
    %c0_375 = arith.constant 0 : index
    %c0_376 = arith.constant 0 : index
    %445 = vector.load %arg9[%c1_374, %c0_375, %c0_376] : memref<2x16x128xf32, #tpu.memory_space<vmem>>, vector<1x16x128xf32>
    %446 = vector.shape_cast %445 : vector<1x16x128xf32> to vector<16x128xf32>
    %447 = vector.shape_cast %444 : vector<16x128xf32> to vector<1x16x128xf32>
    tpu.vector_store %arg9[%c1_374, %c0_375, %c0_376], %447 {strides = array<i32>} : memref<2x16x128xf32, #tpu.memory_space<vmem>>, vector<1x16x128xf32>,
    %448 = arith.truncf %444 : vector<16x128xf32> to vector<16x128xbf16>
    %449 = arith.index_cast %c9_i32 : i32 to index
    %c0_377 = arith.constant 0 : index
    %c0_378 = arith.constant 0 : index
    %450 = vector.load %arg7[%449, %c0_377, %c0_378] : memref<12x16x128xbf16, #tpu.memory_space<vmem>>, vector<1x16x128xbf16>
    %451 = vector.shape_cast %450 : vector<1x16x128xbf16> to vector<16x128xbf16>
    %452 = vector.shape_cast %448 : vector<16x128xbf16> to vector<1x16x128xbf16>
    tpu.vector_store %arg7[%449, %c0_377, %c0_378], %452 {strides = array<i32>} : memref<12x16x128xbf16, #tpu.memory_space<vmem>>, vector<1x16x128xbf16>,
    %c10_i32 = arith.constant 10 : i32
    %453 = arith.index_cast %c10_i32 : i32 to index
    %c0_379 = arith.constant 0 : index
    %c0_380 = arith.constant 0 : index
    %454 = vector.load %arg2[%453, %c0_379, %c0_380] : memref<12x16x128xbf16, #tpu.memory_space<vmem>>, vector<1x16x128xbf16>
    %455 = vector.shape_cast %454 : vector<1x16x128xbf16> to vector<16x128xbf16>
    %c0_381 = arith.constant 0 : index
    %c0_382 = arith.constant 0 : index
    %c0_383 = arith.constant 0 : index
    %456 = vector.load %arg9[%c0_381, %c0_382, %c0_383] : memref<2x16x128xf32, #tpu.memory_space<vmem>>, vector<1x16x128xf32>
    %457 = vector.shape_cast %456 : vector<1x16x128xf32> to vector<16x128xf32>
    %c0_384 = arith.constant 0 : index
    %c0_385 = arith.constant 0 : index
    %c0_386 = arith.constant 0 : index
    %458 = vector.load %arg4[%c0_384, %c0_385, %c0_386] : memref<2x128x128xbf16, #tpu.memory_space<vmem>>, vector<1x128x128xbf16>
    %459 = vector.shape_cast %458 : vector<1x128x128xbf16> to vector<128x128xbf16>
    %cst_387 = arith.constant dense<0.000000e+00> : vector<16x128xf32>
    %460 = tpu.matmul %455, %459, %cst_387 {dimension_numbers = #tpu.dot_dimension_numbers<[1], [0], [0], [1], [0, 0, 1, 1], [], []>} : vector<16x128xbf16>, vector<128x128xbf16>, vector<16x128xf32> -> vector<16x128xf32>
    %461 = arith.truncf %457 : vector<16x128xf32> to vector<16x128xbf16>
    %c0_388 = arith.constant 0 : index
    %c0_389 = arith.constant 0 : index
    %c0_390 = arith.constant 0 : index
    %462 = vector.load %arg5[%c0_388, %c0_389, %c0_390] : memref<2x128x128xbf16, #tpu.memory_space<vmem>>, vector<1x128x128xbf16>
    %463 = vector.shape_cast %462 : vector<1x128x128xbf16> to vector<128x128xbf16>
    %cst_391 = arith.constant dense<0.000000e+00> : vector<16x128xf32>
    %464 = tpu.matmul %461, %463, %cst_391 {dimension_numbers = #tpu.dot_dimension_numbers<[1], [0], [0], [1], [0, 0, 1, 1], [], []>} : vector<16x128xbf16>, vector<128x128xbf16>, vector<16x128xf32> -> vector<16x128xf32>
    %465 = arith.addf %460, %464 : vector<16x128xf32>
    %c0_392 = arith.constant 0 : index
    %c0_393 = arith.constant 0 : index
    %c0_394 = arith.constant 0 : index
    %466 = vector.load %arg6[%c0_392, %c0_393, %c0_394] : memref<2x1x128xf32, #tpu.memory_space<vmem>>, vector<1x1x128xf32>
    %467 = vector.shape_cast %466 : vector<1x1x128xf32> to vector<1x128xf32>
    %468 = vector.broadcast %467 : vector<1x128xf32> to vector<16x128xf32>
    %469 = arith.addf %465, %468 : vector<16x128xf32>
    %470 = math.tanh %469 : vector<16x128xf32>
    %c0_395 = arith.constant 0 : index
    %c0_396 = arith.constant 0 : index
    %c0_397 = arith.constant 0 : index
    %471 = vector.load %arg9[%c0_395, %c0_396, %c0_397] : memref<2x16x128xf32, #tpu.memory_space<vmem>>, vector<1x16x128xf32>
    %472 = vector.shape_cast %471 : vector<1x16x128xf32> to vector<16x128xf32>
    %473 = vector.shape_cast %470 : vector<16x128xf32> to vector<1x16x128xf32>
    tpu.vector_store %arg9[%c0_395, %c0_396, %c0_397], %473 {strides = array<i32>} : memref<2x16x128xf32, #tpu.memory_space<vmem>>, vector<1x16x128xf32>,
    %c1_398 = arith.constant 1 : index
    %c0_399 = arith.constant 0 : index
    %c0_400 = arith.constant 0 : index
    %474 = vector.load %arg9[%c1_398, %c0_399, %c0_400] : memref<2x16x128xf32, #tpu.memory_space<vmem>>, vector<1x16x128xf32>
    %475 = vector.shape_cast %474 : vector<1x16x128xf32> to vector<16x128xf32>
    %476 = arith.truncf %470 : vector<16x128xf32> to vector<16x128xbf16>
    %c1_401 = arith.constant 1 : index
    %c0_402 = arith.constant 0 : index
    %c0_403 = arith.constant 0 : index
    %477 = vector.load %arg4[%c1_401, %c0_402, %c0_403] : memref<2x128x128xbf16, #tpu.memory_space<vmem>>, vector<1x128x128xbf16>
    %478 = vector.shape_cast %477 : vector<1x128x128xbf16> to vector<128x128xbf16>
    %cst_404 = arith.constant dense<0.000000e+00> : vector<16x128xf32>
    %479 = tpu.matmul %476, %478, %cst_404 {dimension_numbers = #tpu.dot_dimension_numbers<[1], [0], [0], [1], [0, 0, 1, 1], [], []>} : vector<16x128xbf16>, vector<128x128xbf16>, vector<16x128xf32> -> vector<16x128xf32>
    %480 = arith.truncf %475 : vector<16x128xf32> to vector<16x128xbf16>
    %c1_405 = arith.constant 1 : index
    %c0_406 = arith.constant 0 : index
    %c0_407 = arith.constant 0 : index
    %481 = vector.load %arg5[%c1_405, %c0_406, %c0_407] : memref<2x128x128xbf16, #tpu.memory_space<vmem>>, vector<1x128x128xbf16>
    %482 = vector.shape_cast %481 : vector<1x128x128xbf16> to vector<128x128xbf16>
    %cst_408 = arith.constant dense<0.000000e+00> : vector<16x128xf32>
    %483 = tpu.matmul %480, %482, %cst_408 {dimension_numbers = #tpu.dot_dimension_numbers<[1], [0], [0], [1], [0, 0, 1, 1], [], []>} : vector<16x128xbf16>, vector<128x128xbf16>, vector<16x128xf32> -> vector<16x128xf32>
    %484 = arith.addf %479, %483 : vector<16x128xf32>
    %c1_409 = arith.constant 1 : index
    %c0_410 = arith.constant 0 : index
    %c0_411 = arith.constant 0 : index
    %485 = vector.load %arg6[%c1_409, %c0_410, %c0_411] : memref<2x1x128xf32, #tpu.memory_space<vmem>>, vector<1x1x128xf32>
    %486 = vector.shape_cast %485 : vector<1x1x128xf32> to vector<1x128xf32>
    %487 = vector.broadcast %486 : vector<1x128xf32> to vector<16x128xf32>
    %488 = arith.addf %484, %487 : vector<16x128xf32>
    %489 = math.tanh %488 : vector<16x128xf32>
    %c1_412 = arith.constant 1 : index
    %c0_413 = arith.constant 0 : index
    %c0_414 = arith.constant 0 : index
    %490 = vector.load %arg9[%c1_412, %c0_413, %c0_414] : memref<2x16x128xf32, #tpu.memory_space<vmem>>, vector<1x16x128xf32>
    %491 = vector.shape_cast %490 : vector<1x16x128xf32> to vector<16x128xf32>
    %492 = vector.shape_cast %489 : vector<16x128xf32> to vector<1x16x128xf32>
    tpu.vector_store %arg9[%c1_412, %c0_413, %c0_414], %492 {strides = array<i32>} : memref<2x16x128xf32, #tpu.memory_space<vmem>>, vector<1x16x128xf32>,
    %493 = arith.truncf %489 : vector<16x128xf32> to vector<16x128xbf16>
    %494 = arith.index_cast %c10_i32 : i32 to index
    %c0_415 = arith.constant 0 : index
    %c0_416 = arith.constant 0 : index
    %495 = vector.load %arg7[%494, %c0_415, %c0_416] : memref<12x16x128xbf16, #tpu.memory_space<vmem>>, vector<1x16x128xbf16>
    %496 = vector.shape_cast %495 : vector<1x16x128xbf16> to vector<16x128xbf16>
    %497 = vector.shape_cast %493 : vector<16x128xbf16> to vector<1x16x128xbf16>
    tpu.vector_store %arg7[%494, %c0_415, %c0_416], %497 {strides = array<i32>} : memref<12x16x128xbf16, #tpu.memory_space<vmem>>, vector<1x16x128xbf16>,
    %c11_i32 = arith.constant 11 : i32
    %498 = arith.index_cast %c11_i32 : i32 to index
    %c0_417 = arith.constant 0 : index
    %c0_418 = arith.constant 0 : index
    %499 = vector.load %arg2[%498, %c0_417, %c0_418] : memref<12x16x128xbf16, #tpu.memory_space<vmem>>, vector<1x16x128xbf16>
    %500 = vector.shape_cast %499 : vector<1x16x128xbf16> to vector<16x128xbf16>
    %c0_419 = arith.constant 0 : index
    %c0_420 = arith.constant 0 : index
    %c0_421 = arith.constant 0 : index
    %501 = vector.load %arg9[%c0_419, %c0_420, %c0_421] : memref<2x16x128xf32, #tpu.memory_space<vmem>>, vector<1x16x128xf32>
    %502 = vector.shape_cast %501 : vector<1x16x128xf32> to vector<16x128xf32>
    %c0_422 = arith.constant 0 : index
    %c0_423 = arith.constant 0 : index
    %c0_424 = arith.constant 0 : index
    %503 = vector.load %arg4[%c0_422, %c0_423, %c0_424] : memref<2x128x128xbf16, #tpu.memory_space<vmem>>, vector<1x128x128xbf16>
    %504 = vector.shape_cast %503 : vector<1x128x128xbf16> to vector<128x128xbf16>
    %cst_425 = arith.constant dense<0.000000e+00> : vector<16x128xf32>
    %505 = tpu.matmul %500, %504, %cst_425 {dimension_numbers = #tpu.dot_dimension_numbers<[1], [0], [0], [1], [0, 0, 1, 1], [], []>} : vector<16x128xbf16>, vector<128x128xbf16>, vector<16x128xf32> -> vector<16x128xf32>
    %506 = arith.truncf %502 : vector<16x128xf32> to vector<16x128xbf16>
    %c0_426 = arith.constant 0 : index
    %c0_427 = arith.constant 0 : index
    %c0_428 = arith.constant 0 : index
    %507 = vector.load %arg5[%c0_426, %c0_427, %c0_428] : memref<2x128x128xbf16, #tpu.memory_space<vmem>>, vector<1x128x128xbf16>
    %508 = vector.shape_cast %507 : vector<1x128x128xbf16> to vector<128x128xbf16>
    %cst_429 = arith.constant dense<0.000000e+00> : vector<16x128xf32>
    %509 = tpu.matmul %506, %508, %cst_429 {dimension_numbers = #tpu.dot_dimension_numbers<[1], [0], [0], [1], [0, 0, 1, 1], [], []>} : vector<16x128xbf16>, vector<128x128xbf16>, vector<16x128xf32> -> vector<16x128xf32>
    %510 = arith.addf %505, %509 : vector<16x128xf32>
    %c0_430 = arith.constant 0 : index
    %c0_431 = arith.constant 0 : index
    %c0_432 = arith.constant 0 : index
    %511 = vector.load %arg6[%c0_430, %c0_431, %c0_432] : memref<2x1x128xf32, #tpu.memory_space<vmem>>, vector<1x1x128xf32>
    %512 = vector.shape_cast %511 : vector<1x1x128xf32> to vector<1x128xf32>
    %513 = vector.broadcast %512 : vector<1x128xf32> to vector<16x128xf32>
    %514 = arith.addf %510, %513 : vector<16x128xf32>
    %515 = math.tanh %514 : vector<16x128xf32>
    %c0_433 = arith.constant 0 : index
    %c0_434 = arith.constant 0 : index
    %c0_435 = arith.constant 0 : index
    %516 = vector.load %arg9[%c0_433, %c0_434, %c0_435] : memref<2x16x128xf32, #tpu.memory_space<vmem>>, vector<1x16x128xf32>
    %517 = vector.shape_cast %516 : vector<1x16x128xf32> to vector<16x128xf32>
    %518 = vector.shape_cast %515 : vector<16x128xf32> to vector<1x16x128xf32>
    tpu.vector_store %arg9[%c0_433, %c0_434, %c0_435], %518 {strides = array<i32>} : memref<2x16x128xf32, #tpu.memory_space<vmem>>, vector<1x16x128xf32>,
    %c1_436 = arith.constant 1 : index
    %c0_437 = arith.constant 0 : index
    %c0_438 = arith.constant 0 : index
    %519 = vector.load %arg9[%c1_436, %c0_437, %c0_438] : memref<2x16x128xf32, #tpu.memory_space<vmem>>, vector<1x16x128xf32>
    %520 = vector.shape_cast %519 : vector<1x16x128xf32> to vector<16x128xf32>
    %521 = arith.truncf %515 : vector<16x128xf32> to vector<16x128xbf16>
    %c1_439 = arith.constant 1 : index
    %c0_440 = arith.constant 0 : index
    %c0_441 = arith.constant 0 : index
    %522 = vector.load %arg4[%c1_439, %c0_440, %c0_441] : memref<2x128x128xbf16, #tpu.memory_space<vmem>>, vector<1x128x128xbf16>
    %523 = vector.shape_cast %522 : vector<1x128x128xbf16> to vector<128x128xbf16>
    %cst_442 = arith.constant dense<0.000000e+00> : vector<16x128xf32>
    %524 = tpu.matmul %521, %523, %cst_442 {dimension_numbers = #tpu.dot_dimension_numbers<[1], [0], [0], [1], [0, 0, 1, 1], [], []>} : vector<16x128xbf16>, vector<128x128xbf16>, vector<16x128xf32> -> vector<16x128xf32>
    %525 = arith.truncf %520 : vector<16x128xf32> to vector<16x128xbf16>
    %c1_443 = arith.constant 1 : index
    %c0_444 = arith.constant 0 : index
    %c0_445 = arith.constant 0 : index
    %526 = vector.load %arg5[%c1_443, %c0_444, %c0_445] : memref<2x128x128xbf16, #tpu.memory_space<vmem>>, vector<1x128x128xbf16>
    %527 = vector.shape_cast %526 : vector<1x128x128xbf16> to vector<128x128xbf16>
    %cst_446 = arith.constant dense<0.000000e+00> : vector<16x128xf32>
    %528 = tpu.matmul %525, %527, %cst_446 {dimension_numbers = #tpu.dot_dimension_numbers<[1], [0], [0], [1], [0, 0, 1, 1], [], []>} : vector<16x128xbf16>, vector<128x128xbf16>, vector<16x128xf32> -> vector<16x128xf32>
    %529 = arith.addf %524, %528 : vector<16x128xf32>
    %c1_447 = arith.constant 1 : index
    %c0_448 = arith.constant 0 : index
    %c0_449 = arith.constant 0 : index
    %530 = vector.load %arg6[%c1_447, %c0_448, %c0_449] : memref<2x1x128xf32, #tpu.memory_space<vmem>>, vector<1x1x128xf32>
    %531 = vector.shape_cast %530 : vector<1x1x128xf32> to vector<1x128xf32>
    %532 = vector.broadcast %531 : vector<1x128xf32> to vector<16x128xf32>
    %533 = arith.addf %529, %532 : vector<16x128xf32>
    %534 = math.tanh %533 : vector<16x128xf32>
    %c1_450 = arith.constant 1 : index
    %c0_451 = arith.constant 0 : index
    %c0_452 = arith.constant 0 : index
    %535 = vector.load %arg9[%c1_450, %c0_451, %c0_452] : memref<2x16x128xf32, #tpu.memory_space<vmem>>, vector<1x16x128xf32>
    %536 = vector.shape_cast %535 : vector<1x16x128xf32> to vector<16x128xf32>
    %537 = vector.shape_cast %534 : vector<16x128xf32> to vector<1x16x128xf32>
    tpu.vector_store %arg9[%c1_450, %c0_451, %c0_452], %537 {strides = array<i32>} : memref<2x16x128xf32, #tpu.memory_space<vmem>>, vector<1x16x128xf32>,
    %538 = arith.truncf %534 : vector<16x128xf32> to vector<16x128xbf16>
    %539 = arith.index_cast %c11_i32 : i32 to index
    %c0_453 = arith.constant 0 : index
    %c0_454 = arith.constant 0 : index
    %540 = vector.load %arg7[%539, %c0_453, %c0_454] : memref<12x16x128xbf16, #tpu.memory_space<vmem>>, vector<1x16x128xbf16>
    %541 = vector.shape_cast %540 : vector<1x16x128xbf16> to vector<16x128xbf16>
    %542 = vector.shape_cast %538 : vector<16x128xbf16> to vector<1x16x128xbf16>
    tpu.vector_store %arg7[%539, %c0_453, %c0_454], %542 {strides = array<i32>} : memref<12x16x128xbf16, #tpu.memory_space<vmem>>, vector<1x16x128xbf16>,
    %c12_i32 = arith.constant 12 : i32
    %c1_i32_455 = arith.constant 1 : i32
    %543 = arith.cmpi eq, %arg1, %c1_i32_455 : i32
    %544 = arith.extui %543 : i1 to i32
    %c0_i32_456 = arith.constant 0 : i32
    %545 = arith.cmpi ne, %544, %c0_i32_456 : i32
    scf.if %545 {
      %c0_457 = arith.constant 0 : index
      %c0_458 = arith.constant 0 : index
      %c0_459 = arith.constant 0 : index
      %546 = vector.load %arg9[%c0_457, %c0_458, %c0_459] : memref<2x16x128xf32, #tpu.memory_space<vmem>>, vector<2x16x128xf32>
      %c0_460 = arith.constant 0 : index
      %c0_461 = arith.constant 0 : index
      %c0_462 = arith.constant 0 : index
      %547 = vector.load %arg8[%c0_460, %c0_461, %c0_462] : memref<2x16x128xf32, #tpu.memory_space<vmem>>, vector<2x16x128xf32>
      tpu.vector_store %arg8[%c0_460, %c0_461, %c0_462], %546 {strides = array<i32>} : memref<2x16x128xf32, #tpu.memory_space<vmem>>, vector<2x16x128xf32>,
    } else {
    }
    return
  }
  func.func @transform_0(%arg0: i32, %arg1: i32) -> (i32, i32, i32) {
    %c0_i32 = arith.constant 0 : i32
    %c0_i32_0 = arith.constant 0 : i32
    return %arg1, %arg0, %c0_i32 : i32, i32, i32
  }
  func.func @transform_1(%arg0: i32, %arg1: i32) -> (i32, i32, i32) {
    %c0_i32 = arith.constant 0 : i32
    %c0_i32_0 = arith.constant 0 : i32
    %c0_i32_1 = arith.constant 0 : i32
    return %c0_i32, %arg0, %c0_i32_0 : i32, i32, i32
  }
  func.func @transform_2(%arg0: i32, %arg1: i32) -> (i32, i32, i32) {
    %c0_i32 = arith.constant 0 : i32
    %c0_i32_0 = arith.constant 0 : i32
    %c0_i32_1 = arith.constant 0 : i32
    %c0_i32_2 = arith.constant 0 : i32
    return %c0_i32, %c0_i32_0, %c0_i32_1 : i32, i32, i32
  }
  func.func @transform_3(%arg0: i32, %arg1: i32) -> (i32, i32, i32) {
    %c0_i32 = arith.constant 0 : i32
    %c0_i32_0 = arith.constant 0 : i32
    %c0_i32_1 = arith.constant 0 : i32
    %c0_i32_2 = arith.constant 0 : i32
    return %c0_i32, %c0_i32_0, %c0_i32_1 : i32, i32, i32
  }
  func.func @transform_4(%arg0: i32, %arg1: i32) -> (i32, i32, i32) {
    %c0_i32 = arith.constant 0 : i32
    %c0_i32_0 = arith.constant 0 : i32
    %c0_i32_1 = arith.constant 0 : i32
    %c0_i32_2 = arith.constant 0 : i32
    return %c0_i32, %c0_i32_0, %c0_i32_1 : i32, i32, i32
  }
  func.func @transform_5(%arg0: i32, %arg1: i32) -> (i32, i32, i32) {
    %c0_i32 = arith.constant 0 : i32
    %c0_i32_0 = arith.constant 0 : i32
    return %arg1, %arg0, %c0_i32 : i32, i32, i32
  }
  func.func @transform_6(%arg0: i32, %arg1: i32) -> (i32, i32, i32) {
    %c0_i32 = arith.constant 0 : i32
    %c0_i32_0 = arith.constant 0 : i32
    %c0_i32_1 = arith.constant 0 : i32
    return %c0_i32, %arg0, %c0_i32_0 : i32, i32, i32
  }
}

</mosaic_0001>

<llo_original>
// kernel: rnn_model_forward.5
$region0: #{rnn_model_forward.5}
  #allocation0 [shape = 'u32[]', space=smem, size = 0x4, offset = 0x4, fixed_abs, tag = 'smem constant byte address 0x4 - core index']
  #allocation1 [shape = 'u32[144,128]{1,0:T(1,128)}', space=vmem, size = 0x12000, scoped, tag = 'internal scratch']
  %s0 = inlined_call_operand.vmem [shape: f32[384,128], index: 0, kind: input, shape index: {}, may-alias: {0,2}]
  %s1 = inlined_call_operand.vmem [shape: f32[384,1], index: 1, kind: input, shape index: {}]
  %s2 = inlined_call_operand.vmem [shape: f32[384,128], index: 2, kind: output, shape index: {}, may-alias: {0,2}]
  %s3 = sld [smem:[#allocation0]]
  $region18: #{rnn_model_forward.5} parent=0
    _
  %s5 = ssub.s32 1, %s3
  %s6 = scalar_select 0, %s5, %s3
  // Predicated region
  $region2: #{rnn_model_forward.5} parent=0 // pred_check
    _
  $region3: #{rnn_model_forward.5} parent=0 // pred_check_branch
    %8 = sbr.rel (0) target = $region5
  $region4: #{rnn_model_forward.5} parent=0 // pred_region
    _
  $region5: #{rnn_model_forward.5} parent=0 // pred_fallthru
    _
  // Predicated region
  $region6: #{rnn_model_forward.5} parent=0 // pred_check
    _
  $region7: #{rnn_model_forward.5} parent=0 // pred_check_branch
    %10 = sbr.rel (0) target = $region9
  $region8: #{rnn_model_forward.5} parent=0 // pred_region
    _
  $region9: #{rnn_model_forward.5} parent=0 // pred_fallthru
    _
  %v11 = vld [vmem:[%s0] sm:$0xff]
  %v12 = vld [vmem:[%s0 + $0x8] sm:$0xff]
  %v13 = vld [vmem:[%s0 + $0x10] sm:$0xff]
  %v14 = vld [vmem:[%s0 + $0x18] sm:$0xff]
  %v15 = vld [vmem:[%s0 + $0x20] sm:$0xff]
  %v16 = vld [vmem:[%s0 + $0x28] sm:$0xff]
  %v17 = vld [vmem:[%s0 + $0x30] sm:$0xff]
  %v18 = vld [vmem:[%s0 + $0x38] sm:$0xff]
  %v19 = vld [vmem:[%s0 + $0x40] sm:$0xff]
  %v20 = vld [vmem:[%s0 + $0x48] sm:$0xff]
  %v21 = vld [vmem:[%s0 + $0x50] sm:$0xff]
  %v22 = vld [vmem:[%s0 + $0x58] sm:$0xff]
  %v23 = vld [vmem:[%s0 + $0x60] sm:$0xff]
  %v24 = vld [vmem:[%s0 + $0x68] sm:$0xff]
  %v25 = vld [vmem:[%s0 + $0x70] sm:$0xff]
  %v26 = vld [vmem:[%s0 + $0x78] sm:$0xff]
  %v27 = vld [vmem:[%s0 + $0x80] sm:$0xff]
  %v28 = vld [vmem:[%s0 + $0x88] sm:$0xff]
  %v29 = vld [vmem:[%s0 + $0x90] sm:$0xff]
  %v30 = vld [vmem:[%s0 + $0x98] sm:$0xff]
  %v31 = vld [vmem:[%s0 + $0xa0] sm:$0xff]
  %v32 = vld [vmem:[%s0 + $0xa8] sm:$0xff]
  %v33 = vld [vmem:[%s0 + $0xb0] sm:$0xff]
  %v34 = vld [vmem:[%s0 + $0xb8] sm:$0xff]
  %v35 = vld [vmem:[%s0 + $0xc0] sm:$0xff]
  %v36 = vld [vmem:[%s0 + $0xc8] sm:$0xff]
  %v37 = vld [vmem:[%s0 + $0xd0] sm:$0xff]
  %v38 = vld [vmem:[%s0 + $0xd8] sm:$0xff]
  %v39 = vld [vmem:[%s0 + $0xe0] sm:$0xff]
  %v40 = vld [vmem:[%s0 + $0xe8] sm:$0xff]
  %v41 = vld [vmem:[%s0 + $0xf0] sm:$0xff]
  %v42 = vld [vmem:[%s0 + $0xf8] sm:$0xff]
  %v43 = vld [vmem:[%s0 + $0x100] sm:$0xff]
  %v44 = vld [vmem:[%s0 + $0x108] sm:$0xff]
  %v45 = vld [vmem:[%s0 + $0x110] sm:$0xff]
  %v46 = vld [vmem:[%s0 + $0x118] sm:$0xff]
  %v47 = vld [vmem:[%s0 + $0x120] sm:$0xff]
  %v48 = vld [vmem:[%s0 + $0x128] sm:$0xff]
  %v49 = vld [vmem:[%s0 + $0x130] sm:$0xff]
  %v50 = vld [vmem:[%s0 + $0x138] sm:$0xff]
  %v51 = vld [vmem:[%s0 + $0x140] sm:$0xff]
  %v52 = vld [vmem:[%s0 + $0x148] sm:$0xff]
  %v53 = vld [vmem:[%s0 + $0x150] sm:$0xff]
  %v54 = vld [vmem:[%s0 + $0x158] sm:$0xff]
  %v55 = vld [vmem:[%s0 + $0x160] sm:$0xff]
  %v56 = vld [vmem:[%s0 + $0x168] sm:$0xff]
  %v57 = vld [vmem:[%s0 + $0x170] sm:$0xff]
  %v58 = vld [vmem:[%s0 + $0x178] sm:$0xff]
  %v59 = vld [vmem:[%s1] sm:$0xff]
  %v60 = vld [vmem:[%s1 + $0x8] sm:$0xff]
  %v61 = vld [vmem:[%s1 + $0x10] sm:$0xff]
  %v62 = vld [vmem:[%s1 + $0x18] sm:$0xff]
  %v63 = vld [vmem:[%s1 + $0x20] sm:$0xff]
  %v64 = vld [vmem:[%s1 + $0x28] sm:$0xff]
  %v65 = vld [vmem:[%s1 + $0x30] sm:$0xff]
  %v66 = vld [vmem:[%s1 + $0x38] sm:$0xff]
  %v67 = vld [vmem:[%s1 + $0x40] sm:$0xff]
  %v68 = vld [vmem:[%s1 + $0x48] sm:$0xff]
  %v69 = vld [vmem:[%s1 + $0x50] sm:$0xff]
  %v70 = vld [vmem:[%s1 + $0x58] sm:$0xff]
  %v71 = vld [vmem:[%s1 + $0x60] sm:$0xff]
  %v72 = vld [vmem:[%s1 + $0x68] sm:$0xff]
  %v73 = vld [vmem:[%s1 + $0x70] sm:$0xff]
  %v74 = vld [vmem:[%s1 + $0x78] sm:$0xff]
  %v75 = vld [vmem:[%s1 + $0x80] sm:$0xff]
  %v76 = vld [vmem:[%s1 + $0x88] sm:$0xff]
  %v77 = vld [vmem:[%s1 + $0x90] sm:$0xff]
  %v78 = vld [vmem:[%s1 + $0x98] sm:$0xff]
  %v79 = vld [vmem:[%s1 + $0xa0] sm:$0xff]
  %v80 = vld [vmem:[%s1 + $0xa8] sm:$0xff]
  %v81 = vld [vmem:[%s1 + $0xb0] sm:$0xff]
  %v82 = vld [vmem:[%s1 + $0xb8] sm:$0xff]
  %v83 = vld [vmem:[%s1 + $0xc0] sm:$0xff]
  %v84 = vld [vmem:[%s1 + $0xc8] sm:$0xff]
  %v85 = vld [vmem:[%s1 + $0xd0] sm:$0xff]
  %v86 = vld [vmem:[%s1 + $0xd8] sm:$0xff]
  %v87 = vld [vmem:[%s1 + $0xe0] sm:$0xff]
  %v88 = vld [vmem:[%s1 + $0xe8] sm:$0xff]
  %v89 = vld [vmem:[%s1 + $0xf0] sm:$0xff]
  %v90 = vld [vmem:[%s1 + $0xf8] sm:$0xff]
  %v91 = vld [vmem:[%s1 + $0x100] sm:$0xff]
  %v92 = vld [vmem:[%s1 + $0x108] sm:$0xff]
  %v93 = vld [vmem:[%s1 + $0x110] sm:$0xff]
  %v94 = vld [vmem:[%s1 + $0x118] sm:$0xff]
  %v95 = vld [vmem:[%s1 + $0x120] sm:$0xff]
  %v96 = vld [vmem:[%s1 + $0x128] sm:$0xff]
  %v97 = vld [vmem:[%s1 + $0x130] sm:$0xff]
  %v98 = vld [vmem:[%s1 + $0x138] sm:$0xff]
  %v99 = vld [vmem:[%s1 + $0x140] sm:$0xff]
  %v100 = vld [vmem:[%s1 + $0x148] sm:$0xff]
  %v101 = vld [vmem:[%s1 + $0x150] sm:$0xff]
  %v102 = vld [vmem:[%s1 + $0x158] sm:$0xff]
  %v103 = vld [vmem:[%s1 + $0x160] sm:$0xff]
  %v104 = vld [vmem:[%s1 + $0x168] sm:$0xff]
  %v105 = vld [vmem:[%s1 + $0x170] sm:$0xff]
  %v106 = vld [vmem:[%s1 + $0x178] sm:$0xff]
  %108 = vset.pattern.permute.xlu0 0
  %109 = vperm.xlu0 %108, %v59
  %v110 = vpop.permute.xlu0 %109
  %113 = vset.pattern.permute.xlu0 0
  %114 = vperm.xlu0 %113, %v60
  %v115 = vpop.permute.xlu0 %114
  %118 = vset.pattern.permute.xlu0 0
  %119 = vperm.xlu0 %118, %v61
  %v120 = vpop.permute.xlu0 %119
  %123 = vset.pattern.permute.xlu0 0
  %124 = vperm.xlu0 %123, %v62
  %v125 = vpop.permute.xlu0 %124
  %128 = vset.pattern.permute.xlu0 0
  %129 = vperm.xlu0 %128, %v63
  %v130 = vpop.permute.xlu0 %129
  %133 = vset.pattern.permute.xlu0 0
  %134 = vperm.xlu0 %133, %v64
  %v135 = vpop.permute.xlu0 %134
  %138 = vset.pattern.permute.xlu0 0
  %139 = vperm.xlu0 %138, %v65
  %v140 = vpop.permute.xlu0 %139
  %143 = vset.pattern.permute.xlu0 0
  %144 = vperm.xlu0 %143, %v66
  %v145 = vpop.permute.xlu0 %144
  %148 = vset.pattern.permute.xlu0 0
  %149 = vperm.xlu0 %148, %v67
  %v150 = vpop.permute.xlu0 %149
  %153 = vset.pattern.permute.xlu0 0
  %154 = vperm.xlu0 %153, %v68
  %v155 = vpop.permute.xlu0 %154
  %158 = vset.pattern.permute.xlu0 0
  %159 = vperm.xlu0 %158, %v69
  %v160 = vpop.permute.xlu0 %159
  %163 = vset.pattern.permute.xlu0 0
  %164 = vperm.xlu0 %163, %v70
  %v165 = vpop.permute.xlu0 %164
  %168 = vset.pattern.permute.xlu0 0
  %169 = vperm.xlu0 %168, %v71
  %v170 = vpop.permute.xlu0 %169
  %173 = vset.pattern.permute.xlu0 0
  %174 = vperm.xlu0 %173, %v72
  %v175 = vpop.permute.xlu0 %174
  %178 = vset.pattern.permute.xlu0 0
  %179 = vperm.xlu0 %178, %v73
  %v180 = vpop.permute.xlu0 %179
  %183 = vset.pattern.permute.xlu0 0
  %184 = vperm.xlu0 %183, %v74
  %v185 = vpop.permute.xlu0 %184
  %188 = vset.pattern.permute.xlu0 0
  %189 = vperm.xlu0 %188, %v75
  %v190 = vpop.permute.xlu0 %189
  %193 = vset.pattern.permute.xlu0 0
  %194 = vperm.xlu0 %193, %v76
  %v195 = vpop.permute.xlu0 %194
  %198 = vset.pattern.permute.xlu0 0
  %199 = vperm.xlu0 %198, %v77
  %v200 = vpop.permute.xlu0 %199
  %203 = vset.pattern.permute.xlu0 0
  %204 = vperm.xlu0 %203, %v78
  %v205 = vpop.permute.xlu0 %204
  %208 = vset.pattern.permute.xlu0 0
  %209 = vperm.xlu0 %208, %v79
  %v210 = vpop.permute.xlu0 %209
  %213 = vset.pattern.permute.xlu0 0
  %214 = vperm.xlu0 %213, %v80
  %v215 = vpop.permute.xlu0 %214
  %218 = vset.pattern.permute.xlu0 0
  %219 = vperm.xlu0 %218, %v81
  %v220 = vpop.permute.xlu0 %219
  %223 = vset.pattern.permute.xlu0 0
  %224 = vperm.xlu0 %223, %v82
  %v225 = vpop.permute.xlu0 %224
  %228 = vset.pattern.permute.xlu0 0
  %229 = vperm.xlu0 %228, %v83
  %v230 = vpop.permute.xlu0 %229
  %233 = vset.pattern.permute.xlu0 0
  %234 = vperm.xlu0 %233, %v84
  %v235 = vpop.permute.xlu0 %234
  %238 = vset.pattern.permute.xlu0 0
  %239 = vperm.xlu0 %238, %v85
  %v240 = vpop.permute.xlu0 %239
  %243 = vset.pattern.permute.xlu0 0
  %244 = vperm.xlu0 %243, %v86
  %v245 = vpop.permute.xlu0 %244
  %248 = vset.pattern.permute.xlu0 0
  %249 = vperm.xlu0 %248, %v87
  %v250 = vpop.permute.xlu0 %249
  %253 = vset.pattern.permute.xlu0 0
  %254 = vperm.xlu0 %253, %v88
  %v255 = vpop.permute.xlu0 %254
  %258 = vset.pattern.permute.xlu0 0
  %259 = vperm.xlu0 %258, %v89
  %v260 = vpop.permute.xlu0 %259
  %263 = vset.pattern.permute.xlu0 0
  %264 = vperm.xlu0 %263, %v90
  %v265 = vpop.permute.xlu0 %264
  %268 = vset.pattern.permute.xlu0 0
  %269 = vperm.xlu0 %268, %v91
  %v270 = vpop.permute.xlu0 %269
  %273 = vset.pattern.permute.xlu0 0
  %274 = vperm.xlu0 %273, %v92
  %v275 = vpop.permute.xlu0 %274
  %278 = vset.pattern.permute.xlu0 0
  %279 = vperm.xlu0 %278, %v93
  %v280 = vpop.permute.xlu0 %279
  %283 = vset.pattern.permute.xlu0 0
  %284 = vperm.xlu0 %283, %v94
  %v285 = vpop.permute.xlu0 %284
  %288 = vset.pattern.permute.xlu0 0
  %289 = vperm.xlu0 %288, %v95
  %v290 = vpop.permute.xlu0 %289
  %293 = vset.pattern.permute.xlu0 0
  %294 = vperm.xlu0 %293, %v96
  %v295 = vpop.permute.xlu0 %294
  %298 = vset.pattern.permute.xlu0 0
  %299 = vperm.xlu0 %298, %v97
  %v300 = vpop.permute.xlu0 %299
  %303 = vset.pattern.permute.xlu0 0
  %304 = vperm.xlu0 %303, %v98
  %v305 = vpop.permute.xlu0 %304
  %308 = vset.pattern.permute.xlu0 0
  %309 = vperm.xlu0 %308, %v99
  %v310 = vpop.permute.xlu0 %309
  %313 = vset.pattern.permute.xlu0 0
  %314 = vperm.xlu0 %313, %v100
  %v315 = vpop.permute.xlu0 %314
  %318 = vset.pattern.permute.xlu0 0
  %319 = vperm.xlu0 %318, %v101
  %v320 = vpop.permute.xlu0 %319
  %323 = vset.pattern.permute.xlu0 0
  %324 = vperm.xlu0 %323, %v102
  %v325 = vpop.permute.xlu0 %324
  %328 = vset.pattern.permute.xlu0 0
  %329 = vperm.xlu0 %328, %v103
  %v330 = vpop.permute.xlu0 %329
  %333 = vset.pattern.permute.xlu0 0
  %334 = vperm.xlu0 %333, %v104
  %v335 = vpop.permute.xlu0 %334
  %338 = vset.pattern.permute.xlu0 0
  %339 = vperm.xlu0 %338, %v105
  %v340 = vpop.permute.xlu0 %339
  %343 = vset.pattern.permute.xlu0 0
  %344 = vperm.xlu0 %343, %v106
  %v345 = vpop.permute.xlu0 %344
  %v347 = vsub.f32 %v11, %v110
  %v348 = vsub.f32 %v12, %v115
  %v349 = vsub.f32 %v13, %v120
  %v350 = vsub.f32 %v14, %v125
  %v351 = vsub.f32 %v15, %v130
  %v352 = vsub.f32 %v16, %v135
  %v353 = vsub.f32 %v17, %v140
  %v354 = vsub.f32 %v18, %v145
  %v355 = vsub.f32 %v19, %v150
  %v356 = vsub.f32 %v20, %v155
  %v357 = vsub.f32 %v21, %v160
  %v358 = vsub.f32 %v22, %v165
  %v359 = vsub.f32 %v23, %v170
  %v360 = vsub.f32 %v24, %v175
  %v361 = vsub.f32 %v25, %v180
  %v362 = vsub.f32 %v26, %v185
  %v363 = vsub.f32 %v27, %v190
  %v364 = vsub.f32 %v28, %v195
  %v365 = vsub.f32 %v29, %v200
  %v366 = vsub.f32 %v30, %v205
  %v367 = vsub.f32 %v31, %v210
  %v368 = vsub.f32 %v32, %v215
  %v369 = vsub.f32 %v33, %v220
  %v370 = vsub.f32 %v34, %v225
  %v371 = vsub.f32 %v35, %v230
  %v372 = vsub.f32 %v36, %v235
  %v373 = vsub.f32 %v37, %v240
  %v374 = vsub.f32 %v38, %v245
  %v375 = vsub.f32 %v39, %v250
  %v376 = vsub.f32 %v40, %v255
  %v377 = vsub.f32 %v41, %v260
  %v378 = vsub.f32 %v42, %v265
  %v379 = vsub.f32 %v43, %v270
  %v380 = vsub.f32 %v44, %v275
  %v381 = vsub.f32 %v45, %v280
  %v382 = vsub.f32 %v46, %v285
  %v383 = vsub.f32 %v47, %v290
  %v384 = vsub.f32 %v48, %v295
  %v385 = vsub.f32 %v49, %v300
  %v386 = vsub.f32 %v50, %v305
  %v387 = vsub.f32 %v51, %v310
  %v388 = vsub.f32 %v52, %v315
  %v389 = vsub.f32 %v53, %v320
  %v390 = vsub.f32 %v54, %v325
  %v391 = vsub.f32 %v55, %v330
  %v392 = vsub.f32 %v56, %v335
  %v393 = vsub.f32 %v57, %v340
  %v394 = vsub.f32 %v58, %v345
  %395 = vst [vmem:[%s2] sm:$0xff] %v347
  %396 = vst [vmem:[%s2 + $0x8] sm:$0xff] %v348
  %397 = vst [vmem:[%s2 + $0x10] sm:$0xff] %v349
  %398 = vst [vmem:[%s2 + $0x18] sm:$0xff] %v350
  %399 = vst [vmem:[%s2 + $0x20] sm:$0xff] %v351
  %400 = vst [vmem:[%s2 + $0x28] sm:$0xff] %v352
  %401 = vst [vmem:[%s2 + $0x30] sm:$0xff] %v353
  %402 = vst [vmem:[%s2 + $0x38] sm:$0xff] %v354
  %403 = vst [vmem:[%s2 + $0x40] sm:$0xff] %v355
  %404 = vst [vmem:[%s2 + $0x48] sm:$0xff] %v356
  %405 = vst [vmem:[%s2 + $0x50] sm:$0xff] %v357
  %406 = vst [vmem:[%s2 + $0x58] sm:$0xff] %v358
  %407 = vst [vmem:[%s2 + $0x60] sm:$0xff] %v359
  %408 = vst [vmem:[%s2 + $0x68] sm:$0xff] %v360
  %409 = vst [vmem:[%s2 + $0x70] sm:$0xff] %v361
  %410 = vst [vmem:[%s2 + $0x78] sm:$0xff] %v362
  %411 = vst [vmem:[%s2 + $0x80] sm:$0xff] %v363
  %412 = vst [vmem:[%s2 + $0x88] sm:$0xff] %v364
  %413 = vst [vmem:[%s2 + $0x90] sm:$0xff] %v365
  %414 = vst [vmem:[%s2 + $0x98] sm:$0xff] %v366
  %415 = vst [vmem:[%s2 + $0xa0] sm:$0xff] %v367
  %416 = vst [vmem:[%s2 + $0xa8] sm:$0xff] %v368
  %417 = vst [vmem:[%s2 + $0xb0] sm:$0xff] %v369
  %418 = vst [vmem:[%s2 + $0xb8] sm:$0xff] %v370
  %419 = vst [vmem:[%s2 + $0xc0] sm:$0xff] %v371
  %420 = vst [vmem:[%s2 + $0xc8] sm:$0xff] %v372
  %421 = vst [vmem:[%s2 + $0xd0] sm:$0xff] %v373
  %422 = vst [vmem:[%s2 + $0xd8] sm:$0xff] %v374
  %423 = vst [vmem:[%s2 + $0xe0] sm:$0xff] %v375
  %424 = vst [vmem:[%s2 + $0xe8] sm:$0xff] %v376
  %425 = vst [vmem:[%s2 + $0xf0] sm:$0xff] %v377
  %426 = vst [vmem:[%s2 + $0xf8] sm:$0xff] %v378
  %427 = vst [vmem:[%s2 + $0x100] sm:$0xff] %v379
  %428 = vst [vmem:[%s2 + $0x108] sm:$0xff] %v380
  %429 = vst [vmem:[%s2 + $0x110] sm:$0xff] %v381
  %430 = vst [vmem:[%s2 + $0x118] sm:$0xff] %v382
  %431 = vst [vmem:[%s2 + $0x120] sm:$0xff] %v383
  %432 = vst [vmem:[%s2 + $0x128] sm:$0xff] %v384
  %433 = vst [vmem:[%s2 + $0x130] sm:$0xff] %v385
  %434 = vst [vmem:[%s2 + $0x138] sm:$0xff] %v386
  %435 = vst [vmem:[%s2 + $0x140] sm:$0xff] %v387
  %436 = vst [vmem:[%s2 + $0x148] sm:$0xff] %v388
  %437 = vst [vmem:[%s2 + $0x150] sm:$0xff] %v389
  %438 = vst [vmem:[%s2 + $0x158] sm:$0xff] %v390
  %439 = vst [vmem:[%s2 + $0x160] sm:$0xff] %v391
  %440 = vst [vmem:[%s2 + $0x168] sm:$0xff] %v392
  %441 = vst [vmem:[%s2 + $0x170] sm:$0xff] %v393
  %442 = vst [vmem:[%s2 + $0x178] sm:$0xff] %v394
  // Predicated region
  $region10: #{rnn_model_forward.5} parent=0 // pred_check
    _
  $region11: #{rnn_model_forward.5} parent=0 // pred_check_branch
    %444 = sbr.rel (0) target = $region13
  $region12: #{rnn_model_forward.5} parent=0 // pred_region
    _
  $region13: #{rnn_model_forward.5} parent=0 // pred_fallthru
    _
  // Predicated region
  $region14: #{rnn_model_forward.5} parent=0 // pred_check
    _
  $region15: #{rnn_model_forward.5} parent=0 // pred_check_branch
    %446 = sbr.rel (0) target = $region17
  $region16: #{rnn_model_forward.5} parent=0 // pred_region
    _
  $region17: #{rnn_model_forward.5} parent=0 // pred_fallthru
    _

// kernel: rnn_model_forward.4
$region0: #{rnn_model_forward.4}
  #allocation0 [shape = 'u32[]', space=smem, size = 0x4, offset = 0x4, fixed_abs, tag = 'smem constant byte address 0x4 - core index']
  #allocation1 [shape = 'u32[144,128]{1,0:T(1,128)}', space=vmem, size = 0x12000, scoped, tag = 'internal scratch']
  #allocation2 [shape = 'f32[384,1]{1,0:T(8,128)}', space=vmem, size = 0x30000, scoped, tag = 'scratch operand']
  #allocation3 [shape = 'f32[384,1]{1,0:T(8,128)}', space=vmem, size = 0x30000, scoped, tag = 'scratch operand']
  %s0 = inlined_call_operand.vmem [shape: bf16[384,128], index: 0, kind: input, shape index: {}]
  %s1 = inlined_call_operand.vmem [shape: bf16[128,128], index: 1, kind: input, shape index: {}]
  %s2 = inlined_call_operand.vmem [shape: f32[1,128], index: 2, kind: input, shape index: {}]
  %s3 = inlined_call_operand.vmem [shape: f32[384,128], index: 3, kind: output, shape index: {0}]
  %s4 = inlined_call_operand.vmem [shape: f32[384,1], index: 4, kind: output, shape index: {1}]
  %5 = xla_tuple %s3, %s4
  %s6 = sld [smem:[#allocation0]]
  $region38: #{rnn_model_forward.4} parent=0
    _
  %s8 = ssub.s32 1, %s6
  %s9 = scalar_select 0, %s8, %s6
  // Predicated region
  $region2: #{rnn_model_forward.4} parent=0 // pred_check
    _
  $region3: #{rnn_model_forward.4} parent=0 // pred_check_branch
    %11 = sbr.rel (0) target = $region5
  $region4: #{rnn_model_forward.4} parent=0 // pred_region
    _
  $region5: #{rnn_model_forward.4} parent=0 // pred_fallthru
    _
  // Predicated region
  $region6: #{rnn_model_forward.4} parent=0 // pred_check
    _
  $region7: #{rnn_model_forward.4} parent=0 // pred_check_branch
    %13 = sbr.rel (0) target = $region9
  $region8: #{rnn_model_forward.4} parent=0 // pred_region
    _
  $region9: #{rnn_model_forward.4} parent=0 // pred_fallthru
    _
  // Predicated region
  $region10: #{rnn_model_forward.4} parent=0 // pred_check
    _
  $region11: #{rnn_model_forward.4} parent=0 // pred_check_branch
    %15 = sbr.rel (0) target = $region13
  $region12: #{rnn_model_forward.4} parent=0 // pred_region
    _
  $region13: #{rnn_model_forward.4} parent=0 // pred_fallthru
    _
  %p17 = scmp.eq.s32.totalorder 0, 0
  // Predicated region
  $region14: #{rnn_model_forward.4} parent=0 // pred_check
    %p18 = pneg %p17
  $region15: #{rnn_model_forward.4} parent=0 // pred_check_branch
    %20 = sbr.rel (%p18) target = $region17
  $region16: #{rnn_model_forward.4} parent=0 // pred_region
    %vm21 = vcmask 7168
    %22 = vst.msk [vmem:[#allocation2] sm:$0xff] %vm21, -inf
    %23 = vst.msk [vmem:[#allocation2 + $0x8] sm:$0xff] %vm21, -inf
    %24 = vst.msk [vmem:[#allocation2 + $0x10] sm:$0xff] %vm21, -inf
    %25 = vst.msk [vmem:[#allocation2 + $0x18] sm:$0xff] %vm21, -inf
    %26 = vst.msk [vmem:[#allocation2 + $0x20] sm:$0xff] %vm21, -inf
    %27 = vst.msk [vmem:[#allocation2 + $0x28] sm:$0xff] %vm21, -inf
    %28 = vst.msk [vmem:[#allocation2 + $0x30] sm:$0xff] %vm21, -inf
    %29 = vst.msk [vmem:[#allocation2 + $0x38] sm:$0xff] %vm21, -inf
    %30 = vst.msk [vmem:[#allocation2 + $0x40] sm:$0xff] %vm21, -inf
    %31 = vst.msk [vmem:[#allocation2 + $0x48] sm:$0xff] %vm21, -inf
    %32 = vst.msk [vmem:[#allocation2 + $0x50] sm:$0xff] %vm21, -inf
    %33 = vst.msk [vmem:[#allocation2 + $0x58] sm:$0xff] %vm21, -inf
    %34 = vst.msk [vmem:[#allocation2 + $0x60] sm:$0xff] %vm21, -inf
    %35 = vst.msk [vmem:[#allocation2 + $0x68] sm:$0xff] %vm21, -inf
    %36 = vst.msk [vmem:[#allocation2 + $0x70] sm:$0xff] %vm21, -inf
    %37 = vst.msk [vmem:[#allocation2 + $0x78] sm:$0xff] %vm21, -inf
    %38 = vst.msk [vmem:[#allocation2 + $0x80] sm:$0xff] %vm21, -inf
    %39 = vst.msk [vmem:[#allocation2 + $0x88] sm:$0xff] %vm21, -inf
    %40 = vst.msk [vmem:[#allocation2 + $0x90] sm:$0xff] %vm21, -inf
    %41 = vst.msk [vmem:[#allocation2 + $0x98] sm:$0xff] %vm21, -inf
    %42 = vst.msk [vmem:[#allocation2 + $0xa0] sm:$0xff] %vm21, -inf
    %43 = vst.msk [vmem:[#allocation2 + $0xa8] sm:$0xff] %vm21, -inf
    %44 = vst.msk [vmem:[#allocation2 + $0xb0] sm:$0xff] %vm21, -inf
    %45 = vst.msk [vmem:[#allocation2 + $0xb8] sm:$0xff] %vm21, -inf
    %46 = vst.msk [vmem:[#allocation2 + $0xc0] sm:$0xff] %vm21, -inf
    %47 = vst.msk [vmem:[#allocation2 + $0xc8] sm:$0xff] %vm21, -inf
    %48 = vst.msk [vmem:[#allocation2 + $0xd0] sm:$0xff] %vm21, -inf
    %49 = vst.msk [vmem:[#allocation2 + $0xd8] sm:$0xff] %vm21, -inf
    %50 = vst.msk [vmem:[#allocation2 + $0xe0] sm:$0xff] %vm21, -inf
    %51 = vst.msk [vmem:[#allocation2 + $0xe8] sm:$0xff] %vm21, -inf
    %52 = vst.msk [vmem:[#allocation2 + $0xf0] sm:$0xff] %vm21, -inf
    %53 = vst.msk [vmem:[#allocation2 + $0xf8] sm:$0xff] %vm21, -inf
    %54 = vst.msk [vmem:[#allocation2 + $0x100] sm:$0xff] %vm21, -inf
    %55 = vst.msk [vmem:[#allocation2 + $0x108] sm:$0xff] %vm21, -inf
    %56 = vst.msk [vmem:[#allocation2 + $0x110] sm:$0xff] %vm21, -inf
    %57 = vst.msk [vmem:[#allocation2 + $0x118] sm:$0xff] %vm21, -inf
    %58 = vst.msk [vmem:[#allocation2 + $0x120] sm:$0xff] %vm21, -inf
    %59 = vst.msk [vmem:[#allocation2 + $0x128] sm:$0xff] %vm21, -inf
    %60 = vst.msk [vmem:[#allocation2 + $0x130] sm:$0xff] %vm21, -inf
    %61 = vst.msk [vmem:[#allocation2 + $0x138] sm:$0xff] %vm21, -inf
    %62 = vst.msk [vmem:[#allocation2 + $0x140] sm:$0xff] %vm21, -inf
    %63 = vst.msk [vmem:[#allocation2 + $0x148] sm:$0xff] %vm21, -inf
    %64 = vst.msk [vmem:[#allocation2 + $0x150] sm:$0xff] %vm21, -inf
    %65 = vst.msk [vmem:[#allocation2 + $0x158] sm:$0xff] %vm21, -inf
    %66 = vst.msk [vmem:[#allocation2 + $0x160] sm:$0xff] %vm21, -inf
    %67 = vst.msk [vmem:[#allocation2 + $0x168] sm:$0xff] %vm21, -inf
    %68 = vst.msk [vmem:[#allocation2 + $0x170] sm:$0xff] %vm21, -inf
    %69 = vst.msk [vmem:[#allocation2 + $0x178] sm:$0xff] %vm21, -inf
    %70 = vst.msk [vmem:[#allocation3] sm:$0xff] %vm21, 0.0
    %71 = vst.msk [vmem:[#allocation3 + $0x8] sm:$0xff] %vm21, 0.0
    %72 = vst.msk [vmem:[#allocation3 + $0x10] sm:$0xff] %vm21, 0.0
    %73 = vst.msk [vmem:[#allocation3 + $0x18] sm:$0xff] %vm21, 0.0
    %74 = vst.msk [vmem:[#allocation3 + $0x20] sm:$0xff] %vm21, 0.0
    %75 = vst.msk [vmem:[#allocation3 + $0x28] sm:$0xff] %vm21, 0.0
    %76 = vst.msk [vmem:[#allocation3 + $0x30] sm:$0xff] %vm21, 0.0
    %77 = vst.msk [vmem:[#allocation3 + $0x38] sm:$0xff] %vm21, 0.0
    %78 = vst.msk [vmem:[#allocation3 + $0x40] sm:$0xff] %vm21, 0.0
    %79 = vst.msk [vmem:[#allocation3 + $0x48] sm:$0xff] %vm21, 0.0
    %80 = vst.msk [vmem:[#allocation3 + $0x50] sm:$0xff] %vm21, 0.0
    %81 = vst.msk [vmem:[#allocation3 + $0x58] sm:$0xff] %vm21, 0.0
    %82 = vst.msk [vmem:[#allocation3 + $0x60] sm:$0xff] %vm21, 0.0
    %83 = vst.msk [vmem:[#allocation3 + $0x68] sm:$0xff] %vm21, 0.0
    %84 = vst.msk [vmem:[#allocation3 + $0x70] sm:$0xff] %vm21, 0.0
    %85 = vst.msk [vmem:[#allocation3 + $0x78] sm:$0xff] %vm21, 0.0
    %86 = vst.msk [vmem:[#allocation3 + $0x80] sm:$0xff] %vm21, 0.0
    %87 = vst.msk [vmem:[#allocation3 + $0x88] sm:$0xff] %vm21, 0.0
    %88 = vst.msk [vmem:[#allocation3 + $0x90] sm:$0xff] %vm21, 0.0
    %89 = vst.msk [vmem:[#allocation3 + $0x98] sm:$0xff] %vm21, 0.0
    %90 = vst.msk [vmem:[#allocation3 + $0xa0] sm:$0xff] %vm21, 0.0
    %91 = vst.msk [vmem:[#allocation3 + $0xa8] sm:$0xff] %vm21, 0.0
    %92 = vst.msk [vmem:[#allocation3 + $0xb0] sm:$0xff] %vm21, 0.0
    %93 = vst.msk [vmem:[#allocation3 + $0xb8] sm:$0xff] %vm21, 0.0
    %94 = vst.msk [vmem:[#allocation3 + $0xc0] sm:$0xff] %vm21, 0.0
    %95 = vst.msk [vmem:[#allocation3 + $0xc8] sm:$0xff] %vm21, 0.0
    %96 = vst.msk [vmem:[#allocation3 + $0xd0] sm:$0xff] %vm21, 0.0
    %97 = vst.msk [vmem:[#allocation3 + $0xd8] sm:$0xff] %vm21, 0.0
    %98 = vst.msk [vmem:[#allocation3 + $0xe0] sm:$0xff] %vm21, 0.0
    %99 = vst.msk [vmem:[#allocation3 + $0xe8] sm:$0xff] %vm21, 0.0
    %100 = vst.msk [vmem:[#allocation3 + $0xf0] sm:$0xff] %vm21, 0.0
    %101 = vst.msk [vmem:[#allocation3 + $0xf8] sm:$0xff] %vm21, 0.0
    %102 = vst.msk [vmem:[#allocation3 + $0x100] sm:$0xff] %vm21, 0.0
    %103 = vst.msk [vmem:[#allocation3 + $0x108] sm:$0xff] %vm21, 0.0
    %104 = vst.msk [vmem:[#allocation3 + $0x110] sm:$0xff] %vm21, 0.0
    %105 = vst.msk [vmem:[#allocation3 + $0x118] sm:$0xff] %vm21, 0.0
    %106 = vst.msk [vmem:[#allocation3 + $0x120] sm:$0xff] %vm21, 0.0
    %107 = vst.msk [vmem:[#allocation3 + $0x128] sm:$0xff] %vm21, 0.0
    %108 = vst.msk [vmem:[#allocation3 + $0x130] sm:$0xff] %vm21, 0.0
    %109 = vst.msk [vmem:[#allocation3 + $0x138] sm:$0xff] %vm21, 0.0
    %110 = vst.msk [vmem:[#allocation3 + $0x140] sm:$0xff] %vm21, 0.0
    %111 = vst.msk [vmem:[#allocation3 + $0x148] sm:$0xff] %vm21, 0.0
    %112 = vst.msk [vmem:[#allocation3 + $0x150] sm:$0xff] %vm21, 0.0
    %113 = vst.msk [vmem:[#allocation3 + $0x158] sm:$0xff] %vm21, 0.0
    %114 = vst.msk [vmem:[#allocation3 + $0x160] sm:$0xff] %vm21, 0.0
    %115 = vst.msk [vmem:[#allocation3 + $0x168] sm:$0xff] %vm21, 0.0
    %116 = vst.msk [vmem:[#allocation3 + $0x170] sm:$0xff] %vm21, 0.0
    %117 = vst.msk [vmem:[#allocation3 + $0x178] sm:$0xff] %vm21, 0.0
  $region17: #{rnn_model_forward.4} parent=0 // pred_fallthru
    _
  %v118 = vld [vmem:[%s0] sm:$0xf]
  %v119 = vld [vmem:[%s0 + $0x4] sm:$0xf]
  %v120 = vld [vmem:[%s0 + $0x8] sm:$0xf]
  %v121 = vld [vmem:[%s0 + $0xc] sm:$0xf]
  %v122 = vld [vmem:[%s0 + $0x10] sm:$0xf]
  %v123 = vld [vmem:[%s0 + $0x14] sm:$0xf]
  %v124 = vld [vmem:[%s0 + $0x18] sm:$0xf]
  %v125 = vld [vmem:[%s0 + $0x1c] sm:$0xf]
  %v126 = vld [vmem:[%s0 + $0x20] sm:$0xf]
  %v127 = vld [vmem:[%s0 + $0x24] sm:$0xf]
  %v128 = vld [vmem:[%s0 + $0x28] sm:$0xf]
  %v129 = vld [vmem:[%s0 + $0x2c] sm:$0xf]
  %v130 = vld [vmem:[%s0 + $0x30] sm:$0xf]
  %v131 = vld [vmem:[%s0 + $0x34] sm:$0xf]
  %v132 = vld [vmem:[%s0 + $0x38] sm:$0xf]
  %v133 = vld [vmem:[%s0 + $0x3c] sm:$0xf]
  %v134 = vld [vmem:[%s0 + $0x40] sm:$0xf]
  %v135 = vld [vmem:[%s0 + $0x44] sm:$0xf]
  %v136 = vld [vmem:[%s0 + $0x48] sm:$0xf]
  %v137 = vld [vmem:[%s0 + $0x4c] sm:$0xf]
  %v138 = vld [vmem:[%s0 + $0x50] sm:$0xf]
  %v139 = vld [vmem:[%s0 + $0x54] sm:$0xf]
  %v140 = vld [vmem:[%s0 + $0x58] sm:$0xf]
  %v141 = vld [vmem:[%s0 + $0x5c] sm:$0xf]
  %v142 = vld [vmem:[%s0 + $0x60] sm:$0xf]
  %v143 = vld [vmem:[%s0 + $0x64] sm:$0xf]
  %v144 = vld [vmem:[%s0 + $0x68] sm:$0xf]
  %v145 = vld [vmem:[%s0 + $0x6c] sm:$0xf]
  %v146 = vld [vmem:[%s0 + $0x70] sm:$0xf]
  %v147 = vld [vmem:[%s0 + $0x74] sm:$0xf]
  %v148 = vld [vmem:[%s0 + $0x78] sm:$0xf]
  %v149 = vld [vmem:[%s0 + $0x7c] sm:$0xf]
  %v150 = vld [vmem:[%s0 + $0x80] sm:$0xf]
  %v151 = vld [vmem:[%s0 + $0x84] sm:$0xf]
  %v152 = vld [vmem:[%s0 + $0x88] sm:$0xf]
  %v153 = vld [vmem:[%s0 + $0x8c] sm:$0xf]
  %v154 = vld [vmem:[%s0 + $0x90] sm:$0xf]
  %v155 = vld [vmem:[%s0 + $0x94] sm:$0xf]
  %v156 = vld [vmem:[%s0 + $0x98] sm:$0xf]
  %v157 = vld [vmem:[%s0 + $0x9c] sm:$0xf]
  %v158 = vld [vmem:[%s0 + $0xa0] sm:$0xf]
  %v159 = vld [vmem:[%s0 + $0xa4] sm:$0xf]
  %v160 = vld [vmem:[%s0 + $0xa8] sm:$0xf]
  %v161 = vld [vmem:[%s0 + $0xac] sm:$0xf]
  %v162 = vld [vmem:[%s0 + $0xb0] sm:$0xf]
  %v163 = vld [vmem:[%s0 + $0xb4] sm:$0xf]
  %v164 = vld [vmem:[%s0 + $0xb8] sm:$0xf]
  %v165 = vld [vmem:[%s0 + $0xbc] sm:$0xf]
  %v166 = vld [vmem:[%s1] sm:$0xf]
  %v167 = vld [vmem:[%s1 + $0x4] sm:$0xf]
  %v168 = vld [vmem:[%s1 + $0x8] sm:$0xf]
  %v169 = vld [vmem:[%s1 + $0xc] sm:$0xf]
  %v170 = vld [vmem:[%s1 + $0x10] sm:$0xf]
  %v171 = vld [vmem:[%s1 + $0x14] sm:$0xf]
  %v172 = vld [vmem:[%s1 + $0x18] sm:$0xf]
  %v173 = vld [vmem:[%s1 + $0x1c] sm:$0xf]
  %v174 = vld [vmem:[%s1 + $0x20] sm:$0xf]
  %v175 = vld [vmem:[%s1 + $0x24] sm:$0xf]
  %v176 = vld [vmem:[%s1 + $0x28] sm:$0xf]
  %v177 = vld [vmem:[%s1 + $0x2c] sm:$0xf]
  %v178 = vld [vmem:[%s1 + $0x30] sm:$0xf]
  %v179 = vld [vmem:[%s1 + $0x34] sm:$0xf]
  %v180 = vld [vmem:[%s1 + $0x38] sm:$0xf]
  %v181 = vld [vmem:[%s1 + $0x3c] sm:$0xf]
  %v182 = vld [vmem:[%s2] sm:$0x1]
  %v184 = vlaneseq
  %v185 = vshrl.u32 %v184, 7
  %v186 = vsub.s32 0, %v185
  %v187 = vrot.slane %v182, %v186
  %v237 = vunpack.c.l.b16 %v118
  %v238 = vunpack.c.l.b16 %v119
  %v239 = vunpack.c.l.b16 %v120
  %v240 = vunpack.c.l.b16 %v121
  %v241 = vunpack.c.l.b16 %v122
  %v242 = vunpack.c.l.b16 %v123
  %v243 = vunpack.c.l.b16 %v124
  %v244 = vunpack.c.l.b16 %v125
  %v245 = vunpack.c.l.b16 %v126
  %v246 = vunpack.c.l.b16 %v127
  %v247 = vunpack.c.l.b16 %v128
  %v248 = vunpack.c.l.b16 %v129
  %v249 = vunpack.c.l.b16 %v130
  %v250 = vunpack.c.l.b16 %v131
  %v251 = vunpack.c.l.b16 %v132
  %v252 = vunpack.c.l.b16 %v133
  %v253 = vunpack.c.l.b16 %v134
  %v254 = vunpack.c.l.b16 %v135
  %v255 = vunpack.c.l.b16 %v136
  %v256 = vunpack.c.l.b16 %v137
  %v257 = vunpack.c.l.b16 %v138
  %v258 = vunpack.c.l.b16 %v139
  %v259 = vunpack.c.l.b16 %v140
  %v260 = vunpack.c.l.b16 %v141
  %v261 = vunpack.c.l.b16 %v142
  %v262 = vunpack.c.l.b16 %v143
  %v263 = vunpack.c.l.b16 %v144
  %v264 = vunpack.c.l.b16 %v145
  %v265 = vunpack.c.l.b16 %v146
  %v266 = vunpack.c.l.b16 %v147
  %v267 = vunpack.c.l.b16 %v148
  %v268 = vunpack.c.l.b16 %v149
  %v269 = vunpack.c.l.b16 %v150
  %v270 = vunpack.c.l.b16 %v151
  %v271 = vunpack.c.l.b16 %v152
  %v272 = vunpack.c.l.b16 %v153
  %v273 = vunpack.c.l.b16 %v154
  %v274 = vunpack.c.l.b16 %v155
  %v275 = vunpack.c.l.b16 %v156
  %v276 = vunpack.c.l.b16 %v157
  %v277 = vunpack.c.l.b16 %v158
  %v278 = vunpack.c.l.b16 %v159
  %v279 = vunpack.c.l.b16 %v160
  %v280 = vunpack.c.l.b16 %v161
  %v281 = vunpack.c.l.b16 %v162
  %v282 = vunpack.c.l.b16 %v163
  %v283 = vunpack.c.l.b16 %v164
  %v284 = vunpack.c.l.b16 %v165
  %v285 = vpack.c.b16 %v238, %v237
  %v286 = vpack.c.b16 %v240, %v239
  %v287 = vpack.c.b16 %v242, %v241
  %v288 = vpack.c.b16 %v244, %v243
  %v289 = vpack.c.b16 %v246, %v245
  %v290 = vpack.c.b16 %v248, %v247
  %v291 = vpack.c.b16 %v250, %v249
  %v292 = vpack.c.b16 %v252, %v251
  %v293 = vpack.c.b16 %v254, %v253
  %v294 = vpack.c.b16 %v256, %v255
  %v295 = vpack.c.b16 %v258, %v257
  %v296 = vpack.c.b16 %v260, %v259
  %v297 = vpack.c.b16 %v262, %v261
  %v298 = vpack.c.b16 %v264, %v263
  %v299 = vpack.c.b16 %v266, %v265
  %v300 = vpack.c.b16 %v268, %v267
  %v301 = vpack.c.b16 %v270, %v269
  %v302 = vpack.c.b16 %v272, %v271
  %v303 = vpack.c.b16 %v274, %v273
  %v304 = vpack.c.b16 %v276, %v275
  %v305 = vpack.c.b16 %v278, %v277
  %v306 = vpack.c.b16 %v280, %v279
  %v307 = vpack.c.b16 %v282, %v281
  %v308 = vpack.c.b16 %v284, %v283
  %v349 = vunpack.c.l.b16 %v166
  %v350 = vunpack.c.l.b16 %v167
  %v351 = vunpack.c.l.b16 %v168
  %v352 = vunpack.c.l.b16 %v169
  %v353 = vunpack.c.l.b16 %v170
  %v354 = vunpack.c.l.b16 %v171
  %v355 = vunpack.c.l.b16 %v172
  %v356 = vunpack.c.l.b16 %v173
  %v357 = vunpack.c.l.b16 %v174
  %v358 = vunpack.c.l.b16 %v175
  %v359 = vunpack.c.l.b16 %v176
  %v360 = vunpack.c.l.b16 %v177
  %v361 = vunpack.c.l.b16 %v178
  %v362 = vunpack.c.l.b16 %v179
  %v363 = vunpack.c.l.b16 %v180
  %v364 = vunpack.c.l.b16 %v181
  %v365 = vpack.c.b16 %v350, %v349
  %v366 = vpack.c.b16 %v352, %v351
  %v367 = vpack.c.b16 %v354, %v353
  %v368 = vpack.c.b16 %v356, %v355
  %v369 = vpack.c.b16 %v358, %v357
  %v370 = vpack.c.b16 %v360, %v359
  %v371 = vpack.c.b16 %v362, %v361
  %v372 = vpack.c.b16 %v364, %v363
  %381 = vmatprep.subr.bf16.mxu0 0
  %382 = vmatpush1.bf16.msra.mxu0 %v365
  %383 = vmatprep.subr.bf16.mxu0 0
  %384 = vmatpush1.bf16.msra.mxu0 %v366
  %385 = vmatprep.subr.bf16.mxu0 0
  %386 = vmatpush1.bf16.msra.mxu0 %v367
  %387 = vmatprep.subr.bf16.mxu0 0
  %388 = vmatpush1.bf16.msra.mxu0 %v368
  %389 = vmatprep.subr.bf16.mxu0 0
  %390 = vmatpush1.bf16.msra.mxu0 %v369
  %391 = vmatprep.subr.bf16.mxu0 0
  %392 = vmatpush1.bf16.msra.mxu0 %v370
  %393 = vmatprep.subr.bf16.mxu0 0
  %394 = vmatpush1.bf16.msra.mxu0 %v371
  %395 = vmatprep.subr.bf16.mxu0 0
  %396 = vmatpush1.bf16.msra.mxu0 %v372
  %397 = vmatprep.subr.bf16.mxu0 0
  %398 = vmatpush1.bf16.msra.mxu0 0
  %399 = vmatprep.subr.bf16.mxu0 0
  %400 = vmatpush1.bf16.msra.mxu0 0
  %401 = vmatprep.subr.bf16.mxu0 0
  %402 = vmatpush1.bf16.msra.mxu0 0
  %403 = vmatprep.subr.bf16.mxu0 0
  %404 = vmatpush1.bf16.msra.mxu0 0
  %405 = vmatprep.subr.bf16.mxu0 0
  %406 = vmatpush1.bf16.msra.mxu0 0
  %407 = vmatprep.subr.bf16.mxu0 0
  %408 = vmatpush1.bf16.msra.mxu0 0
  %409 = vmatprep.subr.bf16.mxu0 0
  %410 = vmatpush1.bf16.msra.mxu0 0
  %411 = vmatprep.subr.bf16.mxu0 0
  %412 = vmatpush1.bf16.msra.mxu0 0
  %413 = vmatprep.mubr.bf16.mxu0 0
  %414 = vmatmul.mubr.bf16.gmra.mrb[0].mxu0 %v285
  %v415 = vpop.f32.mrb[0].mxu0
  %v416 = vadd.f32 %v187, %v415
  %v417 = vpop.f32.mrb[0].mxu0
  %v418 = vpop.f32.mrb[0].mxu0
  %v419 = vadd.f32 %v187, %v418
  %v420 = vpop.f32.mrb[0].mxu0
  %421 = vmatprep.mubr.bf16.mxu0 0
  %422 = vmatmul.mubr.bf16.gmra.mrb[0].mxu0 %v286
  %v423 = vpop.f32.mrb[0].mxu0
  %v424 = vadd.f32 %v187, %v423
  %v425 = vpop.f32.mrb[0].mxu0
  %v426 = vpop.f32.mrb[0].mxu0
  %v427 = vadd.f32 %v187, %v426
  %v428 = vpop.f32.mrb[0].mxu0
  %429 = vmatprep.mubr.bf16.mxu0 0
  %430 = vmatmul.mubr.bf16.gmra.mrb[0].mxu0 %v287
  %v431 = vpop.f32.mrb[0].mxu0
  %v432 = vadd.f32 %v187, %v431
  %v433 = vpop.f32.mrb[0].mxu0
  %v434 = vpop.f32.mrb[0].mxu0
  %v435 = vadd.f32 %v187, %v434
  %v436 = vpop.f32.mrb[0].mxu0
  %437 = vmatprep.mubr.bf16.mxu0 0
  %438 = vmatmul.mubr.bf16.gmra.mrb[0].mxu0 %v288
  %v439 = vpop.f32.mrb[0].mxu0
  %v440 = vadd.f32 %v187, %v439
  %v441 = vpop.f32.mrb[0].mxu0
  %v442 = vpop.f32.mrb[0].mxu0
  %v443 = vadd.f32 %v187, %v442
  %v444 = vpop.f32.mrb[0].mxu0
  %445 = vmatprep.mubr.bf16.mxu0 0
  %446 = vmatmul.mubr.bf16.gmra.mrb[0].mxu0 %v289
  %v447 = vpop.f32.mrb[0].mxu0
  %v448 = vadd.f32 %v187, %v447
  %v449 = vpop.f32.mrb[0].mxu0
  %v450 = vpop.f32.mrb[0].mxu0
  %v451 = vadd.f32 %v187, %v450
  %v452 = vpop.f32.mrb[0].mxu0
  %453 = vmatprep.mubr.bf16.mxu0 0
  %454 = vmatmul.mubr.bf16.gmra.mrb[0].mxu0 %v290
  %v455 = vpop.f32.mrb[0].mxu0
  %v456 = vadd.f32 %v187, %v455
  %v457 = vpop.f32.mrb[0].mxu0
  %v458 = vpop.f32.mrb[0].mxu0
  %v459 = vadd.f32 %v187, %v458
  %v460 = vpop.f32.mrb[0].mxu0
  %461 = vmatprep.mubr.bf16.mxu0 0
  %462 = vmatmul.mubr.bf16.gmra.mrb[0].mxu0 %v291
  %v463 = vpop.f32.mrb[0].mxu0
  %v464 = vadd.f32 %v187, %v463
  %v465 = vpop.f32.mrb[0].mxu0
  %v466 = vpop.f32.mrb[0].mxu0
  %v467 = vadd.f32 %v187, %v466
  %v468 = vpop.f32.mrb[0].mxu0
  %469 = vmatprep.mubr.bf16.mxu0 0
  %470 = vmatmul.mubr.bf16.gmra.mrb[0].mxu0 %v292
  %v471 = vpop.f32.mrb[0].mxu0
  %v472 = vadd.f32 %v187, %v471
  %v473 = vpop.f32.mrb[0].mxu0
  %v474 = vpop.f32.mrb[0].mxu0
  %v475 = vadd.f32 %v187, %v474
  %v476 = vpop.f32.mrb[0].mxu0
  %477 = vmatprep.mubr.bf16.mxu0 0
  %478 = vmatmul.mubr.bf16.gmra.mrb[0].mxu0 %v293
  %v479 = vpop.f32.mrb[0].mxu0
  %v480 = vadd.f32 %v187, %v479
  %v481 = vpop.f32.mrb[0].mxu0
  %v482 = vpop.f32.mrb[0].mxu0
  %v483 = vadd.f32 %v187, %v482
  %v484 = vpop.f32.mrb[0].mxu0
  %485 = vmatprep.mubr.bf16.mxu0 0
  %486 = vmatmul.mubr.bf16.gmra.mrb[0].mxu0 %v294
  %v487 = vpop.f32.mrb[0].mxu0
  %v488 = vadd.f32 %v187, %v487
  %v489 = vpop.f32.mrb[0].mxu0
  %v490 = vpop.f32.mrb[0].mxu0
  %v491 = vadd.f32 %v187, %v490
  %v492 = vpop.f32.mrb[0].mxu0
  %493 = vmatprep.mubr.bf16.mxu0 0
  %494 = vmatmul.mubr.bf16.gmra.mrb[0].mxu0 %v295
  %v495 = vpop.f32.mrb[0].mxu0
  %v496 = vadd.f32 %v187, %v495
  %v497 = vpop.f32.mrb[0].mxu0
  %v498 = vpop.f32.mrb[0].mxu0
  %v499 = vadd.f32 %v187, %v498
  %v500 = vpop.f32.mrb[0].mxu0
  %501 = vmatprep.mubr.bf16.mxu0 0
  %502 = vmatmul.mubr.bf16.gmra.mrb[0].mxu0 %v296
  %v503 = vpop.f32.mrb[0].mxu0
  %v504 = vadd.f32 %v187, %v503
  %v505 = vpop.f32.mrb[0].mxu0
  %v506 = vpop.f32.mrb[0].mxu0
  %v507 = vadd.f32 %v187, %v506
  %v508 = vpop.f32.mrb[0].mxu0
  %509 = vmatprep.mubr.bf16.mxu0 0
  %510 = vmatmul.mubr.bf16.gmra.mrb[0].mxu0 %v297
  %v511 = vpop.f32.mrb[0].mxu0
  %v512 = vadd.f32 %v187, %v511
  %v513 = vpop.f32.mrb[0].mxu0
  %v514 = vpop.f32.mrb[0].mxu0
  %v515 = vadd.f32 %v187, %v514
  %v516 = vpop.f32.mrb[0].mxu0
  %517 = vmatprep.mubr.bf16.mxu0 0
  %518 = vmatmul.mubr.bf16.gmra.mrb[0].mxu0 %v298
  %v519 = vpop.f32.mrb[0].mxu0
  %v520 = vadd.f32 %v187, %v519
  %v521 = vpop.f32.mrb[0].mxu0
  %v522 = vpop.f32.mrb[0].mxu0
  %v523 = vadd.f32 %v187, %v522
  %v524 = vpop.f32.mrb[0].mxu0
  %525 = vmatprep.mubr.bf16.mxu0 0
  %526 = vmatmul.mubr.bf16.gmra.mrb[0].mxu0 %v299
  %v527 = vpop.f32.mrb[0].mxu0
  %v528 = vadd.f32 %v187, %v527
  %v529 = vpop.f32.mrb[0].mxu0
  %v530 = vpop.f32.mrb[0].mxu0
  %v531 = vadd.f32 %v187, %v530
  %v532 = vpop.f32.mrb[0].mxu0
  %533 = vmatprep.mubr.bf16.mxu0 0
  %534 = vmatmul.mubr.bf16.gmra.mrb[0].mxu0 %v300
  %v535 = vpop.f32.mrb[0].mxu0
  %v536 = vadd.f32 %v187, %v535
  %v537 = vpop.f32.mrb[0].mxu0
  %v538 = vpop.f32.mrb[0].mxu0
  %v539 = vadd.f32 %v187, %v538
  %v540 = vpop.f32.mrb[0].mxu0
  %541 = vmatprep.mubr.bf16.mxu0 0
  %542 = vmatmul.mubr.bf16.gmra.mrb[0].mxu0 %v301
  %v543 = vpop.f32.mrb[0].mxu0
  %v544 = vadd.f32 %v187, %v543
  %v545 = vpop.f32.mrb[0].mxu0
  %v546 = vpop.f32.mrb[0].mxu0
  %v547 = vadd.f32 %v187, %v546
  %v548 = vpop.f32.mrb[0].mxu0
  %549 = vmatprep.mubr.bf16.mxu0 0
  %550 = vmatmul.mubr.bf16.gmra.mrb[0].mxu0 %v302
  %v551 = vpop.f32.mrb[0].mxu0
  %v552 = vadd.f32 %v187, %v551
  %v553 = vpop.f32.mrb[0].mxu0
  %v554 = vpop.f32.mrb[0].mxu0
  %v555 = vadd.f32 %v187, %v554
  %v556 = vpop.f32.mrb[0].mxu0
  %557 = vmatprep.mubr.bf16.mxu0 0
  %558 = vmatmul.mubr.bf16.gmra.mrb[0].mxu0 %v303
  %v559 = vpop.f32.mrb[0].mxu0
  %v560 = vadd.f32 %v187, %v559
  %v561 = vpop.f32.mrb[0].mxu0
  %v562 = vpop.f32.mrb[0].mxu0
  %v563 = vadd.f32 %v187, %v562
  %v564 = vpop.f32.mrb[0].mxu0
  %565 = vmatprep.mubr.bf16.mxu0 0
  %566 = vmatmul.mubr.bf16.gmra.mrb[0].mxu0 %v304
  %v567 = vpop.f32.mrb[0].mxu0
  %v568 = vadd.f32 %v187, %v567
  %v569 = vpop.f32.mrb[0].mxu0
  %v570 = vpop.f32.mrb[0].mxu0
  %v571 = vadd.f32 %v187, %v570
  %v572 = vpop.f32.mrb[0].mxu0
  %573 = vmatprep.mubr.bf16.mxu0 0
  %574 = vmatmul.mubr.bf16.gmra.mrb[0].mxu0 %v305
  %v575 = vpop.f32.mrb[0].mxu0
  %v576 = vadd.f32 %v187, %v575
  %v577 = vpop.f32.mrb[0].mxu0
  %v578 = vpop.f32.mrb[0].mxu0
  %v579 = vadd.f32 %v187, %v578
  %v580 = vpop.f32.mrb[0].mxu0
  %581 = vmatprep.mubr.bf16.mxu0 0
  %582 = vmatmul.mubr.bf16.gmra.mrb[0].mxu0 %v306
  %v583 = vpop.f32.mrb[0].mxu0
  %v584 = vadd.f32 %v187, %v583
  %v585 = vpop.f32.mrb[0].mxu0
  %v586 = vpop.f32.mrb[0].mxu0
  %v587 = vadd.f32 %v187, %v586
  %v588 = vpop.f32.mrb[0].mxu0
  %589 = vmatprep.mubr.bf16.mxu0 0
  %590 = vmatmul.mubr.bf16.gmra.mrb[0].mxu0 %v307
  %v591 = vpop.f32.mrb[0].mxu0
  %v592 = vadd.f32 %v187, %v591
  %v593 = vpop.f32.mrb[0].mxu0
  %v594 = vpop.f32.mrb[0].mxu0
  %v595 = vadd.f32 %v187, %v594
  %v596 = vpop.f32.mrb[0].mxu0
  %597 = vmatprep.mubr.bf16.mxu0 0
  %598 = vmatmul.mubr.bf16.gmra.mrb[0].mxu0 %v308
  %v599 = vpop.f32.mrb[0].mxu0
  %v600 = vadd.f32 %v187, %v599
  %v601 = vpop.f32.mrb[0].mxu0
  %v602 = vpop.f32.mrb[0].mxu0
  %v603 = vadd.f32 %v187, %v602
  %v604 = vpop.f32.mrb[0].mxu0
  %605 = vdwg.mxu0
  %606 = vst [vmem:[%s3] sm:$0xff] %v416
  %607 = vst [vmem:[%s3 + $0x8] sm:$0xff] %v419
  %608 = vst [vmem:[%s3 + $0x10] sm:$0xff] %v424
  %609 = vst [vmem:[%s3 + $0x18] sm:$0xff] %v427
  %610 = vst [vmem:[%s3 + $0x20] sm:$0xff] %v432
  %611 = vst [vmem:[%s3 + $0x28] sm:$0xff] %v435
  %612 = vst [vmem:[%s3 + $0x30] sm:$0xff] %v440
  %613 = vst [vmem:[%s3 + $0x38] sm:$0xff] %v443
  %614 = vst [vmem:[%s3 + $0x40] sm:$0xff] %v448
  %615 = vst [vmem:[%s3 + $0x48] sm:$0xff] %v451
  %616 = vst [vmem:[%s3 + $0x50] sm:$0xff] %v456
  %617 = vst [vmem:[%s3 + $0x58] sm:$0xff] %v459
  %618 = vst [vmem:[%s3 + $0x60] sm:$0xff] %v464
  %619 = vst [vmem:[%s3 + $0x68] sm:$0xff] %v467
  %620 = vst [vmem:[%s3 + $0x70] sm:$0xff] %v472
  %621 = vst [vmem:[%s3 + $0x78] sm:$0xff] %v475
  %622 = vst [vmem:[%s3 + $0x80] sm:$0xff] %v480
  %623 = vst [vmem:[%s3 + $0x88] sm:$0xff] %v483
  %624 = vst [vmem:[%s3 + $0x90] sm:$0xff] %v488
  %625 = vst [vmem:[%s3 + $0x98] sm:$0xff] %v491
  %626 = vst [vmem:[%s3 + $0xa0] sm:$0xff] %v496
  %627 = vst [vmem:[%s3 + $0xa8] sm:$0xff] %v499
  %628 = vst [vmem:[%s3 + $0xb0] sm:$0xff] %v504
  %629 = vst [vmem:[%s3 + $0xb8] sm:$0xff] %v507
  %630 = vst [vmem:[%s3 + $0xc0] sm:$0xff] %v512
  %631 = vst [vmem:[%s3 + $0xc8] sm:$0xff] %v515
  %632 = vst [vmem:[%s3 + $0xd0] sm:$0xff] %v520
  %633 = vst [vmem:[%s3 + $0xd8] sm:$0xff] %v523
  %634 = vst [vmem:[%s3 + $0xe0] sm:$0xff] %v528
  %635 = vst [vmem:[%s3 + $0xe8] sm:$0xff] %v531
  %636 = vst [vmem:[%s3 + $0xf0] sm:$0xff] %v536
  %637 = vst [vmem:[%s3 + $0xf8] sm:$0xff] %v539
  %638 = vst [vmem:[%s3 + $0x100] sm:$0xff] %v544
  %639 = vst [vmem:[%s3 + $0x108] sm:$0xff] %v547
  %640 = vst [vmem:[%s3 + $0x110] sm:$0xff] %v552
  %641 = vst [vmem:[%s3 + $0x118] sm:$0xff] %v555
  %642 = vst [vmem:[%s3 + $0x120] sm:$0xff] %v560
  %643 = vst [vmem:[%s3 + $0x128] sm:$0xff] %v563
  %644 = vst [vmem:[%s3 + $0x130] sm:$0xff] %v568
  %645 = vst [vmem:[%s3 + $0x138] sm:$0xff] %v571
  %646 = vst [vmem:[%s3 + $0x140] sm:$0xff] %v576
  %647 = vst [vmem:[%s3 + $0x148] sm:$0xff] %v579
  %648 = vst [vmem:[%s3 + $0x150] sm:$0xff] %v584
  %649 = vst [vmem:[%s3 + $0x158] sm:$0xff] %v587
  %650 = vst [vmem:[%s3 + $0x160] sm:$0xff] %v592
  %651 = vst [vmem:[%s3 + $0x168] sm:$0xff] %v595
  %652 = vst [vmem:[%s3 + $0x170] sm:$0xff] %v600
  %653 = vst [vmem:[%s3 + $0x178] sm:$0xff] %v603
  %v654 = vld [vmem:[#allocation2] sm:$0xff]
  %v655 = vld [vmem:[#allocation2 + $0x8] sm:$0xff]
  %v656 = vld [vmem:[#allocation2 + $0x10] sm:$0xff]
  %v657 = vld [vmem:[#allocation2 + $0x18] sm:$0xff]
  %v658 = vld [vmem:[#allocation2 + $0x20] sm:$0xff]
  %v659 = vld [vmem:[#allocation2 + $0x28] sm:$0xff]
  %v660 = vld [vmem:[#allocation2 + $0x30] sm:$0xff]
  %v661 = vld [vmem:[#allocation2 + $0x38] sm:$0xff]
  %v662 = vld [vmem:[#allocation2 + $0x40] sm:$0xff]
  %v663 = vld [vmem:[#allocation2 + $0x48] sm:$0xff]
  %v664 = vld [vmem:[#allocation2 + $0x50] sm:$0xff]
  %v665 = vld [vmem:[#allocation2 + $0x58] sm:$0xff]
  %v666 = vld [vmem:[#allocation2 + $0x60] sm:$0xff]
  %v667 = vld [vmem:[#allocation2 + $0x68] sm:$0xff]
  %v668 = vld [vmem:[#allocation2 + $0x70] sm:$0xff]
  %v669 = vld [vmem:[#allocation2 + $0x78] sm:$0xff]
  %v670 = vld [vmem:[#allocation2 + $0x80] sm:$0xff]
  %v671 = vld [vmem:[#allocation2 + $0x88] sm:$0xff]
  %v672 = vld [vmem:[#allocation2 + $0x90] sm:$0xff]
  %v673 = vld [vmem:[#allocation2 + $0x98] sm:$0xff]
  %v674 = vld [vmem:[#allocation2 + $0xa0] sm:$0xff]
  %v675 = vld [vmem:[#allocation2 + $0xa8] sm:$0xff]
  %v676 = vld [vmem:[#allocation2 + $0xb0] sm:$0xff]
  %v677 = vld [vmem:[#allocation2 + $0xb8] sm:$0xff]
  %v678 = vld [vmem:[#allocation2 + $0xc0] sm:$0xff]
  %v679 = vld [vmem:[#allocation2 + $0xc8] sm:$0xff]
  %v680 = vld [vmem:[#allocation2 + $0xd0] sm:$0xff]
  %v681 = vld [vmem:[#allocation2 + $0xd8] sm:$0xff]
  %v682 = vld [vmem:[#allocation2 + $0xe0] sm:$0xff]
  %v683 = vld [vmem:[#allocation2 + $0xe8] sm:$0xff]
  %v684 = vld [vmem:[#allocation2 + $0xf0] sm:$0xff]
  %v685 = vld [vmem:[#allocation2 + $0xf8] sm:$0xff]
  %v686 = vld [vmem:[#allocation2 + $0x100] sm:$0xff]
  %v687 = vld [vmem:[#allocation2 + $0x108] sm:$0xff]
  %v688 = vld [vmem:[#allocation2 + $0x110] sm:$0xff]
  %v689 = vld [vmem:[#allocation2 + $0x118] sm:$0xff]
  %v690 = vld [vmem:[#allocation2 + $0x120] sm:$0xff]
  %v691 = vld [vmem:[#allocation2 + $0x128] sm:$0xff]
  %v692 = vld [vmem:[#allocation2 + $0x130] sm:$0xff]
  %v693 = vld [vmem:[#allocation2 + $0x138] sm:$0xff]
  %v694 = vld [vmem:[#allocation2 + $0x140] sm:$0xff]
  %v695 = vld [vmem:[#allocation2 + $0x148] sm:$0xff]
  %v696 = vld [vmem:[#allocation2 + $0x150] sm:$0xff]
  %v697 = vld [vmem:[#allocation2 + $0x158] sm:$0xff]
  %v698 = vld [vmem:[#allocation2 + $0x160] sm:$0xff]
  %v699 = vld [vmem:[#allocation2 + $0x168] sm:$0xff]
  %v700 = vld [vmem:[#allocation2 + $0x170] sm:$0xff]
  %v701 = vld [vmem:[#allocation2 + $0x178] sm:$0xff]
  %702 = vmax.xlane.f32.xlu0 %v416
  %v703 = vpop.xlane.xlu0 %702
  %704 = vmax.xlane.f32.xlu0 %v419
  %v705 = vpop.xlane.xlu0 %704
  %706 = vmax.xlane.f32.xlu0 %v424
  %v707 = vpop.xlane.xlu0 %706
  %708 = vmax.xlane.f32.xlu0 %v427
  %v709 = vpop.xlane.xlu0 %708
  %710 = vmax.xlane.f32.xlu0 %v432
  %v711 = vpop.xlane.xlu0 %710
  %712 = vmax.xlane.f32.xlu0 %v435
  %v713 = vpop.xlane.xlu0 %712
  %714 = vmax.xlane.f32.xlu0 %v440
  %v715 = vpop.xlane.xlu0 %714
  %716 = vmax.xlane.f32.xlu0 %v443
  %v717 = vpop.xlane.xlu0 %716
  %718 = vmax.xlane.f32.xlu0 %v448
  %v719 = vpop.xlane.xlu0 %718
  %720 = vmax.xlane.f32.xlu0 %v451
  %v721 = vpop.xlane.xlu0 %720
  %722 = vmax.xlane.f32.xlu0 %v456
  %v723 = vpop.xlane.xlu0 %722
  %724 = vmax.xlane.f32.xlu0 %v459
  %v725 = vpop.xlane.xlu0 %724
  %726 = vmax.xlane.f32.xlu0 %v464
  %v727 = vpop.xlane.xlu0 %726
  %728 = vmax.xlane.f32.xlu0 %v467
  %v729 = vpop.xlane.xlu0 %728
  %730 = vmax.xlane.f32.xlu0 %v472
  %v731 = vpop.xlane.xlu0 %730
  %732 = vmax.xlane.f32.xlu0 %v475
  %v733 = vpop.xlane.xlu0 %732
  %734 = vmax.xlane.f32.xlu0 %v480
  %v735 = vpop.xlane.xlu0 %734
  %736 = vmax.xlane.f32.xlu0 %v483
  %v737 = vpop.xlane.xlu0 %736
  %738 = vmax.xlane.f32.xlu0 %v488
  %v739 = vpop.xlane.xlu0 %738
  %740 = vmax.xlane.f32.xlu0 %v491
  %v741 = vpop.xlane.xlu0 %740
  %742 = vmax.xlane.f32.xlu0 %v496
  %v743 = vpop.xlane.xlu0 %742
  %744 = vmax.xlane.f32.xlu0 %v499
  %v745 = vpop.xlane.xlu0 %744
  %746 = vmax.xlane.f32.xlu0 %v504
  %v747 = vpop.xlane.xlu0 %746
  %748 = vmax.xlane.f32.xlu0 %v507
  %v749 = vpop.xlane.xlu0 %748
  %750 = vmax.xlane.f32.xlu0 %v512
  %v751 = vpop.xlane.xlu0 %750
  %752 = vmax.xlane.f32.xlu0 %v515
  %v753 = vpop.xlane.xlu0 %752
  %754 = vmax.xlane.f32.xlu0 %v520
  %v755 = vpop.xlane.xlu0 %754
  %756 = vmax.xlane.f32.xlu0 %v523
  %v757 = vpop.xlane.xlu0 %756
  %758 = vmax.xlane.f32.xlu0 %v528
  %v759 = vpop.xlane.xlu0 %758
  %760 = vmax.xlane.f32.xlu0 %v531
  %v761 = vpop.xlane.xlu0 %760
  %762 = vmax.xlane.f32.xlu0 %v536
  %v763 = vpop.xlane.xlu0 %762
  %764 = vmax.xlane.f32.xlu0 %v539
  %v765 = vpop.xlane.xlu0 %764
  %766 = vmax.xlane.f32.xlu0 %v544
  %v767 = vpop.xlane.xlu0 %766
  %768 = vmax.xlane.f32.xlu0 %v547
  %v769 = vpop.xlane.xlu0 %768
  %770 = vmax.xlane.f32.xlu0 %v552
  %v771 = vpop.xlane.xlu0 %770
  %772 = vmax.xlane.f32.xlu0 %v555
  %v773 = vpop.xlane.xlu0 %772
  %774 = vmax.xlane.f32.xlu0 %v560
  %v775 = vpop.xlane.xlu0 %774
  %776 = vmax.xlane.f32.xlu0 %v563
  %v777 = vpop.xlane.xlu0 %776
  %778 = vmax.xlane.f32.xlu0 %v568
  %v779 = vpop.xlane.xlu0 %778
  %780 = vmax.xlane.f32.xlu0 %v571
  %v781 = vpop.xlane.xlu0 %780
  %782 = vmax.xlane.f32.xlu0 %v576
  %v783 = vpop.xlane.xlu0 %782
  %784 = vmax.xlane.f32.xlu0 %v579
  %v785 = vpop.xlane.xlu0 %784
  %786 = vmax.xlane.f32.xlu0 %v584
  %v787 = vpop.xlane.xlu0 %786
  %788 = vmax.xlane.f32.xlu0 %v587
  %v789 = vpop.xlane.xlu0 %788
  %790 = vmax.xlane.f32.xlu0 %v592
  %v791 = vpop.xlane.xlu0 %790
  %792 = vmax.xlane.f32.xlu0 %v595
  %v793 = vpop.xlane.xlu0 %792
  %794 = vmax.xlane.f32.xlu0 %v600
  %v795 = vpop.xlane.xlu0 %794
  %796 = vmax.xlane.f32.xlu0 %v603
  %v797 = vpop.xlane.xlu0 %796
  %v798 = vmax.f32 %v654, %v703
  %v799 = vmax.f32 %v655, %v705
  %v800 = vmax.f32 %v656, %v707
  %v801 = vmax.f32 %v657, %v709
  %v802 = vmax.f32 %v658, %v711
  %v803 = vmax.f32 %v659, %v713
  %v804 = vmax.f32 %v660, %v715
  %v805 = vmax.f32 %v661, %v717
  %v806 = vmax.f32 %v662, %v719
  %v807 = vmax.f32 %v663, %v721
  %v808 = vmax.f32 %v664, %v723
  %v809 = vmax.f32 %v665, %v725
  %v810 = vmax.f32 %v666, %v727
  %v811 = vmax.f32 %v667, %v729
  %v812 = vmax.f32 %v668, %v731
  %v813 = vmax.f32 %v669, %v733
  %v814 = vmax.f32 %v670, %v735
  %v815 = vmax.f32 %v671, %v737
  %v816 = vmax.f32 %v672, %v739
  %v817 = vmax.f32 %v673, %v741
  %v818 = vmax.f32 %v674, %v743
  %v819 = vmax.f32 %v675, %v745
  %v820 = vmax.f32 %v676, %v747
  %v821 = vmax.f32 %v677, %v749
  %v822 = vmax.f32 %v678, %v751
  %v823 = vmax.f32 %v679, %v753
  %v824 = vmax.f32 %v680, %v755
  %v825 = vmax.f32 %v681, %v757
  %v826 = vmax.f32 %v682, %v759
  %v827 = vmax.f32 %v683, %v761
  %v828 = vmax.f32 %v684, %v763
  %v829 = vmax.f32 %v685, %v765
  %v830 = vmax.f32 %v686, %v767
  %v831 = vmax.f32 %v687, %v769
  %v832 = vmax.f32 %v688, %v771
  %v833 = vmax.f32 %v689, %v773
  %v834 = vmax.f32 %v690, %v775
  %v835 = vmax.f32 %v691, %v777
  %v836 = vmax.f32 %v692, %v779
  %v837 = vmax.f32 %v693, %v781
  %v838 = vmax.f32 %v694, %v783
  %v839 = vmax.f32 %v695, %v785
  %v840 = vmax.f32 %v696, %v787
  %v841 = vmax.f32 %v697, %v789
  %v842 = vmax.f32 %v698, %v791
  %v843 = vmax.f32 %v699, %v793
  %v844 = vmax.f32 %v700, %v795
  %v845 = vmax.f32 %v701, %v797
  %v846 = vld [vmem:[#allocation3] sm:$0xff]
  %v847 = vld [vmem:[#allocation3 + $0x8] sm:$0xff]
  %v848 = vld [vmem:[#allocation3 + $0x10] sm:$0xff]
  %v849 = vld [vmem:[#allocation3 + $0x18] sm:$0xff]
  %v850 = vld [vmem:[#allocation3 + $0x20] sm:$0xff]
  %v851 = vld [vmem:[#allocation3 + $0x28] sm:$0xff]
  %v852 = vld [vmem:[#allocation3 + $0x30] sm:$0xff]
  %v853 = vld [vmem:[#allocation3 + $0x38] sm:$0xff]
  %v854 = vld [vmem:[#allocation3 + $0x40] sm:$0xff]
  %v855 = vld [vmem:[#allocation3 + $0x48] sm:$0xff]
  %v856 = vld [vmem:[#allocation3 + $0x50] sm:$0xff]
  %v857 = vld [vmem:[#allocation3 + $0x58] sm:$0xff]
  %v858 = vld [vmem:[#allocation3 + $0x60] sm:$0xff]
  %v859 = vld [vmem:[#allocation3 + $0x68] sm:$0xff]
  %v860 = vld [vmem:[#allocation3 + $0x70] sm:$0xff]
  %v861 = vld [vmem:[#allocation3 + $0x78] sm:$0xff]
  %v862 = vld [vmem:[#allocation3 + $0x80] sm:$0xff]
  %v863 = vld [vmem:[#allocation3 + $0x88] sm:$0xff]
  %v864 = vld [vmem:[#allocation3 + $0x90] sm:$0xff]
  %v865 = vld [vmem:[#allocation3 + $0x98] sm:$0xff]
  %v866 = vld [vmem:[#allocation3 + $0xa0] sm:$0xff]
  %v867 = vld [vmem:[#allocation3 + $0xa8] sm:$0xff]
  %v868 = vld [vmem:[#allocation3 + $0xb0] sm:$0xff]
  %v869 = vld [vmem:[#allocation3 + $0xb8] sm:$0xff]
  %v870 = vld [vmem:[#allocation3 + $0xc0] sm:$0xff]
  %v871 = vld [vmem:[#allocation3 + $0xc8] sm:$0xff]
  %v872 = vld [vmem:[#allocation3 + $0xd0] sm:$0xff]
  %v873 = vld [vmem:[#allocation3 + $0xd8] sm:$0xff]
  %v874 = vld [vmem:[#allocation3 + $0xe0] sm:$0xff]
  %v875 = vld [vmem:[#allocation3 + $0xe8] sm:$0xff]
  %v876 = vld [vmem:[#allocation3 + $0xf0] sm:$0xff]
  %v877 = vld [vmem:[#allocation3 + $0xf8] sm:$0xff]
  %v878 = vld [vmem:[#allocation3 + $0x100] sm:$0xff]
  %v879 = vld [vmem:[#allocation3 + $0x108] sm:$0xff]
  %v880 = vld [vmem:[#allocation3 + $0x110] sm:$0xff]
  %v881 = vld [vmem:[#allocation3 + $0x118] sm:$0xff]
  %v882 = vld [vmem:[#allocation3 + $0x120] sm:$0xff]
  %v883 = vld [vmem:[#allocation3 + $0x128] sm:$0xff]
  %v884 = vld [vmem:[#allocation3 + $0x130] sm:$0xff]
  %v885 = vld [vmem:[#allocation3 + $0x138] sm:$0xff]
  %v886 = vld [vmem:[#allocation3 + $0x140] sm:$0xff]
  %v887 = vld [vmem:[#allocation3 + $0x148] sm:$0xff]
  %v888 = vld [vmem:[#allocation3 + $0x150] sm:$0xff]
  %v889 = vld [vmem:[#allocation3 + $0x158] sm:$0xff]
  %v890 = vld [vmem:[#allocation3 + $0x160] sm:$0xff]
  %v891 = vld [vmem:[#allocation3 + $0x168] sm:$0xff]
  %v892 = vld [vmem:[#allocation3 + $0x170] sm:$0xff]
  %v893 = vld [vmem:[#allocation3 + $0x178] sm:$0xff]
  %v894 = vsub.f32 %v654, %v798
  %v895 = vsub.f32 %v655, %v799
  %v896 = vsub.f32 %v656, %v800
  %v897 = vsub.f32 %v657, %v801
  %v898 = vsub.f32 %v658, %v802
  %v899 = vsub.f32 %v659, %v803
  %v900 = vsub.f32 %v660, %v804
  %v901 = vsub.f32 %v661, %v805
  %v902 = vsub.f32 %v662, %v806
  %v903 = vsub.f32 %v663, %v807
  %v904 = vsub.f32 %v664, %v808
  %v905 = vsub.f32 %v665, %v809
  %v906 = vsub.f32 %v666, %v810
  %v907 = vsub.f32 %v667, %v811
  %v908 = vsub.f32 %v668, %v812
  %v909 = vsub.f32 %v669, %v813
  %v910 = vsub.f32 %v670, %v814
  %v911 = vsub.f32 %v671, %v815
  %v912 = vsub.f32 %v672, %v816
  %v913 = vsub.f32 %v673, %v817
  %v914 = vsub.f32 %v674, %v818
  %v915 = vsub.f32 %v675, %v819
  %v916 = vsub.f32 %v676, %v820
  %v917 = vsub.f32 %v677, %v821
  %v918 = vsub.f32 %v678, %v822
  %v919 = vsub.f32 %v679, %v823
  %v920 = vsub.f32 %v680, %v824
  %v921 = vsub.f32 %v681, %v825
  %v922 = vsub.f32 %v682, %v826
  %v923 = vsub.f32 %v683, %v827
  %v924 = vsub.f32 %v684, %v828
  %v925 = vsub.f32 %v685, %v829
  %v926 = vsub.f32 %v686, %v830
  %v927 = vsub.f32 %v687, %v831
  %v928 = vsub.f32 %v688, %v832
  %v929 = vsub.f32 %v689, %v833
  %v930 = vsub.f32 %v690, %v834
  %v931 = vsub.f32 %v691, %v835
  %v932 = vsub.f32 %v692, %v836
  %v933 = vsub.f32 %v693, %v837
  %v934 = vsub.f32 %v694, %v838
  %v935 = vsub.f32 %v695, %v839
  %v936 = vsub.f32 %v696, %v840
  %v937 = vsub.f32 %v697, %v841
  %v938 = vsub.f32 %v698, %v842
  %v939 = vsub.f32 %v699, %v843
  %v940 = vsub.f32 %v700, %v844
  %v941 = vsub.f32 %v701, %v845
  %v942 = vmul.f32 %v894, 1.442695
  %v943 = vpow.pop %v942
  %v944 = vmul.f32 %v895, 1.442695
  %v945 = vpow.pop %v944
  %v946 = vmul.f32 %v896, 1.442695
  %v947 = vpow.pop %v946
  %v948 = vmul.f32 %v897, 1.442695
  %v949 = vpow.pop %v948
  %v950 = vmul.f32 %v898, 1.442695
  %v951 = vpow.pop %v950
  %v952 = vmul.f32 %v899, 1.442695
  %v953 = vpow.pop %v952
  %v954 = vmul.f32 %v900, 1.442695
  %v955 = vpow.pop %v954
  %v956 = vmul.f32 %v901, 1.442695
  %v957 = vpow.pop %v956
  %v958 = vmul.f32 %v902, 1.442695
  %v959 = vpow.pop %v958
  %v960 = vmul.f32 %v903, 1.442695
  %v961 = vpow.pop %v960
  %v962 = vmul.f32 %v904, 1.442695
  %v963 = vpow.pop %v962
  %v964 = vmul.f32 %v905, 1.442695
  %v965 = vpow.pop %v964
  %v966 = vmul.f32 %v906, 1.442695
  %v967 = vpow.pop %v966
  %v968 = vmul.f32 %v907, 1.442695
  %v969 = vpow.pop %v968
  %v970 = vmul.f32 %v908, 1.442695
  %v971 = vpow.pop %v970
  %v972 = vmul.f32 %v909, 1.442695
  %v973 = vpow.pop %v972
  %v974 = vmul.f32 %v910, 1.442695
  %v975 = vpow.pop %v974
  %v976 = vmul.f32 %v911, 1.442695
  %v977 = vpow.pop %v976
  %v978 = vmul.f32 %v912, 1.442695
  %v979 = vpow.pop %v978
  %v980 = vmul.f32 %v913, 1.442695
  %v981 = vpow.pop %v980
  %v982 = vmul.f32 %v914, 1.442695
  %v983 = vpow.pop %v982
  %v984 = vmul.f32 %v915, 1.442695
  %v985 = vpow.pop %v984
  %v986 = vmul.f32 %v916, 1.442695
  %v987 = vpow.pop %v986
  %v988 = vmul.f32 %v917, 1.442695
  %v989 = vpow.pop %v988
  %v990 = vmul.f32 %v918, 1.442695
  %v991 = vpow.pop %v990
  %v992 = vmul.f32 %v919, 1.442695
  %v993 = vpow.pop %v992
  %v994 = vmul.f32 %v920, 1.442695
  %v995 = vpow.pop %v994
  %v996 = vmul.f32 %v921, 1.442695
  %v997 = vpow.pop %v996
  %v998 = vmul.f32 %v922, 1.442695
  %v999 = vpow.pop %v998
  %v1000 = vmul.f32 %v923, 1.442695
  %v1001 = vpow.pop %v1000
  %v1002 = vmul.f32 %v924, 1.442695
  %v1003 = vpow.pop %v1002
  %v1004 = vmul.f32 %v925, 1.442695
  %v1005 = vpow.pop %v1004
  %v1006 = vmul.f32 %v926, 1.442695
  %v1007 = vpow.pop %v1006
  %v1008 = vmul.f32 %v927, 1.442695
  %v1009 = vpow.pop %v1008
  %v1010 = vmul.f32 %v928, 1.442695
  %v1011 = vpow.pop %v1010
  %v1012 = vmul.f32 %v929, 1.442695
  %v1013 = vpow.pop %v1012
  %v1014 = vmul.f32 %v930, 1.442695
  %v1015 = vpow.pop %v1014
  %v1016 = vmul.f32 %v931, 1.442695
  %v1017 = vpow.pop %v1016
  %v1018 = vmul.f32 %v932, 1.442695
  %v1019 = vpow.pop %v1018
  %v1020 = vmul.f32 %v933, 1.442695
  %v1021 = vpow.pop %v1020
  %v1022 = vmul.f32 %v934, 1.442695
  %v1023 = vpow.pop %v1022
  %v1024 = vmul.f32 %v935, 1.442695
  %v1025 = vpow.pop %v1024
  %v1026 = vmul.f32 %v936, 1.442695
  %v1027 = vpow.pop %v1026
  %v1028 = vmul.f32 %v937, 1.442695
  %v1029 = vpow.pop %v1028
  %v1030 = vmul.f32 %v938, 1.442695
  %v1031 = vpow.pop %v1030
  %v1032 = vmul.f32 %v939, 1.442695
  %v1033 = vpow.pop %v1032
  %v1034 = vmul.f32 %v940, 1.442695
  %v1035 = vpow.pop %v1034
  %v1036 = vmul.f32 %v941, 1.442695
  %v1037 = vpow.pop %v1036
  %v1038 = vmul.f32 %v846, %v943
  %v1039 = vmul.f32 %v847, %v945
  %v1040 = vmul.f32 %v848, %v947
  %v1041 = vmul.f32 %v849, %v949
  %v1042 = vmul.f32 %v850, %v951
  %v1043 = vmul.f32 %v851, %v953
  %v1044 = vmul.f32 %v852, %v955
  %v1045 = vmul.f32 %v853, %v957
  %v1046 = vmul.f32 %v854, %v959
  %v1047 = vmul.f32 %v855, %v961
  %v1048 = vmul.f32 %v856, %v963
  %v1049 = vmul.f32 %v857, %v965
  %v1050 = vmul.f32 %v858, %v967
  %v1051 = vmul.f32 %v859, %v969
  %v1052 = vmul.f32 %v860, %v971
  %v1053 = vmul.f32 %v861, %v973
  %v1054 = vmul.f32 %v862, %v975
  %v1055 = vmul.f32 %v863, %v977
  %v1056 = vmul.f32 %v864, %v979
  %v1057 = vmul.f32 %v865, %v981
  %v1058 = vmul.f32 %v866, %v983
  %v1059 = vmul.f32 %v867, %v985
  %v1060 = vmul.f32 %v868, %v987
  %v1061 = vmul.f32 %v869, %v989
  %v1062 = vmul.f32 %v870, %v991
  %v1063 = vmul.f32 %v871, %v993
  %v1064 = vmul.f32 %v872, %v995
  %v1065 = vmul.f32 %v873, %v997
  %v1066 = vmul.f32 %v874, %v999
  %v1067 = vmul.f32 %v875, %v1001
  %v1068 = vmul.f32 %v876, %v1003
  %v1069 = vmul.f32 %v877, %v1005
  %v1070 = vmul.f32 %v878, %v1007
  %v1071 = vmul.f32 %v879, %v1009
  %v1072 = vmul.f32 %v880, %v1011
  %v1073 = vmul.f32 %v881, %v1013
  %v1074 = vmul.f32 %v882, %v1015
  %v1075 = vmul.f32 %v883, %v1017
  %v1076 = vmul.f32 %v884, %v1019
  %v1077 = vmul.f32 %v885, %v1021
  %v1078 = vmul.f32 %v886, %v1023
  %v1079 = vmul.f32 %v887, %v1025
  %v1080 = vmul.f32 %v888, %v1027
  %v1081 = vmul.f32 %v889, %v1029
  %v1082 = vmul.f32 %v890, %v1031
  %v1083 = vmul.f32 %v891, %v1033
  %v1084 = vmul.f32 %v892, %v1035
  %v1085 = vmul.f32 %v893, %v1037
  %1087 = vset.pattern.permute.xlu0 0
  %1088 = vperm.xlu0 %1087, %v798
  %v1089 = vpop.permute.xlu0 %1088
  %1092 = vset.pattern.permute.xlu0 0
  %1093 = vperm.xlu0 %1092, %v799
  %v1094 = vpop.permute.xlu0 %1093
  %1097 = vset.pattern.permute.xlu0 0
  %1098 = vperm.xlu0 %1097, %v800
  %v1099 = vpop.permute.xlu0 %1098
  %1102 = vset.pattern.permute.xlu0 0
  %1103 = vperm.xlu0 %1102, %v801
  %v1104 = vpop.permute.xlu0 %1103
  %1107 = vset.pattern.permute.xlu0 0
  %1108 = vperm.xlu0 %1107, %v802
  %v1109 = vpop.permute.xlu0 %1108
  %1112 = vset.pattern.permute.xlu0 0
  %1113 = vperm.xlu0 %1112, %v803
  %v1114 = vpop.permute.xlu0 %1113
  %1117 = vset.pattern.permute.xlu0 0
  %1118 = vperm.xlu0 %1117, %v804
  %v1119 = vpop.permute.xlu0 %1118
  %1122 = vset.pattern.permute.xlu0 0
  %1123 = vperm.xlu0 %1122, %v805
  %v1124 = vpop.permute.xlu0 %1123
  %1127 = vset.pattern.permute.xlu0 0
  %1128 = vperm.xlu0 %1127, %v806
  %v1129 = vpop.permute.xlu0 %1128
  %1132 = vset.pattern.permute.xlu0 0
  %1133 = vperm.xlu0 %1132, %v807
  %v1134 = vpop.permute.xlu0 %1133
  %1137 = vset.pattern.permute.xlu0 0
  %1138 = vperm.xlu0 %1137, %v808
  %v1139 = vpop.permute.xlu0 %1138
  %1142 = vset.pattern.permute.xlu0 0
  %1143 = vperm.xlu0 %1142, %v809
  %v1144 = vpop.permute.xlu0 %1143
  %1147 = vset.pattern.permute.xlu0 0
  %1148 = vperm.xlu0 %1147, %v810
  %v1149 = vpop.permute.xlu0 %1148
  %1152 = vset.pattern.permute.xlu0 0
  %1153 = vperm.xlu0 %1152, %v811
  %v1154 = vpop.permute.xlu0 %1153
  %1157 = vset.pattern.permute.xlu0 0
  %1158 = vperm.xlu0 %1157, %v812
  %v1159 = vpop.permute.xlu0 %1158
  %1162 = vset.pattern.permute.xlu0 0
  %1163 = vperm.xlu0 %1162, %v813
  %v1164 = vpop.permute.xlu0 %1163
  %1167 = vset.pattern.permute.xlu0 0
  %1168 = vperm.xlu0 %1167, %v814
  %v1169 = vpop.permute.xlu0 %1168
  %1172 = vset.pattern.permute.xlu0 0
  %1173 = vperm.xlu0 %1172, %v815
  %v1174 = vpop.permute.xlu0 %1173
  %1177 = vset.pattern.permute.xlu0 0
  %1178 = vperm.xlu0 %1177, %v816
  %v1179 = vpop.permute.xlu0 %1178
  %1182 = vset.pattern.permute.xlu0 0
  %1183 = vperm.xlu0 %1182, %v817
  %v1184 = vpop.permute.xlu0 %1183
  %1187 = vset.pattern.permute.xlu0 0
  %1188 = vperm.xlu0 %1187, %v818
  %v1189 = vpop.permute.xlu0 %1188
  %1192 = vset.pattern.permute.xlu0 0
  %1193 = vperm.xlu0 %1192, %v819
  %v1194 = vpop.permute.xlu0 %1193
  %1197 = vset.pattern.permute.xlu0 0
  %1198 = vperm.xlu0 %1197, %v820
  %v1199 = vpop.permute.xlu0 %1198
  %1202 = vset.pattern.permute.xlu0 0
  %1203 = vperm.xlu0 %1202, %v821
  %v1204 = vpop.permute.xlu0 %1203
  %1207 = vset.pattern.permute.xlu0 0
  %1208 = vperm.xlu0 %1207, %v822
  %v1209 = vpop.permute.xlu0 %1208
  %1212 = vset.pattern.permute.xlu0 0
  %1213 = vperm.xlu0 %1212, %v823
  %v1214 = vpop.permute.xlu0 %1213
  %1217 = vset.pattern.permute.xlu0 0
  %1218 = vperm.xlu0 %1217, %v824
  %v1219 = vpop.permute.xlu0 %1218
  %1222 = vset.pattern.permute.xlu0 0
  %1223 = vperm.xlu0 %1222, %v825
  %v1224 = vpop.permute.xlu0 %1223
  %1227 = vset.pattern.permute.xlu0 0
  %1228 = vperm.xlu0 %1227, %v826
  %v1229 = vpop.permute.xlu0 %1228
  %1232 = vset.pattern.permute.xlu0 0
  %1233 = vperm.xlu0 %1232, %v827
  %v1234 = vpop.permute.xlu0 %1233
  %1237 = vset.pattern.permute.xlu0 0
  %1238 = vperm.xlu0 %1237, %v828
  %v1239 = vpop.permute.xlu0 %1238
  %1242 = vset.pattern.permute.xlu0 0
  %1243 = vperm.xlu0 %1242, %v829
  %v1244 = vpop.permute.xlu0 %1243
  %1247 = vset.pattern.permute.xlu0 0
  %1248 = vperm.xlu0 %1247, %v830
  %v1249 = vpop.permute.xlu0 %1248
  %1252 = vset.pattern.permute.xlu0 0
  %1253 = vperm.xlu0 %1252, %v831
  %v1254 = vpop.permute.xlu0 %1253
  %1257 = vset.pattern.permute.xlu0 0
  %1258 = vperm.xlu0 %1257, %v832
  %v1259 = vpop.permute.xlu0 %1258
  %1262 = vset.pattern.permute.xlu0 0
  %1263 = vperm.xlu0 %1262, %v833
  %v1264 = vpop.permute.xlu0 %1263
  %1267 = vset.pattern.permute.xlu0 0
  %1268 = vperm.xlu0 %1267, %v834
  %v1269 = vpop.permute.xlu0 %1268
  %1272 = vset.pattern.permute.xlu0 0
  %1273 = vperm.xlu0 %1272, %v835
  %v1274 = vpop.permute.xlu0 %1273
  %1277 = vset.pattern.permute.xlu0 0
  %1278 = vperm.xlu0 %1277, %v836
  %v1279 = vpop.permute.xlu0 %1278
  %1282 = vset.pattern.permute.xlu0 0
  %1283 = vperm.xlu0 %1282, %v837
  %v1284 = vpop.permute.xlu0 %1283
  %1287 = vset.pattern.permute.xlu0 0
  %1288 = vperm.xlu0 %1287, %v838
  %v1289 = vpop.permute.xlu0 %1288
  %1292 = vset.pattern.permute.xlu0 0
  %1293 = vperm.xlu0 %1292, %v839
  %v1294 = vpop.permute.xlu0 %1293
  %1297 = vset.pattern.permute.xlu0 0
  %1298 = vperm.xlu0 %1297, %v840
  %v1299 = vpop.permute.xlu0 %1298
  %1302 = vset.pattern.permute.xlu0 0
  %1303 = vperm.xlu0 %1302, %v841
  %v1304 = vpop.permute.xlu0 %1303
  %1307 = vset.pattern.permute.xlu0 0
  %1308 = vperm.xlu0 %1307, %v842
  %v1309 = vpop.permute.xlu0 %1308
  %1312 = vset.pattern.permute.xlu0 0
  %1313 = vperm.xlu0 %1312, %v843
  %v1314 = vpop.permute.xlu0 %1313
  %1317 = vset.pattern.permute.xlu0 0
  %1318 = vperm.xlu0 %1317, %v844
  %v1319 = vpop.permute.xlu0 %1318
  %1322 = vset.pattern.permute.xlu0 0
  %1323 = vperm.xlu0 %1322, %v845
  %v1324 = vpop.permute.xlu0 %1323
  %v1326 = vsub.f32 %v416, %v1089
  %v1327 = vsub.f32 %v419, %v1094
  %v1328 = vsub.f32 %v424, %v1099
  %v1329 = vsub.f32 %v427, %v1104
  %v1330 = vsub.f32 %v432, %v1109
  %v1331 = vsub.f32 %v435, %v1114
  %v1332 = vsub.f32 %v440, %v1119
  %v1333 = vsub.f32 %v443, %v1124
  %v1334 = vsub.f32 %v448, %v1129
  %v1335 = vsub.f32 %v451, %v1134
  %v1336 = vsub.f32 %v456, %v1139
  %v1337 = vsub.f32 %v459, %v1144
  %v1338 = vsub.f32 %v464, %v1149
  %v1339 = vsub.f32 %v467, %v1154
  %v1340 = vsub.f32 %v472, %v1159
  %v1341 = vsub.f32 %v475, %v1164
  %v1342 = vsub.f32 %v480, %v1169
  %v1343 = vsub.f32 %v483, %v1174
  %v1344 = vsub.f32 %v488, %v1179
  %v1345 = vsub.f32 %v491, %v1184
  %v1346 = vsub.f32 %v496, %v1189
  %v1347 = vsub.f32 %v499, %v1194
  %v1348 = vsub.f32 %v504, %v1199
  %v1349 = vsub.f32 %v507, %v1204
  %v1350 = vsub.f32 %v512, %v1209
  %v1351 = vsub.f32 %v515, %v1214
  %v1352 = vsub.f32 %v520, %v1219
  %v1353 = vsub.f32 %v523, %v1224
  %v1354 = vsub.f32 %v528, %v1229
  %v1355 = vsub.f32 %v531, %v1234
  %v1356 = vsub.f32 %v536, %v1239
  %v1357 = vsub.f32 %v539, %v1244
  %v1358 = vsub.f32 %v544, %v1249
  %v1359 = vsub.f32 %v547, %v1254
  %v1360 = vsub.f32 %v552, %v1259
  %v1361 = vsub.f32 %v555, %v1264
  %v1362 = vsub.f32 %v560, %v1269
  %v1363 = vsub.f32 %v563, %v1274
  %v1364 = vsub.f32 %v568, %v1279
  %v1365 = vsub.f32 %v571, %v1284
  %v1366 = vsub.f32 %v576, %v1289
  %v1367 = vsub.f32 %v579, %v1294
  %v1368 = vsub.f32 %v584, %v1299
  %v1369 = vsub.f32 %v587, %v1304
  %v1370 = vsub.f32 %v592, %v1309
  %v1371 = vsub.f32 %v595, %v1314
  %v1372 = vsub.f32 %v600, %v1319
  %v1373 = vsub.f32 %v603, %v1324
  %v1374 = vmul.f32 %v1326, 1.442695
  %v1375 = vpow.pop %v1374
  %v1376 = vmul.f32 %v1327, 1.442695
  %v1377 = vpow.pop %v1376
  %v1378 = vmul.f32 %v1328, 1.442695
  %v1379 = vpow.pop %v1378
  %v1380 = vmul.f32 %v1329, 1.442695
  %v1381 = vpow.pop %v1380
  %v1382 = vmul.f32 %v1330, 1.442695
  %v1383 = vpow.pop %v1382
  %v1384 = vmul.f32 %v1331, 1.442695
  %v1385 = vpow.pop %v1384
  %v1386 = vmul.f32 %v1332, 1.442695
  %v1387 = vpow.pop %v1386
  %v1388 = vmul.f32 %v1333, 1.442695
  %v1389 = vpow.pop %v1388
  %v1390 = vmul.f32 %v1334, 1.442695
  %v1391 = vpow.pop %v1390
  %v1392 = vmul.f32 %v1335, 1.442695
  %v1393 = vpow.pop %v1392
  %v1394 = vmul.f32 %v1336, 1.442695
  %v1395 = vpow.pop %v1394
  %v1396 = vmul.f32 %v1337, 1.442695
  %v1397 = vpow.pop %v1396
  %v1398 = vmul.f32 %v1338, 1.442695
  %v1399 = vpow.pop %v1398
  %v1400 = vmul.f32 %v1339, 1.442695
  %v1401 = vpow.pop %v1400
  %v1402 = vmul.f32 %v1340, 1.442695
  %v1403 = vpow.pop %v1402
  %v1404 = vmul.f32 %v1341, 1.442695
  %v1405 = vpow.pop %v1404
  %v1406 = vmul.f32 %v1342, 1.442695
  %v1407 = vpow.pop %v1406
  %v1408 = vmul.f32 %v1343, 1.442695
  %v1409 = vpow.pop %v1408
  %v1410 = vmul.f32 %v1344, 1.442695
  %v1411 = vpow.pop %v1410
  %v1412 = vmul.f32 %v1345, 1.442695
  %v1413 = vpow.pop %v1412
  %v1414 = vmul.f32 %v1346, 1.442695
  %v1415 = vpow.pop %v1414
  %v1416 = vmul.f32 %v1347, 1.442695
  %v1417 = vpow.pop %v1416
  %v1418 = vmul.f32 %v1348, 1.442695
  %v1419 = vpow.pop %v1418
  %v1420 = vmul.f32 %v1349, 1.442695
  %v1421 = vpow.pop %v1420
  %v1422 = vmul.f32 %v1350, 1.442695
  %v1423 = vpow.pop %v1422
  %v1424 = vmul.f32 %v1351, 1.442695
  %v1425 = vpow.pop %v1424
  %v1426 = vmul.f32 %v1352, 1.442695
  %v1427 = vpow.pop %v1426
  %v1428 = vmul.f32 %v1353, 1.442695
  %v1429 = vpow.pop %v1428
  %v1430 = vmul.f32 %v1354, 1.442695
  %v1431 = vpow.pop %v1430
  %v1432 = vmul.f32 %v1355, 1.442695
  %v1433 = vpow.pop %v1432
  %v1434 = vmul.f32 %v1356, 1.442695
  %v1435 = vpow.pop %v1434
  %v1436 = vmul.f32 %v1357, 1.442695
  %v1437 = vpow.pop %v1436
  %v1438 = vmul.f32 %v1358, 1.442695
  %v1439 = vpow.pop %v1438
  %v1440 = vmul.f32 %v1359, 1.442695
  %v1441 = vpow.pop %v1440
  %v1442 = vmul.f32 %v1360, 1.442695
  %v1443 = vpow.pop %v1442
  %v1444 = vmul.f32 %v1361, 1.442695
  %v1445 = vpow.pop %v1444
  %v1446 = vmul.f32 %v1362, 1.442695
  %v1447 = vpow.pop %v1446
  %v1448 = vmul.f32 %v1363, 1.442695
  %v1449 = vpow.pop %v1448
  %v1450 = vmul.f32 %v1364, 1.442695
  %v1451 = vpow.pop %v1450
  %v1452 = vmul.f32 %v1365, 1.442695
  %v1453 = vpow.pop %v1452
  %v1454 = vmul.f32 %v1366, 1.442695
  %v1455 = vpow.pop %v1454
  %v1456 = vmul.f32 %v1367, 1.442695
  %v1457 = vpow.pop %v1456
  %v1458 = vmul.f32 %v1368, 1.442695
  %v1459 = vpow.pop %v1458
  %v1460 = vmul.f32 %v1369, 1.442695
  %v1461 = vpow.pop %v1460
  %v1462 = vmul.f32 %v1370, 1.442695
  %v1463 = vpow.pop %v1462
  %v1464 = vmul.f32 %v1371, 1.442695
  %v1465 = vpow.pop %v1464
  %v1466 = vmul.f32 %v1372, 1.442695
  %v1467 = vpow.pop %v1466
  %v1468 = vmul.f32 %v1373, 1.442695
  %v1469 = vpow.pop %v1468
  %1470 = vadd.xlane.f32.xlu0 %v1375
  %v1471 = vpop.xlane.xlu0 %1470
  %1472 = vadd.xlane.f32.xlu0 %v1377
  %v1473 = vpop.xlane.xlu0 %1472
  %1474 = vadd.xlane.f32.xlu0 %v1379
  %v1475 = vpop.xlane.xlu0 %1474
  %1476 = vadd.xlane.f32.xlu0 %v1381
  %v1477 = vpop.xlane.xlu0 %1476
  %1478 = vadd.xlane.f32.xlu0 %v1383
  %v1479 = vpop.xlane.xlu0 %1478
  %1480 = vadd.xlane.f32.xlu0 %v1385
  %v1481 = vpop.xlane.xlu0 %1480
  %1482 = vadd.xlane.f32.xlu0 %v1387
  %v1483 = vpop.xlane.xlu0 %1482
  %1484 = vadd.xlane.f32.xlu0 %v1389
  %v1485 = vpop.xlane.xlu0 %1484
  %1486 = vadd.xlane.f32.xlu0 %v1391
  %v1487 = vpop.xlane.xlu0 %1486
  %1488 = vadd.xlane.f32.xlu0 %v1393
  %v1489 = vpop.xlane.xlu0 %1488
  %1490 = vadd.xlane.f32.xlu0 %v1395
  %v1491 = vpop.xlane.xlu0 %1490
  %1492 = vadd.xlane.f32.xlu0 %v1397
  %v1493 = vpop.xlane.xlu0 %1492
  %1494 = vadd.xlane.f32.xlu0 %v1399
  %v1495 = vpop.xlane.xlu0 %1494
  %1496 = vadd.xlane.f32.xlu0 %v1401
  %v1497 = vpop.xlane.xlu0 %1496
  %1498 = vadd.xlane.f32.xlu0 %v1403
  %v1499 = vpop.xlane.xlu0 %1498
  %1500 = vadd.xlane.f32.xlu0 %v1405
  %v1501 = vpop.xlane.xlu0 %1500
  %1502 = vadd.xlane.f32.xlu0 %v1407
  %v1503 = vpop.xlane.xlu0 %1502
  %1504 = vadd.xlane.f32.xlu0 %v1409
  %v1505 = vpop.xlane.xlu0 %1504
  %1506 = vadd.xlane.f32.xlu0 %v1411
  %v1507 = vpop.xlane.xlu0 %1506
  %1508 = vadd.xlane.f32.xlu0 %v1413
  %v1509 = vpop.xlane.xlu0 %1508
  %1510 = vadd.xlane.f32.xlu0 %v1415
  %v1511 = vpop.xlane.xlu0 %1510
  %1512 = vadd.xlane.f32.xlu0 %v1417
  %v1513 = vpop.xlane.xlu0 %1512
  %1514 = vadd.xlane.f32.xlu0 %v1419
  %v1515 = vpop.xlane.xlu0 %1514
  %1516 = vadd.xlane.f32.xlu0 %v1421
  %v1517 = vpop.xlane.xlu0 %1516
  %1518 = vadd.xlane.f32.xlu0 %v1423
  %v1519 = vpop.xlane.xlu0 %1518
  %1520 = vadd.xlane.f32.xlu0 %v1425
  %v1521 = vpop.xlane.xlu0 %1520
  %1522 = vadd.xlane.f32.xlu0 %v1427
  %v1523 = vpop.xlane.xlu0 %1522
  %1524 = vadd.xlane.f32.xlu0 %v1429
  %v1525 = vpop.xlane.xlu0 %1524
  %1526 = vadd.xlane.f32.xlu0 %v1431
  %v1527 = vpop.xlane.xlu0 %1526
  %1528 = vadd.xlane.f32.xlu0 %v1433
  %v1529 = vpop.xlane.xlu0 %1528
  %1530 = vadd.xlane.f32.xlu0 %v1435
  %v1531 = vpop.xlane.xlu0 %1530
  %1532 = vadd.xlane.f32.xlu0 %v1437
  %v1533 = vpop.xlane.xlu0 %1532
  %1534 = vadd.xlane.f32.xlu0 %v1439
  %v1535 = vpop.xlane.xlu0 %1534
  %1536 = vadd.xlane.f32.xlu0 %v1441
  %v1537 = vpop.xlane.xlu0 %1536
  %1538 = vadd.xlane.f32.xlu0 %v1443
  %v1539 = vpop.xlane.xlu0 %1538
  %1540 = vadd.xlane.f32.xlu0 %v1445
  %v1541 = vpop.xlane.xlu0 %1540
  %1542 = vadd.xlane.f32.xlu0 %v1447
  %v1543 = vpop.xlane.xlu0 %1542
  %1544 = vadd.xlane.f32.xlu0 %v1449
  %v1545 = vpop.xlane.xlu0 %1544
  %1546 = vadd.xlane.f32.xlu0 %v1451
  %v1547 = vpop.xlane.xlu0 %1546
  %1548 = vadd.xlane.f32.xlu0 %v1453
  %v1549 = vpop.xlane.xlu0 %1548
  %1550 = vadd.xlane.f32.xlu0 %v1455
  %v1551 = vpop.xlane.xlu0 %1550
  %1552 = vadd.xlane.f32.xlu0 %v1457
  %v1553 = vpop.xlane.xlu0 %1552
  %1554 = vadd.xlane.f32.xlu0 %v1459
  %v1555 = vpop.xlane.xlu0 %1554
  %1556 = vadd.xlane.f32.xlu0 %v1461
  %v1557 = vpop.xlane.xlu0 %1556
  %1558 = vadd.xlane.f32.xlu0 %v1463
  %v1559 = vpop.xlane.xlu0 %1558
  %1560 = vadd.xlane.f32.xlu0 %v1465
  %v1561 = vpop.xlane.xlu0 %1560
  %1562 = vadd.xlane.f32.xlu0 %v1467
  %v1563 = vpop.xlane.xlu0 %1562
  %1564 = vadd.xlane.f32.xlu0 %v1469
  %v1565 = vpop.xlane.xlu0 %1564
  %v1566 = vadd.f32 %v1038, %v1471
  %v1567 = vadd.f32 %v1039, %v1473
  %v1568 = vadd.f32 %v1040, %v1475
  %v1569 = vadd.f32 %v1041, %v1477
  %v1570 = vadd.f32 %v1042, %v1479
  %v1571 = vadd.f32 %v1043, %v1481
  %v1572 = vadd.f32 %v1044, %v1483
  %v1573 = vadd.f32 %v1045, %v1485
  %v1574 = vadd.f32 %v1046, %v1487
  %v1575 = vadd.f32 %v1047, %v1489
  %v1576 = vadd.f32 %v1048, %v1491
  %v1577 = vadd.f32 %v1049, %v1493
  %v1578 = vadd.f32 %v1050, %v1495
  %v1579 = vadd.f32 %v1051, %v1497
  %v1580 = vadd.f32 %v1052, %v1499
  %v1581 = vadd.f32 %v1053, %v1501
  %v1582 = vadd.f32 %v1054, %v1503
  %v1583 = vadd.f32 %v1055, %v1505
  %v1584 = vadd.f32 %v1056, %v1507
  %v1585 = vadd.f32 %v1057, %v1509
  %v1586 = vadd.f32 %v1058, %v1511
  %v1587 = vadd.f32 %v1059, %v1513
  %v1588 = vadd.f32 %v1060, %v1515
  %v1589 = vadd.f32 %v1061, %v1517
  %v1590 = vadd.f32 %v1062, %v1519
  %v1591 = vadd.f32 %v1063, %v1521
  %v1592 = vadd.f32 %v1064, %v1523
  %v1593 = vadd.f32 %v1065, %v1525
  %v1594 = vadd.f32 %v1066, %v1527
  %v1595 = vadd.f32 %v1067, %v1529
  %v1596 = vadd.f32 %v1068, %v1531
  %v1597 = vadd.f32 %v1069, %v1533
  %v1598 = vadd.f32 %v1070, %v1535
  %v1599 = vadd.f32 %v1071, %v1537
  %v1600 = vadd.f32 %v1072, %v1539
  %v1601 = vadd.f32 %v1073, %v1541
  %v1602 = vadd.f32 %v1074, %v1543
  %v1603 = vadd.f32 %v1075, %v1545
  %v1604 = vadd.f32 %v1076, %v1547
  %v1605 = vadd.f32 %v1077, %v1549
  %v1606 = vadd.f32 %v1078, %v1551
  %v1607 = vadd.f32 %v1079, %v1553
  %v1608 = vadd.f32 %v1080, %v1555
  %v1609 = vadd.f32 %v1081, %v1557
  %v1610 = vadd.f32 %v1082, %v1559
  %v1611 = vadd.f32 %v1083, %v1561
  %v1612 = vadd.f32 %v1084, %v1563
  %v1613 = vadd.f32 %v1085, %v1565
  %vm1614 = vcmask 7168
  %1615 = vst.msk [vmem:[#allocation2] sm:$0xff] %vm1614, %v798
  %1616 = vst.msk [vmem:[#allocation2 + $0x8] sm:$0xff] %vm1614, %v799
  %1617 = vst.msk [vmem:[#allocation2 + $0x10] sm:$0xff] %vm1614, %v800
  %1618 = vst.msk [vmem:[#allocation2 + $0x18] sm:$0xff] %vm1614, %v801
  %1619 = vst.msk [vmem:[#allocation2 + $0x20] sm:$0xff] %vm1614, %v802
  %1620 = vst.msk [vmem:[#allocation2 + $0x28] sm:$0xff] %vm1614, %v803
  %1621 = vst.msk [vmem:[#allocation2 + $0x30] sm:$0xff] %vm1614, %v804
  %1622 = vst.msk [vmem:[#allocation2 + $0x38] sm:$0xff] %vm1614, %v805
  %1623 = vst.msk [vmem:[#allocation2 + $0x40] sm:$0xff] %vm1614, %v806
  %1624 = vst.msk [vmem:[#allocation2 + $0x48] sm:$0xff] %vm1614, %v807
  %1625 = vst.msk [vmem:[#allocation2 + $0x50] sm:$0xff] %vm1614, %v808
  %1626 = vst.msk [vmem:[#allocation2 + $0x58] sm:$0xff] %vm1614, %v809
  %1627 = vst.msk [vmem:[#allocation2 + $0x60] sm:$0xff] %vm1614, %v810
  %1628 = vst.msk [vmem:[#allocation2 + $0x68] sm:$0xff] %vm1614, %v811
  %1629 = vst.msk [vmem:[#allocation2 + $0x70] sm:$0xff] %vm1614, %v812
  %1630 = vst.msk [vmem:[#allocation2 + $0x78] sm:$0xff] %vm1614, %v813
  %1631 = vst.msk [vmem:[#allocation2 + $0x80] sm:$0xff] %vm1614, %v814
  %1632 = vst.msk [vmem:[#allocation2 + $0x88] sm:$0xff] %vm1614, %v815
  %1633 = vst.msk [vmem:[#allocation2 + $0x90] sm:$0xff] %vm1614, %v816
  %1634 = vst.msk [vmem:[#allocation2 + $0x98] sm:$0xff] %vm1614, %v817
  %1635 = vst.msk [vmem:[#allocation2 + $0xa0] sm:$0xff] %vm1614, %v818
  %1636 = vst.msk [vmem:[#allocation2 + $0xa8] sm:$0xff] %vm1614, %v819
  %1637 = vst.msk [vmem:[#allocation2 + $0xb0] sm:$0xff] %vm1614, %v820
  %1638 = vst.msk [vmem:[#allocation2 + $0xb8] sm:$0xff] %vm1614, %v821
  %1639 = vst.msk [vmem:[#allocation2 + $0xc0] sm:$0xff] %vm1614, %v822
  %1640 = vst.msk [vmem:[#allocation2 + $0xc8] sm:$0xff] %vm1614, %v823
  %1641 = vst.msk [vmem:[#allocation2 + $0xd0] sm:$0xff] %vm1614, %v824
  %1642 = vst.msk [vmem:[#allocation2 + $0xd8] sm:$0xff] %vm1614, %v825
  %1643 = vst.msk [vmem:[#allocation2 + $0xe0] sm:$0xff] %vm1614, %v826
  %1644 = vst.msk [vmem:[#allocation2 + $0xe8] sm:$0xff] %vm1614, %v827
  %1645 = vst.msk [vmem:[#allocation2 + $0xf0] sm:$0xff] %vm1614, %v828
  %1646 = vst.msk [vmem:[#allocation2 + $0xf8] sm:$0xff] %vm1614, %v829
  %1647 = vst.msk [vmem:[#allocation2 + $0x100] sm:$0xff] %vm1614, %v830
  %1648 = vst.msk [vmem:[#allocation2 + $0x108] sm:$0xff] %vm1614, %v831
  %1649 = vst.msk [vmem:[#allocation2 + $0x110] sm:$0xff] %vm1614, %v832
  %1650 = vst.msk [vmem:[#allocation2 + $0x118] sm:$0xff] %vm1614, %v833
  %1651 = vst.msk [vmem:[#allocation2 + $0x120] sm:$0xff] %vm1614, %v834
  %1652 = vst.msk [vmem:[#allocation2 + $0x128] sm:$0xff] %vm1614, %v835
  %1653 = vst.msk [vmem:[#allocation2 + $0x130] sm:$0xff] %vm1614, %v836
  %1654 = vst.msk [vmem:[#allocation2 + $0x138] sm:$0xff] %vm1614, %v837
  %1655 = vst.msk [vmem:[#allocation2 + $0x140] sm:$0xff] %vm1614, %v838
  %1656 = vst.msk [vmem:[#allocation2 + $0x148] sm:$0xff] %vm1614, %v839
  %1657 = vst.msk [vmem:[#allocation2 + $0x150] sm:$0xff] %vm1614, %v840
  %1658 = vst.msk [vmem:[#allocation2 + $0x158] sm:$0xff] %vm1614, %v841
  %1659 = vst.msk [vmem:[#allocation2 + $0x160] sm:$0xff] %vm1614, %v842
  %1660 = vst.msk [vmem:[#allocation2 + $0x168] sm:$0xff] %vm1614, %v843
  %1661 = vst.msk [vmem:[#allocation2 + $0x170] sm:$0xff] %vm1614, %v844
  %1662 = vst.msk [vmem:[#allocation2 + $0x178] sm:$0xff] %vm1614, %v845
  %1663 = vst.msk [vmem:[#allocation3] sm:$0xff] %vm1614, %v1566
  %1664 = vst.msk [vmem:[#allocation3 + $0x8] sm:$0xff] %vm1614, %v1567
  %1665 = vst.msk [vmem:[#allocation3 + $0x10] sm:$0xff] %vm1614, %v1568
  %1666 = vst.msk [vmem:[#allocation3 + $0x18] sm:$0xff] %vm1614, %v1569
  %1667 = vst.msk [vmem:[#allocation3 + $0x20] sm:$0xff] %vm1614, %v1570
  %1668 = vst.msk [vmem:[#allocation3 + $0x28] sm:$0xff] %vm1614, %v1571
  %1669 = vst.msk [vmem:[#allocation3 + $0x30] sm:$0xff] %vm1614, %v1572
  %1670 = vst.msk [vmem:[#allocation3 + $0x38] sm:$0xff] %vm1614, %v1573
  %1671 = vst.msk [vmem:[#allocation3 + $0x40] sm:$0xff] %vm1614, %v1574
  %1672 = vst.msk [vmem:[#allocation3 + $0x48] sm:$0xff] %vm1614, %v1575
  %1673 = vst.msk [vmem:[#allocation3 + $0x50] sm:$0xff] %vm1614, %v1576
  %1674 = vst.msk [vmem:[#allocation3 + $0x58] sm:$0xff] %vm1614, %v1577
  %1675 = vst.msk [vmem:[#allocation3 + $0x60] sm:$0xff] %vm1614, %v1578
  %1676 = vst.msk [vmem:[#allocation3 + $0x68] sm:$0xff] %vm1614, %v1579
  %1677 = vst.msk [vmem:[#allocation3 + $0x70] sm:$0xff] %vm1614, %v1580
  %1678 = vst.msk [vmem:[#allocation3 + $0x78] sm:$0xff] %vm1614, %v1581
  %1679 = vst.msk [vmem:[#allocation3 + $0x80] sm:$0xff] %vm1614, %v1582
  %1680 = vst.msk [vmem:[#allocation3 + $0x88] sm:$0xff] %vm1614, %v1583
  %1681 = vst.msk [vmem:[#allocation3 + $0x90] sm:$0xff] %vm1614, %v1584
  %1682 = vst.msk [vmem:[#allocation3 + $0x98] sm:$0xff] %vm1614, %v1585
  %1683 = vst.msk [vmem:[#allocation3 + $0xa0] sm:$0xff] %vm1614, %v1586
  %1684 = vst.msk [vmem:[#allocation3 + $0xa8] sm:$0xff] %vm1614, %v1587
  %1685 = vst.msk [vmem:[#allocation3 + $0xb0] sm:$0xff] %vm1614, %v1588
  %1686 = vst.msk [vmem:[#allocation3 + $0xb8] sm:$0xff] %vm1614, %v1589
  %1687 = vst.msk [vmem:[#allocation3 + $0xc0] sm:$0xff] %vm1614, %v1590
  %1688 = vst.msk [vmem:[#allocation3 + $0xc8] sm:$0xff] %vm1614, %v1591
  %1689 = vst.msk [vmem:[#allocation3 + $0xd0] sm:$0xff] %vm1614, %v1592
  %1690 = vst.msk [vmem:[#allocation3 + $0xd8] sm:$0xff] %vm1614, %v1593
  %1691 = vst.msk [vmem:[#allocation3 + $0xe0] sm:$0xff] %vm1614, %v1594
  %1692 = vst.msk [vmem:[#allocation3 + $0xe8] sm:$0xff] %vm1614, %v1595
  %1693 = vst.msk [vmem:[#allocation3 + $0xf0] sm:$0xff] %vm1614, %v1596
  %1694 = vst.msk [vmem:[#allocation3 + $0xf8] sm:$0xff] %vm1614, %v1597
  %1695 = vst.msk [vmem:[#allocation3 + $0x100] sm:$0xff] %vm1614, %v1598
  %1696 = vst.msk [vmem:[#allocation3 + $0x108] sm:$0xff] %vm1614, %v1599
  %1697 = vst.msk [vmem:[#allocation3 + $0x110] sm:$0xff] %vm1614, %v1600
  %1698 = vst.msk [vmem:[#allocation3 + $0x118] sm:$0xff] %vm1614, %v1601
  %1699 = vst.msk [vmem:[#allocation3 + $0x120] sm:$0xff] %vm1614, %v1602
  %1700 = vst.msk [vmem:[#allocation3 + $0x128] sm:$0xff] %vm1614, %v1603
  %1701 = vst.msk [vmem:[#allocation3 + $0x130] sm:$0xff] %vm1614, %v1604
  %1702 = vst.msk [vmem:[#allocation3 + $0x138] sm:$0xff] %vm1614, %v1605
  %1703 = vst.msk [vmem:[#allocation3 + $0x140] sm:$0xff] %vm1614, %v1606
  %1704 = vst.msk [vmem:[#allocation3 + $0x148] sm:$0xff] %vm1614, %v1607
  %1705 = vst.msk [vmem:[#allocation3 + $0x150] sm:$0xff] %vm1614, %v1608
  %1706 = vst.msk [vmem:[#allocation3 + $0x158] sm:$0xff] %vm1614, %v1609
  %1707 = vst.msk [vmem:[#allocation3 + $0x160] sm:$0xff] %vm1614, %v1610
  %1708 = vst.msk [vmem:[#allocation3 + $0x168] sm:$0xff] %vm1614, %v1611
  %1709 = vst.msk [vmem:[#allocation3 + $0x170] sm:$0xff] %vm1614, %v1612
  %1710 = vst.msk [vmem:[#allocation3 + $0x178] sm:$0xff] %vm1614, %v1613
  // Predicated region
  $region18: #{rnn_model_forward.4} parent=0 // pred_check
    %p1711 = pneg %p17
  $region19: #{rnn_model_forward.4} parent=0 // pred_check_branch
    %1713 = sbr.rel (%p1711) target = $region21
  $region20: #{rnn_model_forward.4} parent=0 // pred_region
    %v1714 = vlog2.pop %v1566
    %v1715 = vmul.f32 %v1714, 0.6931472
    %v1716 = vlog2.pop %v1567
    %v1717 = vmul.f32 %v1716, 0.6931472
    %v1718 = vlog2.pop %v1568
    %v1719 = vmul.f32 %v1718, 0.6931472
    %v1720 = vlog2.pop %v1569
    %v1721 = vmul.f32 %v1720, 0.6931472
    %v1722 = vlog2.pop %v1570
    %v1723 = vmul.f32 %v1722, 0.6931472
    %v1724 = vlog2.pop %v1571
    %v1725 = vmul.f32 %v1724, 0.6931472
    %v1726 = vlog2.pop %v1572
    %v1727 = vmul.f32 %v1726, 0.6931472
    %v1728 = vlog2.pop %v1573
    %v1729 = vmul.f32 %v1728, 0.6931472
    %v1730 = vlog2.pop %v1574
    %v1731 = vmul.f32 %v1730, 0.6931472
    %v1732 = vlog2.pop %v1575
    %v1733 = vmul.f32 %v1732, 0.6931472
    %v1734 = vlog2.pop %v1576
    %v1735 = vmul.f32 %v1734, 0.6931472
    %v1736 = vlog2.pop %v1577
    %v1737 = vmul.f32 %v1736, 0.6931472
    %v1738 = vlog2.pop %v1578
    %v1739 = vmul.f32 %v1738, 0.6931472
    %v1740 = vlog2.pop %v1579
    %v1741 = vmul.f32 %v1740, 0.6931472
    %v1742 = vlog2.pop %v1580
    %v1743 = vmul.f32 %v1742, 0.6931472
    %v1744 = vlog2.pop %v1581
    %v1745 = vmul.f32 %v1744, 0.6931472
    %v1746 = vlog2.pop %v1582
    %v1747 = vmul.f32 %v1746, 0.6931472
    %v1748 = vlog2.pop %v1583
    %v1749 = vmul.f32 %v1748, 0.6931472
    %v1750 = vlog2.pop %v1584
    %v1751 = vmul.f32 %v1750, 0.6931472
    %v1752 = vlog2.pop %v1585
    %v1753 = vmul.f32 %v1752, 0.6931472
    %v1754 = vlog2.pop %v1586
    %v1755 = vmul.f32 %v1754, 0.6931472
    %v1756 = vlog2.pop %v1587
    %v1757 = vmul.f32 %v1756, 0.6931472
    %v1758 = vlog2.pop %v1588
    %v1759 = vmul.f32 %v1758, 0.6931472
    %v1760 = vlog2.pop %v1589
    %v1761 = vmul.f32 %v1760, 0.6931472
    %v1762 = vlog2.pop %v1590
    %v1763 = vmul.f32 %v1762, 0.6931472
    %v1764 = vlog2.pop %v1591
    %v1765 = vmul.f32 %v1764, 0.6931472
    %v1766 = vlog2.pop %v1592
    %v1767 = vmul.f32 %v1766, 0.6931472
    %v1768 = vlog2.pop %v1593
    %v1769 = vmul.f32 %v1768, 0.6931472
    %v1770 = vlog2.pop %v1594
    %v1771 = vmul.f32 %v1770, 0.6931472
    %v1772 = vlog2.pop %v1595
    %v1773 = vmul.f32 %v1772, 0.6931472
    %v1774 = vlog2.pop %v1596
    %v1775 = vmul.f32 %v1774, 0.6931472
    %v1776 = vlog2.pop %v1597
    %v1777 = vmul.f32 %v1776, 0.6931472
    %v1778 = vlog2.pop %v1598
    %v1779 = vmul.f32 %v1778, 0.6931472
    %v1780 = vlog2.pop %v1599
    %v1781 = vmul.f32 %v1780, 0.6931472
    %v1782 = vlog2.pop %v1600
    %v1783 = vmul.f32 %v1782, 0.6931472
    %v1784 = vlog2.pop %v1601
    %v1785 = vmul.f32 %v1784, 0.6931472
    %v1786 = vlog2.pop %v1602
    %v1787 = vmul.f32 %v1786, 0.6931472
    %v1788 = vlog2.pop %v1603
    %v1789 = vmul.f32 %v1788, 0.6931472
    %v1790 = vlog2.pop %v1604
    %v1791 = vmul.f32 %v1790, 0.6931472
    %v1792 = vlog2.pop %v1605
    %v1793 = vmul.f32 %v1792, 0.6931472
    %v1794 = vlog2.pop %v1606
    %v1795 = vmul.f32 %v1794, 0.6931472
    %v1796 = vlog2.pop %v1607
    %v1797 = vmul.f32 %v1796, 0.6931472
    %v1798 = vlog2.pop %v1608
    %v1799 = vmul.f32 %v1798, 0.6931472
    %v1800 = vlog2.pop %v1609
    %v1801 = vmul.f32 %v1800, 0.6931472
    %v1802 = vlog2.pop %v1610
    %v1803 = vmul.f32 %v1802, 0.6931472
    %v1804 = vlog2.pop %v1611
    %v1805 = vmul.f32 %v1804, 0.6931472
    %v1806 = vlog2.pop %v1612
    %v1807 = vmul.f32 %v1806, 0.6931472
    %v1808 = vlog2.pop %v1613
    %v1809 = vmul.f32 %v1808, 0.6931472
    %v1810 = vadd.f32 %v798, %v1715
    %v1811 = vadd.f32 %v799, %v1717
    %v1812 = vadd.f32 %v800, %v1719
    %v1813 = vadd.f32 %v801, %v1721
    %v1814 = vadd.f32 %v802, %v1723
    %v1815 = vadd.f32 %v803, %v1725
    %v1816 = vadd.f32 %v804, %v1727
    %v1817 = vadd.f32 %v805, %v1729
    %v1818 = vadd.f32 %v806, %v1731
    %v1819 = vadd.f32 %v807, %v1733
    %v1820 = vadd.f32 %v808, %v1735
    %v1821 = vadd.f32 %v809, %v1737
    %v1822 = vadd.f32 %v810, %v1739
    %v1823 = vadd.f32 %v811, %v1741
    %v1824 = vadd.f32 %v812, %v1743
    %v1825 = vadd.f32 %v813, %v1745
    %v1826 = vadd.f32 %v814, %v1747
    %v1827 = vadd.f32 %v815, %v1749
    %v1828 = vadd.f32 %v816, %v1751
    %v1829 = vadd.f32 %v817, %v1753
    %v1830 = vadd.f32 %v818, %v1755
    %v1831 = vadd.f32 %v819, %v1757
    %v1832 = vadd.f32 %v820, %v1759
    %v1833 = vadd.f32 %v821, %v1761
    %v1834 = vadd.f32 %v822, %v1763
    %v1835 = vadd.f32 %v823, %v1765
    %v1836 = vadd.f32 %v824, %v1767
    %v1837 = vadd.f32 %v825, %v1769
    %v1838 = vadd.f32 %v826, %v1771
    %v1839 = vadd.f32 %v827, %v1773
    %v1840 = vadd.f32 %v828, %v1775
    %v1841 = vadd.f32 %v829, %v1777
    %v1842 = vadd.f32 %v830, %v1779
    %v1843 = vadd.f32 %v831, %v1781
    %v1844 = vadd.f32 %v832, %v1783
    %v1845 = vadd.f32 %v833, %v1785
    %v1846 = vadd.f32 %v834, %v1787
    %v1847 = vadd.f32 %v835, %v1789
    %v1848 = vadd.f32 %v836, %v1791
    %v1849 = vadd.f32 %v837, %v1793
    %v1850 = vadd.f32 %v838, %v1795
    %v1851 = vadd.f32 %v839, %v1797
    %v1852 = vadd.f32 %v840, %v1799
    %v1853 = vadd.f32 %v841, %v1801
    %v1854 = vadd.f32 %v842, %v1803
    %v1855 = vadd.f32 %v843, %v1805
    %v1856 = vadd.f32 %v844, %v1807
    %v1857 = vadd.f32 %v845, %v1809
    %1858 = vst.msk [vmem:[%s4] sm:$0xff] %vm1614, %v1810
    %1859 = vst.msk [vmem:[%s4 + $0x8] sm:$0xff] %vm1614, %v1811
    %1860 = vst.msk [vmem:[%s4 + $0x10] sm:$0xff] %vm1614, %v1812
    %1861 = vst.msk [vmem:[%s4 + $0x18] sm:$0xff] %vm1614, %v1813
    %1862 = vst.msk [vmem:[%s4 + $0x20] sm:$0xff] %vm1614, %v1814
    %1863 = vst.msk [vmem:[%s4 + $0x28] sm:$0xff] %vm1614, %v1815
    %1864 = vst.msk [vmem:[%s4 + $0x30] sm:$0xff] %vm1614, %v1816
    %1865 = vst.msk [vmem:[%s4 + $0x38] sm:$0xff] %vm1614, %v1817
    %1866 = vst.msk [vmem:[%s4 + $0x40] sm:$0xff] %vm1614, %v1818
    %1867 = vst.msk [vmem:[%s4 + $0x48] sm:$0xff] %vm1614, %v1819
    %1868 = vst.msk [vmem:[%s4 + $0x50] sm:$0xff] %vm1614, %v1820
    %1869 = vst.msk [vmem:[%s4 + $0x58] sm:$0xff] %vm1614, %v1821
    %1870 = vst.msk [vmem:[%s4 + $0x60] sm:$0xff] %vm1614, %v1822
    %1871 = vst.msk [vmem:[%s4 + $0x68] sm:$0xff] %vm1614, %v1823
    %1872 = vst.msk [vmem:[%s4 + $0x70] sm:$0xff] %vm1614, %v1824
    %1873 = vst.msk [vmem:[%s4 + $0x78] sm:$0xff] %vm1614, %v1825
    %1874 = vst.msk [vmem:[%s4 + $0x80] sm:$0xff] %vm1614, %v1826
    %1875 = vst.msk [vmem:[%s4 + $0x88] sm:$0xff] %vm1614, %v1827
    %1876 = vst.msk [vmem:[%s4 + $0x90] sm:$0xff] %vm1614, %v1828
    %1877 = vst.msk [vmem:[%s4 + $0x98] sm:$0xff] %vm1614, %v1829
    %1878 = vst.msk [vmem:[%s4 + $0xa0] sm:$0xff] %vm1614, %v1830
    %1879 = vst.msk [vmem:[%s4 + $0xa8] sm:$0xff] %vm1614, %v1831
    %1880 = vst.msk [vmem:[%s4 + $0xb0] sm:$0xff] %vm1614, %v1832
    %1881 = vst.msk [vmem:[%s4 + $0xb8] sm:$0xff] %vm1614, %v1833
    %1882 = vst.msk [vmem:[%s4 + $0xc0] sm:$0xff] %vm1614, %v1834
    %1883 = vst.msk [vmem:[%s4 + $0xc8] sm:$0xff] %vm1614, %v1835
    %1884 = vst.msk [vmem:[%s4 + $0xd0] sm:$0xff] %vm1614, %v1836
    %1885 = vst.msk [vmem:[%s4 + $0xd8] sm:$0xff] %vm1614, %v1837
    %1886 = vst.msk [vmem:[%s4 + $0xe0] sm:$0xff] %vm1614, %v1838
    %1887 = vst.msk [vmem:[%s4 + $0xe8] sm:$0xff] %vm1614, %v1839
    %1888 = vst.msk [vmem:[%s4 + $0xf0] sm:$0xff] %vm1614, %v1840
    %1889 = vst.msk [vmem:[%s4 + $0xf8] sm:$0xff] %vm1614, %v1841
    %1890 = vst.msk [vmem:[%s4 + $0x100] sm:$0xff] %vm1614, %v1842
    %1891 = vst.msk [vmem:[%s4 + $0x108] sm:$0xff] %vm1614, %v1843
    %1892 = vst.msk [vmem:[%s4 + $0x110] sm:$0xff] %vm1614, %v1844
    %1893 = vst.msk [vmem:[%s4 + $0x118] sm:$0xff] %vm1614, %v1845
    %1894 = vst.msk [vmem:[%s4 + $0x120] sm:$0xff] %vm1614, %v1846
    %1895 = vst.msk [vmem:[%s4 + $0x128] sm:$0xff] %vm1614, %v1847
    %1896 = vst.msk [vmem:[%s4 + $0x130] sm:$0xff] %vm1614, %v1848
    %1897 = vst.msk [vmem:[%s4 + $0x138] sm:$0xff] %vm1614, %v1849
    %1898 = vst.msk [vmem:[%s4 + $0x140] sm:$0xff] %vm1614, %v1850
    %1899 = vst.msk [vmem:[%s4 + $0x148] sm:$0xff] %vm1614, %v1851
    %1900 = vst.msk [vmem:[%s4 + $0x150] sm:$0xff] %vm1614, %v1852
    %1901 = vst.msk [vmem:[%s4 + $0x158] sm:$0xff] %vm1614, %v1853
    %1902 = vst.msk [vmem:[%s4 + $0x160] sm:$0xff] %vm1614, %v1854
    %1903 = vst.msk [vmem:[%s4 + $0x168] sm:$0xff] %vm1614, %v1855
    %1904 = vst.msk [vmem:[%s4 + $0x170] sm:$0xff] %vm1614, %v1856
    %1905 = vst.msk [vmem:[%s4 + $0x178] sm:$0xff] %vm1614, %v1857
  $region21: #{rnn_model_forward.4} parent=0 // pred_fallthru
    _
  // Predicated region
  $region22: #{rnn_model_forward.4} parent=0 // pred_check
    _
  $region23: #{rnn_model_forward.4} parent=0 // pred_check_branch
    %1907 = sbr.rel (0) target = $region25
  $region24: #{rnn_model_forward.4} parent=0 // pred_region
    _
  $region25: #{rnn_model_forward.4} parent=0 // pred_fallthru
    _
  // Predicated region
  $region26: #{rnn_model_forward.4} parent=0 // pred_check
    _
  $region27: #{rnn_model_forward.4} parent=0 // pred_check_branch
    %1909 = sbr.rel (0) target = $region29
  $region28: #{rnn_model_forward.4} parent=0 // pred_region
    _
  $region29: #{rnn_model_forward.4} parent=0 // pred_fallthru
    _
  // Predicated region
  $region30: #{rnn_model_forward.4} parent=0 // pred_check
    _
  $region31: #{rnn_model_forward.4} parent=0 // pred_check_branch
    %1911 = sbr.rel (0) target = $region33
  $region32: #{rnn_model_forward.4} parent=0 // pred_region
    _
  $region33: #{rnn_model_forward.4} parent=0 // pred_fallthru
    _
  // Predicated region
  $region34: #{rnn_model_forward.4} parent=0 // pred_check
    _
  $region35: #{rnn_model_forward.4} parent=0 // pred_check_branch
    %1913 = sbr.rel (0) target = $region37
  $region36: #{rnn_model_forward.4} parent=0 // pred_region
    _
  $region37: #{rnn_model_forward.4} parent=0 // pred_fallthru
    _

// kernel: rnn_model_forward.3
$region0: #{rnn_model_forward.3}
  #allocation0 [shape = 'u32[]', space=smem, size = 0x4, offset = 0x4, fixed_abs, tag = 'smem constant byte address 0x4 - core index']
  #allocation1 [shape = 'u32[144,128]{1,0:T(1,128)}', space=vmem, size = 0x12000, scoped, tag = 'internal scratch']
  #allocation2 [shape = 'f32[2,16,128]{2,1,0:T(8,128)}', space=vmem, size = 0x4000, scoped, tag = 'scratch operand']
  %s0 = inlined_call_operand.vmem [shape: bf16[24,16,128], index: 0, kind: input, shape index: {}]
  %s1 = inlined_call_operand.vmem [shape: f32[2,16,128], index: 1, kind: input, shape index: {}]
  %s2 = inlined_call_operand.vmem [shape: bf16[2,128,128], index: 2, kind: input, shape index: {}]
  %s3 = inlined_call_operand.vmem [shape: bf16[2,128,128], index: 3, kind: input, shape index: {}]
  %s4 = inlined_call_operand.vmem [shape: f32[2,1,128], index: 4, kind: input, shape index: {}]
  %s5 = inlined_call_operand.vmem [shape: bf16[24,16,128], index: 5, kind: output, shape index: {0}]
  %s6 = inlined_call_operand.vmem [shape: f32[2,16,128], index: 6, kind: output, shape index: {1}]
  %7 = xla_tuple %s5, %s6
  %s8 = sld [smem:[#allocation0]]
  $region69: #{rnn_model_forward.3} parent=0
    _
  %s10 = ssub.s32 1, %s8
  %s11 = scalar_select 0, %s10, %s8
  loop: start=0, step=1, limit=4
  $region2: #{rnn_model_forward.3} parent=0 // loop_pre_header
    _
  $region3: #{rnn_model_forward.3} parent=0 // loop_header
    %s13 = sphi 0, %s17
    %p14 = scmp.ge.s32.totalorder %s13, 4
    %s20 = sphi 0, %s32
    %s21 = sphi 0, %s28
    %s22 = sphi 0, %s20
    %s23 = sphi 0, %s21
    %s24 = sphi 0, %s22
    %s25 = sphi 0, %s23
    %s37 = sphi 0, %s39
    %s40 = sphi 0, %s37
    %s41 = sphi 0, %s40
    %s57 = sphi 0, %s41
    %s63 = sphi 0, %s65
    %s66 = sphi 0, %s63
    %s67 = sphi 0, %s66
    %s83 = sphi 0, %s67
    %s87 = sphi 0, %s87
    %s89 = sphi 0, %s87
    %s90 = sphi 0, %s89
    %s104 = sphi 0, %s90
    %s108 = sphi 0, %s108
    %s110 = sphi 0, %s108
    %s111 = sphi 0, %s110
    %s125 = sphi 0, %s111
    %s129 = sphi 0, %s129
    %s131 = sphi 0, %s129
    %s132 = sphi 0, %s131
    %s146 = sphi 0, %s132
    %s154 = sphi 0, %s156
    %s157 = sphi 0, %s154
    %s158 = sphi 0, %s157
    %s174 = sphi 0, %s158
    %s180 = sphi 0, %s182
    %s183 = sphi 0, %s180
    %s184 = sphi 0, %s183
    %s200 = sphi 0, %s184
  $region4: #{rnn_model_forward.3} parent=0 // loop_header_branch
    %16 = sbr.rel (%p14) target = $region8
  $region5: #{rnn_model_forward.3} parent=0 // loop_body
    %s18 = ssub.s32 %s13, 1
    %s19 = ssub.s32 %s13, 2
    %s26 = sadd.s32 1, %s21
    %p27 = scmp.ge.s32.totalorder %s26, 2
    %s28 = scalar_select %p27, 0, %s26
    %s29 = sadd.s32 1, %s20
    %s30 = scalar_select %p27, %s29, %s20
    %p31 = scmp.ge.s32.totalorder %s30, 1
    %s32 = scalar_select %p31, 0, %s30
    %s33 = ssub.s32 %s21, %s28
    %s34 = ssub.s32 %s20, %s32
    %s35 = sor.u32 %s33, %s34
    %p36 = scmp.eq.s32.totalorder %s35, 0
    %s38 = sadd.s32 %s37, 1
    %s39 = scalar_select %p36, %s37, %s38
    %p42 = pneg %p36
    %p43 = scmp.eq.s32.totalorder %s13, 1
    %p44 = por %p42, %p43
    %p45 = scmp.ne.s32.totalorder %s37, %s40
    %p46 = scmp.eq.s32.totalorder %s13, 0
    %p47 = por %p45, %p46
    %p48 = scmp.ne.s32.totalorder %s37, %s40
    %p49 = scmp.eq.s32.totalorder %s18, 1
    %p50 = por %p48, %p49
    %p51 = scmp.ne.s32.totalorder %s40, %s41
    %p52 = scmp.eq.s32.totalorder %s18, 0
    %p53 = por %p51, %p52
    %p54 = scmp.ne.s32.totalorder %s40, %s41
    %p55 = scmp.eq.s32.totalorder %s19, 1
    %p56 = por %p54, %p55
    %p58 = scmp.ne.s32.totalorder %s41, %s57
    %p59 = scmp.eq.s32.totalorder %s19, 0
    %p60 = por %p58, %p59
    %s61 = ssub.s32 %s20, %s32
    %p62 = scmp.eq.s32.totalorder %s61, 0
    %s64 = sadd.s32 %s63, 1
    %s65 = scalar_select %p62, %s63, %s64
    %p68 = pneg %p62
    %p69 = scmp.eq.s32.totalorder %s13, 1
    %p70 = por %p68, %p69
    %p71 = scmp.ne.s32.totalorder %s63, %s66
    %p72 = scmp.eq.s32.totalorder %s13, 0
    %p73 = por %p71, %p72
    %p74 = scmp.ne.s32.totalorder %s63, %s66
    %p75 = scmp.eq.s32.totalorder %s18, 1
    %p76 = por %p74, %p75
    %p77 = scmp.ne.s32.totalorder %s66, %s67
    %p78 = scmp.eq.s32.totalorder %s18, 0
    %p79 = por %p77, %p78
    %p80 = scmp.ne.s32.totalorder %s66, %s67
    %p81 = scmp.eq.s32.totalorder %s19, 1
    %p82 = por %p80, %p81
    %p84 = scmp.ne.s32.totalorder %s67, %s83
    %p85 = scmp.eq.s32.totalorder %s19, 0
    %p86 = por %p84, %p85
    %s88 = sadd.s32 %s87, 1
    %p91 = scmp.eq.s32.totalorder %s13, 1
    %p92 = scmp.ne.s32.totalorder %s87, %s89
    %p93 = scmp.eq.s32.totalorder %s13, 0
    %p94 = por %p92, %p93
    %p95 = scmp.ne.s32.totalorder %s87, %s89
    %p96 = scmp.eq.s32.totalorder %s18, 1
    %p97 = por %p95, %p96
    %p98 = scmp.ne.s32.totalorder %s89, %s90
    %p99 = scmp.eq.s32.totalorder %s18, 0
    %p100 = por %p98, %p99
    %p101 = scmp.ne.s32.totalorder %s89, %s90
    %p102 = scmp.eq.s32.totalorder %s19, 1
    %p103 = por %p101, %p102
    %p105 = scmp.ne.s32.totalorder %s90, %s104
    %p106 = scmp.eq.s32.totalorder %s19, 0
    %p107 = por %p105, %p106
    %s109 = sadd.s32 %s108, 1
    %p112 = scmp.eq.s32.totalorder %s13, 1
    %p113 = scmp.ne.s32.totalorder %s108, %s110
    %p114 = scmp.eq.s32.totalorder %s13, 0
    %p115 = por %p113, %p114
    %p116 = scmp.ne.s32.totalorder %s108, %s110
    %p117 = scmp.eq.s32.totalorder %s18, 1
    %p118 = por %p116, %p117
    %p119 = scmp.ne.s32.totalorder %s110, %s111
    %p120 = scmp.eq.s32.totalorder %s18, 0
    %p121 = por %p119, %p120
    %p122 = scmp.ne.s32.totalorder %s110, %s111
    %p123 = scmp.eq.s32.totalorder %s19, 1
    %p124 = por %p122, %p123
    %p126 = scmp.ne.s32.totalorder %s111, %s125
    %p127 = scmp.eq.s32.totalorder %s19, 0
    %p128 = por %p126, %p127
    %s130 = sadd.s32 %s129, 1
    %p133 = scmp.eq.s32.totalorder %s13, 1
    %p134 = scmp.ne.s32.totalorder %s129, %s131
    %p135 = scmp.eq.s32.totalorder %s13, 0
    %p136 = por %p134, %p135
    %p137 = scmp.ne.s32.totalorder %s129, %s131
    %p138 = scmp.eq.s32.totalorder %s18, 1
    %p139 = por %p137, %p138
    %p140 = scmp.ne.s32.totalorder %s131, %s132
    %p141 = scmp.eq.s32.totalorder %s18, 0
    %p142 = por %p140, %p141
    %p143 = scmp.ne.s32.totalorder %s131, %s132
    %p144 = scmp.eq.s32.totalorder %s19, 1
    %p145 = por %p143, %p144
    %p147 = scmp.ne.s32.totalorder %s132, %s146
    %p148 = scmp.eq.s32.totalorder %s19, 0
    %p149 = por %p147, %p148
    %s150 = ssub.s32 %s21, %s28
    %s151 = ssub.s32 %s20, %s32
    %s152 = sor.u32 %s150, %s151
    %p153 = scmp.eq.s32.totalorder %s152, 0
    %s155 = sadd.s32 %s154, 1
    %s156 = scalar_select %p153, %s154, %s155
    %p159 = pneg %p153
    %p160 = scmp.eq.s32.totalorder %s13, 1
    %p161 = por %p159, %p160
    %p162 = scmp.ne.s32.totalorder %s154, %s157
    %p163 = scmp.eq.s32.totalorder %s13, 0
    %p164 = por %p162, %p163
    %p165 = scmp.ne.s32.totalorder %s154, %s157
    %p166 = scmp.eq.s32.totalorder %s18, 1
    %p167 = por %p165, %p166
    %p168 = scmp.ne.s32.totalorder %s157, %s158
    %p169 = scmp.eq.s32.totalorder %s18, 0
    %p170 = por %p168, %p169
    %p171 = scmp.ne.s32.totalorder %s157, %s158
    %p172 = scmp.eq.s32.totalorder %s19, 1
    %p173 = por %p171, %p172
    %p175 = scmp.ne.s32.totalorder %s158, %s174
    %p176 = scmp.eq.s32.totalorder %s19, 0
    %p177 = por %p175, %p176
    %s178 = ssub.s32 %s20, %s32
    %p179 = scmp.eq.s32.totalorder %s178, 0
    %s181 = sadd.s32 %s180, 1
    %s182 = scalar_select %p179, %s180, %s181
    %p185 = pneg %p179
    %p186 = scmp.eq.s32.totalorder %s13, 1
    %p187 = por %p185, %p186
    %p188 = scmp.ne.s32.totalorder %s180, %s183
    %p189 = scmp.eq.s32.totalorder %s13, 0
    %p190 = por %p188, %p189
    %p191 = scmp.ne.s32.totalorder %s180, %s183
    %p192 = scmp.eq.s32.totalorder %s18, 1
    %p193 = por %p191, %p192
    %p194 = scmp.ne.s32.totalorder %s183, %s184
    %p195 = scmp.eq.s32.totalorder %s18, 0
    %p196 = por %p194, %p195
    %p197 = scmp.ne.s32.totalorder %s183, %s184
    %p198 = scmp.eq.s32.totalorder %s19, 1
    %p199 = por %p197, %p198
    %p201 = scmp.ne.s32.totalorder %s184, %s200
    %p202 = scmp.eq.s32.totalorder %s19, 0
    %p203 = por %p201, %p202
    %p204 = scmp.le.s32.totalorder 1, %s13
    %p205 = scmp.lt.s32.totalorder %s13, 3
    %p206 = pnand %p204, %p205
    %p207 = pneg %p206
    // Predicated region
    $region9: #{rnn_model_forward.3} parent=5 // pred_check
      _
    $region10: #{rnn_model_forward.3} parent=5 // pred_check_branch
      %209 = sbr.rel (%p206) target = $region12
    $region11: #{rnn_model_forward.3} parent=5 // pred_region
      %s210 = ssub.s32 %s13, 1
      // Predicated region
      $region13: #{rnn_model_forward.3} parent=11 // pred_check
        %p211 = pneg %p79
      $region14: #{rnn_model_forward.3} parent=11 // pred_check_branch
        %213 = sbr.rel (%p211) target = $region16
      $region15: #{rnn_model_forward.3} parent=11 // pred_region
        %s214 = smul.u32 2, %s22
        %p215 = scmp.lt.s32.totalorder %s214, 1
        %s216 = scalar_select %p215, %s214, 1
        %s217 = smul.addr %s216, 8
        %s218 = scalar_lea.vmem %s1, %s217
        %s219 = smul.u32 2, %s22
      $region16: #{rnn_model_forward.3} parent=11 // pred_fallthru
        _
      // Predicated region
      $region17: #{rnn_model_forward.3} parent=11 // pred_check
        %p220 = pneg %p100
      $region18: #{rnn_model_forward.3} parent=11 // pred_check_branch
        %222 = sbr.rel (%p220) target = $region20
      $region19: #{rnn_model_forward.3} parent=11 // pred_region
        _
      $region20: #{rnn_model_forward.3} parent=11 // pred_fallthru
        _
      // Predicated region
      $region21: #{rnn_model_forward.3} parent=11 // pred_check
        %p223 = pneg %p121
      $region22: #{rnn_model_forward.3} parent=11 // pred_check_branch
        %225 = sbr.rel (%p223) target = $region24
      $region23: #{rnn_model_forward.3} parent=11 // pred_region
        _
      $region24: #{rnn_model_forward.3} parent=11 // pred_fallthru
        _
      // Predicated region
      $region25: #{rnn_model_forward.3} parent=11 // pred_check
        %p226 = pneg %p142
      $region26: #{rnn_model_forward.3} parent=11 // pred_check_branch
        %228 = sbr.rel (%p226) target = $region28
      $region27: #{rnn_model_forward.3} parent=11 // pred_region
        _
      $region28: #{rnn_model_forward.3} parent=11 // pred_fallthru
        _
    $region12: #{rnn_model_forward.3} parent=5 // pred_fallthru
      _
    %p229 = scmp.lt.s32.totalorder %s13, 2
    // Predicated region
    $region29: #{rnn_model_forward.3} parent=5 // pred_check
      %p230 = pneg %p229
    $region30: #{rnn_model_forward.3} parent=5 // pred_check_branch
      %232 = sbr.rel (%p230) target = $region32
    $region31: #{rnn_model_forward.3} parent=5 // pred_region
      // Predicated region
      $region33: #{rnn_model_forward.3} parent=31 // pred_check
        %p233 = pneg %p47
      $region34: #{rnn_model_forward.3} parent=31 // pred_check_branch
        %235 = sbr.rel (%p233) target = $region36
      $region35: #{rnn_model_forward.3} parent=31 // pred_region
        %s236 = smul.u32 12, %s21
        %s237 = smul.u32 2, %s20
        %p238 = scmp.lt.s32.totalorder %s236, 23
        %s239 = scalar_select %p238, %s236, 23
        %p240 = scmp.lt.s32.totalorder %s237, 1
        %s241 = scalar_select %p240, %s237, 1
        %s242 = smul.addr %s239, 2
        %s243 = sadd.s32 %s241, %s242
        %s244 = smul.addr %s243, 4
        %s245 = scalar_lea.vmem %s0, %s244
        %s246 = smul.u32 12, %s21
        %s247 = smul.u32 2, %s20
      $region36: #{rnn_model_forward.3} parent=31 // pred_fallthru
        _
    $region32: #{rnn_model_forward.3} parent=5 // pred_fallthru
      _
    %p248 = scmp.le.s32.totalorder 1, %s13
    %p249 = scmp.lt.s32.totalorder %s13, 3
    %p250 = pnand %p248, %p249
    %p251 = pneg %p250
    // Predicated region
    $region37: #{rnn_model_forward.3} parent=5 // pred_check
      _
    $region38: #{rnn_model_forward.3} parent=5 // pred_check_branch
      %253 = sbr.rel (%p250) target = $region40
    $region39: #{rnn_model_forward.3} parent=5 // pred_region
      %s254 = ssub.s32 %s13, 1
      %s255 = smul.u32 12, %s23
      %s256 = smul.u32 2, %s22
      %p257 = scmp.lt.s32.totalorder %s255, 23
      %s258 = scalar_select %p257, %s255, 23
      %p259 = scmp.lt.s32.totalorder %s256, 1
      %s260 = scalar_select %p259, %s256, 1
      %s261 = smul.addr %s258, 2
      %s262 = sadd.s32 %s260, %s261
      %s263 = smul.addr %s262, 4
      %s264 = scalar_lea.vmem %s0, %s263
      %p265 = pneg %p53
      %p266 = pneg %p50
      %s267 = smul.u32 2, %s22
      %p268 = scmp.lt.s32.totalorder %s267, 1
      %s269 = scalar_select %p268, %s267, 1
      %s270 = smul.addr %s269, 8
      %s271 = scalar_lea.vmem %s1, %s270
      %p272 = pneg %p79
      %p273 = pneg %p76
      %p274 = pneg %p100
      %p275 = pneg %p97
      %p276 = pneg %p121
      %p277 = pneg %p118
      %p278 = pneg %p142
      %p279 = pneg %p139
      %p280 = pneg %p170
      %p281 = pneg %p167
      %s282 = smul.u32 12, %s23
      %s283 = smul.u32 2, %s22
      %p284 = scmp.lt.s32.totalorder %s282, 23
      %s285 = scalar_select %p284, %s282, 23
      %p286 = scmp.lt.s32.totalorder %s283, 1
      %s287 = scalar_select %p286, %s283, 1
      %s288 = smul.addr %s285, 2
      %s289 = sadd.s32 %s287, %s288
      %s290 = smul.addr %s289, 4
      %s291 = scalar_lea.vmem %s5, %s290
      %p292 = pneg %p196
      %p293 = pneg %p193
      %s294 = smul.u32 2, %s22
      %p295 = scmp.lt.s32.totalorder %s294, 1
      %s296 = scalar_select %p295, %s294, 1
      %s297 = smul.addr %s296, 8
      %s298 = scalar_lea.vmem %s6, %s297
      %s299 = smul.u32 12, %s23
      %s300 = smul.u32 2, %s22
      %p301 = scmp.lt.s32.totalorder %s299, 23
      %s302 = scalar_select %p301, %s299, 23
      %p303 = scmp.lt.s32.totalorder %s300, 1
      %s304 = scalar_select %p303, %s300, 1
      %s305 = smul.addr %s302, 2
      %s306 = sadd.s32 %s304, %s305
      %s307 = smul.addr %s306, 4
      %s308 = scalar_lea.vmem %s0, %s307
      %s309 = smul.u32 12, %s23
      %s310 = smul.u32 2, %s22
      %s311 = smul.u32 2, %s22
      %p312 = scmp.lt.s32.totalorder %s311, 1
      %s313 = scalar_select %p312, %s311, 1
      %s314 = smul.addr %s313, 8
      %s315 = scalar_lea.vmem %s1, %s314
      %s316 = smul.u32 2, %s22
      %s317 = smul.u32 12, %s23
      %s318 = smul.u32 2, %s22
      %p319 = scmp.lt.s32.totalorder %s317, 23
      %s320 = scalar_select %p319, %s317, 23
      %p321 = scmp.lt.s32.totalorder %s318, 1
      %s322 = scalar_select %p321, %s318, 1
      %s323 = smul.addr %s320, 2
      %s324 = sadd.s32 %s322, %s323
      %s325 = smul.addr %s324, 4
      %s326 = scalar_lea.vmem %s5, %s325
      %s327 = smul.u32 12, %s23
      %s328 = smul.u32 2, %s22
      %s329 = smul.u32 2, %s22
      %p330 = scmp.lt.s32.totalorder %s329, 1
      %s331 = scalar_select %p330, %s329, 1
      %s332 = smul.addr %s331, 8
      %s333 = scalar_lea.vmem %s6, %s332
      %s334 = smul.u32 2, %s22
      %p336 = scmp.eq.s32.totalorder %s23, 0
      // Predicated region
      $region41: #{rnn_model_forward.3} parent=39 // pred_check
        %p337 = pneg %p336
      $region42: #{rnn_model_forward.3} parent=39 // pred_check_branch
        %339 = sbr.rel (%p337) target = $region44
      $region43: #{rnn_model_forward.3} parent=39 // pred_region
        %v340 = vld [vmem:[%s315] sm:$0xff]
        %v341 = vld [vmem:[%s315 + $0x8] sm:$0xff]
        %v342 = vld [vmem:[%s315 + $0x10] sm:$0xff]
        %v343 = vld [vmem:[%s315 + $0x18] sm:$0xff]
        %344 = vst [vmem:[#allocation2] sm:$0xff] %v340
        %345 = vst [vmem:[#allocation2 + $0x8] sm:$0xff] %v341
        %346 = vst [vmem:[#allocation2 + $0x10] sm:$0xff] %v342
        %347 = vst [vmem:[#allocation2 + $0x18] sm:$0xff] %v343
      $region44: #{rnn_model_forward.3} parent=39 // pred_fallthru
        _
      %v348 = vld [vmem:[%s308] sm:$0xf]
      %v349 = vld [vmem:[%s308 + $0x4] sm:$0xf]
      %v350 = vld [vmem:[#allocation2] sm:$0xff]
      %v351 = vld [vmem:[#allocation2 + $0x8] sm:$0xff]
      %v352 = vld [vmem:[%s2] sm:$0xf]
      %v353 = vld [vmem:[%s2 + $0x4] sm:$0xf]
      %v354 = vld [vmem:[%s2 + $0x8] sm:$0xf]
      %v355 = vld [vmem:[%s2 + $0xc] sm:$0xf]
      %v356 = vld [vmem:[%s2 + $0x10] sm:$0xf]
      %v357 = vld [vmem:[%s2 + $0x14] sm:$0xf]
      %v358 = vld [vmem:[%s2 + $0x18] sm:$0xf]
      %v359 = vld [vmem:[%s2 + $0x1c] sm:$0xf]
      %v360 = vld [vmem:[%s2 + $0x20] sm:$0xf]
      %v361 = vld [vmem:[%s2 + $0x24] sm:$0xf]
      %v362 = vld [vmem:[%s2 + $0x28] sm:$0xf]
      %v363 = vld [vmem:[%s2 + $0x2c] sm:$0xf]
      %v364 = vld [vmem:[%s2 + $0x30] sm:$0xf]
      %v365 = vld [vmem:[%s2 + $0x34] sm:$0xf]
      %v366 = vld [vmem:[%s2 + $0x38] sm:$0xf]
      %v367 = vld [vmem:[%s2 + $0x3c] sm:$0xf]
      %v368 = vpack.c.bf16 %v351, %v350
      %v369 = vld [vmem:[%s3] sm:$0xf]
      %v370 = vld [vmem:[%s3 + $0x4] sm:$0xf]
      %v371 = vld [vmem:[%s3 + $0x8] sm:$0xf]
      %v372 = vld [vmem:[%s3 + $0xc] sm:$0xf]
      %v373 = vld [vmem:[%s3 + $0x10] sm:$0xf]
      %v374 = vld [vmem:[%s3 + $0x14] sm:$0xf]
      %v375 = vld [vmem:[%s3 + $0x18] sm:$0xf]
      %v376 = vld [vmem:[%s3 + $0x1c] sm:$0xf]
      %v377 = vld [vmem:[%s3 + $0x20] sm:$0xf]
      %v378 = vld [vmem:[%s3 + $0x24] sm:$0xf]
      %v379 = vld [vmem:[%s3 + $0x28] sm:$0xf]
      %v380 = vld [vmem:[%s3 + $0x2c] sm:$0xf]
      %v381 = vld [vmem:[%s3 + $0x30] sm:$0xf]
      %v382 = vld [vmem:[%s3 + $0x34] sm:$0xf]
      %v383 = vld [vmem:[%s3 + $0x38] sm:$0xf]
      %v384 = vld [vmem:[%s3 + $0x3c] sm:$0xf]
      %v401 = vunpack.c.l.b16 %v369
      %v402 = vunpack.c.l.b16 %v370
      %v403 = vunpack.c.l.b16 %v371
      %v404 = vunpack.c.l.b16 %v372
      %v405 = vunpack.c.l.b16 %v373
      %v406 = vunpack.c.l.b16 %v374
      %v407 = vunpack.c.l.b16 %v375
      %v408 = vunpack.c.l.b16 %v376
      %v409 = vunpack.c.l.b16 %v377
      %v410 = vunpack.c.l.b16 %v378
      %v411 = vunpack.c.l.b16 %v379
      %v412 = vunpack.c.l.b16 %v380
      %v413 = vunpack.c.l.b16 %v381
      %v414 = vunpack.c.l.b16 %v382
      %v415 = vunpack.c.l.b16 %v383
      %v416 = vunpack.c.l.b16 %v384
      %v417 = vpack.c.b16 %v402, %v401
      %v418 = vpack.c.b16 %v404, %v403
      %v419 = vpack.c.b16 %v406, %v405
      %v420 = vpack.c.b16 %v408, %v407
      %v421 = vpack.c.b16 %v410, %v409
      %v422 = vpack.c.b16 %v412, %v411
      %v423 = vpack.c.b16 %v414, %v413
      %v424 = vpack.c.b16 %v416, %v415
      %433 = vmatprep.subr.bf16.mxu0 0
      %434 = vmatpush1.bf16.msra.mxu0 %v417
      %435 = vmatprep.subr.bf16.mxu0 0
      %436 = vmatpush1.bf16.msra.mxu0 %v418
      %437 = vmatprep.subr.bf16.mxu0 0
      %438 = vmatpush1.bf16.msra.mxu0 %v419
      %439 = vmatprep.subr.bf16.mxu0 0
      %440 = vmatpush1.bf16.msra.mxu0 %v420
      %441 = vmatprep.subr.bf16.mxu0 0
      %442 = vmatpush1.bf16.msra.mxu0 %v421
      %443 = vmatprep.subr.bf16.mxu0 0
      %444 = vmatpush1.bf16.msra.mxu0 %v422
      %445 = vmatprep.subr.bf16.mxu0 0
      %446 = vmatpush1.bf16.msra.mxu0 %v423
      %447 = vmatprep.subr.bf16.mxu0 0
      %448 = vmatpush1.bf16.msra.mxu0 %v424
      %449 = vmatprep.subr.bf16.mxu0 0
      %450 = vmatpush1.bf16.msra.mxu0 0
      %451 = vmatprep.subr.bf16.mxu0 0
      %452 = vmatpush1.bf16.msra.mxu0 0
      %453 = vmatprep.subr.bf16.mxu0 0
      %454 = vmatpush1.bf16.msra.mxu0 0
      %455 = vmatprep.subr.bf16.mxu0 0
      %456 = vmatpush1.bf16.msra.mxu0 0
      %457 = vmatprep.subr.bf16.mxu0 0
      %458 = vmatpush1.bf16.msra.mxu0 0
      %459 = vmatprep.subr.bf16.mxu0 0
      %460 = vmatpush1.bf16.msra.mxu0 0
      %461 = vmatprep.subr.bf16.mxu0 0
      %462 = vmatpush1.bf16.msra.mxu0 0
      %463 = vmatprep.subr.bf16.mxu0 0
      %464 = vmatpush1.bf16.msra.mxu0 0
      %465 = vmatprep.mubr.bf16.mxu0 0
      %466 = vmatmul.mubr.bf16.gmra.mrb[0].mxu0 %v368
      %v467 = vpop.f32.mrb[0].mxu0
      %v468 = vadd.f32 0.0, %v467
      %v469 = vpop.f32.mrb[0].mxu0
      %v470 = vpop.f32.mrb[0].mxu0
      %v471 = vadd.f32 0.0, %v470
      %v472 = vpop.f32.mrb[0].mxu0
      %473 = vdwg.mxu0
      %v476 = vunpack.c.l.b16 %v348
      %v477 = vunpack.c.l.b16 %v349
      %v478 = vpack.c.b16 %v477, %v476
      %v496 = vunpack.c.l.b16 %v352
      %v497 = vunpack.c.l.b16 %v353
      %v498 = vunpack.c.l.b16 %v354
      %v499 = vunpack.c.l.b16 %v355
      %v500 = vunpack.c.l.b16 %v356
      %v501 = vunpack.c.l.b16 %v357
      %v502 = vunpack.c.l.b16 %v358
      %v503 = vunpack.c.l.b16 %v359
      %v504 = vunpack.c.l.b16 %v360
      %v505 = vunpack.c.l.b16 %v361
      %v506 = vunpack.c.l.b16 %v362
      %v507 = vunpack.c.l.b16 %v363
      %v508 = vunpack.c.l.b16 %v364
      %v509 = vunpack.c.l.b16 %v365
      %v510 = vunpack.c.l.b16 %v366
      %v511 = vunpack.c.l.b16 %v367
      %v512 = vpack.c.b16 %v497, %v496
      %v513 = vpack.c.b16 %v499, %v498
      %v514 = vpack.c.b16 %v501, %v500
      %v515 = vpack.c.b16 %v503, %v502
      %v516 = vpack.c.b16 %v505, %v504
      %v517 = vpack.c.b16 %v507, %v506
      %v518 = vpack.c.b16 %v509, %v508
      %v519 = vpack.c.b16 %v511, %v510
      %528 = vmatprep.subr.bf16.mxu0 0
      %529 = vmatpush1.bf16.msra.mxu0 %v512
      %530 = vmatprep.subr.bf16.mxu0 0
      %531 = vmatpush1.bf16.msra.mxu0 %v513
      %532 = vmatprep.subr.bf16.mxu0 0
      %533 = vmatpush1.bf16.msra.mxu0 %v514
      %534 = vmatprep.subr.bf16.mxu0 0
      %535 = vmatpush1.bf16.msra.mxu0 %v515
      %536 = vmatprep.subr.bf16.mxu0 0
      %537 = vmatpush1.bf16.msra.mxu0 %v516
      %538 = vmatprep.subr.bf16.mxu0 0
      %539 = vmatpush1.bf16.msra.mxu0 %v517
      %540 = vmatprep.subr.bf16.mxu0 0
      %541 = vmatpush1.bf16.msra.mxu0 %v518
      %542 = vmatprep.subr.bf16.mxu0 0
      %543 = vmatpush1.bf16.msra.mxu0 %v519
      %544 = vmatprep.subr.bf16.mxu0 0
      %545 = vmatpush1.bf16.msra.mxu0 0
      %546 = vmatprep.subr.bf16.mxu0 0
      %547 = vmatpush1.bf16.msra.mxu0 0
      %548 = vmatprep.subr.bf16.mxu0 0
      %549 = vmatpush1.bf16.msra.mxu0 0
      %550 = vmatprep.subr.bf16.mxu0 0
      %551 = vmatpush1.bf16.msra.mxu0 0
      %552 = vmatprep.subr.bf16.mxu0 0
      %553 = vmatpush1.bf16.msra.mxu0 0
      %554 = vmatprep.subr.bf16.mxu0 0
      %555 = vmatpush1.bf16.msra.mxu0 0
      %556 = vmatprep.subr.bf16.mxu0 0
      %557 = vmatpush1.bf16.msra.mxu0 0
      %558 = vmatprep.subr.bf16.mxu0 0
      %559 = vmatpush1.bf16.msra.mxu0 0
      %560 = vmatprep.mubr.bf16.mxu0 0
      %561 = vmatmul.mubr.bf16.gmra.mrb[0].mxu0 %v478
      %v562 = vpop.f32.mrb[0].mxu0
      %v563 = vadd.f32 %v468, %v562
      %v564 = vpop.f32.mrb[0].mxu0
      %v565 = vpop.f32.mrb[0].mxu0
      %v566 = vadd.f32 %v471, %v565
      %v567 = vpop.f32.mrb[0].mxu0
      %568 = vdwg.mxu0
      %v569 = vld [vmem:[%s4] sm:$0x1]
      %v571 = vlaneseq
      %v572 = vshrl.u32 %v571, 7
      %v573 = vsub.s32 0, %v572
      %v574 = vrot.slane %v569, %v573
      %v576 = vadd.f32 %v563, %v574
      %v577 = vadd.f32 %v566, %v574
      %v578 = vtanh.pop %v576
      %v579 = vtanh.pop %v577
      %580 = vst [vmem:[#allocation2] sm:$0xff] %v578
      %581 = vst [vmem:[#allocation2 + $0x8] sm:$0xff] %v579
      %s582 = scalar_lea.vmem [#allocation2], 16
      %v583 = vld [vmem:[%s582] sm:$0xff]
      %v584 = vld [vmem:[%s582 + $0x8] sm:$0xff]
      %v585 = vpack.c.bf16 %v579, %v578
      %s586 = scalar_lea.vmem %s2, 64
      %v587 = vld [vmem:[%s586] sm:$0xf]
      %v588 = vld [vmem:[%s586 + $0x4] sm:$0xf]
      %v589 = vld [vmem:[%s586 + $0x8] sm:$0xf]
      %v590 = vld [vmem:[%s586 + $0xc] sm:$0xf]
      %v591 = vld [vmem:[%s586 + $0x10] sm:$0xf]
      %v592 = vld [vmem:[%s586 + $0x14] sm:$0xf]
      %v593 = vld [vmem:[%s586 + $0x18] sm:$0xf]
      %v594 = vld [vmem:[%s586 + $0x1c] sm:$0xf]
      %v595 = vld [vmem:[%s586 + $0x20] sm:$0xf]
      %v596 = vld [vmem:[%s586 + $0x24] sm:$0xf]
      %v597 = vld [vmem:[%s586 + $0x28] sm:$0xf]
      %v598 = vld [vmem:[%s586 + $0x2c] sm:$0xf]
      %v599 = vld [vmem:[%s586 + $0x30] sm:$0xf]
      %v600 = vld [vmem:[%s586 + $0x34] sm:$0xf]
      %v601 = vld [vmem:[%s586 + $0x38] sm:$0xf]
      %v602 = vld [vmem:[%s586 + $0x3c] sm:$0xf]
      %v603 = vpack.c.bf16 %v584, %v583
      %s604 = scalar_lea.vmem %s3, 64
      %v605 = vld [vmem:[%s604] sm:$0xf]
      %v606 = vld [vmem:[%s604 + $0x4] sm:$0xf]
      %v607 = vld [vmem:[%s604 + $0x8] sm:$0xf]
      %v608 = vld [vmem:[%s604 + $0xc] sm:$0xf]
      %v609 = vld [vmem:[%s604 + $0x10] sm:$0xf]
      %v610 = vld [vmem:[%s604 + $0x14] sm:$0xf]
      %v611 = vld [vmem:[%s604 + $0x18] sm:$0xf]
      %v612 = vld [vmem:[%s604 + $0x1c] sm:$0xf]
      %v613 = vld [vmem:[%s604 + $0x20] sm:$0xf]
      %v614 = vld [vmem:[%s604 + $0x24] sm:$0xf]
      %v615 = vld [vmem:[%s604 + $0x28] sm:$0xf]
      %v616 = vld [vmem:[%s604 + $0x2c] sm:$0xf]
      %v617 = vld [vmem:[%s604 + $0x30] sm:$0xf]
      %v618 = vld [vmem:[%s604 + $0x34] sm:$0xf]
      %v619 = vld [vmem:[%s604 + $0x38] sm:$0xf]
      %v620 = vld [vmem:[%s604 + $0x3c] sm:$0xf]
      %v637 = vunpack.c.l.b16 %v605
      %v638 = vunpack.c.l.b16 %v606
      %v639 = vunpack.c.l.b16 %v607
      %v640 = vunpack.c.l.b16 %v608
      %v641 = vunpack.c.l.b16 %v609
      %v642 = vunpack.c.l.b16 %v610
      %v643 = vunpack.c.l.b16 %v611
      %v644 = vunpack.c.l.b16 %v612
      %v645 = vunpack.c.l.b16 %v613
      %v646 = vunpack.c.l.b16 %v614
      %v647 = vunpack.c.l.b16 %v615
      %v648 = vunpack.c.l.b16 %v616
      %v649 = vunpack.c.l.b16 %v617
      %v650 = vunpack.c.l.b16 %v618
      %v651 = vunpack.c.l.b16 %v619
      %v652 = vunpack.c.l.b16 %v620
      %v653 = vpack.c.b16 %v638, %v637
      %v654 = vpack.c.b16 %v640, %v639
      %v655 = vpack.c.b16 %v642, %v641
      %v656 = vpack.c.b16 %v644, %v643
      %v657 = vpack.c.b16 %v646, %v645
      %v658 = vpack.c.b16 %v648, %v647
      %v659 = vpack.c.b16 %v650, %v649
      %v660 = vpack.c.b16 %v652, %v651
      %669 = vmatprep.subr.bf16.mxu0 0
      %670 = vmatpush1.bf16.msra.mxu0 %v653
      %671 = vmatprep.subr.bf16.mxu0 0
      %672 = vmatpush1.bf16.msra.mxu0 %v654
      %673 = vmatprep.subr.bf16.mxu0 0
      %674 = vmatpush1.bf16.msra.mxu0 %v655
      %675 = vmatprep.subr.bf16.mxu0 0
      %676 = vmatpush1.bf16.msra.mxu0 %v656
      %677 = vmatprep.subr.bf16.mxu0 0
      %678 = vmatpush1.bf16.msra.mxu0 %v657
      %679 = vmatprep.subr.bf16.mxu0 0
      %680 = vmatpush1.bf16.msra.mxu0 %v658
      %681 = vmatprep.subr.bf16.mxu0 0
      %682 = vmatpush1.bf16.msra.mxu0 %v659
      %683 = vmatprep.subr.bf16.mxu0 0
      %684 = vmatpush1.bf16.msra.mxu0 %v660
      %685 = vmatprep.subr.bf16.mxu0 0
      %686 = vmatpush1.bf16.msra.mxu0 0
      %687 = vmatprep.subr.bf16.mxu0 0
      %688 = vmatpush1.bf16.msra.mxu0 0
      %689 = vmatprep.subr.bf16.mxu0 0
      %690 = vmatpush1.bf16.msra.mxu0 0
      %691 = vmatprep.subr.bf16.mxu0 0
      %692 = vmatpush1.bf16.msra.mxu0 0
      %693 = vmatprep.subr.bf16.mxu0 0
      %694 = vmatpush1.bf16.msra.mxu0 0
      %695 = vmatprep.subr.bf16.mxu0 0
      %696 = vmatpush1.bf16.msra.mxu0 0
      %697 = vmatprep.subr.bf16.mxu0 0
      %698 = vmatpush1.bf16.msra.mxu0 0
      %699 = vmatprep.subr.bf16.mxu0 0
      %700 = vmatpush1.bf16.msra.mxu0 0
      %701 = vmatprep.mubr.bf16.mxu0 0
      %702 = vmatmul.mubr.bf16.gmra.mrb[0].mxu0 %v603
      %v703 = vpop.f32.mrb[0].mxu0
      %v704 = vadd.f32 0.0, %v703
      %v705 = vpop.f32.mrb[0].mxu0
      %v706 = vpop.f32.mrb[0].mxu0
      %v707 = vadd.f32 0.0, %v706
      %v708 = vpop.f32.mrb[0].mxu0
      %709 = vdwg.mxu0
      %v726 = vunpack.c.l.b16 %v587
      %v727 = vunpack.c.l.b16 %v588
      %v728 = vunpack.c.l.b16 %v589
      %v729 = vunpack.c.l.b16 %v590
      %v730 = vunpack.c.l.b16 %v591
      %v731 = vunpack.c.l.b16 %v592
      %v732 = vunpack.c.l.b16 %v593
      %v733 = vunpack.c.l.b16 %v594
      %v734 = vunpack.c.l.b16 %v595
      %v735 = vunpack.c.l.b16 %v596
      %v736 = vunpack.c.l.b16 %v597
      %v737 = vunpack.c.l.b16 %v598
      %v738 = vunpack.c.l.b16 %v599
      %v739 = vunpack.c.l.b16 %v600
      %v740 = vunpack.c.l.b16 %v601
      %v741 = vunpack.c.l.b16 %v602
      %v742 = vpack.c.b16 %v727, %v726
      %v743 = vpack.c.b16 %v729, %v728
      %v744 = vpack.c.b16 %v731, %v730
      %v745 = vpack.c.b16 %v733, %v732
      %v746 = vpack.c.b16 %v735, %v734
      %v747 = vpack.c.b16 %v737, %v736
      %v748 = vpack.c.b16 %v739, %v738
      %v749 = vpack.c.b16 %v741, %v740
      %758 = vmatprep.subr.bf16.mxu0 0
      %759 = vmatpush1.bf16.msra.mxu0 %v742
      %760 = vmatprep.subr.bf16.mxu0 0
      %761 = vmatpush1.bf16.msra.mxu0 %v743
      %762 = vmatprep.subr.bf16.mxu0 0
      %763 = vmatpush1.bf16.msra.mxu0 %v744
      %764 = vmatprep.subr.bf16.mxu0 0
      %765 = vmatpush1.bf16.msra.mxu0 %v745
      %766 = vmatprep.subr.bf16.mxu0 0
      %767 = vmatpush1.bf16.msra.mxu0 %v746
      %768 = vmatprep.subr.bf16.mxu0 0
      %769 = vmatpush1.bf16.msra.mxu0 %v747
      %770 = vmatprep.subr.bf16.mxu0 0
      %771 = vmatpush1.bf16.msra.mxu0 %v748
      %772 = vmatprep.subr.bf16.mxu0 0
      %773 = vmatpush1.bf16.msra.mxu0 %v749
      %774 = vmatprep.subr.bf16.mxu0 0
      %775 = vmatpush1.bf16.msra.mxu0 0
      %776 = vmatprep.subr.bf16.mxu0 0
      %777 = vmatpush1.bf16.msra.mxu0 0
      %778 = vmatprep.subr.bf16.mxu0 0
      %779 = vmatpush1.bf16.msra.mxu0 0
      %780 = vmatprep.subr.bf16.mxu0 0
      %781 = vmatpush1.bf16.msra.mxu0 0
      %782 = vmatprep.subr.bf16.mxu0 0
      %783 = vmatpush1.bf16.msra.mxu0 0
      %784 = vmatprep.subr.bf16.mxu0 0
      %785 = vmatpush1.bf16.msra.mxu0 0
      %786 = vmatprep.subr.bf16.mxu0 0
      %787 = vmatpush1.bf16.msra.mxu0 0
      %788 = vmatprep.subr.bf16.mxu0 0
      %789 = vmatpush1.bf16.msra.mxu0 0
      %790 = vmatprep.mubr.bf16.mxu0 0
      %791 = vmatmul.mubr.bf16.gmra.mrb[0].mxu0 %v585
      %v792 = vpop.f32.mrb[0].mxu0
      %v793 = vadd.f32 %v704, %v792
      %v794 = vpop.f32.mrb[0].mxu0
      %v795 = vpop.f32.mrb[0].mxu0
      %v796 = vadd.f32 %v707, %v795
      %v797 = vpop.f32.mrb[0].mxu0
      %798 = vdwg.mxu0
      %s799 = scalar_lea.vmem %s4, 1
      %v800 = vld [vmem:[%s799] sm:$0x1]
      %v802 = vlaneseq
      %v803 = vshrl.u32 %v802, 7
      %v804 = vsub.s32 0, %v803
      %v805 = vrot.slane %v800, %v804
      %v807 = vadd.f32 %v793, %v805
      %v808 = vadd.f32 %v796, %v805
      %v809 = vtanh.pop %v807
      %v810 = vtanh.pop %v808
      %811 = vst [vmem:[%s582] sm:$0xff] %v809
      %812 = vst [vmem:[%s582 + $0x8] sm:$0xff] %v810
      %v813 = vpack.c.bf16 %v810, %v809
      %v815 = vunpack.c.l.b16 %v813
      %v816 = vunpack.c.h.b16 %v813
      %v817 = vpack.c.b16 %v815, %v815
      %v818 = vpack.c.b16 %v816, %v816
      %821 = vst [vmem:[%s326] sm:$0xf] %v817
      %822 = vst [vmem:[%s326 + $0x4] sm:$0xf] %v818
      %s823 = scalar_lea.vmem %s308, 8
      %v824 = vld [vmem:[%s823] sm:$0xf]
      %v825 = vld [vmem:[%s823 + $0x4] sm:$0xf]
      %v826 = vld [vmem:[#allocation2] sm:$0xff]
      %v827 = vld [vmem:[#allocation2 + $0x8] sm:$0xff]
      %v828 = vld [vmem:[%s2] sm:$0xf]
      %v829 = vld [vmem:[%s2 + $0x4] sm:$0xf]
      %v830 = vld [vmem:[%s2 + $0x8] sm:$0xf]
      %v831 = vld [vmem:[%s2 + $0xc] sm:$0xf]
      %v832 = vld [vmem:[%s2 + $0x10] sm:$0xf]
      %v833 = vld [vmem:[%s2 + $0x14] sm:$0xf]
      %v834 = vld [vmem:[%s2 + $0x18] sm:$0xf]
      %v835 = vld [vmem:[%s2 + $0x1c] sm:$0xf]
      %v836 = vld [vmem:[%s2 + $0x20] sm:$0xf]
      %v837 = vld [vmem:[%s2 + $0x24] sm:$0xf]
      %v838 = vld [vmem:[%s2 + $0x28] sm:$0xf]
      %v839 = vld [vmem:[%s2 + $0x2c] sm:$0xf]
      %v840 = vld [vmem:[%s2 + $0x30] sm:$0xf]
      %v841 = vld [vmem:[%s2 + $0x34] sm:$0xf]
      %v842 = vld [vmem:[%s2 + $0x38] sm:$0xf]
      %v843 = vld [vmem:[%s2 + $0x3c] sm:$0xf]
      %v844 = vpack.c.bf16 %v827, %v826
      %v845 = vld [vmem:[%s3] sm:$0xf]
      %v846 = vld [vmem:[%s3 + $0x4] sm:$0xf]
      %v847 = vld [vmem:[%s3 + $0x8] sm:$0xf]
      %v848 = vld [vmem:[%s3 + $0xc] sm:$0xf]
      %v849 = vld [vmem:[%s3 + $0x10] sm:$0xf]
      %v850 = vld [vmem:[%s3 + $0x14] sm:$0xf]
      %v851 = vld [vmem:[%s3 + $0x18] sm:$0xf]
      %v852 = vld [vmem:[%s3 + $0x1c] sm:$0xf]
      %v853 = vld [vmem:[%s3 + $0x20] sm:$0xf]
      %v854 = vld [vmem:[%s3 + $0x24] sm:$0xf]
      %v855 = vld [vmem:[%s3 + $0x28] sm:$0xf]
      %v856 = vld [vmem:[%s3 + $0x2c] sm:$0xf]
      %v857 = vld [vmem:[%s3 + $0x30] sm:$0xf]
      %v858 = vld [vmem:[%s3 + $0x34] sm:$0xf]
      %v859 = vld [vmem:[%s3 + $0x38] sm:$0xf]
      %v860 = vld [vmem:[%s3 + $0x3c] sm:$0xf]
      %v877 = vunpack.c.l.b16 %v845
      %v878 = vunpack.c.l.b16 %v846
      %v879 = vunpack.c.l.b16 %v847
      %v880 = vunpack.c.l.b16 %v848
      %v881 = vunpack.c.l.b16 %v849
      %v882 = vunpack.c.l.b16 %v850
      %v883 = vunpack.c.l.b16 %v851
      %v884 = vunpack.c.l.b16 %v852
      %v885 = vunpack.c.l.b16 %v853
      %v886 = vunpack.c.l.b16 %v854
      %v887 = vunpack.c.l.b16 %v855
      %v888 = vunpack.c.l.b16 %v856
      %v889 = vunpack.c.l.b16 %v857
      %v890 = vunpack.c.l.b16 %v858
      %v891 = vunpack.c.l.b16 %v859
      %v892 = vunpack.c.l.b16 %v860
      %v893 = vpack.c.b16 %v878, %v877
      %v894 = vpack.c.b16 %v880, %v879
      %v895 = vpack.c.b16 %v882, %v881
      %v896 = vpack.c.b16 %v884, %v883
      %v897 = vpack.c.b16 %v886, %v885
      %v898 = vpack.c.b16 %v888, %v887
      %v899 = vpack.c.b16 %v890, %v889
      %v900 = vpack.c.b16 %v892, %v891
      %909 = vmatprep.subr.bf16.mxu0 0
      %910 = vmatpush1.bf16.msra.mxu0 %v893
      %911 = vmatprep.subr.bf16.mxu0 0
      %912 = vmatpush1.bf16.msra.mxu0 %v894
      %913 = vmatprep.subr.bf16.mxu0 0
      %914 = vmatpush1.bf16.msra.mxu0 %v895
      %915 = vmatprep.subr.bf16.mxu0 0
      %916 = vmatpush1.bf16.msra.mxu0 %v896
      %917 = vmatprep.subr.bf16.mxu0 0
      %918 = vmatpush1.bf16.msra.mxu0 %v897
      %919 = vmatprep.subr.bf16.mxu0 0
      %920 = vmatpush1.bf16.msra.mxu0 %v898
      %921 = vmatprep.subr.bf16.mxu0 0
      %922 = vmatpush1.bf16.msra.mxu0 %v899
      %923 = vmatprep.subr.bf16.mxu0 0
      %924 = vmatpush1.bf16.msra.mxu0 %v900
      %925 = vmatprep.subr.bf16.mxu0 0
      %926 = vmatpush1.bf16.msra.mxu0 0
      %927 = vmatprep.subr.bf16.mxu0 0
      %928 = vmatpush1.bf16.msra.mxu0 0
      %929 = vmatprep.subr.bf16.mxu0 0
      %930 = vmatpush1.bf16.msra.mxu0 0
      %931 = vmatprep.subr.bf16.mxu0 0
      %932 = vmatpush1.bf16.msra.mxu0 0
      %933 = vmatprep.subr.bf16.mxu0 0
      %934 = vmatpush1.bf16.msra.mxu0 0
      %935 = vmatprep.subr.bf16.mxu0 0
      %936 = vmatpush1.bf16.msra.mxu0 0
      %937 = vmatprep.subr.bf16.mxu0 0
      %938 = vmatpush1.bf16.msra.mxu0 0
      %939 = vmatprep.subr.bf16.mxu0 0
      %940 = vmatpush1.bf16.msra.mxu0 0
      %941 = vmatprep.mubr.bf16.mxu0 0
      %942 = vmatmul.mubr.bf16.gmra.mrb[0].mxu0 %v844
      %v943 = vpop.f32.mrb[0].mxu0
      %v944 = vadd.f32 0.0, %v943
      %v945 = vpop.f32.mrb[0].mxu0
      %v946 = vpop.f32.mrb[0].mxu0
      %v947 = vadd.f32 0.0, %v946
      %v948 = vpop.f32.mrb[0].mxu0
      %949 = vdwg.mxu0
      %v952 = vunpack.c.l.b16 %v824
      %v953 = vunpack.c.l.b16 %v825
      %v954 = vpack.c.b16 %v953, %v952
      %v972 = vunpack.c.l.b16 %v828
      %v973 = vunpack.c.l.b16 %v829
      %v974 = vunpack.c.l.b16 %v830
      %v975 = vunpack.c.l.b16 %v831
      %v976 = vunpack.c.l.b16 %v832
      %v977 = vunpack.c.l.b16 %v833
      %v978 = vunpack.c.l.b16 %v834
      %v979 = vunpack.c.l.b16 %v835
      %v980 = vunpack.c.l.b16 %v836
      %v981 = vunpack.c.l.b16 %v837
      %v982 = vunpack.c.l.b16 %v838
      %v983 = vunpack.c.l.b16 %v839
      %v984 = vunpack.c.l.b16 %v840
      %v985 = vunpack.c.l.b16 %v841
      %v986 = vunpack.c.l.b16 %v842
      %v987 = vunpack.c.l.b16 %v843
      %v988 = vpack.c.b16 %v973, %v972
      %v989 = vpack.c.b16 %v975, %v974
      %v990 = vpack.c.b16 %v977, %v976
      %v991 = vpack.c.b16 %v979, %v978
      %v992 = vpack.c.b16 %v981, %v980
      %v993 = vpack.c.b16 %v983, %v982
      %v994 = vpack.c.b16 %v985, %v984
      %v995 = vpack.c.b16 %v987, %v986
      %1004 = vmatprep.subr.bf16.mxu0 0
      %1005 = vmatpush1.bf16.msra.mxu0 %v988
      %1006 = vmatprep.subr.bf16.mxu0 0
      %1007 = vmatpush1.bf16.msra.mxu0 %v989
      %1008 = vmatprep.subr.bf16.mxu0 0
      %1009 = vmatpush1.bf16.msra.mxu0 %v990
      %1010 = vmatprep.subr.bf16.mxu0 0
      %1011 = vmatpush1.bf16.msra.mxu0 %v991
      %1012 = vmatprep.subr.bf16.mxu0 0
      %1013 = vmatpush1.bf16.msra.mxu0 %v992
      %1014 = vmatprep.subr.bf16.mxu0 0
      %1015 = vmatpush1.bf16.msra.mxu0 %v993
      %1016 = vmatprep.subr.bf16.mxu0 0
      %1017 = vmatpush1.bf16.msra.mxu0 %v994
      %1018 = vmatprep.subr.bf16.mxu0 0
      %1019 = vmatpush1.bf16.msra.mxu0 %v995
      %1020 = vmatprep.subr.bf16.mxu0 0
      %1021 = vmatpush1.bf16.msra.mxu0 0
      %1022 = vmatprep.subr.bf16.mxu0 0
      %1023 = vmatpush1.bf16.msra.mxu0 0
      %1024 = vmatprep.subr.bf16.mxu0 0
      %1025 = vmatpush1.bf16.msra.mxu0 0
      %1026 = vmatprep.subr.bf16.mxu0 0
      %1027 = vmatpush1.bf16.msra.mxu0 0
      %1028 = vmatprep.subr.bf16.mxu0 0
      %1029 = vmatpush1.bf16.msra.mxu0 0
      %1030 = vmatprep.subr.bf16.mxu0 0
      %1031 = vmatpush1.bf16.msra.mxu0 0
      %1032 = vmatprep.subr.bf16.mxu0 0
      %1033 = vmatpush1.bf16.msra.mxu0 0
      %1034 = vmatprep.subr.bf16.mxu0 0
      %1035 = vmatpush1.bf16.msra.mxu0 0
      %1036 = vmatprep.mubr.bf16.mxu0 0
      %1037 = vmatmul.mubr.bf16.gmra.mrb[0].mxu0 %v954
      %v1038 = vpop.f32.mrb[0].mxu0
      %v1039 = vadd.f32 %v944, %v1038
      %v1040 = vpop.f32.mrb[0].mxu0
      %v1041 = vpop.f32.mrb[0].mxu0
      %v1042 = vadd.f32 %v947, %v1041
      %v1043 = vpop.f32.mrb[0].mxu0
      %1044 = vdwg.mxu0
      %v1045 = vld [vmem:[%s4] sm:$0x1]
      %v1047 = vlaneseq
      %v1048 = vshrl.u32 %v1047, 7
      %v1049 = vsub.s32 0, %v1048
      %v1050 = vrot.slane %v1045, %v1049
      %v1052 = vadd.f32 %v1039, %v1050
      %v1053 = vadd.f32 %v1042, %v1050
      %v1054 = vtanh.pop %v1052
      %v1055 = vtanh.pop %v1053
      %1056 = vst [vmem:[#allocation2] sm:$0xff] %v1054
      %1057 = vst [vmem:[#allocation2 + $0x8] sm:$0xff] %v1055
      %v1058 = vld [vmem:[%s582] sm:$0xff]
      %v1059 = vld [vmem:[%s582 + $0x8] sm:$0xff]
      %v1060 = vpack.c.bf16 %v1055, %v1054
      %v1061 = vld [vmem:[%s586] sm:$0xf]
      %v1062 = vld [vmem:[%s586 + $0x4] sm:$0xf]
      %v1063 = vld [vmem:[%s586 + $0x8] sm:$0xf]
      %v1064 = vld [vmem:[%s586 + $0xc] sm:$0xf]
      %v1065 = vld [vmem:[%s586 + $0x10] sm:$0xf]
      %v1066 = vld [vmem:[%s586 + $0x14] sm:$0xf]
      %v1067 = vld [vmem:[%s586 + $0x18] sm:$0xf]
      %v1068 = vld [vmem:[%s586 + $0x1c] sm:$0xf]
      %v1069 = vld [vmem:[%s586 + $0x20] sm:$0xf]
      %v1070 = vld [vmem:[%s586 + $0x24] sm:$0xf]
      %v1071 = vld [vmem:[%s586 + $0x28] sm:$0xf]
      %v1072 = vld [vmem:[%s586 + $0x2c] sm:$0xf]
      %v1073 = vld [vmem:[%s586 + $0x30] sm:$0xf]
      %v1074 = vld [vmem:[%s586 + $0x34] sm:$0xf]
      %v1075 = vld [vmem:[%s586 + $0x38] sm:$0xf]
      %v1076 = vld [vmem:[%s586 + $0x3c] sm:$0xf]
      %v1077 = vpack.c.bf16 %v1059, %v1058
      %v1078 = vld [vmem:[%s604] sm:$0xf]
      %v1079 = vld [vmem:[%s604 + $0x4] sm:$0xf]
      %v1080 = vld [vmem:[%s604 + $0x8] sm:$0xf]
      %v1081 = vld [vmem:[%s604 + $0xc] sm:$0xf]
      %v1082 = vld [vmem:[%s604 + $0x10] sm:$0xf]
      %v1083 = vld [vmem:[%s604 + $0x14] sm:$0xf]
      %v1084 = vld [vmem:[%s604 + $0x18] sm:$0xf]
      %v1085 = vld [vmem:[%s604 + $0x1c] sm:$0xf]
      %v1086 = vld [vmem:[%s604 + $0x20] sm:$0xf]
      %v1087 = vld [vmem:[%s604 + $0x24] sm:$0xf]
      %v1088 = vld [vmem:[%s604 + $0x28] sm:$0xf]
      %v1089 = vld [vmem:[%s604 + $0x2c] sm:$0xf]
      %v1090 = vld [vmem:[%s604 + $0x30] sm:$0xf]
      %v1091 = vld [vmem:[%s604 + $0x34] sm:$0xf]
      %v1092 = vld [vmem:[%s604 + $0x38] sm:$0xf]
      %v1093 = vld [vmem:[%s604 + $0x3c] sm:$0xf]
      %v1110 = vunpack.c.l.b16 %v1078
      %v1111 = vunpack.c.l.b16 %v1079
      %v1112 = vunpack.c.l.b16 %v1080
      %v1113 = vunpack.c.l.b16 %v1081
      %v1114 = vunpack.c.l.b16 %v1082
      %v1115 = vunpack.c.l.b16 %v1083
      %v1116 = vunpack.c.l.b16 %v1084
      %v1117 = vunpack.c.l.b16 %v1085
      %v1118 = vunpack.c.l.b16 %v1086
      %v1119 = vunpack.c.l.b16 %v1087
      %v1120 = vunpack.c.l.b16 %v1088
      %v1121 = vunpack.c.l.b16 %v1089
      %v1122 = vunpack.c.l.b16 %v1090
      %v1123 = vunpack.c.l.b16 %v1091
      %v1124 = vunpack.c.l.b16 %v1092
      %v1125 = vunpack.c.l.b16 %v1093
      %v1126 = vpack.c.b16 %v1111, %v1110
      %v1127 = vpack.c.b16 %v1113, %v1112
      %v1128 = vpack.c.b16 %v1115, %v1114
      %v1129 = vpack.c.b16 %v1117, %v1116
      %v1130 = vpack.c.b16 %v1119, %v1118
      %v1131 = vpack.c.b16 %v1121, %v1120
      %v1132 = vpack.c.b16 %v1123, %v1122
      %v1133 = vpack.c.b16 %v1125, %v1124
      %1142 = vmatprep.subr.bf16.mxu0 0
      %1143 = vmatpush1.bf16.msra.mxu0 %v1126
      %1144 = vmatprep.subr.bf16.mxu0 0
      %1145 = vmatpush1.bf16.msra.mxu0 %v1127
      %1146 = vmatprep.subr.bf16.mxu0 0
      %1147 = vmatpush1.bf16.msra.mxu0 %v1128
      %1148 = vmatprep.subr.bf16.mxu0 0
      %1149 = vmatpush1.bf16.msra.mxu0 %v1129
      %1150 = vmatprep.subr.bf16.mxu0 0
      %1151 = vmatpush1.bf16.msra.mxu0 %v1130
      %1152 = vmatprep.subr.bf16.mxu0 0
      %1153 = vmatpush1.bf16.msra.mxu0 %v1131
      %1154 = vmatprep.subr.bf16.mxu0 0
      %1155 = vmatpush1.bf16.msra.mxu0 %v1132
      %1156 = vmatprep.subr.bf16.mxu0 0
      %1157 = vmatpush1.bf16.msra.mxu0 %v1133
      %1158 = vmatprep.subr.bf16.mxu0 0
      %1159 = vmatpush1.bf16.msra.mxu0 0
      %1160 = vmatprep.subr.bf16.mxu0 0
      %1161 = vmatpush1.bf16.msra.mxu0 0
      %1162 = vmatprep.subr.bf16.mxu0 0
      %1163 = vmatpush1.bf16.msra.mxu0 0
      %1164 = vmatprep.subr.bf16.mxu0 0
      %1165 = vmatpush1.bf16.msra.mxu0 0
      %1166 = vmatprep.subr.bf16.mxu0 0
      %1167 = vmatpush1.bf16.msra.mxu0 0
      %1168 = vmatprep.subr.bf16.mxu0 0
      %1169 = vmatpush1.bf16.msra.mxu0 0
      %1170 = vmatprep.subr.bf16.mxu0 0
      %1171 = vmatpush1.bf16.msra.mxu0 0
      %1172 = vmatprep.subr.bf16.mxu0 0
      %1173 = vmatpush1.bf16.msra.mxu0 0
      %1174 = vmatprep.mubr.bf16.mxu0 0
      %1175 = vmatmul.mubr.bf16.gmra.mrb[0].mxu0 %v1077
      %v1176 = vpop.f32.mrb[0].mxu0
      %v1177 = vadd.f32 0.0, %v1176
      %v1178 = vpop.f32.mrb[0].mxu0
      %v1179 = vpop.f32.mrb[0].mxu0
      %v1180 = vadd.f32 0.0, %v1179
      %v1181 = vpop.f32.mrb[0].mxu0
      %1182 = vdwg.mxu0
      %v1199 = vunpack.c.l.b16 %v1061
      %v1200 = vunpack.c.l.b16 %v1062
      %v1201 = vunpack.c.l.b16 %v1063
      %v1202 = vunpack.c.l.b16 %v1064
      %v1203 = vunpack.c.l.b16 %v1065
      %v1204 = vunpack.c.l.b16 %v1066
      %v1205 = vunpack.c.l.b16 %v1067
      %v1206 = vunpack.c.l.b16 %v1068
      %v1207 = vunpack.c.l.b16 %v1069
      %v1208 = vunpack.c.l.b16 %v1070
      %v1209 = vunpack.c.l.b16 %v1071
      %v1210 = vunpack.c.l.b16 %v1072
      %v1211 = vunpack.c.l.b16 %v1073
      %v1212 = vunpack.c.l.b16 %v1074
      %v1213 = vunpack.c.l.b16 %v1075
      %v1214 = vunpack.c.l.b16 %v1076
      %v1215 = vpack.c.b16 %v1200, %v1199
      %v1216 = vpack.c.b16 %v1202, %v1201
      %v1217 = vpack.c.b16 %v1204, %v1203
      %v1218 = vpack.c.b16 %v1206, %v1205
      %v1219 = vpack.c.b16 %v1208, %v1207
      %v1220 = vpack.c.b16 %v1210, %v1209
      %v1221 = vpack.c.b16 %v1212, %v1211
      %v1222 = vpack.c.b16 %v1214, %v1213
      %1231 = vmatprep.subr.bf16.mxu0 0
      %1232 = vmatpush1.bf16.msra.mxu0 %v1215
      %1233 = vmatprep.subr.bf16.mxu0 0
      %1234 = vmatpush1.bf16.msra.mxu0 %v1216
      %1235 = vmatprep.subr.bf16.mxu0 0
      %1236 = vmatpush1.bf16.msra.mxu0 %v1217
      %1237 = vmatprep.subr.bf16.mxu0 0
      %1238 = vmatpush1.bf16.msra.mxu0 %v1218
      %1239 = vmatprep.subr.bf16.mxu0 0
      %1240 = vmatpush1.bf16.msra.mxu0 %v1219
      %1241 = vmatprep.subr.bf16.mxu0 0
      %1242 = vmatpush1.bf16.msra.mxu0 %v1220
      %1243 = vmatprep.subr.bf16.mxu0 0
      %1244 = vmatpush1.bf16.msra.mxu0 %v1221
      %1245 = vmatprep.subr.bf16.mxu0 0
      %1246 = vmatpush1.bf16.msra.mxu0 %v1222
      %1247 = vmatprep.subr.bf16.mxu0 0
      %1248 = vmatpush1.bf16.msra.mxu0 0
      %1249 = vmatprep.subr.bf16.mxu0 0
      %1250 = vmatpush1.bf16.msra.mxu0 0
      %1251 = vmatprep.subr.bf16.mxu0 0
      %1252 = vmatpush1.bf16.msra.mxu0 0
      %1253 = vmatprep.subr.bf16.mxu0 0
      %1254 = vmatpush1.bf16.msra.mxu0 0
      %1255 = vmatprep.subr.bf16.mxu0 0
      %1256 = vmatpush1.bf16.msra.mxu0 0
      %1257 = vmatprep.subr.bf16.mxu0 0
      %1258 = vmatpush1.bf16.msra.mxu0 0
      %1259 = vmatprep.subr.bf16.mxu0 0
      %1260 = vmatpush1.bf16.msra.mxu0 0
      %1261 = vmatprep.subr.bf16.mxu0 0
      %1262 = vmatpush1.bf16.msra.mxu0 0
      %1263 = vmatprep.mubr.bf16.mxu0 0
      %1264 = vmatmul.mubr.bf16.gmra.mrb[0].mxu0 %v1060
      %v1265 = vpop.f32.mrb[0].mxu0
      %v1266 = vadd.f32 %v1177, %v1265
      %v1267 = vpop.f32.mrb[0].mxu0
      %v1268 = vpop.f32.mrb[0].mxu0
      %v1269 = vadd.f32 %v1180, %v1268
      %v1270 = vpop.f32.mrb[0].mxu0
      %1271 = vdwg.mxu0
      %v1272 = vld [vmem:[%s799] sm:$0x1]
      %v1274 = vlaneseq
      %v1275 = vshrl.u32 %v1274, 7
      %v1276 = vsub.s32 0, %v1275
      %v1277 = vrot.slane %v1272, %v1276
      %v1279 = vadd.f32 %v1266, %v1277
      %v1280 = vadd.f32 %v1269, %v1277
      %v1281 = vtanh.pop %v1279
      %v1282 = vtanh.pop %v1280
      %1283 = vst [vmem:[%s582] sm:$0xff] %v1281
      %1284 = vst [vmem:[%s582 + $0x8] sm:$0xff] %v1282
      %v1285 = vpack.c.bf16 %v1282, %v1281
      %v1287 = vunpack.c.l.b16 %v1285
      %v1288 = vunpack.c.h.b16 %v1285
      %v1289 = vpack.c.b16 %v1287, %v1287
      %v1290 = vpack.c.b16 %v1288, %v1288
      %s1293 = scalar_lea.vmem %s326, 8
      %1294 = vst [vmem:[%s1293] sm:$0xf] %v1289
      %1295 = vst [vmem:[%s1293 + $0x4] sm:$0xf] %v1290
      %s1296 = scalar_lea.vmem %s308, 16
      %v1297 = vld [vmem:[%s1296] sm:$0xf]
      %v1298 = vld [vmem:[%s1296 + $0x4] sm:$0xf]
      %v1299 = vld [vmem:[#allocation2] sm:$0xff]
      %v1300 = vld [vmem:[#allocation2 + $0x8] sm:$0xff]
      %v1301 = vld [vmem:[%s2] sm:$0xf]
      %v1302 = vld [vmem:[%s2 + $0x4] sm:$0xf]
      %v1303 = vld [vmem:[%s2 + $0x8] sm:$0xf]
      %v1304 = vld [vmem:[%s2 + $0xc] sm:$0xf]
      %v1305 = vld [vmem:[%s2 + $0x10] sm:$0xf]
      %v1306 = vld [vmem:[%s2 + $0x14] sm:$0xf]
      %v1307 = vld [vmem:[%s2 + $0x18] sm:$0xf]
      %v1308 = vld [vmem:[%s2 + $0x1c] sm:$0xf]
      %v1309 = vld [vmem:[%s2 + $0x20] sm:$0xf]
      %v1310 = vld [vmem:[%s2 + $0x24] sm:$0xf]
      %v1311 = vld [vmem:[%s2 + $0x28] sm:$0xf]
      %v1312 = vld [vmem:[%s2 + $0x2c] sm:$0xf]
      %v1313 = vld [vmem:[%s2 + $0x30] sm:$0xf]
      %v1314 = vld [vmem:[%s2 + $0x34] sm:$0xf]
      %v1315 = vld [vmem:[%s2 + $0x38] sm:$0xf]
      %v1316 = vld [vmem:[%s2 + $0x3c] sm:$0xf]
      %v1317 = vpack.c.bf16 %v1300, %v1299
      %v1318 = vld [vmem:[%s3] sm:$0xf]
      %v1319 = vld [vmem:[%s3 + $0x4] sm:$0xf]
      %v1320 = vld [vmem:[%s3 + $0x8] sm:$0xf]
      %v1321 = vld [vmem:[%s3 + $0xc] sm:$0xf]
      %v1322 = vld [vmem:[%s3 + $0x10] sm:$0xf]
      %v1323 = vld [vmem:[%s3 + $0x14] sm:$0xf]
      %v1324 = vld [vmem:[%s3 + $0x18] sm:$0xf]
      %v1325 = vld [vmem:[%s3 + $0x1c] sm:$0xf]
      %v1326 = vld [vmem:[%s3 + $0x20] sm:$0xf]
      %v1327 = vld [vmem:[%s3 + $0x24] sm:$0xf]
      %v1328 = vld [vmem:[%s3 + $0x28] sm:$0xf]
      %v1329 = vld [vmem:[%s3 + $0x2c] sm:$0xf]
      %v1330 = vld [vmem:[%s3 + $0x30] sm:$0xf]
      %v1331 = vld [vmem:[%s3 + $0x34] sm:$0xf]
      %v1332 = vld [vmem:[%s3 + $0x38] sm:$0xf]
      %v1333 = vld [vmem:[%s3 + $0x3c] sm:$0xf]
      %v1350 = vunpack.c.l.b16 %v1318
      %v1351 = vunpack.c.l.b16 %v1319
      %v1352 = vunpack.c.l.b16 %v1320
      %v1353 = vunpack.c.l.b16 %v1321
      %v1354 = vunpack.c.l.b16 %v1322
      %v1355 = vunpack.c.l.b16 %v1323
      %v1356 = vunpack.c.l.b16 %v1324
      %v1357 = vunpack.c.l.b16 %v1325
      %v1358 = vunpack.c.l.b16 %v1326
      %v1359 = vunpack.c.l.b16 %v1327
      %v1360 = vunpack.c.l.b16 %v1328
      %v1361 = vunpack.c.l.b16 %v1329
      %v1362 = vunpack.c.l.b16 %v1330
      %v1363 = vunpack.c.l.b16 %v1331
      %v1364 = vunpack.c.l.b16 %v1332
      %v1365 = vunpack.c.l.b16 %v1333
      %v1366 = vpack.c.b16 %v1351, %v1350
      %v1367 = vpack.c.b16 %v1353, %v1352
      %v1368 = vpack.c.b16 %v1355, %v1354
      %v1369 = vpack.c.b16 %v1357, %v1356
      %v1370 = vpack.c.b16 %v1359, %v1358
      %v1371 = vpack.c.b16 %v1361, %v1360
      %v1372 = vpack.c.b16 %v1363, %v1362
      %v1373 = vpack.c.b16 %v1365, %v1364
      %1382 = vmatprep.subr.bf16.mxu0 0
      %1383 = vmatpush1.bf16.msra.mxu0 %v1366
      %1384 = vmatprep.subr.bf16.mxu0 0
      %1385 = vmatpush1.bf16.msra.mxu0 %v1367
      %1386 = vmatprep.subr.bf16.mxu0 0
      %1387 = vmatpush1.bf16.msra.mxu0 %v1368
      %1388 = vmatprep.subr.bf16.mxu0 0
      %1389 = vmatpush1.bf16.msra.mxu0 %v1369
      %1390 = vmatprep.subr.bf16.mxu0 0
      %1391 = vmatpush1.bf16.msra.mxu0 %v1370
      %1392 = vmatprep.subr.bf16.mxu0 0
      %1393 = vmatpush1.bf16.msra.mxu0 %v1371
      %1394 = vmatprep.subr.bf16.mxu0 0
      %1395 = vmatpush1.bf16.msra.mxu0 %v1372
      %1396 = vmatprep.subr.bf16.mxu0 0
      %1397 = vmatpush1.bf16.msra.mxu0 %v1373
      %1398 = vmatprep.subr.bf16.mxu0 0
      %1399 = vmatpush1.bf16.msra.mxu0 0
      %1400 = vmatprep.subr.bf16.mxu0 0
      %1401 = vmatpush1.bf16.msra.mxu0 0
      %1402 = vmatprep.subr.bf16.mxu0 0
      %1403 = vmatpush1.bf16.msra.mxu0 0
      %1404 = vmatprep.subr.bf16.mxu0 0
      %1405 = vmatpush1.bf16.msra.mxu0 0
      %1406 = vmatprep.subr.bf16.mxu0 0
      %1407 = vmatpush1.bf16.msra.mxu0 0
      %1408 = vmatprep.subr.bf16.mxu0 0
      %1409 = vmatpush1.bf16.msra.mxu0 0
      %1410 = vmatprep.subr.bf16.mxu0 0
      %1411 = vmatpush1.bf16.msra.mxu0 0
      %1412 = vmatprep.subr.bf16.mxu0 0
      %1413 = vmatpush1.bf16.msra.mxu0 0
      %1414 = vmatprep.mubr.bf16.mxu0 0
      %1415 = vmatmul.mubr.bf16.gmra.mrb[0].mxu0 %v1317
      %v1416 = vpop.f32.mrb[0].mxu0
      %v1417 = vadd.f32 0.0, %v1416
      %v1418 = vpop.f32.mrb[0].mxu0
      %v1419 = vpop.f32.mrb[0].mxu0
      %v1420 = vadd.f32 0.0, %v1419
      %v1421 = vpop.f32.mrb[0].mxu0
      %1422 = vdwg.mxu0
      %v1425 = vunpack.c.l.b16 %v1297
      %v1426 = vunpack.c.l.b16 %v1298
      %v1427 = vpack.c.b16 %v1426, %v1425
      %v1445 = vunpack.c.l.b16 %v1301
      %v1446 = vunpack.c.l.b16 %v1302
      %v1447 = vunpack.c.l.b16 %v1303
      %v1448 = vunpack.c.l.b16 %v1304
      %v1449 = vunpack.c.l.b16 %v1305
      %v1450 = vunpack.c.l.b16 %v1306
      %v1451 = vunpack.c.l.b16 %v1307
      %v1452 = vunpack.c.l.b16 %v1308
      %v1453 = vunpack.c.l.b16 %v1309
      %v1454 = vunpack.c.l.b16 %v1310
      %v1455 = vunpack.c.l.b16 %v1311
      %v1456 = vunpack.c.l.b16 %v1312
      %v1457 = vunpack.c.l.b16 %v1313
      %v1458 = vunpack.c.l.b16 %v1314
      %v1459 = vunpack.c.l.b16 %v1315
      %v1460 = vunpack.c.l.b16 %v1316
      %v1461 = vpack.c.b16 %v1446, %v1445
      %v1462 = vpack.c.b16 %v1448, %v1447
      %v1463 = vpack.c.b16 %v1450, %v1449
      %v1464 = vpack.c.b16 %v1452, %v1451
      %v1465 = vpack.c.b16 %v1454, %v1453
      %v1466 = vpack.c.b16 %v1456, %v1455
      %v1467 = vpack.c.b16 %v1458, %v1457
      %v1468 = vpack.c.b16 %v1460, %v1459
      %1477 = vmatprep.subr.bf16.mxu0 0
      %1478 = vmatpush1.bf16.msra.mxu0 %v1461
      %1479 = vmatprep.subr.bf16.mxu0 0
      %1480 = vmatpush1.bf16.msra.mxu0 %v1462
      %1481 = vmatprep.subr.bf16.mxu0 0
      %1482 = vmatpush1.bf16.msra.mxu0 %v1463
      %1483 = vmatprep.subr.bf16.mxu0 0
      %1484 = vmatpush1.bf16.msra.mxu0 %v1464
      %1485 = vmatprep.subr.bf16.mxu0 0
      %1486 = vmatpush1.bf16.msra.mxu0 %v1465
      %1487 = vmatprep.subr.bf16.mxu0 0
      %1488 = vmatpush1.bf16.msra.mxu0 %v1466
      %1489 = vmatprep.subr.bf16.mxu0 0
      %1490 = vmatpush1.bf16.msra.mxu0 %v1467
      %1491 = vmatprep.subr.bf16.mxu0 0
      %1492 = vmatpush1.bf16.msra.mxu0 %v1468
      %1493 = vmatprep.subr.bf16.mxu0 0
      %1494 = vmatpush1.bf16.msra.mxu0 0
      %1495 = vmatprep.subr.bf16.mxu0 0
      %1496 = vmatpush1.bf16.msra.mxu0 0
      %1497 = vmatprep.subr.bf16.mxu0 0
      %1498 = vmatpush1.bf16.msra.mxu0 0
      %1499 = vmatprep.subr.bf16.mxu0 0
      %1500 = vmatpush1.bf16.msra.mxu0 0
      %1501 = vmatprep.subr.bf16.mxu0 0
      %1502 = vmatpush1.bf16.msra.mxu0 0
      %1503 = vmatprep.subr.bf16.mxu0 0
      %1504 = vmatpush1.bf16.msra.mxu0 0
      %1505 = vmatprep.subr.bf16.mxu0 0
      %1506 = vmatpush1.bf16.msra.mxu0 0
      %1507 = vmatprep.subr.bf16.mxu0 0
      %1508 = vmatpush1.bf16.msra.mxu0 0
      %1509 = vmatprep.mubr.bf16.mxu0 0
      %1510 = vmatmul.mubr.bf16.gmra.mrb[0].mxu0 %v1427
      %v1511 = vpop.f32.mrb[0].mxu0
      %v1512 = vadd.f32 %v1417, %v1511
      %v1513 = vpop.f32.mrb[0].mxu0
      %v1514 = vpop.f32.mrb[0].mxu0
      %v1515 = vadd.f32 %v1420, %v1514
      %v1516 = vpop.f32.mrb[0].mxu0
      %1517 = vdwg.mxu0
      %v1518 = vld [vmem:[%s4] sm:$0x1]
      %v1520 = vlaneseq
      %v1521 = vshrl.u32 %v1520, 7
      %v1522 = vsub.s32 0, %v1521
      %v1523 = vrot.slane %v1518, %v1522
      %v1525 = vadd.f32 %v1512, %v1523
      %v1526 = vadd.f32 %v1515, %v1523
      %v1527 = vtanh.pop %v1525
      %v1528 = vtanh.pop %v1526
      %1529 = vst [vmem:[#allocation2] sm:$0xff] %v1527
      %1530 = vst [vmem:[#allocation2 + $0x8] sm:$0xff] %v1528
      %v1531 = vld [vmem:[%s582] sm:$0xff]
      %v1532 = vld [vmem:[%s582 + $0x8] sm:$0xff]
      %v1533 = vpack.c.bf16 %v1528, %v1527
      %v1534 = vld [vmem:[%s586] sm:$0xf]
      %v1535 = vld [vmem:[%s586 + $0x4] sm:$0xf]
      %v1536 = vld [vmem:[%s586 + $0x8] sm:$0xf]
      %v1537 = vld [vmem:[%s586 + $0xc] sm:$0xf]
      %v1538 = vld [vmem:[%s586 + $0x10] sm:$0xf]
      %v1539 = vld [vmem:[%s586 + $0x14] sm:$0xf]
      %v1540 = vld [vmem:[%s586 + $0x18] sm:$0xf]
      %v1541 = vld [vmem:[%s586 + $0x1c] sm:$0xf]
      %v1542 = vld [vmem:[%s586 + $0x20] sm:$0xf]
      %v1543 = vld [vmem:[%s586 + $0x24] sm:$0xf]
      %v1544 = vld [vmem:[%s586 + $0x28] sm:$0xf]
      %v1545 = vld [vmem:[%s586 + $0x2c] sm:$0xf]
      %v1546 = vld [vmem:[%s586 + $0x30] sm:$0xf]
      %v1547 = vld [vmem:[%s586 + $0x34] sm:$0xf]
      %v1548 = vld [vmem:[%s586 + $0x38] sm:$0xf]
      %v1549 = vld [vmem:[%s586 + $0x3c] sm:$0xf]
      %v1550 = vpack.c.bf16 %v1532, %v1531
      %v1551 = vld [vmem:[%s604] sm:$0xf]
      %v1552 = vld [vmem:[%s604 + $0x4] sm:$0xf]
      %v1553 = vld [vmem:[%s604 + $0x8] sm:$0xf]
      %v1554 = vld [vmem:[%s604 + $0xc] sm:$0xf]
      %v1555 = vld [vmem:[%s604 + $0x10] sm:$0xf]
      %v1556 = vld [vmem:[%s604 + $0x14] sm:$0xf]
      %v1557 = vld [vmem:[%s604 + $0x18] sm:$0xf]
      %v1558 = vld [vmem:[%s604 + $0x1c] sm:$0xf]
      %v1559 = vld [vmem:[%s604 + $0x20] sm:$0xf]
      %v1560 = vld [vmem:[%s604 + $0x24] sm:$0xf]
      %v1561 = vld [vmem:[%s604 + $0x28] sm:$0xf]
      %v1562 = vld [vmem:[%s604 + $0x2c] sm:$0xf]
      %v1563 = vld [vmem:[%s604 + $0x30] sm:$0xf]
      %v1564 = vld [vmem:[%s604 + $0x34] sm:$0xf]
      %v1565 = vld [vmem:[%s604 + $0x38] sm:$0xf]
      %v1566 = vld [vmem:[%s604 + $0x3c] sm:$0xf]
      %v1583 = vunpack.c.l.b16 %v1551
      %v1584 = vunpack.c.l.b16 %v1552
      %v1585 = vunpack.c.l.b16 %v1553
      %v1586 = vunpack.c.l.b16 %v1554
      %v1587 = vunpack.c.l.b16 %v1555
      %v1588 = vunpack.c.l.b16 %v1556
      %v1589 = vunpack.c.l.b16 %v1557
      %v1590 = vunpack.c.l.b16 %v1558
      %v1591 = vunpack.c.l.b16 %v1559
      %v1592 = vunpack.c.l.b16 %v1560
      %v1593 = vunpack.c.l.b16 %v1561
      %v1594 = vunpack.c.l.b16 %v1562
      %v1595 = vunpack.c.l.b16 %v1563
      %v1596 = vunpack.c.l.b16 %v1564
      %v1597 = vunpack.c.l.b16 %v1565
      %v1598 = vunpack.c.l.b16 %v1566
      %v1599 = vpack.c.b16 %v1584, %v1583
      %v1600 = vpack.c.b16 %v1586, %v1585
      %v1601 = vpack.c.b16 %v1588, %v1587
      %v1602 = vpack.c.b16 %v1590, %v1589
      %v1603 = vpack.c.b16 %v1592, %v1591
      %v1604 = vpack.c.b16 %v1594, %v1593
      %v1605 = vpack.c.b16 %v1596, %v1595
      %v1606 = vpack.c.b16 %v1598, %v1597
      %1615 = vmatprep.subr.bf16.mxu0 0
      %1616 = vmatpush1.bf16.msra.mxu0 %v1599
      %1617 = vmatprep.subr.bf16.mxu0 0
      %1618 = vmatpush1.bf16.msra.mxu0 %v1600
      %1619 = vmatprep.subr.bf16.mxu0 0
      %1620 = vmatpush1.bf16.msra.mxu0 %v1601
      %1621 = vmatprep.subr.bf16.mxu0 0
      %1622 = vmatpush1.bf16.msra.mxu0 %v1602
      %1623 = vmatprep.subr.bf16.mxu0 0
      %1624 = vmatpush1.bf16.msra.mxu0 %v1603
      %1625 = vmatprep.subr.bf16.mxu0 0
      %1626 = vmatpush1.bf16.msra.mxu0 %v1604
      %1627 = vmatprep.subr.bf16.mxu0 0
      %1628 = vmatpush1.bf16.msra.mxu0 %v1605
      %1629 = vmatprep.subr.bf16.mxu0 0
      %1630 = vmatpush1.bf16.msra.mxu0 %v1606
      %1631 = vmatprep.subr.bf16.mxu0 0
      %1632 = vmatpush1.bf16.msra.mxu0 0
      %1633 = vmatprep.subr.bf16.mxu0 0
      %1634 = vmatpush1.bf16.msra.mxu0 0
      %1635 = vmatprep.subr.bf16.mxu0 0
      %1636 = vmatpush1.bf16.msra.mxu0 0
      %1637 = vmatprep.subr.bf16.mxu0 0
      %1638 = vmatpush1.bf16.msra.mxu0 0
      %1639 = vmatprep.subr.bf16.mxu0 0
      %1640 = vmatpush1.bf16.msra.mxu0 0
      %1641 = vmatprep.subr.bf16.mxu0 0
      %1642 = vmatpush1.bf16.msra.mxu0 0
      %1643 = vmatprep.subr.bf16.mxu0 0
      %1644 = vmatpush1.bf16.msra.mxu0 0
      %1645 = vmatprep.subr.bf16.mxu0 0
      %1646 = vmatpush1.bf16.msra.mxu0 0
      %1647 = vmatprep.mubr.bf16.mxu0 0
      %1648 = vmatmul.mubr.bf16.gmra.mrb[0].mxu0 %v1550
      %v1649 = vpop.f32.mrb[0].mxu0
      %v1650 = vadd.f32 0.0, %v1649
      %v1651 = vpop.f32.mrb[0].mxu0
      %v1652 = vpop.f32.mrb[0].mxu0
      %v1653 = vadd.f32 0.0, %v1652
      %v1654 = vpop.f32.mrb[0].mxu0
      %1655 = vdwg.mxu0
      %v1672 = vunpack.c.l.b16 %v1534
      %v1673 = vunpack.c.l.b16 %v1535
      %v1674 = vunpack.c.l.b16 %v1536
      %v1675 = vunpack.c.l.b16 %v1537
      %v1676 = vunpack.c.l.b16 %v1538
      %v1677 = vunpack.c.l.b16 %v1539
      %v1678 = vunpack.c.l.b16 %v1540
      %v1679 = vunpack.c.l.b16 %v1541
      %v1680 = vunpack.c.l.b16 %v1542
      %v1681 = vunpack.c.l.b16 %v1543
      %v1682 = vunpack.c.l.b16 %v1544
      %v1683 = vunpack.c.l.b16 %v1545
      %v1684 = vunpack.c.l.b16 %v1546
      %v1685 = vunpack.c.l.b16 %v1547
      %v1686 = vunpack.c.l.b16 %v1548
      %v1687 = vunpack.c.l.b16 %v1549
      %v1688 = vpack.c.b16 %v1673, %v1672
      %v1689 = vpack.c.b16 %v1675, %v1674
      %v1690 = vpack.c.b16 %v1677, %v1676
      %v1691 = vpack.c.b16 %v1679, %v1678
      %v1692 = vpack.c.b16 %v1681, %v1680
      %v1693 = vpack.c.b16 %v1683, %v1682
      %v1694 = vpack.c.b16 %v1685, %v1684
      %v1695 = vpack.c.b16 %v1687, %v1686
      %1704 = vmatprep.subr.bf16.mxu0 0
      %1705 = vmatpush1.bf16.msra.mxu0 %v1688
      %1706 = vmatprep.subr.bf16.mxu0 0
      %1707 = vmatpush1.bf16.msra.mxu0 %v1689
      %1708 = vmatprep.subr.bf16.mxu0 0
      %1709 = vmatpush1.bf16.msra.mxu0 %v1690
      %1710 = vmatprep.subr.bf16.mxu0 0
      %1711 = vmatpush1.bf16.msra.mxu0 %v1691
      %1712 = vmatprep.subr.bf16.mxu0 0
      %1713 = vmatpush1.bf16.msra.mxu0 %v1692
      %1714 = vmatprep.subr.bf16.mxu0 0
      %1715 = vmatpush1.bf16.msra.mxu0 %v1693
      %1716 = vmatprep.subr.bf16.mxu0 0
      %1717 = vmatpush1.bf16.msra.mxu0 %v1694
      %1718 = vmatprep.subr.bf16.mxu0 0
      %1719 = vmatpush1.bf16.msra.mxu0 %v1695
      %1720 = vmatprep.subr.bf16.mxu0 0
      %1721 = vmatpush1.bf16.msra.mxu0 0
      %1722 = vmatprep.subr.bf16.mxu0 0
      %1723 = vmatpush1.bf16.msra.mxu0 0
      %1724 = vmatprep.subr.bf16.mxu0 0
      %1725 = vmatpush1.bf16.msra.mxu0 0
      %1726 = vmatprep.subr.bf16.mxu0 0
      %1727 = vmatpush1.bf16.msra.mxu0 0
      %1728 = vmatprep.subr.bf16.mxu0 0
      %1729 = vmatpush1.bf16.msra.mxu0 0
      %1730 = vmatprep.subr.bf16.mxu0 0
      %1731 = vmatpush1.bf16.msra.mxu0 0
      %1732 = vmatprep.subr.bf16.mxu0 0
      %1733 = vmatpush1.bf16.msra.mxu0 0
      %1734 = vmatprep.subr.bf16.mxu0 0
      %1735 = vmatpush1.bf16.msra.mxu0 0
      %1736 = vmatprep.mubr.bf16.mxu0 0
      %1737 = vmatmul.mubr.bf16.gmra.mrb[0].mxu0 %v1533
      %v1738 = vpop.f32.mrb[0].mxu0
      %v1739 = vadd.f32 %v1650, %v1738
      %v1740 = vpop.f32.mrb[0].mxu0
      %v1741 = vpop.f32.mrb[0].mxu0
      %v1742 = vadd.f32 %v1653, %v1741
      %v1743 = vpop.f32.mrb[0].mxu0
      %1744 = vdwg.mxu0
      %v1745 = vld [vmem:[%s799] sm:$0x1]
      %v1747 = vlaneseq
      %v1748 = vshrl.u32 %v1747, 7
      %v1749 = vsub.s32 0, %v1748
      %v1750 = vrot.slane %v1745, %v1749
      %v1752 = vadd.f32 %v1739, %v1750
      %v1753 = vadd.f32 %v1742, %v1750
      %v1754 = vtanh.pop %v1752
      %v1755 = vtanh.pop %v1753
      %1756 = vst [vmem:[%s582] sm:$0xff] %v1754
      %1757 = vst [vmem:[%s582 + $0x8] sm:$0xff] %v1755
      %v1758 = vpack.c.bf16 %v1755, %v1754
      %v1760 = vunpack.c.l.b16 %v1758
      %v1761 = vunpack.c.h.b16 %v1758
      %v1762 = vpack.c.b16 %v1760, %v1760
      %v1763 = vpack.c.b16 %v1761, %v1761
      %s1766 = scalar_lea.vmem %s326, 16
      %1767 = vst [vmem:[%s1766] sm:$0xf] %v1762
      %1768 = vst [vmem:[%s1766 + $0x4] sm:$0xf] %v1763
      %s1769 = scalar_lea.vmem %s308, 24
      %v1770 = vld [vmem:[%s1769] sm:$0xf]
      %v1771 = vld [vmem:[%s1769 + $0x4] sm:$0xf]
      %v1772 = vld [vmem:[#allocation2] sm:$0xff]
      %v1773 = vld [vmem:[#allocation2 + $0x8] sm:$0xff]
      %v1774 = vld [vmem:[%s2] sm:$0xf]
      %v1775 = vld [vmem:[%s2 + $0x4] sm:$0xf]
      %v1776 = vld [vmem:[%s2 + $0x8] sm:$0xf]
      %v1777 = vld [vmem:[%s2 + $0xc] sm:$0xf]
      %v1778 = vld [vmem:[%s2 + $0x10] sm:$0xf]
      %v1779 = vld [vmem:[%s2 + $0x14] sm:$0xf]
      %v1780 = vld [vmem:[%s2 + $0x18] sm:$0xf]
      %v1781 = vld [vmem:[%s2 + $0x1c] sm:$0xf]
      %v1782 = vld [vmem:[%s2 + $0x20] sm:$0xf]
      %v1783 = vld [vmem:[%s2 + $0x24] sm:$0xf]
      %v1784 = vld [vmem:[%s2 + $0x28] sm:$0xf]
      %v1785 = vld [vmem:[%s2 + $0x2c] sm:$0xf]
      %v1786 = vld [vmem:[%s2 + $0x30] sm:$0xf]
      %v1787 = vld [vmem:[%s2 + $0x34] sm:$0xf]
      %v1788 = vld [vmem:[%s2 + $0x38] sm:$0xf]
      %v1789 = vld [vmem:[%s2 + $0x3c] sm:$0xf]
      %v1790 = vpack.c.bf16 %v1773, %v1772
      %v1791 = vld [vmem:[%s3] sm:$0xf]
      %v1792 = vld [vmem:[%s3 + $0x4] sm:$0xf]
      %v1793 = vld [vmem:[%s3 + $0x8] sm:$0xf]
      %v1794 = vld [vmem:[%s3 + $0xc] sm:$0xf]
      %v1795 = vld [vmem:[%s3 + $0x10] sm:$0xf]
      %v1796 = vld [vmem:[%s3 + $0x14] sm:$0xf]
      %v1797 = vld [vmem:[%s3 + $0x18] sm:$0xf]
      %v1798 = vld [vmem:[%s3 + $0x1c] sm:$0xf]
      %v1799 = vld [vmem:[%s3 + $0x20] sm:$0xf]
      %v1800 = vld [vmem:[%s3 + $0x24] sm:$0xf]
      %v1801 = vld [vmem:[%s3 + $0x28] sm:$0xf]
      %v1802 = vld [vmem:[%s3 + $0x2c] sm:$0xf]
      %v1803 = vld [vmem:[%s3 + $0x30] sm:$0xf]
      %v1804 = vld [vmem:[%s3 + $0x34] sm:$0xf]
      %v1805 = vld [vmem:[%s3 + $0x38] sm:$0xf]
      %v1806 = vld [vmem:[%s3 + $0x3c] sm:$0xf]
      %v1823 = vunpack.c.l.b16 %v1791
      %v1824 = vunpack.c.l.b16 %v1792
      %v1825 = vunpack.c.l.b16 %v1793
      %v1826 = vunpack.c.l.b16 %v1794
      %v1827 = vunpack.c.l.b16 %v1795
      %v1828 = vunpack.c.l.b16 %v1796
      %v1829 = vunpack.c.l.b16 %v1797
      %v1830 = vunpack.c.l.b16 %v1798
      %v1831 = vunpack.c.l.b16 %v1799
      %v1832 = vunpack.c.l.b16 %v1800
      %v1833 = vunpack.c.l.b16 %v1801
      %v1834 = vunpack.c.l.b16 %v1802
      %v1835 = vunpack.c.l.b16 %v1803
      %v1836 = vunpack.c.l.b16 %v1804
      %v1837 = vunpack.c.l.b16 %v1805
      %v1838 = vunpack.c.l.b16 %v1806
      %v1839 = vpack.c.b16 %v1824, %v1823
      %v1840 = vpack.c.b16 %v1826, %v1825
      %v1841 = vpack.c.b16 %v1828, %v1827
      %v1842 = vpack.c.b16 %v1830, %v1829
      %v1843 = vpack.c.b16 %v1832, %v1831
      %v1844 = vpack.c.b16 %v1834, %v1833
      %v1845 = vpack.c.b16 %v1836, %v1835
      %v1846 = vpack.c.b16 %v1838, %v1837
      %1855 = vmatprep.subr.bf16.mxu0 0
      %1856 = vmatpush1.bf16.msra.mxu0 %v1839
      %1857 = vmatprep.subr.bf16.mxu0 0
      %1858 = vmatpush1.bf16.msra.mxu0 %v1840
      %1859 = vmatprep.subr.bf16.mxu0 0
      %1860 = vmatpush1.bf16.msra.mxu0 %v1841
      %1861 = vmatprep.subr.bf16.mxu0 0
      %1862 = vmatpush1.bf16.msra.mxu0 %v1842
      %1863 = vmatprep.subr.bf16.mxu0 0
      %1864 = vmatpush1.bf16.msra.mxu0 %v1843
      %1865 = vmatprep.subr.bf16.mxu0 0
      %1866 = vmatpush1.bf16.msra.mxu0 %v1844
      %1867 = vmatprep.subr.bf16.mxu0 0
      %1868 = vmatpush1.bf16.msra.mxu0 %v1845
      %1869 = vmatprep.subr.bf16.mxu0 0
      %1870 = vmatpush1.bf16.msra.mxu0 %v1846
      %1871 = vmatprep.subr.bf16.mxu0 0
      %1872 = vmatpush1.bf16.msra.mxu0 0
      %1873 = vmatprep.subr.bf16.mxu0 0
      %1874 = vmatpush1.bf16.msra.mxu0 0
      %1875 = vmatprep.subr.bf16.mxu0 0
      %1876 = vmatpush1.bf16.msra.mxu0 0
      %1877 = vmatprep.subr.bf16.mxu0 0
      %1878 = vmatpush1.bf16.msra.mxu0 0
      %1879 = vmatprep.subr.bf16.mxu0 0
      %1880 = vmatpush1.bf16.msra.mxu0 0
      %1881 = vmatprep.subr.bf16.mxu0 0
      %1882 = vmatpush1.bf16.msra.mxu0 0
      %1883 = vmatprep.subr.bf16.mxu0 0
      %1884 = vmatpush1.bf16.msra.mxu0 0
      %1885 = vmatprep.subr.bf16.mxu0 0
      %1886 = vmatpush1.bf16.msra.mxu0 0
      %1887 = vmatprep.mubr.bf16.mxu0 0
      %1888 = vmatmul.mubr.bf16.gmra.mrb[0].mxu0 %v1790
      %v1889 = vpop.f32.mrb[0].mxu0
      %v1890 = vadd.f32 0.0, %v1889
      %v1891 = vpop.f32.mrb[0].mxu0
      %v1892 = vpop.f32.mrb[0].mxu0
      %v1893 = vadd.f32 0.0, %v1892
      %v1894 = vpop.f32.mrb[0].mxu0
      %1895 = vdwg.mxu0
      %v1898 = vunpack.c.l.b16 %v1770
      %v1899 = vunpack.c.l.b16 %v1771
      %v1900 = vpack.c.b16 %v1899, %v1898
      %v1918 = vunpack.c.l.b16 %v1774
      %v1919 = vunpack.c.l.b16 %v1775
      %v1920 = vunpack.c.l.b16 %v1776
      %v1921 = vunpack.c.l.b16 %v1777
      %v1922 = vunpack.c.l.b16 %v1778
      %v1923 = vunpack.c.l.b16 %v1779
      %v1924 = vunpack.c.l.b16 %v1780
      %v1925 = vunpack.c.l.b16 %v1781
      %v1926 = vunpack.c.l.b16 %v1782
      %v1927 = vunpack.c.l.b16 %v1783
      %v1928 = vunpack.c.l.b16 %v1784
      %v1929 = vunpack.c.l.b16 %v1785
      %v1930 = vunpack.c.l.b16 %v1786
      %v1931 = vunpack.c.l.b16 %v1787
      %v1932 = vunpack.c.l.b16 %v1788
      %v1933 = vunpack.c.l.b16 %v1789
      %v1934 = vpack.c.b16 %v1919, %v1918
      %v1935 = vpack.c.b16 %v1921, %v1920
      %v1936 = vpack.c.b16 %v1923, %v1922
      %v1937 = vpack.c.b16 %v1925, %v1924
      %v1938 = vpack.c.b16 %v1927, %v1926
      %v1939 = vpack.c.b16 %v1929, %v1928
      %v1940 = vpack.c.b16 %v1931, %v1930
      %v1941 = vpack.c.b16 %v1933, %v1932
      %1950 = vmatprep.subr.bf16.mxu0 0
      %1951 = vmatpush1.bf16.msra.mxu0 %v1934
      %1952 = vmatprep.subr.bf16.mxu0 0
      %1953 = vmatpush1.bf16.msra.mxu0 %v1935
      %1954 = vmatprep.subr.bf16.mxu0 0
      %1955 = vmatpush1.bf16.msra.mxu0 %v1936
      %1956 = vmatprep.subr.bf16.mxu0 0
      %1957 = vmatpush1.bf16.msra.mxu0 %v1937
      %1958 = vmatprep.subr.bf16.mxu0 0
      %1959 = vmatpush1.bf16.msra.mxu0 %v1938
      %1960 = vmatprep.subr.bf16.mxu0 0
      %1961 = vmatpush1.bf16.msra.mxu0 %v1939
      %1962 = vmatprep.subr.bf16.mxu0 0
      %1963 = vmatpush1.bf16.msra.mxu0 %v1940
      %1964 = vmatprep.subr.bf16.mxu0 0
      %1965 = vmatpush1.bf16.msra.mxu0 %v1941
      %1966 = vmatprep.subr.bf16.mxu0 0
      %1967 = vmatpush1.bf16.msra.mxu0 0
      %1968 = vmatprep.subr.bf16.mxu0 0
      %1969 = vmatpush1.bf16.msra.mxu0 0
      %1970 = vmatprep.subr.bf16.mxu0 0
      %1971 = vmatpush1.bf16.msra.mxu0 0
      %1972 = vmatprep.subr.bf16.mxu0 0
      %1973 = vmatpush1.bf16.msra.mxu0 0
      %1974 = vmatprep.subr.bf16.mxu0 0
      %1975 = vmatpush1.bf16.msra.mxu0 0
      %1976 = vmatprep.subr.bf16.mxu0 0
      %1977 = vmatpush1.bf16.msra.mxu0 0
      %1978 = vmatprep.subr.bf16.mxu0 0
      %1979 = vmatpush1.bf16.msra.mxu0 0
      %1980 = vmatprep.subr.bf16.mxu0 0
      %1981 = vmatpush1.bf16.msra.mxu0 0
      %1982 = vmatprep.mubr.bf16.mxu0 0
      %1983 = vmatmul.mubr.bf16.gmra.mrb[0].mxu0 %v1900
      %v1984 = vpop.f32.mrb[0].mxu0
      %v1985 = vadd.f32 %v1890, %v1984
      %v1986 = vpop.f32.mrb[0].mxu0
      %v1987 = vpop.f32.mrb[0].mxu0
      %v1988 = vadd.f32 %v1893, %v1987
      %v1989 = vpop.f32.mrb[0].mxu0
      %1990 = vdwg.mxu0
      %v1991 = vld [vmem:[%s4] sm:$0x1]
      %v1993 = vlaneseq
      %v1994 = vshrl.u32 %v1993, 7
      %v1995 = vsub.s32 0, %v1994
      %v1996 = vrot.slane %v1991, %v1995
      %v1998 = vadd.f32 %v1985, %v1996
      %v1999 = vadd.f32 %v1988, %v1996
      %v2000 = vtanh.pop %v1998
      %v2001 = vtanh.pop %v1999
      %2002 = vst [vmem:[#allocation2] sm:$0xff] %v2000
      %2003 = vst [vmem:[#allocation2 + $0x8] sm:$0xff] %v2001
      %v2004 = vld [vmem:[%s582] sm:$0xff]
      %v2005 = vld [vmem:[%s582 + $0x8] sm:$0xff]
      %v2006 = vpack.c.bf16 %v2001, %v2000
      %v2007 = vld [vmem:[%s586] sm:$0xf]
      %v2008 = vld [vmem:[%s586 + $0x4] sm:$0xf]
      %v2009 = vld [vmem:[%s586 + $0x8] sm:$0xf]
      %v2010 = vld [vmem:[%s586 + $0xc] sm:$0xf]
      %v2011 = vld [vmem:[%s586 + $0x10] sm:$0xf]
      %v2012 = vld [vmem:[%s586 + $0x14] sm:$0xf]
      %v2013 = vld [vmem:[%s586 + $0x18] sm:$0xf]
      %v2014 = vld [vmem:[%s586 + $0x1c] sm:$0xf]
      %v2015 = vld [vmem:[%s586 + $0x20] sm:$0xf]
      %v2016 = vld [vmem:[%s586 + $0x24] sm:$0xf]
      %v2017 = vld [vmem:[%s586 + $0x28] sm:$0xf]
      %v2018 = vld [vmem:[%s586 + $0x2c] sm:$0xf]
      %v2019 = vld [vmem:[%s586 + $0x30] sm:$0xf]
      %v2020 = vld [vmem:[%s586 + $0x34] sm:$0xf]
      %v2021 = vld [vmem:[%s586 + $0x38] sm:$0xf]
      %v2022 = vld [vmem:[%s586 + $0x3c] sm:$0xf]
      %v2023 = vpack.c.bf16 %v2005, %v2004
      %v2024 = vld [vmem:[%s604] sm:$0xf]
      %v2025 = vld [vmem:[%s604 + $0x4] sm:$0xf]
      %v2026 = vld [vmem:[%s604 + $0x8] sm:$0xf]
      %v2027 = vld [vmem:[%s604 + $0xc] sm:$0xf]
      %v2028 = vld [vmem:[%s604 + $0x10] sm:$0xf]
      %v2029 = vld [vmem:[%s604 + $0x14] sm:$0xf]
      %v2030 = vld [vmem:[%s604 + $0x18] sm:$0xf]
      %v2031 = vld [vmem:[%s604 + $0x1c] sm:$0xf]
      %v2032 = vld [vmem:[%s604 + $0x20] sm:$0xf]
      %v2033 = vld [vmem:[%s604 + $0x24] sm:$0xf]
      %v2034 = vld [vmem:[%s604 + $0x28] sm:$0xf]
      %v2035 = vld [vmem:[%s604 + $0x2c] sm:$0xf]
      %v2036 = vld [vmem:[%s604 + $0x30] sm:$0xf]
      %v2037 = vld [vmem:[%s604 + $0x34] sm:$0xf]
      %v2038 = vld [vmem:[%s604 + $0x38] sm:$0xf]
      %v2039 = vld [vmem:[%s604 + $0x3c] sm:$0xf]
      %v2056 = vunpack.c.l.b16 %v2024
      %v2057 = vunpack.c.l.b16 %v2025
      %v2058 = vunpack.c.l.b16 %v2026
      %v2059 = vunpack.c.l.b16 %v2027
      %v2060 = vunpack.c.l.b16 %v2028
      %v2061 = vunpack.c.l.b16 %v2029
      %v2062 = vunpack.c.l.b16 %v2030
      %v2063 = vunpack.c.l.b16 %v2031
      %v2064 = vunpack.c.l.b16 %v2032
      %v2065 = vunpack.c.l.b16 %v2033
      %v2066 = vunpack.c.l.b16 %v2034
      %v2067 = vunpack.c.l.b16 %v2035
      %v2068 = vunpack.c.l.b16 %v2036
      %v2069 = vunpack.c.l.b16 %v2037
      %v2070 = vunpack.c.l.b16 %v2038
      %v2071 = vunpack.c.l.b16 %v2039
      %v2072 = vpack.c.b16 %v2057, %v2056
      %v2073 = vpack.c.b16 %v2059, %v2058
      %v2074 = vpack.c.b16 %v2061, %v2060
      %v2075 = vpack.c.b16 %v2063, %v2062
      %v2076 = vpack.c.b16 %v2065, %v2064
      %v2077 = vpack.c.b16 %v2067, %v2066
      %v2078 = vpack.c.b16 %v2069, %v2068
      %v2079 = vpack.c.b16 %v2071, %v2070
      %2088 = vmatprep.subr.bf16.mxu0 0
      %2089 = vmatpush1.bf16.msra.mxu0 %v2072
      %2090 = vmatprep.subr.bf16.mxu0 0
      %2091 = vmatpush1.bf16.msra.mxu0 %v2073
      %2092 = vmatprep.subr.bf16.mxu0 0
      %2093 = vmatpush1.bf16.msra.mxu0 %v2074
      %2094 = vmatprep.subr.bf16.mxu0 0
      %2095 = vmatpush1.bf16.msra.mxu0 %v2075
      %2096 = vmatprep.subr.bf16.mxu0 0
      %2097 = vmatpush1.bf16.msra.mxu0 %v2076
      %2098 = vmatprep.subr.bf16.mxu0 0
      %2099 = vmatpush1.bf16.msra.mxu0 %v2077
      %2100 = vmatprep.subr.bf16.mxu0 0
      %2101 = vmatpush1.bf16.msra.mxu0 %v2078
      %2102 = vmatprep.subr.bf16.mxu0 0
      %2103 = vmatpush1.bf16.msra.mxu0 %v2079
      %2104 = vmatprep.subr.bf16.mxu0 0
      %2105 = vmatpush1.bf16.msra.mxu0 0
      %2106 = vmatprep.subr.bf16.mxu0 0
      %2107 = vmatpush1.bf16.msra.mxu0 0
      %2108 = vmatprep.subr.bf16.mxu0 0
      %2109 = vmatpush1.bf16.msra.mxu0 0
      %2110 = vmatprep.subr.bf16.mxu0 0
      %2111 = vmatpush1.bf16.msra.mxu0 0
      %2112 = vmatprep.subr.bf16.mxu0 0
      %2113 = vmatpush1.bf16.msra.mxu0 0
      %2114 = vmatprep.subr.bf16.mxu0 0
      %2115 = vmatpush1.bf16.msra.mxu0 0
      %2116 = vmatprep.subr.bf16.mxu0 0
      %2117 = vmatpush1.bf16.msra.mxu0 0
      %2118 = vmatprep.subr.bf16.mxu0 0
      %2119 = vmatpush1.bf16.msra.mxu0 0
      %2120 = vmatprep.mubr.bf16.mxu0 0
      %2121 = vmatmul.mubr.bf16.gmra.mrb[0].mxu0 %v2023
      %v2122 = vpop.f32.mrb[0].mxu0
      %v2123 = vadd.f32 0.0, %v2122
      %v2124 = vpop.f32.mrb[0].mxu0
      %v2125 = vpop.f32.mrb[0].mxu0
      %v2126 = vadd.f32 0.0, %v2125
      %v2127 = vpop.f32.mrb[0].mxu0
      %2128 = vdwg.mxu0
      %v2145 = vunpack.c.l.b16 %v2007
      %v2146 = vunpack.c.l.b16 %v2008
      %v2147 = vunpack.c.l.b16 %v2009
      %v2148 = vunpack.c.l.b16 %v2010
      %v2149 = vunpack.c.l.b16 %v2011
      %v2150 = vunpack.c.l.b16 %v2012
      %v2151 = vunpack.c.l.b16 %v2013
      %v2152 = vunpack.c.l.b16 %v2014
      %v2153 = vunpack.c.l.b16 %v2015
      %v2154 = vunpack.c.l.b16 %v2016
      %v2155 = vunpack.c.l.b16 %v2017
      %v2156 = vunpack.c.l.b16 %v2018
      %v2157 = vunpack.c.l.b16 %v2019
      %v2158 = vunpack.c.l.b16 %v2020
      %v2159 = vunpack.c.l.b16 %v2021
      %v2160 = vunpack.c.l.b16 %v2022
      %v2161 = vpack.c.b16 %v2146, %v2145
      %v2162 = vpack.c.b16 %v2148, %v2147
      %v2163 = vpack.c.b16 %v2150, %v2149
      %v2164 = vpack.c.b16 %v2152, %v2151
      %v2165 = vpack.c.b16 %v2154, %v2153
      %v2166 = vpack.c.b16 %v2156, %v2155
      %v2167 = vpack.c.b16 %v2158, %v2157
      %v2168 = vpack.c.b16 %v2160, %v2159
      %2177 = vmatprep.subr.bf16.mxu0 0
      %2178 = vmatpush1.bf16.msra.mxu0 %v2161
      %2179 = vmatprep.subr.bf16.mxu0 0
      %2180 = vmatpush1.bf16.msra.mxu0 %v2162
      %2181 = vmatprep.subr.bf16.mxu0 0
      %2182 = vmatpush1.bf16.msra.mxu0 %v2163
      %2183 = vmatprep.subr.bf16.mxu0 0
      %2184 = vmatpush1.bf16.msra.mxu0 %v2164
      %2185 = vmatprep.subr.bf16.mxu0 0
      %2186 = vmatpush1.bf16.msra.mxu0 %v2165
      %2187 = vmatprep.subr.bf16.mxu0 0
      %2188 = vmatpush1.bf16.msra.mxu0 %v2166
      %2189 = vmatprep.subr.bf16.mxu0 0
      %2190 = vmatpush1.bf16.msra.mxu0 %v2167
      %2191 = vmatprep.subr.bf16.mxu0 0
      %2192 = vmatpush1.bf16.msra.mxu0 %v2168
      %2193 = vmatprep.subr.bf16.mxu0 0
      %2194 = vmatpush1.bf16.msra.mxu0 0
      %2195 = vmatprep.subr.bf16.mxu0 0
      %2196 = vmatpush1.bf16.msra.mxu0 0
      %2197 = vmatprep.subr.bf16.mxu0 0
      %2198 = vmatpush1.bf16.msra.mxu0 0
      %2199 = vmatprep.subr.bf16.mxu0 0
      %2200 = vmatpush1.bf16.msra.mxu0 0
      %2201 = vmatprep.subr.bf16.mxu0 0
      %2202 = vmatpush1.bf16.msra.mxu0 0
      %2203 = vmatprep.subr.bf16.mxu0 0
      %2204 = vmatpush1.bf16.msra.mxu0 0
      %2205 = vmatprep.subr.bf16.mxu0 0
      %2206 = vmatpush1.bf16.msra.mxu0 0
      %2207 = vmatprep.subr.bf16.mxu0 0
      %2208 = vmatpush1.bf16.msra.mxu0 0
      %2209 = vmatprep.mubr.bf16.mxu0 0
      %2210 = vmatmul.mubr.bf16.gmra.mrb[0].mxu0 %v2006
      %v2211 = vpop.f32.mrb[0].mxu0
      %v2212 = vadd.f32 %v2123, %v2211
      %v2213 = vpop.f32.mrb[0].mxu0
      %v2214 = vpop.f32.mrb[0].mxu0
      %v2215 = vadd.f32 %v2126, %v2214
      %v2216 = vpop.f32.mrb[0].mxu0
      %2217 = vdwg.mxu0
      %v2218 = vld [vmem:[%s799] sm:$0x1]
      %v2220 = vlaneseq
      %v2221 = vshrl.u32 %v2220, 7
      %v2222 = vsub.s32 0, %v2221
      %v2223 = vrot.slane %v2218, %v2222
      %v2225 = vadd.f32 %v2212, %v2223
      %v2226 = vadd.f32 %v2215, %v2223
      %v2227 = vtanh.pop %v2225
      %v2228 = vtanh.pop %v2226
      %2229 = vst [vmem:[%s582] sm:$0xff] %v2227
      %2230 = vst [vmem:[%s582 + $0x8] sm:$0xff] %v2228
      %v2231 = vpack.c.bf16 %v2228, %v2227
      %v2233 = vunpack.c.l.b16 %v2231
      %v2234 = vunpack.c.h.b16 %v2231
      %v2235 = vpack.c.b16 %v2233, %v2233
      %v2236 = vpack.c.b16 %v2234, %v2234
      %s2239 = scalar_lea.vmem %s326, 24
      %2240 = vst [vmem:[%s2239] sm:$0xf] %v2235
      %2241 = vst [vmem:[%s2239 + $0x4] sm:$0xf] %v2236
      %s2242 = scalar_lea.vmem %s308, 32
      %v2243 = vld [vmem:[%s2242] sm:$0xf]
      %v2244 = vld [vmem:[%s2242 + $0x4] sm:$0xf]
      %v2245 = vld [vmem:[#allocation2] sm:$0xff]
      %v2246 = vld [vmem:[#allocation2 + $0x8] sm:$0xff]
      %v2247 = vld [vmem:[%s2] sm:$0xf]
      %v2248 = vld [vmem:[%s2 + $0x4] sm:$0xf]
      %v2249 = vld [vmem:[%s2 + $0x8] sm:$0xf]
      %v2250 = vld [vmem:[%s2 + $0xc] sm:$0xf]
      %v2251 = vld [vmem:[%s2 + $0x10] sm:$0xf]
      %v2252 = vld [vmem:[%s2 + $0x14] sm:$0xf]
      %v2253 = vld [vmem:[%s2 + $0x18] sm:$0xf]
      %v2254 = vld [vmem:[%s2 + $0x1c] sm:$0xf]
      %v2255 = vld [vmem:[%s2 + $0x20] sm:$0xf]
      %v2256 = vld [vmem:[%s2 + $0x24] sm:$0xf]
      %v2257 = vld [vmem:[%s2 + $0x28] sm:$0xf]
      %v2258 = vld [vmem:[%s2 + $0x2c] sm:$0xf]
      %v2259 = vld [vmem:[%s2 + $0x30] sm:$0xf]
      %v2260 = vld [vmem:[%s2 + $0x34] sm:$0xf]
      %v2261 = vld [vmem:[%s2 + $0x38] sm:$0xf]
      %v2262 = vld [vmem:[%s2 + $0x3c] sm:$0xf]
      %v2263 = vpack.c.bf16 %v2246, %v2245
      %v2264 = vld [vmem:[%s3] sm:$0xf]
      %v2265 = vld [vmem:[%s3 + $0x4] sm:$0xf]
      %v2266 = vld [vmem:[%s3 + $0x8] sm:$0xf]
      %v2267 = vld [vmem:[%s3 + $0xc] sm:$0xf]
      %v2268 = vld [vmem:[%s3 + $0x10] sm:$0xf]
      %v2269 = vld [vmem:[%s3 + $0x14] sm:$0xf]
      %v2270 = vld [vmem:[%s3 + $0x18] sm:$0xf]
      %v2271 = vld [vmem:[%s3 + $0x1c] sm:$0xf]
      %v2272 = vld [vmem:[%s3 + $0x20] sm:$0xf]
      %v2273 = vld [vmem:[%s3 + $0x24] sm:$0xf]
      %v2274 = vld [vmem:[%s3 + $0x28] sm:$0xf]
      %v2275 = vld [vmem:[%s3 + $0x2c] sm:$0xf]
      %v2276 = vld [vmem:[%s3 + $0x30] sm:$0xf]
      %v2277 = vld [vmem:[%s3 + $0x34] sm:$0xf]
      %v2278 = vld [vmem:[%s3 + $0x38] sm:$0xf]
      %v2279 = vld [vmem:[%s3 + $0x3c] sm:$0xf]
      %v2296 = vunpack.c.l.b16 %v2264
      %v2297 = vunpack.c.l.b16 %v2265
      %v2298 = vunpack.c.l.b16 %v2266
      %v2299 = vunpack.c.l.b16 %v2267
      %v2300 = vunpack.c.l.b16 %v2268
      %v2301 = vunpack.c.l.b16 %v2269
      %v2302 = vunpack.c.l.b16 %v2270
      %v2303 = vunpack.c.l.b16 %v2271
      %v2304 = vunpack.c.l.b16 %v2272
      %v2305 = vunpack.c.l.b16 %v2273
      %v2306 = vunpack.c.l.b16 %v2274
      %v2307 = vunpack.c.l.b16 %v2275
      %v2308 = vunpack.c.l.b16 %v2276
      %v2309 = vunpack.c.l.b16 %v2277
      %v2310 = vunpack.c.l.b16 %v2278
      %v2311 = vunpack.c.l.b16 %v2279
      %v2312 = vpack.c.b16 %v2297, %v2296
      %v2313 = vpack.c.b16 %v2299, %v2298
      %v2314 = vpack.c.b16 %v2301, %v2300
      %v2315 = vpack.c.b16 %v2303, %v2302
      %v2316 = vpack.c.b16 %v2305, %v2304
      %v2317 = vpack.c.b16 %v2307, %v2306
      %v2318 = vpack.c.b16 %v2309, %v2308
      %v2319 = vpack.c.b16 %v2311, %v2310
      %2328 = vmatprep.subr.bf16.mxu0 0
      %2329 = vmatpush1.bf16.msra.mxu0 %v2312
      %2330 = vmatprep.subr.bf16.mxu0 0
      %2331 = vmatpush1.bf16.msra.mxu0 %v2313
      %2332 = vmatprep.subr.bf16.mxu0 0
      %2333 = vmatpush1.bf16.msra.mxu0 %v2314
      %2334 = vmatprep.subr.bf16.mxu0 0
      %2335 = vmatpush1.bf16.msra.mxu0 %v2315
      %2336 = vmatprep.subr.bf16.mxu0 0
      %2337 = vmatpush1.bf16.msra.mxu0 %v2316
      %2338 = vmatprep.subr.bf16.mxu0 0
      %2339 = vmatpush1.bf16.msra.mxu0 %v2317
      %2340 = vmatprep.subr.bf16.mxu0 0
      %2341 = vmatpush1.bf16.msra.mxu0 %v2318
      %2342 = vmatprep.subr.bf16.mxu0 0
      %2343 = vmatpush1.bf16.msra.mxu0 %v2319
      %2344 = vmatprep.subr.bf16.mxu0 0
      %2345 = vmatpush1.bf16.msra.mxu0 0
      %2346 = vmatprep.subr.bf16.mxu0 0
      %2347 = vmatpush1.bf16.msra.mxu0 0
      %2348 = vmatprep.subr.bf16.mxu0 0
      %2349 = vmatpush1.bf16.msra.mxu0 0
      %2350 = vmatprep.subr.bf16.mxu0 0
      %2351 = vmatpush1.bf16.msra.mxu0 0
      %2352 = vmatprep.subr.bf16.mxu0 0
      %2353 = vmatpush1.bf16.msra.mxu0 0
      %2354 = vmatprep.subr.bf16.mxu0 0
      %2355 = vmatpush1.bf16.msra.mxu0 0
      %2356 = vmatprep.subr.bf16.mxu0 0
      %2357 = vmatpush1.bf16.msra.mxu0 0
      %2358 = vmatprep.subr.bf16.mxu0 0
      %2359 = vmatpush1.bf16.msra.mxu0 0
      %2360 = vmatprep.mubr.bf16.mxu0 0
      %2361 = vmatmul.mubr.bf16.gmra.mrb[0].mxu0 %v2263
      %v2362 = vpop.f32.mrb[0].mxu0
      %v2363 = vadd.f32 0.0, %v2362
      %v2364 = vpop.f32.mrb[0].mxu0
      %v2365 = vpop.f32.mrb[0].mxu0
      %v2366 = vadd.f32 0.0, %v2365
      %v2367 = vpop.f32.mrb[0].mxu0
      %2368 = vdwg.mxu0
      %v2371 = vunpack.c.l.b16 %v2243
      %v2372 = vunpack.c.l.b16 %v2244
      %v2373 = vpack.c.b16 %v2372, %v2371
      %v2391 = vunpack.c.l.b16 %v2247
      %v2392 = vunpack.c.l.b16 %v2248
      %v2393 = vunpack.c.l.b16 %v2249
      %v2394 = vunpack.c.l.b16 %v2250
      %v2395 = vunpack.c.l.b16 %v2251
      %v2396 = vunpack.c.l.b16 %v2252
      %v2397 = vunpack.c.l.b16 %v2253
      %v2398 = vunpack.c.l.b16 %v2254
      %v2399 = vunpack.c.l.b16 %v2255
      %v2400 = vunpack.c.l.b16 %v2256
      %v2401 = vunpack.c.l.b16 %v2257
      %v2402 = vunpack.c.l.b16 %v2258
      %v2403 = vunpack.c.l.b16 %v2259
      %v2404 = vunpack.c.l.b16 %v2260
      %v2405 = vunpack.c.l.b16 %v2261
      %v2406 = vunpack.c.l.b16 %v2262
      %v2407 = vpack.c.b16 %v2392, %v2391
      %v2408 = vpack.c.b16 %v2394, %v2393
      %v2409 = vpack.c.b16 %v2396, %v2395
      %v2410 = vpack.c.b16 %v2398, %v2397
      %v2411 = vpack.c.b16 %v2400, %v2399
      %v2412 = vpack.c.b16 %v2402, %v2401
      %v2413 = vpack.c.b16 %v2404, %v2403
      %v2414 = vpack.c.b16 %v2406, %v2405
      %2423 = vmatprep.subr.bf16.mxu0 0
      %2424 = vmatpush1.bf16.msra.mxu0 %v2407
      %2425 = vmatprep.subr.bf16.mxu0 0
      %2426 = vmatpush1.bf16.msra.mxu0 %v2408
      %2427 = vmatprep.subr.bf16.mxu0 0
      %2428 = vmatpush1.bf16.msra.mxu0 %v2409
      %2429 = vmatprep.subr.bf16.mxu0 0
      %2430 = vmatpush1.bf16.msra.mxu0 %v2410
      %2431 = vmatprep.subr.bf16.mxu0 0
      %2432 = vmatpush1.bf16.msra.mxu0 %v2411
      %2433 = vmatprep.subr.bf16.mxu0 0
      %2434 = vmatpush1.bf16.msra.mxu0 %v2412
      %2435 = vmatprep.subr.bf16.mxu0 0
      %2436 = vmatpush1.bf16.msra.mxu0 %v2413
      %2437 = vmatprep.subr.bf16.mxu0 0
      %2438 = vmatpush1.bf16.msra.mxu0 %v2414
      %2439 = vmatprep.subr.bf16.mxu0 0
      %2440 = vmatpush1.bf16.msra.mxu0 0
      %2441 = vmatprep.subr.bf16.mxu0 0
      %2442 = vmatpush1.bf16.msra.mxu0 0
      %2443 = vmatprep.subr.bf16.mxu0 0
      %2444 = vmatpush1.bf16.msra.mxu0 0
      %2445 = vmatprep.subr.bf16.mxu0 0
      %2446 = vmatpush1.bf16.msra.mxu0 0
      %2447 = vmatprep.subr.bf16.mxu0 0
      %2448 = vmatpush1.bf16.msra.mxu0 0
      %2449 = vmatprep.subr.bf16.mxu0 0
      %2450 = vmatpush1.bf16.msra.mxu0 0
      %2451 = vmatprep.subr.bf16.mxu0 0
      %2452 = vmatpush1.bf16.msra.mxu0 0
      %2453 = vmatprep.subr.bf16.mxu0 0
      %2454 = vmatpush1.bf16.msra.mxu0 0
      %2455 = vmatprep.mubr.bf16.mxu0 0
      %2456 = vmatmul.mubr.bf16.gmra.mrb[0].mxu0 %v2373
      %v2457 = vpop.f32.mrb[0].mxu0
      %v2458 = vadd.f32 %v2363, %v2457
      %v2459 = vpop.f32.mrb[0].mxu0
      %v2460 = vpop.f32.mrb[0].mxu0
      %v2461 = vadd.f32 %v2366, %v2460
      %v2462 = vpop.f32.mrb[0].mxu0
      %2463 = vdwg.mxu0
      %v2464 = vld [vmem:[%s4] sm:$0x1]
      %v2466 = vlaneseq
      %v2467 = vshrl.u32 %v2466, 7
      %v2468 = vsub.s32 0, %v2467
      %v2469 = vrot.slane %v2464, %v2468
      %v2471 = vadd.f32 %v2458, %v2469
      %v2472 = vadd.f32 %v2461, %v2469
      %v2473 = vtanh.pop %v2471
      %v2474 = vtanh.pop %v2472
      %2475 = vst [vmem:[#allocation2] sm:$0xff] %v2473
      %2476 = vst [vmem:[#allocation2 + $0x8] sm:$0xff] %v2474
      %v2477 = vld [vmem:[%s582] sm:$0xff]
      %v2478 = vld [vmem:[%s582 + $0x8] sm:$0xff]
      %v2479 = vpack.c.bf16 %v2474, %v2473
      %v2480 = vld [vmem:[%s586] sm:$0xf]
      %v2481 = vld [vmem:[%s586 + $0x4] sm:$0xf]
      %v2482 = vld [vmem:[%s586 + $0x8] sm:$0xf]
      %v2483 = vld [vmem:[%s586 + $0xc] sm:$0xf]
      %v2484 = vld [vmem:[%s586 + $0x10] sm:$0xf]
      %v2485 = vld [vmem:[%s586 + $0x14] sm:$0xf]
      %v2486 = vld [vmem:[%s586 + $0x18] sm:$0xf]
      %v2487 = vld [vmem:[%s586 + $0x1c] sm:$0xf]
      %v2488 = vld [vmem:[%s586 + $0x20] sm:$0xf]
      %v2489 = vld [vmem:[%s586 + $0x24] sm:$0xf]
      %v2490 = vld [vmem:[%s586 + $0x28] sm:$0xf]
      %v2491 = vld [vmem:[%s586 + $0x2c] sm:$0xf]
      %v2492 = vld [vmem:[%s586 + $0x30] sm:$0xf]
      %v2493 = vld [vmem:[%s586 + $0x34] sm:$0xf]
      %v2494 = vld [vmem:[%s586 + $0x38] sm:$0xf]
      %v2495 = vld [vmem:[%s586 + $0x3c] sm:$0xf]
      %v2496 = vpack.c.bf16 %v2478, %v2477
      %v2497 = vld [vmem:[%s604] sm:$0xf]
      %v2498 = vld [vmem:[%s604 + $0x4] sm:$0xf]
      %v2499 = vld [vmem:[%s604 + $0x8] sm:$0xf]
      %v2500 = vld [vmem:[%s604 + $0xc] sm:$0xf]
      %v2501 = vld [vmem:[%s604 + $0x10] sm:$0xf]
      %v2502 = vld [vmem:[%s604 + $0x14] sm:$0xf]
      %v2503 = vld [vmem:[%s604 + $0x18] sm:$0xf]
      %v2504 = vld [vmem:[%s604 + $0x1c] sm:$0xf]
      %v2505 = vld [vmem:[%s604 + $0x20] sm:$0xf]
      %v2506 = vld [vmem:[%s604 + $0x24] sm:$0xf]
      %v2507 = vld [vmem:[%s604 + $0x28] sm:$0xf]
      %v2508 = vld [vmem:[%s604 + $0x2c] sm:$0xf]
      %v2509 = vld [vmem:[%s604 + $0x30] sm:$0xf]
      %v2510 = vld [vmem:[%s604 + $0x34] sm:$0xf]
      %v2511 = vld [vmem:[%s604 + $0x38] sm:$0xf]
      %v2512 = vld [vmem:[%s604 + $0x3c] sm:$0xf]
      %v2529 = vunpack.c.l.b16 %v2497
      %v2530 = vunpack.c.l.b16 %v2498
      %v2531 = vunpack.c.l.b16 %v2499
      %v2532 = vunpack.c.l.b16 %v2500
      %v2533 = vunpack.c.l.b16 %v2501
      %v2534 = vunpack.c.l.b16 %v2502
      %v2535 = vunpack.c.l.b16 %v2503
      %v2536 = vunpack.c.l.b16 %v2504
      %v2537 = vunpack.c.l.b16 %v2505
      %v2538 = vunpack.c.l.b16 %v2506
      %v2539 = vunpack.c.l.b16 %v2507
      %v2540 = vunpack.c.l.b16 %v2508
      %v2541 = vunpack.c.l.b16 %v2509
      %v2542 = vunpack.c.l.b16 %v2510
      %v2543 = vunpack.c.l.b16 %v2511
      %v2544 = vunpack.c.l.b16 %v2512
      %v2545 = vpack.c.b16 %v2530, %v2529
      %v2546 = vpack.c.b16 %v2532, %v2531
      %v2547 = vpack.c.b16 %v2534, %v2533
      %v2548 = vpack.c.b16 %v2536, %v2535
      %v2549 = vpack.c.b16 %v2538, %v2537
      %v2550 = vpack.c.b16 %v2540, %v2539
      %v2551 = vpack.c.b16 %v2542, %v2541
      %v2552 = vpack.c.b16 %v2544, %v2543
      %2561 = vmatprep.subr.bf16.mxu0 0
      %2562 = vmatpush1.bf16.msra.mxu0 %v2545
      %2563 = vmatprep.subr.bf16.mxu0 0
      %2564 = vmatpush1.bf16.msra.mxu0 %v2546
      %2565 = vmatprep.subr.bf16.mxu0 0
      %2566 = vmatpush1.bf16.msra.mxu0 %v2547
      %2567 = vmatprep.subr.bf16.mxu0 0
      %2568 = vmatpush1.bf16.msra.mxu0 %v2548
      %2569 = vmatprep.subr.bf16.mxu0 0
      %2570 = vmatpush1.bf16.msra.mxu0 %v2549
      %2571 = vmatprep.subr.bf16.mxu0 0
      %2572 = vmatpush1.bf16.msra.mxu0 %v2550
      %2573 = vmatprep.subr.bf16.mxu0 0
      %2574 = vmatpush1.bf16.msra.mxu0 %v2551
      %2575 = vmatprep.subr.bf16.mxu0 0
      %2576 = vmatpush1.bf16.msra.mxu0 %v2552
      %2577 = vmatprep.subr.bf16.mxu0 0
      %2578 = vmatpush1.bf16.msra.mxu0 0
      %2579 = vmatprep.subr.bf16.mxu0 0
      %2580 = vmatpush1.bf16.msra.mxu0 0
      %2581 = vmatprep.subr.bf16.mxu0 0
      %2582 = vmatpush1.bf16.msra.mxu0 0
      %2583 = vmatprep.subr.bf16.mxu0 0
      %2584 = vmatpush1.bf16.msra.mxu0 0
      %2585 = vmatprep.subr.bf16.mxu0 0
      %2586 = vmatpush1.bf16.msra.mxu0 0
      %2587 = vmatprep.subr.bf16.mxu0 0
      %2588 = vmatpush1.bf16.msra.mxu0 0
      %2589 = vmatprep.subr.bf16.mxu0 0
      %2590 = vmatpush1.bf16.msra.mxu0 0
      %2591 = vmatprep.subr.bf16.mxu0 0
      %2592 = vmatpush1.bf16.msra.mxu0 0
      %2593 = vmatprep.mubr.bf16.mxu0 0
      %2594 = vmatmul.mubr.bf16.gmra.mrb[0].mxu0 %v2496
      %v2595 = vpop.f32.mrb[0].mxu0
      %v2596 = vadd.f32 0.0, %v2595
      %v2597 = vpop.f32.mrb[0].mxu0
      %v2598 = vpop.f32.mrb[0].mxu0
      %v2599 = vadd.f32 0.0, %v2598
      %v2600 = vpop.f32.mrb[0].mxu0
      %2601 = vdwg.mxu0
      %v2618 = vunpack.c.l.b16 %v2480
      %v2619 = vunpack.c.l.b16 %v2481
      %v2620 = vunpack.c.l.b16 %v2482
      %v2621 = vunpack.c.l.b16 %v2483
      %v2622 = vunpack.c.l.b16 %v2484
      %v2623 = vunpack.c.l.b16 %v2485
      %v2624 = vunpack.c.l.b16 %v2486
      %v2625 = vunpack.c.l.b16 %v2487
      %v2626 = vunpack.c.l.b16 %v2488
      %v2627 = vunpack.c.l.b16 %v2489
      %v2628 = vunpack.c.l.b16 %v2490
      %v2629 = vunpack.c.l.b16 %v2491
      %v2630 = vunpack.c.l.b16 %v2492
      %v2631 = vunpack.c.l.b16 %v2493
      %v2632 = vunpack.c.l.b16 %v2494
      %v2633 = vunpack.c.l.b16 %v2495
      %v2634 = vpack.c.b16 %v2619, %v2618
      %v2635 = vpack.c.b16 %v2621, %v2620
      %v2636 = vpack.c.b16 %v2623, %v2622
      %v2637 = vpack.c.b16 %v2625, %v2624
      %v2638 = vpack.c.b16 %v2627, %v2626
      %v2639 = vpack.c.b16 %v2629, %v2628
      %v2640 = vpack.c.b16 %v2631, %v2630
      %v2641 = vpack.c.b16 %v2633, %v2632
      %2650 = vmatprep.subr.bf16.mxu0 0
      %2651 = vmatpush1.bf16.msra.mxu0 %v2634
      %2652 = vmatprep.subr.bf16.mxu0 0
      %2653 = vmatpush1.bf16.msra.mxu0 %v2635
      %2654 = vmatprep.subr.bf16.mxu0 0
      %2655 = vmatpush1.bf16.msra.mxu0 %v2636
      %2656 = vmatprep.subr.bf16.mxu0 0
      %2657 = vmatpush1.bf16.msra.mxu0 %v2637
      %2658 = vmatprep.subr.bf16.mxu0 0
      %2659 = vmatpush1.bf16.msra.mxu0 %v2638
      %2660 = vmatprep.subr.bf16.mxu0 0
      %2661 = vmatpush1.bf16.msra.mxu0 %v2639
      %2662 = vmatprep.subr.bf16.mxu0 0
      %2663 = vmatpush1.bf16.msra.mxu0 %v2640
      %2664 = vmatprep.subr.bf16.mxu0 0
      %2665 = vmatpush1.bf16.msra.mxu0 %v2641
      %2666 = vmatprep.subr.bf16.mxu0 0
      %2667 = vmatpush1.bf16.msra.mxu0 0
      %2668 = vmatprep.subr.bf16.mxu0 0
      %2669 = vmatpush1.bf16.msra.mxu0 0
      %2670 = vmatprep.subr.bf16.mxu0 0
      %2671 = vmatpush1.bf16.msra.mxu0 0
      %2672 = vmatprep.subr.bf16.mxu0 0
      %2673 = vmatpush1.bf16.msra.mxu0 0
      %2674 = vmatprep.subr.bf16.mxu0 0
      %2675 = vmatpush1.bf16.msra.mxu0 0
      %2676 = vmatprep.subr.bf16.mxu0 0
      %2677 = vmatpush1.bf16.msra.mxu0 0
      %2678 = vmatprep.subr.bf16.mxu0 0
      %2679 = vmatpush1.bf16.msra.mxu0 0
      %2680 = vmatprep.subr.bf16.mxu0 0
      %2681 = vmatpush1.bf16.msra.mxu0 0
      %2682 = vmatprep.mubr.bf16.mxu0 0
      %2683 = vmatmul.mubr.bf16.gmra.mrb[0].mxu0 %v2479
      %v2684 = vpop.f32.mrb[0].mxu0
      %v2685 = vadd.f32 %v2596, %v2684
      %v2686 = vpop.f32.mrb[0].mxu0
      %v2687 = vpop.f32.mrb[0].mxu0
      %v2688 = vadd.f32 %v2599, %v2687
      %v2689 = vpop.f32.mrb[0].mxu0
      %2690 = vdwg.mxu0
      %v2691 = vld [vmem:[%s799] sm:$0x1]
      %v2693 = vlaneseq
      %v2694 = vshrl.u32 %v2693, 7
      %v2695 = vsub.s32 0, %v2694
      %v2696 = vrot.slane %v2691, %v2695
      %v2698 = vadd.f32 %v2685, %v2696
      %v2699 = vadd.f32 %v2688, %v2696
      %v2700 = vtanh.pop %v2698
      %v2701 = vtanh.pop %v2699
      %2702 = vst [vmem:[%s582] sm:$0xff] %v2700
      %2703 = vst [vmem:[%s582 + $0x8] sm:$0xff] %v2701
      %v2704 = vpack.c.bf16 %v2701, %v2700
      %v2706 = vunpack.c.l.b16 %v2704
      %v2707 = vunpack.c.h.b16 %v2704
      %v2708 = vpack.c.b16 %v2706, %v2706
      %v2709 = vpack.c.b16 %v2707, %v2707
      %s2712 = scalar_lea.vmem %s326, 32
      %2713 = vst [vmem:[%s2712] sm:$0xf] %v2708
      %2714 = vst [vmem:[%s2712 + $0x4] sm:$0xf] %v2709
      %s2715 = scalar_lea.vmem %s308, 40
      %v2716 = vld [vmem:[%s2715] sm:$0xf]
      %v2717 = vld [vmem:[%s2715 + $0x4] sm:$0xf]
      %v2718 = vld [vmem:[#allocation2] sm:$0xff]
      %v2719 = vld [vmem:[#allocation2 + $0x8] sm:$0xff]
      %v2720 = vld [vmem:[%s2] sm:$0xf]
      %v2721 = vld [vmem:[%s2 + $0x4] sm:$0xf]
      %v2722 = vld [vmem:[%s2 + $0x8] sm:$0xf]
      %v2723 = vld [vmem:[%s2 + $0xc] sm:$0xf]
      %v2724 = vld [vmem:[%s2 + $0x10] sm:$0xf]
      %v2725 = vld [vmem:[%s2 + $0x14] sm:$0xf]
      %v2726 = vld [vmem:[%s2 + $0x18] sm:$0xf]
      %v2727 = vld [vmem:[%s2 + $0x1c] sm:$0xf]
      %v2728 = vld [vmem:[%s2 + $0x20] sm:$0xf]
      %v2729 = vld [vmem:[%s2 + $0x24] sm:$0xf]
      %v2730 = vld [vmem:[%s2 + $0x28] sm:$0xf]
      %v2731 = vld [vmem:[%s2 + $0x2c] sm:$0xf]
      %v2732 = vld [vmem:[%s2 + $0x30] sm:$0xf]
      %v2733 = vld [vmem:[%s2 + $0x34] sm:$0xf]
      %v2734 = vld [vmem:[%s2 + $0x38] sm:$0xf]
      %v2735 = vld [vmem:[%s2 + $0x3c] sm:$0xf]
      %v2736 = vpack.c.bf16 %v2719, %v2718
      %v2737 = vld [vmem:[%s3] sm:$0xf]
      %v2738 = vld [vmem:[%s3 + $0x4] sm:$0xf]
      %v2739 = vld [vmem:[%s3 + $0x8] sm:$0xf]
      %v2740 = vld [vmem:[%s3 + $0xc] sm:$0xf]
      %v2741 = vld [vmem:[%s3 + $0x10] sm:$0xf]
      %v2742 = vld [vmem:[%s3 + $0x14] sm:$0xf]
      %v2743 = vld [vmem:[%s3 + $0x18] sm:$0xf]
      %v2744 = vld [vmem:[%s3 + $0x1c] sm:$0xf]
      %v2745 = vld [vmem:[%s3 + $0x20] sm:$0xf]
      %v2746 = vld [vmem:[%s3 + $0x24] sm:$0xf]
      %v2747 = vld [vmem:[%s3 + $0x28] sm:$0xf]
      %v2748 = vld [vmem:[%s3 + $0x2c] sm:$0xf]
      %v2749 = vld [vmem:[%s3 + $0x30] sm:$0xf]
      %v2750 = vld [vmem:[%s3 + $0x34] sm:$0xf]
      %v2751 = vld [vmem:[%s3 + $0x38] sm:$0xf]
      %v2752 = vld [vmem:[%s3 + $0x3c] sm:$0xf]
      %v2769 = vunpack.c.l.b16 %v2737
      %v2770 = vunpack.c.l.b16 %v2738
      %v2771 = vunpack.c.l.b16 %v2739
      %v2772 = vunpack.c.l.b16 %v2740
      %v2773 = vunpack.c.l.b16 %v2741
      %v2774 = vunpack.c.l.b16 %v2742
      %v2775 = vunpack.c.l.b16 %v2743
      %v2776 = vunpack.c.l.b16 %v2744
      %v2777 = vunpack.c.l.b16 %v2745
      %v2778 = vunpack.c.l.b16 %v2746
      %v2779 = vunpack.c.l.b16 %v2747
      %v2780 = vunpack.c.l.b16 %v2748
      %v2781 = vunpack.c.l.b16 %v2749
      %v2782 = vunpack.c.l.b16 %v2750
      %v2783 = vunpack.c.l.b16 %v2751
      %v2784 = vunpack.c.l.b16 %v2752
      %v2785 = vpack.c.b16 %v2770, %v2769
      %v2786 = vpack.c.b16 %v2772, %v2771
      %v2787 = vpack.c.b16 %v2774, %v2773
      %v2788 = vpack.c.b16 %v2776, %v2775
      %v2789 = vpack.c.b16 %v2778, %v2777
      %v2790 = vpack.c.b16 %v2780, %v2779
      %v2791 = vpack.c.b16 %v2782, %v2781
      %v2792 = vpack.c.b16 %v2784, %v2783
      %2801 = vmatprep.subr.bf16.mxu0 0
      %2802 = vmatpush1.bf16.msra.mxu0 %v2785
      %2803 = vmatprep.subr.bf16.mxu0 0
      %2804 = vmatpush1.bf16.msra.mxu0 %v2786
      %2805 = vmatprep.subr.bf16.mxu0 0
      %2806 = vmatpush1.bf16.msra.mxu0 %v2787
      %2807 = vmatprep.subr.bf16.mxu0 0
      %2808 = vmatpush1.bf16.msra.mxu0 %v2788
      %2809 = vmatprep.subr.bf16.mxu0 0
      %2810 = vmatpush1.bf16.msra.mxu0 %v2789
      %2811 = vmatprep.subr.bf16.mxu0 0
      %2812 = vmatpush1.bf16.msra.mxu0 %v2790
      %2813 = vmatprep.subr.bf16.mxu0 0
      %2814 = vmatpush1.bf16.msra.mxu0 %v2791
      %2815 = vmatprep.subr.bf16.mxu0 0
      %2816 = vmatpush1.bf16.msra.mxu0 %v2792
      %2817 = vmatprep.subr.bf16.mxu0 0
      %2818 = vmatpush1.bf16.msra.mxu0 0
      %2819 = vmatprep.subr.bf16.mxu0 0
      %2820 = vmatpush1.bf16.msra.mxu0 0
      %2821 = vmatprep.subr.bf16.mxu0 0
      %2822 = vmatpush1.bf16.msra.mxu0 0
      %2823 = vmatprep.subr.bf16.mxu0 0
      %2824 = vmatpush1.bf16.msra.mxu0 0
      %2825 = vmatprep.subr.bf16.mxu0 0
      %2826 = vmatpush1.bf16.msra.mxu0 0
      %2827 = vmatprep.subr.bf16.mxu0 0
      %2828 = vmatpush1.bf16.msra.mxu0 0
      %2829 = vmatprep.subr.bf16.mxu0 0
      %2830 = vmatpush1.bf16.msra.mxu0 0
      %2831 = vmatprep.subr.bf16.mxu0 0
      %2832 = vmatpush1.bf16.msra.mxu0 0
      %2833 = vmatprep.mubr.bf16.mxu0 0
      %2834 = vmatmul.mubr.bf16.gmra.mrb[0].mxu0 %v2736
      %v2835 = vpop.f32.mrb[0].mxu0
      %v2836 = vadd.f32 0.0, %v2835
      %v2837 = vpop.f32.mrb[0].mxu0
      %v2838 = vpop.f32.mrb[0].mxu0
      %v2839 = vadd.f32 0.0, %v2838
      %v2840 = vpop.f32.mrb[0].mxu0
      %2841 = vdwg.mxu0
      %v2844 = vunpack.c.l.b16 %v2716
      %v2845 = vunpack.c.l.b16 %v2717
      %v2846 = vpack.c.b16 %v2845, %v2844
      %v2864 = vunpack.c.l.b16 %v2720
      %v2865 = vunpack.c.l.b16 %v2721
      %v2866 = vunpack.c.l.b16 %v2722
      %v2867 = vunpack.c.l.b16 %v2723
      %v2868 = vunpack.c.l.b16 %v2724
      %v2869 = vunpack.c.l.b16 %v2725
      %v2870 = vunpack.c.l.b16 %v2726
      %v2871 = vunpack.c.l.b16 %v2727
      %v2872 = vunpack.c.l.b16 %v2728
      %v2873 = vunpack.c.l.b16 %v2729
      %v2874 = vunpack.c.l.b16 %v2730
      %v2875 = vunpack.c.l.b16 %v2731
      %v2876 = vunpack.c.l.b16 %v2732
      %v2877 = vunpack.c.l.b16 %v2733
      %v2878 = vunpack.c.l.b16 %v2734
      %v2879 = vunpack.c.l.b16 %v2735
      %v2880 = vpack.c.b16 %v2865, %v2864
      %v2881 = vpack.c.b16 %v2867, %v2866
      %v2882 = vpack.c.b16 %v2869, %v2868
      %v2883 = vpack.c.b16 %v2871, %v2870
      %v2884 = vpack.c.b16 %v2873, %v2872
      %v2885 = vpack.c.b16 %v2875, %v2874
      %v2886 = vpack.c.b16 %v2877, %v2876
      %v2887 = vpack.c.b16 %v2879, %v2878
      %2896 = vmatprep.subr.bf16.mxu0 0
      %2897 = vmatpush1.bf16.msra.mxu0 %v2880
      %2898 = vmatprep.subr.bf16.mxu0 0
      %2899 = vmatpush1.bf16.msra.mxu0 %v2881
      %2900 = vmatprep.subr.bf16.mxu0 0
      %2901 = vmatpush1.bf16.msra.mxu0 %v2882
      %2902 = vmatprep.subr.bf16.mxu0 0
      %2903 = vmatpush1.bf16.msra.mxu0 %v2883
      %2904 = vmatprep.subr.bf16.mxu0 0
      %2905 = vmatpush1.bf16.msra.mxu0 %v2884
      %2906 = vmatprep.subr.bf16.mxu0 0
      %2907 = vmatpush1.bf16.msra.mxu0 %v2885
      %2908 = vmatprep.subr.bf16.mxu0 0
      %2909 = vmatpush1.bf16.msra.mxu0 %v2886
      %2910 = vmatprep.subr.bf16.mxu0 0
      %2911 = vmatpush1.bf16.msra.mxu0 %v2887
      %2912 = vmatprep.subr.bf16.mxu0 0
      %2913 = vmatpush1.bf16.msra.mxu0 0
      %2914 = vmatprep.subr.bf16.mxu0 0
      %2915 = vmatpush1.bf16.msra.mxu0 0
      %2916 = vmatprep.subr.bf16.mxu0 0
      %2917 = vmatpush1.bf16.msra.mxu0 0
      %2918 = vmatprep.subr.bf16.mxu0 0
      %2919 = vmatpush1.bf16.msra.mxu0 0
      %2920 = vmatprep.subr.bf16.mxu0 0
      %2921 = vmatpush1.bf16.msra.mxu0 0
      %2922 = vmatprep.subr.bf16.mxu0 0
      %2923 = vmatpush1.bf16.msra.mxu0 0
      %2924 = vmatprep.subr.bf16.mxu0 0
      %2925 = vmatpush1.bf16.msra.mxu0 0
      %2926 = vmatprep.subr.bf16.mxu0 0
      %2927 = vmatpush1.bf16.msra.mxu0 0
      %2928 = vmatprep.mubr.bf16.mxu0 0
      %2929 = vmatmul.mubr.bf16.gmra.mrb[0].mxu0 %v2846
      %v2930 = vpop.f32.mrb[0].mxu0
      %v2931 = vadd.f32 %v2836, %v2930
      %v2932 = vpop.f32.mrb[0].mxu0
      %v2933 = vpop.f32.mrb[0].mxu0
      %v2934 = vadd.f32 %v2839, %v2933
      %v2935 = vpop.f32.mrb[0].mxu0
      %2936 = vdwg.mxu0
      %v2937 = vld [vmem:[%s4] sm:$0x1]
      %v2939 = vlaneseq
      %v2940 = vshrl.u32 %v2939, 7
      %v2941 = vsub.s32 0, %v2940
      %v2942 = vrot.slane %v2937, %v2941
      %v2944 = vadd.f32 %v2931, %v2942
      %v2945 = vadd.f32 %v2934, %v2942
      %v2946 = vtanh.pop %v2944
      %v2947 = vtanh.pop %v2945
      %2948 = vst [vmem:[#allocation2] sm:$0xff] %v2946
      %2949 = vst [vmem:[#allocation2 + $0x8] sm:$0xff] %v2947
      %v2950 = vld [vmem:[%s582] sm:$0xff]
      %v2951 = vld [vmem:[%s582 + $0x8] sm:$0xff]
      %v2952 = vpack.c.bf16 %v2947, %v2946
      %v2953 = vld [vmem:[%s586] sm:$0xf]
      %v2954 = vld [vmem:[%s586 + $0x4] sm:$0xf]
      %v2955 = vld [vmem:[%s586 + $0x8] sm:$0xf]
      %v2956 = vld [vmem:[%s586 + $0xc] sm:$0xf]
      %v2957 = vld [vmem:[%s586 + $0x10] sm:$0xf]
      %v2958 = vld [vmem:[%s586 + $0x14] sm:$0xf]
      %v2959 = vld [vmem:[%s586 + $0x18] sm:$0xf]
      %v2960 = vld [vmem:[%s586 + $0x1c] sm:$0xf]
      %v2961 = vld [vmem:[%s586 + $0x20] sm:$0xf]
      %v2962 = vld [vmem:[%s586 + $0x24] sm:$0xf]
      %v2963 = vld [vmem:[%s586 + $0x28] sm:$0xf]
      %v2964 = vld [vmem:[%s586 + $0x2c] sm:$0xf]
      %v2965 = vld [vmem:[%s586 + $0x30] sm:$0xf]
      %v2966 = vld [vmem:[%s586 + $0x34] sm:$0xf]
      %v2967 = vld [vmem:[%s586 + $0x38] sm:$0xf]
      %v2968 = vld [vmem:[%s586 + $0x3c] sm:$0xf]
      %v2969 = vpack.c.bf16 %v2951, %v2950
      %v2970 = vld [vmem:[%s604] sm:$0xf]
      %v2971 = vld [vmem:[%s604 + $0x4] sm:$0xf]
      %v2972 = vld [vmem:[%s604 + $0x8] sm:$0xf]
      %v2973 = vld [vmem:[%s604 + $0xc] sm:$0xf]
      %v2974 = vld [vmem:[%s604 + $0x10] sm:$0xf]
      %v2975 = vld [vmem:[%s604 + $0x14] sm:$0xf]
      %v2976 = vld [vmem:[%s604 + $0x18] sm:$0xf]
      %v2977 = vld [vmem:[%s604 + $0x1c] sm:$0xf]
      %v2978 = vld [vmem:[%s604 + $0x20] sm:$0xf]
      %v2979 = vld [vmem:[%s604 + $0x24] sm:$0xf]
      %v2980 = vld [vmem:[%s604 + $0x28] sm:$0xf]
      %v2981 = vld [vmem:[%s604 + $0x2c] sm:$0xf]
      %v2982 = vld [vmem:[%s604 + $0x30] sm:$0xf]
      %v2983 = vld [vmem:[%s604 + $0x34] sm:$0xf]
      %v2984 = vld [vmem:[%s604 + $0x38] sm:$0xf]
      %v2985 = vld [vmem:[%s604 + $0x3c] sm:$0xf]
      %v3002 = vunpack.c.l.b16 %v2970
      %v3003 = vunpack.c.l.b16 %v2971
      %v3004 = vunpack.c.l.b16 %v2972
      %v3005 = vunpack.c.l.b16 %v2973
      %v3006 = vunpack.c.l.b16 %v2974
      %v3007 = vunpack.c.l.b16 %v2975
      %v3008 = vunpack.c.l.b16 %v2976
      %v3009 = vunpack.c.l.b16 %v2977
      %v3010 = vunpack.c.l.b16 %v2978
      %v3011 = vunpack.c.l.b16 %v2979
      %v3012 = vunpack.c.l.b16 %v2980
      %v3013 = vunpack.c.l.b16 %v2981
      %v3014 = vunpack.c.l.b16 %v2982
      %v3015 = vunpack.c.l.b16 %v2983
      %v3016 = vunpack.c.l.b16 %v2984
      %v3017 = vunpack.c.l.b16 %v2985
      %v3018 = vpack.c.b16 %v3003, %v3002
      %v3019 = vpack.c.b16 %v3005, %v3004
      %v3020 = vpack.c.b16 %v3007, %v3006
      %v3021 = vpack.c.b16 %v3009, %v3008
      %v3022 = vpack.c.b16 %v3011, %v3010
      %v3023 = vpack.c.b16 %v3013, %v3012
      %v3024 = vpack.c.b16 %v3015, %v3014
      %v3025 = vpack.c.b16 %v3017, %v3016
      %3034 = vmatprep.subr.bf16.mxu0 0
      %3035 = vmatpush1.bf16.msra.mxu0 %v3018
      %3036 = vmatprep.subr.bf16.mxu0 0
      %3037 = vmatpush1.bf16.msra.mxu0 %v3019
      %3038 = vmatprep.subr.bf16.mxu0 0
      %3039 = vmatpush1.bf16.msra.mxu0 %v3020
      %3040 = vmatprep.subr.bf16.mxu0 0
      %3041 = vmatpush1.bf16.msra.mxu0 %v3021
      %3042 = vmatprep.subr.bf16.mxu0 0
      %3043 = vmatpush1.bf16.msra.mxu0 %v3022
      %3044 = vmatprep.subr.bf16.mxu0 0
      %3045 = vmatpush1.bf16.msra.mxu0 %v3023
      %3046 = vmatprep.subr.bf16.mxu0 0
      %3047 = vmatpush1.bf16.msra.mxu0 %v3024
      %3048 = vmatprep.subr.bf16.mxu0 0
      %3049 = vmatpush1.bf16.msra.mxu0 %v3025
      %3050 = vmatprep.subr.bf16.mxu0 0
      %3051 = vmatpush1.bf16.msra.mxu0 0
      %3052 = vmatprep.subr.bf16.mxu0 0
      %3053 = vmatpush1.bf16.msra.mxu0 0
      %3054 = vmatprep.subr.bf16.mxu0 0
      %3055 = vmatpush1.bf16.msra.mxu0 0
      %3056 = vmatprep.subr.bf16.mxu0 0
      %3057 = vmatpush1.bf16.msra.mxu0 0
      %3058 = vmatprep.subr.bf16.mxu0 0
      %3059 = vmatpush1.bf16.msra.mxu0 0
      %3060 = vmatprep.subr.bf16.mxu0 0
      %3061 = vmatpush1.bf16.msra.mxu0 0
      %3062 = vmatprep.subr.bf16.mxu0 0
      %3063 = vmatpush1.bf16.msra.mxu0 0
      %3064 = vmatprep.subr.bf16.mxu0 0
      %3065 = vmatpush1.bf16.msra.mxu0 0
      %3066 = vmatprep.mubr.bf16.mxu0 0
      %3067 = vmatmul.mubr.bf16.gmra.mrb[0].mxu0 %v2969
      %v3068 = vpop.f32.mrb[0].mxu0
      %v3069 = vadd.f32 0.0, %v3068
      %v3070 = vpop.f32.mrb[0].mxu0
      %v3071 = vpop.f32.mrb[0].mxu0
      %v3072 = vadd.f32 0.0, %v3071
      %v3073 = vpop.f32.mrb[0].mxu0
      %3074 = vdwg.mxu0
      %v3091 = vunpack.c.l.b16 %v2953
      %v3092 = vunpack.c.l.b16 %v2954
      %v3093 = vunpack.c.l.b16 %v2955
      %v3094 = vunpack.c.l.b16 %v2956
      %v3095 = vunpack.c.l.b16 %v2957
      %v3096 = vunpack.c.l.b16 %v2958
      %v3097 = vunpack.c.l.b16 %v2959
      %v3098 = vunpack.c.l.b16 %v2960
      %v3099 = vunpack.c.l.b16 %v2961
      %v3100 = vunpack.c.l.b16 %v2962
      %v3101 = vunpack.c.l.b16 %v2963
      %v3102 = vunpack.c.l.b16 %v2964
      %v3103 = vunpack.c.l.b16 %v2965
      %v3104 = vunpack.c.l.b16 %v2966
      %v3105 = vunpack.c.l.b16 %v2967
      %v3106 = vunpack.c.l.b16 %v2968
      %v3107 = vpack.c.b16 %v3092, %v3091
      %v3108 = vpack.c.b16 %v3094, %v3093
      %v3109 = vpack.c.b16 %v3096, %v3095
      %v3110 = vpack.c.b16 %v3098, %v3097
      %v3111 = vpack.c.b16 %v3100, %v3099
      %v3112 = vpack.c.b16 %v3102, %v3101
      %v3113 = vpack.c.b16 %v3104, %v3103
      %v3114 = vpack.c.b16 %v3106, %v3105
      %3123 = vmatprep.subr.bf16.mxu0 0
      %3124 = vmatpush1.bf16.msra.mxu0 %v3107
      %3125 = vmatprep.subr.bf16.mxu0 0
      %3126 = vmatpush1.bf16.msra.mxu0 %v3108
      %3127 = vmatprep.subr.bf16.mxu0 0
      %3128 = vmatpush1.bf16.msra.mxu0 %v3109
      %3129 = vmatprep.subr.bf16.mxu0 0
      %3130 = vmatpush1.bf16.msra.mxu0 %v3110
      %3131 = vmatprep.subr.bf16.mxu0 0
      %3132 = vmatpush1.bf16.msra.mxu0 %v3111
      %3133 = vmatprep.subr.bf16.mxu0 0
      %3134 = vmatpush1.bf16.msra.mxu0 %v3112
      %3135 = vmatprep.subr.bf16.mxu0 0
      %3136 = vmatpush1.bf16.msra.mxu0 %v3113
      %3137 = vmatprep.subr.bf16.mxu0 0
      %3138 = vmatpush1.bf16.msra.mxu0 %v3114
      %3139 = vmatprep.subr.bf16.mxu0 0
      %3140 = vmatpush1.bf16.msra.mxu0 0
      %3141 = vmatprep.subr.bf16.mxu0 0
      %3142 = vmatpush1.bf16.msra.mxu0 0
      %3143 = vmatprep.subr.bf16.mxu0 0
      %3144 = vmatpush1.bf16.msra.mxu0 0
      %3145 = vmatprep.subr.bf16.mxu0 0
      %3146 = vmatpush1.bf16.msra.mxu0 0
      %3147 = vmatprep.subr.bf16.mxu0 0
      %3148 = vmatpush1.bf16.msra.mxu0 0
      %3149 = vmatprep.subr.bf16.mxu0 0
      %3150 = vmatpush1.bf16.msra.mxu0 0
      %3151 = vmatprep.subr.bf16.mxu0 0
      %3152 = vmatpush1.bf16.msra.mxu0 0
      %3153 = vmatprep.subr.bf16.mxu0 0
      %3154 = vmatpush1.bf16.msra.mxu0 0
      %3155 = vmatprep.mubr.bf16.mxu0 0
      %3156 = vmatmul.mubr.bf16.gmra.mrb[0].mxu0 %v2952
      %v3157 = vpop.f32.mrb[0].mxu0
      %v3158 = vadd.f32 %v3069, %v3157
      %v3159 = vpop.f32.mrb[0].mxu0
      %v3160 = vpop.f32.mrb[0].mxu0
      %v3161 = vadd.f32 %v3072, %v3160
      %v3162 = vpop.f32.mrb[0].mxu0
      %3163 = vdwg.mxu0
      %v3164 = vld [vmem:[%s799] sm:$0x1]
      %v3166 = vlaneseq
      %v3167 = vshrl.u32 %v3166, 7
      %v3168 = vsub.s32 0, %v3167
      %v3169 = vrot.slane %v3164, %v3168
      %v3171 = vadd.f32 %v3158, %v3169
      %v3172 = vadd.f32 %v3161, %v3169
      %v3173 = vtanh.pop %v3171
      %v3174 = vtanh.pop %v3172
      %3175 = vst [vmem:[%s582] sm:$0xff] %v3173
      %3176 = vst [vmem:[%s582 + $0x8] sm:$0xff] %v3174
      %v3177 = vpack.c.bf16 %v3174, %v3173
      %v3179 = vunpack.c.l.b16 %v3177
      %v3180 = vunpack.c.h.b16 %v3177
      %v3181 = vpack.c.b16 %v3179, %v3179
      %v3182 = vpack.c.b16 %v3180, %v3180
      %s3185 = scalar_lea.vmem %s326, 40
      %3186 = vst [vmem:[%s3185] sm:$0xf] %v3181
      %3187 = vst [vmem:[%s3185 + $0x4] sm:$0xf] %v3182
      %s3188 = scalar_lea.vmem %s308, 48
      %v3189 = vld [vmem:[%s3188] sm:$0xf]
      %v3190 = vld [vmem:[%s3188 + $0x4] sm:$0xf]
      %v3191 = vld [vmem:[#allocation2] sm:$0xff]
      %v3192 = vld [vmem:[#allocation2 + $0x8] sm:$0xff]
      %v3193 = vld [vmem:[%s2] sm:$0xf]
      %v3194 = vld [vmem:[%s2 + $0x4] sm:$0xf]
      %v3195 = vld [vmem:[%s2 + $0x8] sm:$0xf]
      %v3196 = vld [vmem:[%s2 + $0xc] sm:$0xf]
      %v3197 = vld [vmem:[%s2 + $0x10] sm:$0xf]
      %v3198 = vld [vmem:[%s2 + $0x14] sm:$0xf]
      %v3199 = vld [vmem:[%s2 + $0x18] sm:$0xf]
      %v3200 = vld [vmem:[%s2 + $0x1c] sm:$0xf]
      %v3201 = vld [vmem:[%s2 + $0x20] sm:$0xf]
      %v3202 = vld [vmem:[%s2 + $0x24] sm:$0xf]
      %v3203 = vld [vmem:[%s2 + $0x28] sm:$0xf]
      %v3204 = vld [vmem:[%s2 + $0x2c] sm:$0xf]
      %v3205 = vld [vmem:[%s2 + $0x30] sm:$0xf]
      %v3206 = vld [vmem:[%s2 + $0x34] sm:$0xf]
      %v3207 = vld [vmem:[%s2 + $0x38] sm:$0xf]
      %v3208 = vld [vmem:[%s2 + $0x3c] sm:$0xf]
      %v3209 = vpack.c.bf16 %v3192, %v3191
      %v3210 = vld [vmem:[%s3] sm:$0xf]
      %v3211 = vld [vmem:[%s3 + $0x4] sm:$0xf]
      %v3212 = vld [vmem:[%s3 + $0x8] sm:$0xf]
      %v3213 = vld [vmem:[%s3 + $0xc] sm:$0xf]
      %v3214 = vld [vmem:[%s3 + $0x10] sm:$0xf]
      %v3215 = vld [vmem:[%s3 + $0x14] sm:$0xf]
      %v3216 = vld [vmem:[%s3 + $0x18] sm:$0xf]
      %v3217 = vld [vmem:[%s3 + $0x1c] sm:$0xf]
      %v3218 = vld [vmem:[%s3 + $0x20] sm:$0xf]
      %v3219 = vld [vmem:[%s3 + $0x24] sm:$0xf]
      %v3220 = vld [vmem:[%s3 + $0x28] sm:$0xf]
      %v3221 = vld [vmem:[%s3 + $0x2c] sm:$0xf]
      %v3222 = vld [vmem:[%s3 + $0x30] sm:$0xf]
      %v3223 = vld [vmem:[%s3 + $0x34] sm:$0xf]
      %v3224 = vld [vmem:[%s3 + $0x38] sm:$0xf]
      %v3225 = vld [vmem:[%s3 + $0x3c] sm:$0xf]
      %v3242 = vunpack.c.l.b16 %v3210
      %v3243 = vunpack.c.l.b16 %v3211
      %v3244 = vunpack.c.l.b16 %v3212
      %v3245 = vunpack.c.l.b16 %v3213
      %v3246 = vunpack.c.l.b16 %v3214
      %v3247 = vunpack.c.l.b16 %v3215
      %v3248 = vunpack.c.l.b16 %v3216
      %v3249 = vunpack.c.l.b16 %v3217
      %v3250 = vunpack.c.l.b16 %v3218
      %v3251 = vunpack.c.l.b16 %v3219
      %v3252 = vunpack.c.l.b16 %v3220
      %v3253 = vunpack.c.l.b16 %v3221
      %v3254 = vunpack.c.l.b16 %v3222
      %v3255 = vunpack.c.l.b16 %v3223
      %v3256 = vunpack.c.l.b16 %v3224
      %v3257 = vunpack.c.l.b16 %v3225
      %v3258 = vpack.c.b16 %v3243, %v3242
      %v3259 = vpack.c.b16 %v3245, %v3244
      %v3260 = vpack.c.b16 %v3247, %v3246
      %v3261 = vpack.c.b16 %v3249, %v3248
      %v3262 = vpack.c.b16 %v3251, %v3250
      %v3263 = vpack.c.b16 %v3253, %v3252
      %v3264 = vpack.c.b16 %v3255, %v3254
      %v3265 = vpack.c.b16 %v3257, %v3256
      %3274 = vmatprep.subr.bf16.mxu0 0
      %3275 = vmatpush1.bf16.msra.mxu0 %v3258
      %3276 = vmatprep.subr.bf16.mxu0 0
      %3277 = vmatpush1.bf16.msra.mxu0 %v3259
      %3278 = vmatprep.subr.bf16.mxu0 0
      %3279 = vmatpush1.bf16.msra.mxu0 %v3260
      %3280 = vmatprep.subr.bf16.mxu0 0
      %3281 = vmatpush1.bf16.msra.mxu0 %v3261
      %3282 = vmatprep.subr.bf16.mxu0 0
      %3283 = vmatpush1.bf16.msra.mxu0 %v3262
      %3284 = vmatprep.subr.bf16.mxu0 0
      %3285 = vmatpush1.bf16.msra.mxu0 %v3263
      %3286 = vmatprep.subr.bf16.mxu0 0
      %3287 = vmatpush1.bf16.msra.mxu0 %v3264
      %3288 = vmatprep.subr.bf16.mxu0 0
      %3289 = vmatpush1.bf16.msra.mxu0 %v3265
      %3290 = vmatprep.subr.bf16.mxu0 0
      %3291 = vmatpush1.bf16.msra.mxu0 0
      %3292 = vmatprep.subr.bf16.mxu0 0
      %3293 = vmatpush1.bf16.msra.mxu0 0
      %3294 = vmatprep.subr.bf16.mxu0 0
      %3295 = vmatpush1.bf16.msra.mxu0 0
      %3296 = vmatprep.subr.bf16.mxu0 0
      %3297 = vmatpush1.bf16.msra.mxu0 0
      %3298 = vmatprep.subr.bf16.mxu0 0
      %3299 = vmatpush1.bf16.msra.mxu0 0
      %3300 = vmatprep.subr.bf16.mxu0 0
      %3301 = vmatpush1.bf16.msra.mxu0 0
      %3302 = vmatprep.subr.bf16.mxu0 0
      %3303 = vmatpush1.bf16.msra.mxu0 0
      %3304 = vmatprep.subr.bf16.mxu0 0
      %3305 = vmatpush1.bf16.msra.mxu0 0
      %3306 = vmatprep.mubr.bf16.mxu0 0
      %3307 = vmatmul.mubr.bf16.gmra.mrb[0].mxu0 %v3209
      %v3308 = vpop.f32.mrb[0].mxu0
      %v3309 = vadd.f32 0.0, %v3308
      %v3310 = vpop.f32.mrb[0].mxu0
      %v3311 = vpop.f32.mrb[0].mxu0
      %v3312 = vadd.f32 0.0, %v3311
      %v3313 = vpop.f32.mrb[0].mxu0
      %3314 = vdwg.mxu0
      %v3317 = vunpack.c.l.b16 %v3189
      %v3318 = vunpack.c.l.b16 %v3190
      %v3319 = vpack.c.b16 %v3318, %v3317
      %v3337 = vunpack.c.l.b16 %v3193
      %v3338 = vunpack.c.l.b16 %v3194
      %v3339 = vunpack.c.l.b16 %v3195
      %v3340 = vunpack.c.l.b16 %v3196
      %v3341 = vunpack.c.l.b16 %v3197
      %v3342 = vunpack.c.l.b16 %v3198
      %v3343 = vunpack.c.l.b16 %v3199
      %v3344 = vunpack.c.l.b16 %v3200
      %v3345 = vunpack.c.l.b16 %v3201
      %v3346 = vunpack.c.l.b16 %v3202
      %v3347 = vunpack.c.l.b16 %v3203
      %v3348 = vunpack.c.l.b16 %v3204
      %v3349 = vunpack.c.l.b16 %v3205
      %v3350 = vunpack.c.l.b16 %v3206
      %v3351 = vunpack.c.l.b16 %v3207
      %v3352 = vunpack.c.l.b16 %v3208
      %v3353 = vpack.c.b16 %v3338, %v3337
      %v3354 = vpack.c.b16 %v3340, %v3339
      %v3355 = vpack.c.b16 %v3342, %v3341
      %v3356 = vpack.c.b16 %v3344, %v3343
      %v3357 = vpack.c.b16 %v3346, %v3345
      %v3358 = vpack.c.b16 %v3348, %v3347
      %v3359 = vpack.c.b16 %v3350, %v3349
      %v3360 = vpack.c.b16 %v3352, %v3351
      %3369 = vmatprep.subr.bf16.mxu0 0
      %3370 = vmatpush1.bf16.msra.mxu0 %v3353
      %3371 = vmatprep.subr.bf16.mxu0 0
      %3372 = vmatpush1.bf16.msra.mxu0 %v3354
      %3373 = vmatprep.subr.bf16.mxu0 0
      %3374 = vmatpush1.bf16.msra.mxu0 %v3355
      %3375 = vmatprep.subr.bf16.mxu0 0
      %3376 = vmatpush1.bf16.msra.mxu0 %v3356
      %3377 = vmatprep.subr.bf16.mxu0 0
      %3378 = vmatpush1.bf16.msra.mxu0 %v3357
      %3379 = vmatprep.subr.bf16.mxu0 0
      %3380 = vmatpush1.bf16.msra.mxu0 %v3358
      %3381 = vmatprep.subr.bf16.mxu0 0
      %3382 = vmatpush1.bf16.msra.mxu0 %v3359
      %3383 = vmatprep.subr.bf16.mxu0 0
      %3384 = vmatpush1.bf16.msra.mxu0 %v3360
      %3385 = vmatprep.subr.bf16.mxu0 0
      %3386 = vmatpush1.bf16.msra.mxu0 0
      %3387 = vmatprep.subr.bf16.mxu0 0
      %3388 = vmatpush1.bf16.msra.mxu0 0
      %3389 = vmatprep.subr.bf16.mxu0 0
      %3390 = vmatpush1.bf16.msra.mxu0 0
      %3391 = vmatprep.subr.bf16.mxu0 0
      %3392 = vmatpush1.bf16.msra.mxu0 0
      %3393 = vmatprep.subr.bf16.mxu0 0
      %3394 = vmatpush1.bf16.msra.mxu0 0
      %3395 = vmatprep.subr.bf16.mxu0 0
      %3396 = vmatpush1.bf16.msra.mxu0 0
      %3397 = vmatprep.subr.bf16.mxu0 0
      %3398 = vmatpush1.bf16.msra.mxu0 0
      %3399 = vmatprep.subr.bf16.mxu0 0
      %3400 = vmatpush1.bf16.msra.mxu0 0
      %3401 = vmatprep.mubr.bf16.mxu0 0
      %3402 = vmatmul.mubr.bf16.gmra.mrb[0].mxu0 %v3319
      %v3403 = vpop.f32.mrb[0].mxu0
      %v3404 = vadd.f32 %v3309, %v3403
      %v3405 = vpop.f32.mrb[0].mxu0
      %v3406 = vpop.f32.mrb[0].mxu0
      %v3407 = vadd.f32 %v3312, %v3406
      %v3408 = vpop.f32.mrb[0].mxu0
      %3409 = vdwg.mxu0
      %v3410 = vld [vmem:[%s4] sm:$0x1]
      %v3412 = vlaneseq
      %v3413 = vshrl.u32 %v3412, 7
      %v3414 = vsub.s32 0, %v3413
      %v3415 = vrot.slane %v3410, %v3414
      %v3417 = vadd.f32 %v3404, %v3415
      %v3418 = vadd.f32 %v3407, %v3415
      %v3419 = vtanh.pop %v3417
      %v3420 = vtanh.pop %v3418
      %3421 = vst [vmem:[#allocation2] sm:$0xff] %v3419
      %3422 = vst [vmem:[#allocation2 + $0x8] sm:$0xff] %v3420
      %v3423 = vld [vmem:[%s582] sm:$0xff]
      %v3424 = vld [vmem:[%s582 + $0x8] sm:$0xff]
      %v3425 = vpack.c.bf16 %v3420, %v3419
      %v3426 = vld [vmem:[%s586] sm:$0xf]
      %v3427 = vld [vmem:[%s586 + $0x4] sm:$0xf]
      %v3428 = vld [vmem:[%s586 + $0x8] sm:$0xf]
      %v3429 = vld [vmem:[%s586 + $0xc] sm:$0xf]
      %v3430 = vld [vmem:[%s586 + $0x10] sm:$0xf]
      %v3431 = vld [vmem:[%s586 + $0x14] sm:$0xf]
      %v3432 = vld [vmem:[%s586 + $0x18] sm:$0xf]
      %v3433 = vld [vmem:[%s586 + $0x1c] sm:$0xf]
      %v3434 = vld [vmem:[%s586 + $0x20] sm:$0xf]
      %v3435 = vld [vmem:[%s586 + $0x24] sm:$0xf]
      %v3436 = vld [vmem:[%s586 + $0x28] sm:$0xf]
      %v3437 = vld [vmem:[%s586 + $0x2c] sm:$0xf]
      %v3438 = vld [vmem:[%s586 + $0x30] sm:$0xf]
      %v3439 = vld [vmem:[%s586 + $0x34] sm:$0xf]
      %v3440 = vld [vmem:[%s586 + $0x38] sm:$0xf]
      %v3441 = vld [vmem:[%s586 + $0x3c] sm:$0xf]
      %v3442 = vpack.c.bf16 %v3424, %v3423
      %v3443 = vld [vmem:[%s604] sm:$0xf]
      %v3444 = vld [vmem:[%s604 + $0x4] sm:$0xf]
      %v3445 = vld [vmem:[%s604 + $0x8] sm:$0xf]
      %v3446 = vld [vmem:[%s604 + $0xc] sm:$0xf]
      %v3447 = vld [vmem:[%s604 + $0x10] sm:$0xf]
      %v3448 = vld [vmem:[%s604 + $0x14] sm:$0xf]
      %v3449 = vld [vmem:[%s604 + $0x18] sm:$0xf]
      %v3450 = vld [vmem:[%s604 + $0x1c] sm:$0xf]
      %v3451 = vld [vmem:[%s604 + $0x20] sm:$0xf]
      %v3452 = vld [vmem:[%s604 + $0x24] sm:$0xf]
      %v3453 = vld [vmem:[%s604 + $0x28] sm:$0xf]
      %v3454 = vld [vmem:[%s604 + $0x2c] sm:$0xf]
      %v3455 = vld [vmem:[%s604 + $0x30] sm:$0xf]
      %v3456 = vld [vmem:[%s604 + $0x34] sm:$0xf]
      %v3457 = vld [vmem:[%s604 + $0x38] sm:$0xf]
      %v3458 = vld [vmem:[%s604 + $0x3c] sm:$0xf]
      %v3475 = vunpack.c.l.b16 %v3443
      %v3476 = vunpack.c.l.b16 %v3444
      %v3477 = vunpack.c.l.b16 %v3445
      %v3478 = vunpack.c.l.b16 %v3446
      %v3479 = vunpack.c.l.b16 %v3447
      %v3480 = vunpack.c.l.b16 %v3448
      %v3481 = vunpack.c.l.b16 %v3449
      %v3482 = vunpack.c.l.b16 %v3450
      %v3483 = vunpack.c.l.b16 %v3451
      %v3484 = vunpack.c.l.b16 %v3452
      %v3485 = vunpack.c.l.b16 %v3453
      %v3486 = vunpack.c.l.b16 %v3454
      %v3487 = vunpack.c.l.b16 %v3455
      %v3488 = vunpack.c.l.b16 %v3456
      %v3489 = vunpack.c.l.b16 %v3457
      %v3490 = vunpack.c.l.b16 %v3458
      %v3491 = vpack.c.b16 %v3476, %v3475
      %v3492 = vpack.c.b16 %v3478, %v3477
      %v3493 = vpack.c.b16 %v3480, %v3479
      %v3494 = vpack.c.b16 %v3482, %v3481
      %v3495 = vpack.c.b16 %v3484, %v3483
      %v3496 = vpack.c.b16 %v3486, %v3485
      %v3497 = vpack.c.b16 %v3488, %v3487
      %v3498 = vpack.c.b16 %v3490, %v3489
      %3507 = vmatprep.subr.bf16.mxu0 0
      %3508 = vmatpush1.bf16.msra.mxu0 %v3491
      %3509 = vmatprep.subr.bf16.mxu0 0
      %3510 = vmatpush1.bf16.msra.mxu0 %v3492
      %3511 = vmatprep.subr.bf16.mxu0 0
      %3512 = vmatpush1.bf16.msra.mxu0 %v3493
      %3513 = vmatprep.subr.bf16.mxu0 0
      %3514 = vmatpush1.bf16.msra.mxu0 %v3494
      %3515 = vmatprep.subr.bf16.mxu0 0
      %3516 = vmatpush1.bf16.msra.mxu0 %v3495
      %3517 = vmatprep.subr.bf16.mxu0 0
      %3518 = vmatpush1.bf16.msra.mxu0 %v3496
      %3519 = vmatprep.subr.bf16.mxu0 0
      %3520 = vmatpush1.bf16.msra.mxu0 %v3497
      %3521 = vmatprep.subr.bf16.mxu0 0
      %3522 = vmatpush1.bf16.msra.mxu0 %v3498
      %3523 = vmatprep.subr.bf16.mxu0 0
      %3524 = vmatpush1.bf16.msra.mxu0 0
      %3525 = vmatprep.subr.bf16.mxu0 0
      %3526 = vmatpush1.bf16.msra.mxu0 0
      %3527 = vmatprep.subr.bf16.mxu0 0
      %3528 = vmatpush1.bf16.msra.mxu0 0
      %3529 = vmatprep.subr.bf16.mxu0 0
      %3530 = vmatpush1.bf16.msra.mxu0 0
      %3531 = vmatprep.subr.bf16.mxu0 0
      %3532 = vmatpush1.bf16.msra.mxu0 0
      %3533 = vmatprep.subr.bf16.mxu0 0
      %3534 = vmatpush1.bf16.msra.mxu0 0
      %3535 = vmatprep.subr.bf16.mxu0 0
      %3536 = vmatpush1.bf16.msra.mxu0 0
      %3537 = vmatprep.subr.bf16.mxu0 0
      %3538 = vmatpush1.bf16.msra.mxu0 0
      %3539 = vmatprep.mubr.bf16.mxu0 0
      %3540 = vmatmul.mubr.bf16.gmra.mrb[0].mxu0 %v3442
      %v3541 = vpop.f32.mrb[0].mxu0
      %v3542 = vadd.f32 0.0, %v3541
      %v3543 = vpop.f32.mrb[0].mxu0
      %v3544 = vpop.f32.mrb[0].mxu0
      %v3545 = vadd.f32 0.0, %v3544
      %v3546 = vpop.f32.mrb[0].mxu0
      %3547 = vdwg.mxu0
      %v3564 = vunpack.c.l.b16 %v3426
      %v3565 = vunpack.c.l.b16 %v3427
      %v3566 = vunpack.c.l.b16 %v3428
      %v3567 = vunpack.c.l.b16 %v3429
      %v3568 = vunpack.c.l.b16 %v3430
      %v3569 = vunpack.c.l.b16 %v3431
      %v3570 = vunpack.c.l.b16 %v3432
      %v3571 = vunpack.c.l.b16 %v3433
      %v3572 = vunpack.c.l.b16 %v3434
      %v3573 = vunpack.c.l.b16 %v3435
      %v3574 = vunpack.c.l.b16 %v3436
      %v3575 = vunpack.c.l.b16 %v3437
      %v3576 = vunpack.c.l.b16 %v3438
      %v3577 = vunpack.c.l.b16 %v3439
      %v3578 = vunpack.c.l.b16 %v3440
      %v3579 = vunpack.c.l.b16 %v3441
      %v3580 = vpack.c.b16 %v3565, %v3564
      %v3581 = vpack.c.b16 %v3567, %v3566
      %v3582 = vpack.c.b16 %v3569, %v3568
      %v3583 = vpack.c.b16 %v3571, %v3570
      %v3584 = vpack.c.b16 %v3573, %v3572
      %v3585 = vpack.c.b16 %v3575, %v3574
      %v3586 = vpack.c.b16 %v3577, %v3576
      %v3587 = vpack.c.b16 %v3579, %v3578
      %3596 = vmatprep.subr.bf16.mxu0 0
      %3597 = vmatpush1.bf16.msra.mxu0 %v3580
      %3598 = vmatprep.subr.bf16.mxu0 0
      %3599 = vmatpush1.bf16.msra.mxu0 %v3581
      %3600 = vmatprep.subr.bf16.mxu0 0
      %3601 = vmatpush1.bf16.msra.mxu0 %v3582
      %3602 = vmatprep.subr.bf16.mxu0 0
      %3603 = vmatpush1.bf16.msra.mxu0 %v3583
      %3604 = vmatprep.subr.bf16.mxu0 0
      %3605 = vmatpush1.bf16.msra.mxu0 %v3584
      %3606 = vmatprep.subr.bf16.mxu0 0
      %3607 = vmatpush1.bf16.msra.mxu0 %v3585
      %3608 = vmatprep.subr.bf16.mxu0 0
      %3609 = vmatpush1.bf16.msra.mxu0 %v3586
      %3610 = vmatprep.subr.bf16.mxu0 0
      %3611 = vmatpush1.bf16.msra.mxu0 %v3587
      %3612 = vmatprep.subr.bf16.mxu0 0
      %3613 = vmatpush1.bf16.msra.mxu0 0
      %3614 = vmatprep.subr.bf16.mxu0 0
      %3615 = vmatpush1.bf16.msra.mxu0 0
      %3616 = vmatprep.subr.bf16.mxu0 0
      %3617 = vmatpush1.bf16.msra.mxu0 0
      %3618 = vmatprep.subr.bf16.mxu0 0
      %3619 = vmatpush1.bf16.msra.mxu0 0
      %3620 = vmatprep.subr.bf16.mxu0 0
      %3621 = vmatpush1.bf16.msra.mxu0 0
      %3622 = vmatprep.subr.bf16.mxu0 0
      %3623 = vmatpush1.bf16.msra.mxu0 0
      %3624 = vmatprep.subr.bf16.mxu0 0
      %3625 = vmatpush1.bf16.msra.mxu0 0
      %3626 = vmatprep.subr.bf16.mxu0 0
      %3627 = vmatpush1.bf16.msra.mxu0 0
      %3628 = vmatprep.mubr.bf16.mxu0 0
      %3629 = vmatmul.mubr.bf16.gmra.mrb[0].mxu0 %v3425
      %v3630 = vpop.f32.mrb[0].mxu0
      %v3631 = vadd.f32 %v3542, %v3630
      %v3632 = vpop.f32.mrb[0].mxu0
      %v3633 = vpop.f32.mrb[0].mxu0
      %v3634 = vadd.f32 %v3545, %v3633
      %v3635 = vpop.f32.mrb[0].mxu0
      %3636 = vdwg.mxu0
      %v3637 = vld [vmem:[%s799] sm:$0x1]
      %v3639 = vlaneseq
      %v3640 = vshrl.u32 %v3639, 7
      %v3641 = vsub.s32 0, %v3640
      %v3642 = vrot.slane %v3637, %v3641
      %v3644 = vadd.f32 %v3631, %v3642
      %v3645 = vadd.f32 %v3634, %v3642
      %v3646 = vtanh.pop %v3644
      %v3647 = vtanh.pop %v3645
      %3648 = vst [vmem:[%s582] sm:$0xff] %v3646
      %3649 = vst [vmem:[%s582 + $0x8] sm:$0xff] %v3647
      %v3650 = vpack.c.bf16 %v3647, %v3646
      %v3652 = vunpack.c.l.b16 %v3650
      %v3653 = vunpack.c.h.b16 %v3650
      %v3654 = vpack.c.b16 %v3652, %v3652
      %v3655 = vpack.c.b16 %v3653, %v3653
      %s3658 = scalar_lea.vmem %s326, 48
      %3659 = vst [vmem:[%s3658] sm:$0xf] %v3654
      %3660 = vst [vmem:[%s3658 + $0x4] sm:$0xf] %v3655
      %s3661 = scalar_lea.vmem %s308, 56
      %v3662 = vld [vmem:[%s3661] sm:$0xf]
      %v3663 = vld [vmem:[%s3661 + $0x4] sm:$0xf]
      %v3664 = vld [vmem:[#allocation2] sm:$0xff]
      %v3665 = vld [vmem:[#allocation2 + $0x8] sm:$0xff]
      %v3666 = vld [vmem:[%s2] sm:$0xf]
      %v3667 = vld [vmem:[%s2 + $0x4] sm:$0xf]
      %v3668 = vld [vmem:[%s2 + $0x8] sm:$0xf]
      %v3669 = vld [vmem:[%s2 + $0xc] sm:$0xf]
      %v3670 = vld [vmem:[%s2 + $0x10] sm:$0xf]
      %v3671 = vld [vmem:[%s2 + $0x14] sm:$0xf]
      %v3672 = vld [vmem:[%s2 + $0x18] sm:$0xf]
      %v3673 = vld [vmem:[%s2 + $0x1c] sm:$0xf]
      %v3674 = vld [vmem:[%s2 + $0x20] sm:$0xf]
      %v3675 = vld [vmem:[%s2 + $0x24] sm:$0xf]
      %v3676 = vld [vmem:[%s2 + $0x28] sm:$0xf]
      %v3677 = vld [vmem:[%s2 + $0x2c] sm:$0xf]
      %v3678 = vld [vmem:[%s2 + $0x30] sm:$0xf]
      %v3679 = vld [vmem:[%s2 + $0x34] sm:$0xf]
      %v3680 = vld [vmem:[%s2 + $0x38] sm:$0xf]
      %v3681 = vld [vmem:[%s2 + $0x3c] sm:$0xf]
      %v3682 = vpack.c.bf16 %v3665, %v3664
      %v3683 = vld [vmem:[%s3] sm:$0xf]
      %v3684 = vld [vmem:[%s3 + $0x4] sm:$0xf]
      %v3685 = vld [vmem:[%s3 + $0x8] sm:$0xf]
      %v3686 = vld [vmem:[%s3 + $0xc] sm:$0xf]
      %v3687 = vld [vmem:[%s3 + $0x10] sm:$0xf]
      %v3688 = vld [vmem:[%s3 + $0x14] sm:$0xf]
      %v3689 = vld [vmem:[%s3 + $0x18] sm:$0xf]
      %v3690 = vld [vmem:[%s3 + $0x1c] sm:$0xf]
      %v3691 = vld [vmem:[%s3 + $0x20] sm:$0xf]
      %v3692 = vld [vmem:[%s3 + $0x24] sm:$0xf]
      %v3693 = vld [vmem:[%s3 + $0x28] sm:$0xf]
      %v3694 = vld [vmem:[%s3 + $0x2c] sm:$0xf]
      %v3695 = vld [vmem:[%s3 + $0x30] sm:$0xf]
      %v3696 = vld [vmem:[%s3 + $0x34] sm:$0xf]
      %v3697 = vld [vmem:[%s3 + $0x38] sm:$0xf]
      %v3698 = vld [vmem:[%s3 + $0x3c] sm:$0xf]
      %v3715 = vunpack.c.l.b16 %v3683
      %v3716 = vunpack.c.l.b16 %v3684
      %v3717 = vunpack.c.l.b16 %v3685
      %v3718 = vunpack.c.l.b16 %v3686
      %v3719 = vunpack.c.l.b16 %v3687
      %v3720 = vunpack.c.l.b16 %v3688
      %v3721 = vunpack.c.l.b16 %v3689
      %v3722 = vunpack.c.l.b16 %v3690
      %v3723 = vunpack.c.l.b16 %v3691
      %v3724 = vunpack.c.l.b16 %v3692
      %v3725 = vunpack.c.l.b16 %v3693
      %v3726 = vunpack.c.l.b16 %v3694
      %v3727 = vunpack.c.l.b16 %v3695
      %v3728 = vunpack.c.l.b16 %v3696
      %v3729 = vunpack.c.l.b16 %v3697
      %v3730 = vunpack.c.l.b16 %v3698
      %v3731 = vpack.c.b16 %v3716, %v3715
      %v3732 = vpack.c.b16 %v3718, %v3717
      %v3733 = vpack.c.b16 %v3720, %v3719
      %v3734 = vpack.c.b16 %v3722, %v3721
      %v3735 = vpack.c.b16 %v3724, %v3723
      %v3736 = vpack.c.b16 %v3726, %v3725
      %v3737 = vpack.c.b16 %v3728, %v3727
      %v3738 = vpack.c.b16 %v3730, %v3729
      %3747 = vmatprep.subr.bf16.mxu0 0
      %3748 = vmatpush1.bf16.msra.mxu0 %v3731
      %3749 = vmatprep.subr.bf16.mxu0 0
      %3750 = vmatpush1.bf16.msra.mxu0 %v3732
      %3751 = vmatprep.subr.bf16.mxu0 0
      %3752 = vmatpush1.bf16.msra.mxu0 %v3733
      %3753 = vmatprep.subr.bf16.mxu0 0
      %3754 = vmatpush1.bf16.msra.mxu0 %v3734
      %3755 = vmatprep.subr.bf16.mxu0 0
      %3756 = vmatpush1.bf16.msra.mxu0 %v3735
      %3757 = vmatprep.subr.bf16.mxu0 0
      %3758 = vmatpush1.bf16.msra.mxu0 %v3736
      %3759 = vmatprep.subr.bf16.mxu0 0
      %3760 = vmatpush1.bf16.msra.mxu0 %v3737
      %3761 = vmatprep.subr.bf16.mxu0 0
      %3762 = vmatpush1.bf16.msra.mxu0 %v3738
      %3763 = vmatprep.subr.bf16.mxu0 0
      %3764 = vmatpush1.bf16.msra.mxu0 0
      %3765 = vmatprep.subr.bf16.mxu0 0
      %3766 = vmatpush1.bf16.msra.mxu0 0
      %3767 = vmatprep.subr.bf16.mxu0 0
      %3768 = vmatpush1.bf16.msra.mxu0 0
      %3769 = vmatprep.subr.bf16.mxu0 0
      %3770 = vmatpush1.bf16.msra.mxu0 0
      %3771 = vmatprep.subr.bf16.mxu0 0
      %3772 = vmatpush1.bf16.msra.mxu0 0
      %3773 = vmatprep.subr.bf16.mxu0 0
      %3774 = vmatpush1.bf16.msra.mxu0 0
      %3775 = vmatprep.subr.bf16.mxu0 0
      %3776 = vmatpush1.bf16.msra.mxu0 0
      %3777 = vmatprep.subr.bf16.mxu0 0
      %3778 = vmatpush1.bf16.msra.mxu0 0
      %3779 = vmatprep.mubr.bf16.mxu0 0
      %3780 = vmatmul.mubr.bf16.gmra.mrb[0].mxu0 %v3682
      %v3781 = vpop.f32.mrb[0].mxu0
      %v3782 = vadd.f32 0.0, %v3781
      %v3783 = vpop.f32.mrb[0].mxu0
      %v3784 = vpop.f32.mrb[0].mxu0
      %v3785 = vadd.f32 0.0, %v3784
      %v3786 = vpop.f32.mrb[0].mxu0
      %3787 = vdwg.mxu0
      %v3790 = vunpack.c.l.b16 %v3662
      %v3791 = vunpack.c.l.b16 %v3663
      %v3792 = vpack.c.b16 %v3791, %v3790
      %v3810 = vunpack.c.l.b16 %v3666
      %v3811 = vunpack.c.l.b16 %v3667
      %v3812 = vunpack.c.l.b16 %v3668
      %v3813 = vunpack.c.l.b16 %v3669
      %v3814 = vunpack.c.l.b16 %v3670
      %v3815 = vunpack.c.l.b16 %v3671
      %v3816 = vunpack.c.l.b16 %v3672
      %v3817 = vunpack.c.l.b16 %v3673
      %v3818 = vunpack.c.l.b16 %v3674
      %v3819 = vunpack.c.l.b16 %v3675
      %v3820 = vunpack.c.l.b16 %v3676
      %v3821 = vunpack.c.l.b16 %v3677
      %v3822 = vunpack.c.l.b16 %v3678
      %v3823 = vunpack.c.l.b16 %v3679
      %v3824 = vunpack.c.l.b16 %v3680
      %v3825 = vunpack.c.l.b16 %v3681
      %v3826 = vpack.c.b16 %v3811, %v3810
      %v3827 = vpack.c.b16 %v3813, %v3812
      %v3828 = vpack.c.b16 %v3815, %v3814
      %v3829 = vpack.c.b16 %v3817, %v3816
      %v3830 = vpack.c.b16 %v3819, %v3818
      %v3831 = vpack.c.b16 %v3821, %v3820
      %v3832 = vpack.c.b16 %v3823, %v3822
      %v3833 = vpack.c.b16 %v3825, %v3824
      %3842 = vmatprep.subr.bf16.mxu0 0
      %3843 = vmatpush1.bf16.msra.mxu0 %v3826
      %3844 = vmatprep.subr.bf16.mxu0 0
      %3845 = vmatpush1.bf16.msra.mxu0 %v3827
      %3846 = vmatprep.subr.bf16.mxu0 0
      %3847 = vmatpush1.bf16.msra.mxu0 %v3828
      %3848 = vmatprep.subr.bf16.mxu0 0
      %3849 = vmatpush1.bf16.msra.mxu0 %v3829
      %3850 = vmatprep.subr.bf16.mxu0 0
      %3851 = vmatpush1.bf16.msra.mxu0 %v3830
      %3852 = vmatprep.subr.bf16.mxu0 0
      %3853 = vmatpush1.bf16.msra.mxu0 %v3831
      %3854 = vmatprep.subr.bf16.mxu0 0
      %3855 = vmatpush1.bf16.msra.mxu0 %v3832
      %3856 = vmatprep.subr.bf16.mxu0 0
      %3857 = vmatpush1.bf16.msra.mxu0 %v3833
      %3858 = vmatprep.subr.bf16.mxu0 0
      %3859 = vmatpush1.bf16.msra.mxu0 0
      %3860 = vmatprep.subr.bf16.mxu0 0
      %3861 = vmatpush1.bf16.msra.mxu0 0
      %3862 = vmatprep.subr.bf16.mxu0 0
      %3863 = vmatpush1.bf16.msra.mxu0 0
      %3864 = vmatprep.subr.bf16.mxu0 0
      %3865 = vmatpush1.bf16.msra.mxu0 0
      %3866 = vmatprep.subr.bf16.mxu0 0
      %3867 = vmatpush1.bf16.msra.mxu0 0
      %3868 = vmatprep.subr.bf16.mxu0 0
      %3869 = vmatpush1.bf16.msra.mxu0 0
      %3870 = vmatprep.subr.bf16.mxu0 0
      %3871 = vmatpush1.bf16.msra.mxu0 0
      %3872 = vmatprep.subr.bf16.mxu0 0
      %3873 = vmatpush1.bf16.msra.mxu0 0
      %3874 = vmatprep.mubr.bf16.mxu0 0
      %3875 = vmatmul.mubr.bf16.gmra.mrb[0].mxu0 %v3792
      %v3876 = vpop.f32.mrb[0].mxu0
      %v3877 = vadd.f32 %v3782, %v3876
      %v3878 = vpop.f32.mrb[0].mxu0
      %v3879 = vpop.f32.mrb[0].mxu0
      %v3880 = vadd.f32 %v3785, %v3879
      %v3881 = vpop.f32.mrb[0].mxu0
      %3882 = vdwg.mxu0
      %v3883 = vld [vmem:[%s4] sm:$0x1]
      %v3885 = vlaneseq
      %v3886 = vshrl.u32 %v3885, 7
      %v3887 = vsub.s32 0, %v3886
      %v3888 = vrot.slane %v3883, %v3887
      %v3890 = vadd.f32 %v3877, %v3888
      %v3891 = vadd.f32 %v3880, %v3888
      %v3892 = vtanh.pop %v3890
      %v3893 = vtanh.pop %v3891
      %3894 = vst [vmem:[#allocation2] sm:$0xff] %v3892
      %3895 = vst [vmem:[#allocation2 + $0x8] sm:$0xff] %v3893
      %v3896 = vld [vmem:[%s582] sm:$0xff]
      %v3897 = vld [vmem:[%s582 + $0x8] sm:$0xff]
      %v3898 = vpack.c.bf16 %v3893, %v3892
      %v3899 = vld [vmem:[%s586] sm:$0xf]
      %v3900 = vld [vmem:[%s586 + $0x4] sm:$0xf]
      %v3901 = vld [vmem:[%s586 + $0x8] sm:$0xf]
      %v3902 = vld [vmem:[%s586 + $0xc] sm:$0xf]
      %v3903 = vld [vmem:[%s586 + $0x10] sm:$0xf]
      %v3904 = vld [vmem:[%s586 + $0x14] sm:$0xf]
      %v3905 = vld [vmem:[%s586 + $0x18] sm:$0xf]
      %v3906 = vld [vmem:[%s586 + $0x1c] sm:$0xf]
      %v3907 = vld [vmem:[%s586 + $0x20] sm:$0xf]
      %v3908 = vld [vmem:[%s586 + $0x24] sm:$0xf]
      %v3909 = vld [vmem:[%s586 + $0x28] sm:$0xf]
      %v3910 = vld [vmem:[%s586 + $0x2c] sm:$0xf]
      %v3911 = vld [vmem:[%s586 + $0x30] sm:$0xf]
      %v3912 = vld [vmem:[%s586 + $0x34] sm:$0xf]
      %v3913 = vld [vmem:[%s586 + $0x38] sm:$0xf]
      %v3914 = vld [vmem:[%s586 + $0x3c] sm:$0xf]
      %v3915 = vpack.c.bf16 %v3897, %v3896
      %v3916 = vld [vmem:[%s604] sm:$0xf]
      %v3917 = vld [vmem:[%s604 + $0x4] sm:$0xf]
      %v3918 = vld [vmem:[%s604 + $0x8] sm:$0xf]
      %v3919 = vld [vmem:[%s604 + $0xc] sm:$0xf]
      %v3920 = vld [vmem:[%s604 + $0x10] sm:$0xf]
      %v3921 = vld [vmem:[%s604 + $0x14] sm:$0xf]
      %v3922 = vld [vmem:[%s604 + $0x18] sm:$0xf]
      %v3923 = vld [vmem:[%s604 + $0x1c] sm:$0xf]
      %v3924 = vld [vmem:[%s604 + $0x20] sm:$0xf]
      %v3925 = vld [vmem:[%s604 + $0x24] sm:$0xf]
      %v3926 = vld [vmem:[%s604 + $0x28] sm:$0xf]
      %v3927 = vld [vmem:[%s604 + $0x2c] sm:$0xf]
      %v3928 = vld [vmem:[%s604 + $0x30] sm:$0xf]
      %v3929 = vld [vmem:[%s604 + $0x34] sm:$0xf]
      %v3930 = vld [vmem:[%s604 + $0x38] sm:$0xf]
      %v3931 = vld [vmem:[%s604 + $0x3c] sm:$0xf]
      %v3948 = vunpack.c.l.b16 %v3916
      %v3949 = vunpack.c.l.b16 %v3917
      %v3950 = vunpack.c.l.b16 %v3918
      %v3951 = vunpack.c.l.b16 %v3919
      %v3952 = vunpack.c.l.b16 %v3920
      %v3953 = vunpack.c.l.b16 %v3921
      %v3954 = vunpack.c.l.b16 %v3922
      %v3955 = vunpack.c.l.b16 %v3923
      %v3956 = vunpack.c.l.b16 %v3924
      %v3957 = vunpack.c.l.b16 %v3925
      %v3958 = vunpack.c.l.b16 %v3926
      %v3959 = vunpack.c.l.b16 %v3927
      %v3960 = vunpack.c.l.b16 %v3928
      %v3961 = vunpack.c.l.b16 %v3929
      %v3962 = vunpack.c.l.b16 %v3930
      %v3963 = vunpack.c.l.b16 %v3931
      %v3964 = vpack.c.b16 %v3949, %v3948
      %v3965 = vpack.c.b16 %v3951, %v3950
      %v3966 = vpack.c.b16 %v3953, %v3952
      %v3967 = vpack.c.b16 %v3955, %v3954
      %v3968 = vpack.c.b16 %v3957, %v3956
      %v3969 = vpack.c.b16 %v3959, %v3958
      %v3970 = vpack.c.b16 %v3961, %v3960
      %v3971 = vpack.c.b16 %v3963, %v3962
      %3980 = vmatprep.subr.bf16.mxu0 0
      %3981 = vmatpush1.bf16.msra.mxu0 %v3964
      %3982 = vmatprep.subr.bf16.mxu0 0
      %3983 = vmatpush1.bf16.msra.mxu0 %v3965
      %3984 = vmatprep.subr.bf16.mxu0 0
      %3985 = vmatpush1.bf16.msra.mxu0 %v3966
      %3986 = vmatprep.subr.bf16.mxu0 0
      %3987 = vmatpush1.bf16.msra.mxu0 %v3967
      %3988 = vmatprep.subr.bf16.mxu0 0
      %3989 = vmatpush1.bf16.msra.mxu0 %v3968
      %3990 = vmatprep.subr.bf16.mxu0 0
      %3991 = vmatpush1.bf16.msra.mxu0 %v3969
      %3992 = vmatprep.subr.bf16.mxu0 0
      %3993 = vmatpush1.bf16.msra.mxu0 %v3970
      %3994 = vmatprep.subr.bf16.mxu0 0
      %3995 = vmatpush1.bf16.msra.mxu0 %v3971
      %3996 = vmatprep.subr.bf16.mxu0 0
      %3997 = vmatpush1.bf16.msra.mxu0 0
      %3998 = vmatprep.subr.bf16.mxu0 0
      %3999 = vmatpush1.bf16.msra.mxu0 0
      %4000 = vmatprep.subr.bf16.mxu0 0
      %4001 = vmatpush1.bf16.msra.mxu0 0
      %4002 = vmatprep.subr.bf16.mxu0 0
      %4003 = vmatpush1.bf16.msra.mxu0 0
      %4004 = vmatprep.subr.bf16.mxu0 0
      %4005 = vmatpush1.bf16.msra.mxu0 0
      %4006 = vmatprep.subr.bf16.mxu0 0
      %4007 = vmatpush1.bf16.msra.mxu0 0
      %4008 = vmatprep.subr.bf16.mxu0 0
      %4009 = vmatpush1.bf16.msra.mxu0 0
      %4010 = vmatprep.subr.bf16.mxu0 0
      %4011 = vmatpush1.bf16.msra.mxu0 0
      %4012 = vmatprep.mubr.bf16.mxu0 0
      %4013 = vmatmul.mubr.bf16.gmra.mrb[0].mxu0 %v3915
      %v4014 = vpop.f32.mrb[0].mxu0
      %v4015 = vadd.f32 0.0, %v4014
      %v4016 = vpop.f32.mrb[0].mxu0
      %v4017 = vpop.f32.mrb[0].mxu0
      %v4018 = vadd.f32 0.0, %v4017
      %v4019 = vpop.f32.mrb[0].mxu0
      %4020 = vdwg.mxu0
      %v4037 = vunpack.c.l.b16 %v3899
      %v4038 = vunpack.c.l.b16 %v3900
      %v4039 = vunpack.c.l.b16 %v3901
      %v4040 = vunpack.c.l.b16 %v3902
      %v4041 = vunpack.c.l.b16 %v3903
      %v4042 = vunpack.c.l.b16 %v3904
      %v4043 = vunpack.c.l.b16 %v3905
      %v4044 = vunpack.c.l.b16 %v3906
      %v4045 = vunpack.c.l.b16 %v3907
      %v4046 = vunpack.c.l.b16 %v3908
      %v4047 = vunpack.c.l.b16 %v3909
      %v4048 = vunpack.c.l.b16 %v3910
      %v4049 = vunpack.c.l.b16 %v3911
      %v4050 = vunpack.c.l.b16 %v3912
      %v4051 = vunpack.c.l.b16 %v3913
      %v4052 = vunpack.c.l.b16 %v3914
      %v4053 = vpack.c.b16 %v4038, %v4037
      %v4054 = vpack.c.b16 %v4040, %v4039
      %v4055 = vpack.c.b16 %v4042, %v4041
      %v4056 = vpack.c.b16 %v4044, %v4043
      %v4057 = vpack.c.b16 %v4046, %v4045
      %v4058 = vpack.c.b16 %v4048, %v4047
      %v4059 = vpack.c.b16 %v4050, %v4049
      %v4060 = vpack.c.b16 %v4052, %v4051
      %4069 = vmatprep.subr.bf16.mxu0 0
      %4070 = vmatpush1.bf16.msra.mxu0 %v4053
      %4071 = vmatprep.subr.bf16.mxu0 0
      %4072 = vmatpush1.bf16.msra.mxu0 %v4054
      %4073 = vmatprep.subr.bf16.mxu0 0
      %4074 = vmatpush1.bf16.msra.mxu0 %v4055
      %4075 = vmatprep.subr.bf16.mxu0 0
      %4076 = vmatpush1.bf16.msra.mxu0 %v4056
      %4077 = vmatprep.subr.bf16.mxu0 0
      %4078 = vmatpush1.bf16.msra.mxu0 %v4057
      %4079 = vmatprep.subr.bf16.mxu0 0
      %4080 = vmatpush1.bf16.msra.mxu0 %v4058
      %4081 = vmatprep.subr.bf16.mxu0 0
      %4082 = vmatpush1.bf16.msra.mxu0 %v4059
      %4083 = vmatprep.subr.bf16.mxu0 0
      %4084 = vmatpush1.bf16.msra.mxu0 %v4060
      %4085 = vmatprep.subr.bf16.mxu0 0
      %4086 = vmatpush1.bf16.msra.mxu0 0
      %4087 = vmatprep.subr.bf16.mxu0 0
      %4088 = vmatpush1.bf16.msra.mxu0 0
      %4089 = vmatprep.subr.bf16.mxu0 0
      %4090 = vmatpush1.bf16.msra.mxu0 0
      %4091 = vmatprep.subr.bf16.mxu0 0
      %4092 = vmatpush1.bf16.msra.mxu0 0
      %4093 = vmatprep.subr.bf16.mxu0 0
      %4094 = vmatpush1.bf16.msra.mxu0 0
      %4095 = vmatprep.subr.bf16.mxu0 0
      %4096 = vmatpush1.bf16.msra.mxu0 0
      %4097 = vmatprep.subr.bf16.mxu0 0
      %4098 = vmatpush1.bf16.msra.mxu0 0
      %4099 = vmatprep.subr.bf16.mxu0 0
      %4100 = vmatpush1.bf16.msra.mxu0 0
      %4101 = vmatprep.mubr.bf16.mxu0 0
      %4102 = vmatmul.mubr.bf16.gmra.mrb[0].mxu0 %v3898
      %v4103 = vpop.f32.mrb[0].mxu0
      %v4104 = vadd.f32 %v4015, %v4103
      %v4105 = vpop.f32.mrb[0].mxu0
      %v4106 = vpop.f32.mrb[0].mxu0
      %v4107 = vadd.f32 %v4018, %v4106
      %v4108 = vpop.f32.mrb[0].mxu0
      %4109 = vdwg.mxu0
      %v4110 = vld [vmem:[%s799] sm:$0x1]
      %v4112 = vlaneseq
      %v4113 = vshrl.u32 %v4112, 7
      %v4114 = vsub.s32 0, %v4113
      %v4115 = vrot.slane %v4110, %v4114
      %v4117 = vadd.f32 %v4104, %v4115
      %v4118 = vadd.f32 %v4107, %v4115
      %v4119 = vtanh.pop %v4117
      %v4120 = vtanh.pop %v4118
      %4121 = vst [vmem:[%s582] sm:$0xff] %v4119
      %4122 = vst [vmem:[%s582 + $0x8] sm:$0xff] %v4120
      %v4123 = vpack.c.bf16 %v4120, %v4119
      %v4125 = vunpack.c.l.b16 %v4123
      %v4126 = vunpack.c.h.b16 %v4123
      %v4127 = vpack.c.b16 %v4125, %v4125
      %v4128 = vpack.c.b16 %v4126, %v4126
      %s4131 = scalar_lea.vmem %s326, 56
      %4132 = vst [vmem:[%s4131] sm:$0xf] %v4127
      %4133 = vst [vmem:[%s4131 + $0x4] sm:$0xf] %v4128
      %s4134 = scalar_lea.vmem %s308, 64
      %v4135 = vld [vmem:[%s4134] sm:$0xf]
      %v4136 = vld [vmem:[%s4134 + $0x4] sm:$0xf]
      %v4137 = vld [vmem:[#allocation2] sm:$0xff]
      %v4138 = vld [vmem:[#allocation2 + $0x8] sm:$0xff]
      %v4139 = vld [vmem:[%s2] sm:$0xf]
      %v4140 = vld [vmem:[%s2 + $0x4] sm:$0xf]
      %v4141 = vld [vmem:[%s2 + $0x8] sm:$0xf]
      %v4142 = vld [vmem:[%s2 + $0xc] sm:$0xf]
      %v4143 = vld [vmem:[%s2 + $0x10] sm:$0xf]
      %v4144 = vld [vmem:[%s2 + $0x14] sm:$0xf]
      %v4145 = vld [vmem:[%s2 + $0x18] sm:$0xf]
      %v4146 = vld [vmem:[%s2 + $0x1c] sm:$0xf]
      %v4147 = vld [vmem:[%s2 + $0x20] sm:$0xf]
      %v4148 = vld [vmem:[%s2 + $0x24] sm:$0xf]
      %v4149 = vld [vmem:[%s2 + $0x28] sm:$0xf]
      %v4150 = vld [vmem:[%s2 + $0x2c] sm:$0xf]
      %v4151 = vld [vmem:[%s2 + $0x30] sm:$0xf]
      %v4152 = vld [vmem:[%s2 + $0x34] sm:$0xf]
      %v4153 = vld [vmem:[%s2 + $0x38] sm:$0xf]
      %v4154 = vld [vmem:[%s2 + $0x3c] sm:$0xf]
      %v4155 = vpack.c.bf16 %v4138, %v4137
      %v4156 = vld [vmem:[%s3] sm:$0xf]
      %v4157 = vld [vmem:[%s3 + $0x4] sm:$0xf]
      %v4158 = vld [vmem:[%s3 + $0x8] sm:$0xf]
      %v4159 = vld [vmem:[%s3 + $0xc] sm:$0xf]
      %v4160 = vld [vmem:[%s3 + $0x10] sm:$0xf]
      %v4161 = vld [vmem:[%s3 + $0x14] sm:$0xf]
      %v4162 = vld [vmem:[%s3 + $0x18] sm:$0xf]
      %v4163 = vld [vmem:[%s3 + $0x1c] sm:$0xf]
      %v4164 = vld [vmem:[%s3 + $0x20] sm:$0xf]
      %v4165 = vld [vmem:[%s3 + $0x24] sm:$0xf]
      %v4166 = vld [vmem:[%s3 + $0x28] sm:$0xf]
      %v4167 = vld [vmem:[%s3 + $0x2c] sm:$0xf]
      %v4168 = vld [vmem:[%s3 + $0x30] sm:$0xf]
      %v4169 = vld [vmem:[%s3 + $0x34] sm:$0xf]
      %v4170 = vld [vmem:[%s3 + $0x38] sm:$0xf]
      %v4171 = vld [vmem:[%s3 + $0x3c] sm:$0xf]
      %v4188 = vunpack.c.l.b16 %v4156
      %v4189 = vunpack.c.l.b16 %v4157
      %v4190 = vunpack.c.l.b16 %v4158
      %v4191 = vunpack.c.l.b16 %v4159
      %v4192 = vunpack.c.l.b16 %v4160
      %v4193 = vunpack.c.l.b16 %v4161
      %v4194 = vunpack.c.l.b16 %v4162
      %v4195 = vunpack.c.l.b16 %v4163
      %v4196 = vunpack.c.l.b16 %v4164
      %v4197 = vunpack.c.l.b16 %v4165
      %v4198 = vunpack.c.l.b16 %v4166
      %v4199 = vunpack.c.l.b16 %v4167
      %v4200 = vunpack.c.l.b16 %v4168
      %v4201 = vunpack.c.l.b16 %v4169
      %v4202 = vunpack.c.l.b16 %v4170
      %v4203 = vunpack.c.l.b16 %v4171
      %v4204 = vpack.c.b16 %v4189, %v4188
      %v4205 = vpack.c.b16 %v4191, %v4190
      %v4206 = vpack.c.b16 %v4193, %v4192
      %v4207 = vpack.c.b16 %v4195, %v4194
      %v4208 = vpack.c.b16 %v4197, %v4196
      %v4209 = vpack.c.b16 %v4199, %v4198
      %v4210 = vpack.c.b16 %v4201, %v4200
      %v4211 = vpack.c.b16 %v4203, %v4202
      %4220 = vmatprep.subr.bf16.mxu0 0
      %4221 = vmatpush1.bf16.msra.mxu0 %v4204
      %4222 = vmatprep.subr.bf16.mxu0 0
      %4223 = vmatpush1.bf16.msra.mxu0 %v4205
      %4224 = vmatprep.subr.bf16.mxu0 0
      %4225 = vmatpush1.bf16.msra.mxu0 %v4206
      %4226 = vmatprep.subr.bf16.mxu0 0
      %4227 = vmatpush1.bf16.msra.mxu0 %v4207
      %4228 = vmatprep.subr.bf16.mxu0 0
      %4229 = vmatpush1.bf16.msra.mxu0 %v4208
      %4230 = vmatprep.subr.bf16.mxu0 0
      %4231 = vmatpush1.bf16.msra.mxu0 %v4209
      %4232 = vmatprep.subr.bf16.mxu0 0
      %4233 = vmatpush1.bf16.msra.mxu0 %v4210
      %4234 = vmatprep.subr.bf16.mxu0 0
      %4235 = vmatpush1.bf16.msra.mxu0 %v4211
      %4236 = vmatprep.subr.bf16.mxu0 0
      %4237 = vmatpush1.bf16.msra.mxu0 0
      %4238 = vmatprep.subr.bf16.mxu0 0
      %4239 = vmatpush1.bf16.msra.mxu0 0
      %4240 = vmatprep.subr.bf16.mxu0 0
      %4241 = vmatpush1.bf16.msra.mxu0 0
      %4242 = vmatprep.subr.bf16.mxu0 0
      %4243 = vmatpush1.bf16.msra.mxu0 0
      %4244 = vmatprep.subr.bf16.mxu0 0
      %4245 = vmatpush1.bf16.msra.mxu0 0
      %4246 = vmatprep.subr.bf16.mxu0 0
      %4247 = vmatpush1.bf16.msra.mxu0 0
      %4248 = vmatprep.subr.bf16.mxu0 0
      %4249 = vmatpush1.bf16.msra.mxu0 0
      %4250 = vmatprep.subr.bf16.mxu0 0
      %4251 = vmatpush1.bf16.msra.mxu0 0
      %4252 = vmatprep.mubr.bf16.mxu0 0
      %4253 = vmatmul.mubr.bf16.gmra.mrb[0].mxu0 %v4155
      %v4254 = vpop.f32.mrb[0].mxu0
      %v4255 = vadd.f32 0.0, %v4254
      %v4256 = vpop.f32.mrb[0].mxu0
      %v4257 = vpop.f32.mrb[0].mxu0
      %v4258 = vadd.f32 0.0, %v4257
      %v4259 = vpop.f32.mrb[0].mxu0
      %4260 = vdwg.mxu0
      %v4263 = vunpack.c.l.b16 %v4135
      %v4264 = vunpack.c.l.b16 %v4136
      %v4265 = vpack.c.b16 %v4264, %v4263
      %v4283 = vunpack.c.l.b16 %v4139
      %v4284 = vunpack.c.l.b16 %v4140
      %v4285 = vunpack.c.l.b16 %v4141
      %v4286 = vunpack.c.l.b16 %v4142
      %v4287 = vunpack.c.l.b16 %v4143
      %v4288 = vunpack.c.l.b16 %v4144
      %v4289 = vunpack.c.l.b16 %v4145
      %v4290 = vunpack.c.l.b16 %v4146
      %v4291 = vunpack.c.l.b16 %v4147
      %v4292 = vunpack.c.l.b16 %v4148
      %v4293 = vunpack.c.l.b16 %v4149
      %v4294 = vunpack.c.l.b16 %v4150
      %v4295 = vunpack.c.l.b16 %v4151
      %v4296 = vunpack.c.l.b16 %v4152
      %v4297 = vunpack.c.l.b16 %v4153
      %v4298 = vunpack.c.l.b16 %v4154
      %v4299 = vpack.c.b16 %v4284, %v4283
      %v4300 = vpack.c.b16 %v4286, %v4285
      %v4301 = vpack.c.b16 %v4288, %v4287
      %v4302 = vpack.c.b16 %v4290, %v4289
      %v4303 = vpack.c.b16 %v4292, %v4291
      %v4304 = vpack.c.b16 %v4294, %v4293
      %v4305 = vpack.c.b16 %v4296, %v4295
      %v4306 = vpack.c.b16 %v4298, %v4297
      %4315 = vmatprep.subr.bf16.mxu0 0
      %4316 = vmatpush1.bf16.msra.mxu0 %v4299
      %4317 = vmatprep.subr.bf16.mxu0 0
      %4318 = vmatpush1.bf16.msra.mxu0 %v4300
      %4319 = vmatprep.subr.bf16.mxu0 0
      %4320 = vmatpush1.bf16.msra.mxu0 %v4301
      %4321 = vmatprep.subr.bf16.mxu0 0
      %4322 = vmatpush1.bf16.msra.mxu0 %v4302
      %4323 = vmatprep.subr.bf16.mxu0 0
      %4324 = vmatpush1.bf16.msra.mxu0 %v4303
      %4325 = vmatprep.subr.bf16.mxu0 0
      %4326 = vmatpush1.bf16.msra.mxu0 %v4304
      %4327 = vmatprep.subr.bf16.mxu0 0
      %4328 = vmatpush1.bf16.msra.mxu0 %v4305
      %4329 = vmatprep.subr.bf16.mxu0 0
      %4330 = vmatpush1.bf16.msra.mxu0 %v4306
      %4331 = vmatprep.subr.bf16.mxu0 0
      %4332 = vmatpush1.bf16.msra.mxu0 0
      %4333 = vmatprep.subr.bf16.mxu0 0
      %4334 = vmatpush1.bf16.msra.mxu0 0
      %4335 = vmatprep.subr.bf16.mxu0 0
      %4336 = vmatpush1.bf16.msra.mxu0 0
      %4337 = vmatprep.subr.bf16.mxu0 0
      %4338 = vmatpush1.bf16.msra.mxu0 0
      %4339 = vmatprep.subr.bf16.mxu0 0
      %4340 = vmatpush1.bf16.msra.mxu0 0
      %4341 = vmatprep.subr.bf16.mxu0 0
      %4342 = vmatpush1.bf16.msra.mxu0 0
      %4343 = vmatprep.subr.bf16.mxu0 0
      %4344 = vmatpush1.bf16.msra.mxu0 0
      %4345 = vmatprep.subr.bf16.mxu0 0
      %4346 = vmatpush1.bf16.msra.mxu0 0
      %4347 = vmatprep.mubr.bf16.mxu0 0
      %4348 = vmatmul.mubr.bf16.gmra.mrb[0].mxu0 %v4265
      %v4349 = vpop.f32.mrb[0].mxu0
      %v4350 = vadd.f32 %v4255, %v4349
      %v4351 = vpop.f32.mrb[0].mxu0
      %v4352 = vpop.f32.mrb[0].mxu0
      %v4353 = vadd.f32 %v4258, %v4352
      %v4354 = vpop.f32.mrb[0].mxu0
      %4355 = vdwg.mxu0
      %v4356 = vld [vmem:[%s4] sm:$0x1]
      %v4358 = vlaneseq
      %v4359 = vshrl.u32 %v4358, 7
      %v4360 = vsub.s32 0, %v4359
      %v4361 = vrot.slane %v4356, %v4360
      %v4363 = vadd.f32 %v4350, %v4361
      %v4364 = vadd.f32 %v4353, %v4361
      %v4365 = vtanh.pop %v4363
      %v4366 = vtanh.pop %v4364
      %4367 = vst [vmem:[#allocation2] sm:$0xff] %v4365
      %4368 = vst [vmem:[#allocation2 + $0x8] sm:$0xff] %v4366
      %v4369 = vld [vmem:[%s582] sm:$0xff]
      %v4370 = vld [vmem:[%s582 + $0x8] sm:$0xff]
      %v4371 = vpack.c.bf16 %v4366, %v4365
      %v4372 = vld [vmem:[%s586] sm:$0xf]
      %v4373 = vld [vmem:[%s586 + $0x4] sm:$0xf]
      %v4374 = vld [vmem:[%s586 + $0x8] sm:$0xf]
      %v4375 = vld [vmem:[%s586 + $0xc] sm:$0xf]
      %v4376 = vld [vmem:[%s586 + $0x10] sm:$0xf]
      %v4377 = vld [vmem:[%s586 + $0x14] sm:$0xf]
      %v4378 = vld [vmem:[%s586 + $0x18] sm:$0xf]
      %v4379 = vld [vmem:[%s586 + $0x1c] sm:$0xf]
      %v4380 = vld [vmem:[%s586 + $0x20] sm:$0xf]
      %v4381 = vld [vmem:[%s586 + $0x24] sm:$0xf]
      %v4382 = vld [vmem:[%s586 + $0x28] sm:$0xf]
      %v4383 = vld [vmem:[%s586 + $0x2c] sm:$0xf]
      %v4384 = vld [vmem:[%s586 + $0x30] sm:$0xf]
      %v4385 = vld [vmem:[%s586 + $0x34] sm:$0xf]
      %v4386 = vld [vmem:[%s586 + $0x38] sm:$0xf]
      %v4387 = vld [vmem:[%s586 + $0x3c] sm:$0xf]
      %v4388 = vpack.c.bf16 %v4370, %v4369
      %v4389 = vld [vmem:[%s604] sm:$0xf]
      %v4390 = vld [vmem:[%s604 + $0x4] sm:$0xf]
      %v4391 = vld [vmem:[%s604 + $0x8] sm:$0xf]
      %v4392 = vld [vmem:[%s604 + $0xc] sm:$0xf]
      %v4393 = vld [vmem:[%s604 + $0x10] sm:$0xf]
      %v4394 = vld [vmem:[%s604 + $0x14] sm:$0xf]
      %v4395 = vld [vmem:[%s604 + $0x18] sm:$0xf]
      %v4396 = vld [vmem:[%s604 + $0x1c] sm:$0xf]
      %v4397 = vld [vmem:[%s604 + $0x20] sm:$0xf]
      %v4398 = vld [vmem:[%s604 + $0x24] sm:$0xf]
      %v4399 = vld [vmem:[%s604 + $0x28] sm:$0xf]
      %v4400 = vld [vmem:[%s604 + $0x2c] sm:$0xf]
      %v4401 = vld [vmem:[%s604 + $0x30] sm:$0xf]
      %v4402 = vld [vmem:[%s604 + $0x34] sm:$0xf]
      %v4403 = vld [vmem:[%s604 + $0x38] sm:$0xf]
      %v4404 = vld [vmem:[%s604 + $0x3c] sm:$0xf]
      %v4421 = vunpack.c.l.b16 %v4389
      %v4422 = vunpack.c.l.b16 %v4390
      %v4423 = vunpack.c.l.b16 %v4391
      %v4424 = vunpack.c.l.b16 %v4392
      %v4425 = vunpack.c.l.b16 %v4393
      %v4426 = vunpack.c.l.b16 %v4394
      %v4427 = vunpack.c.l.b16 %v4395
      %v4428 = vunpack.c.l.b16 %v4396
      %v4429 = vunpack.c.l.b16 %v4397
      %v4430 = vunpack.c.l.b16 %v4398
      %v4431 = vunpack.c.l.b16 %v4399
      %v4432 = vunpack.c.l.b16 %v4400
      %v4433 = vunpack.c.l.b16 %v4401
      %v4434 = vunpack.c.l.b16 %v4402
      %v4435 = vunpack.c.l.b16 %v4403
      %v4436 = vunpack.c.l.b16 %v4404
      %v4437 = vpack.c.b16 %v4422, %v4421
      %v4438 = vpack.c.b16 %v4424, %v4423
      %v4439 = vpack.c.b16 %v4426, %v4425
      %v4440 = vpack.c.b16 %v4428, %v4427
      %v4441 = vpack.c.b16 %v4430, %v4429
      %v4442 = vpack.c.b16 %v4432, %v4431
      %v4443 = vpack.c.b16 %v4434, %v4433
      %v4444 = vpack.c.b16 %v4436, %v4435
      %4453 = vmatprep.subr.bf16.mxu0 0
      %4454 = vmatpush1.bf16.msra.mxu0 %v4437
      %4455 = vmatprep.subr.bf16.mxu0 0
      %4456 = vmatpush1.bf16.msra.mxu0 %v4438
      %4457 = vmatprep.subr.bf16.mxu0 0
      %4458 = vmatpush1.bf16.msra.mxu0 %v4439
      %4459 = vmatprep.subr.bf16.mxu0 0
      %4460 = vmatpush1.bf16.msra.mxu0 %v4440
      %4461 = vmatprep.subr.bf16.mxu0 0
      %4462 = vmatpush1.bf16.msra.mxu0 %v4441
      %4463 = vmatprep.subr.bf16.mxu0 0
      %4464 = vmatpush1.bf16.msra.mxu0 %v4442
      %4465 = vmatprep.subr.bf16.mxu0 0
      %4466 = vmatpush1.bf16.msra.mxu0 %v4443
      %4467 = vmatprep.subr.bf16.mxu0 0
      %4468 = vmatpush1.bf16.msra.mxu0 %v4444
      %4469 = vmatprep.subr.bf16.mxu0 0
      %4470 = vmatpush1.bf16.msra.mxu0 0
      %4471 = vmatprep.subr.bf16.mxu0 0
      %4472 = vmatpush1.bf16.msra.mxu0 0
      %4473 = vmatprep.subr.bf16.mxu0 0
      %4474 = vmatpush1.bf16.msra.mxu0 0
      %4475 = vmatprep.subr.bf16.mxu0 0
      %4476 = vmatpush1.bf16.msra.mxu0 0
      %4477 = vmatprep.subr.bf16.mxu0 0
      %4478 = vmatpush1.bf16.msra.mxu0 0
      %4479 = vmatprep.subr.bf16.mxu0 0
      %4480 = vmatpush1.bf16.msra.mxu0 0
      %4481 = vmatprep.subr.bf16.mxu0 0
      %4482 = vmatpush1.bf16.msra.mxu0 0
      %4483 = vmatprep.subr.bf16.mxu0 0
      %4484 = vmatpush1.bf16.msra.mxu0 0
      %4485 = vmatprep.mubr.bf16.mxu0 0
      %4486 = vmatmul.mubr.bf16.gmra.mrb[0].mxu0 %v4388
      %v4487 = vpop.f32.mrb[0].mxu0
      %v4488 = vadd.f32 0.0, %v4487
      %v4489 = vpop.f32.mrb[0].mxu0
      %v4490 = vpop.f32.mrb[0].mxu0
      %v4491 = vadd.f32 0.0, %v4490
      %v4492 = vpop.f32.mrb[0].mxu0
      %4493 = vdwg.mxu0
      %v4510 = vunpack.c.l.b16 %v4372
      %v4511 = vunpack.c.l.b16 %v4373
      %v4512 = vunpack.c.l.b16 %v4374
      %v4513 = vunpack.c.l.b16 %v4375
      %v4514 = vunpack.c.l.b16 %v4376
      %v4515 = vunpack.c.l.b16 %v4377
      %v4516 = vunpack.c.l.b16 %v4378
      %v4517 = vunpack.c.l.b16 %v4379
      %v4518 = vunpack.c.l.b16 %v4380
      %v4519 = vunpack.c.l.b16 %v4381
      %v4520 = vunpack.c.l.b16 %v4382
      %v4521 = vunpack.c.l.b16 %v4383
      %v4522 = vunpack.c.l.b16 %v4384
      %v4523 = vunpack.c.l.b16 %v4385
      %v4524 = vunpack.c.l.b16 %v4386
      %v4525 = vunpack.c.l.b16 %v4387
      %v4526 = vpack.c.b16 %v4511, %v4510
      %v4527 = vpack.c.b16 %v4513, %v4512
      %v4528 = vpack.c.b16 %v4515, %v4514
      %v4529 = vpack.c.b16 %v4517, %v4516
      %v4530 = vpack.c.b16 %v4519, %v4518
      %v4531 = vpack.c.b16 %v4521, %v4520
      %v4532 = vpack.c.b16 %v4523, %v4522
      %v4533 = vpack.c.b16 %v4525, %v4524
      %4542 = vmatprep.subr.bf16.mxu0 0
      %4543 = vmatpush1.bf16.msra.mxu0 %v4526
      %4544 = vmatprep.subr.bf16.mxu0 0
      %4545 = vmatpush1.bf16.msra.mxu0 %v4527
      %4546 = vmatprep.subr.bf16.mxu0 0
      %4547 = vmatpush1.bf16.msra.mxu0 %v4528
      %4548 = vmatprep.subr.bf16.mxu0 0
      %4549 = vmatpush1.bf16.msra.mxu0 %v4529
      %4550 = vmatprep.subr.bf16.mxu0 0
      %4551 = vmatpush1.bf16.msra.mxu0 %v4530
      %4552 = vmatprep.subr.bf16.mxu0 0
      %4553 = vmatpush1.bf16.msra.mxu0 %v4531
      %4554 = vmatprep.subr.bf16.mxu0 0
      %4555 = vmatpush1.bf16.msra.mxu0 %v4532
      %4556 = vmatprep.subr.bf16.mxu0 0
      %4557 = vmatpush1.bf16.msra.mxu0 %v4533
      %4558 = vmatprep.subr.bf16.mxu0 0
      %4559 = vmatpush1.bf16.msra.mxu0 0
      %4560 = vmatprep.subr.bf16.mxu0 0
      %4561 = vmatpush1.bf16.msra.mxu0 0
      %4562 = vmatprep.subr.bf16.mxu0 0
      %4563 = vmatpush1.bf16.msra.mxu0 0
      %4564 = vmatprep.subr.bf16.mxu0 0
      %4565 = vmatpush1.bf16.msra.mxu0 0
      %4566 = vmatprep.subr.bf16.mxu0 0
      %4567 = vmatpush1.bf16.msra.mxu0 0
      %4568 = vmatprep.subr.bf16.mxu0 0
      %4569 = vmatpush1.bf16.msra.mxu0 0
      %4570 = vmatprep.subr.bf16.mxu0 0
      %4571 = vmatpush1.bf16.msra.mxu0 0
      %4572 = vmatprep.subr.bf16.mxu0 0
      %4573 = vmatpush1.bf16.msra.mxu0 0
      %4574 = vmatprep.mubr.bf16.mxu0 0
      %4575 = vmatmul.mubr.bf16.gmra.mrb[0].mxu0 %v4371
      %v4576 = vpop.f32.mrb[0].mxu0
      %v4577 = vadd.f32 %v4488, %v4576
      %v4578 = vpop.f32.mrb[0].mxu0
      %v4579 = vpop.f32.mrb[0].mxu0
      %v4580 = vadd.f32 %v4491, %v4579
      %v4581 = vpop.f32.mrb[0].mxu0
      %4582 = vdwg.mxu0
      %v4583 = vld [vmem:[%s799] sm:$0x1]
      %v4585 = vlaneseq
      %v4586 = vshrl.u32 %v4585, 7
      %v4587 = vsub.s32 0, %v4586
      %v4588 = vrot.slane %v4583, %v4587
      %v4590 = vadd.f32 %v4577, %v4588
      %v4591 = vadd.f32 %v4580, %v4588
      %v4592 = vtanh.pop %v4590
      %v4593 = vtanh.pop %v4591
      %4594 = vst [vmem:[%s582] sm:$0xff] %v4592
      %4595 = vst [vmem:[%s582 + $0x8] sm:$0xff] %v4593
      %v4596 = vpack.c.bf16 %v4593, %v4592
      %v4598 = vunpack.c.l.b16 %v4596
      %v4599 = vunpack.c.h.b16 %v4596
      %v4600 = vpack.c.b16 %v4598, %v4598
      %v4601 = vpack.c.b16 %v4599, %v4599
      %s4604 = scalar_lea.vmem %s326, 64
      %4605 = vst [vmem:[%s4604] sm:$0xf] %v4600
      %4606 = vst [vmem:[%s4604 + $0x4] sm:$0xf] %v4601
      %s4607 = scalar_lea.vmem %s308, 72
      %v4608 = vld [vmem:[%s4607] sm:$0xf]
      %v4609 = vld [vmem:[%s4607 + $0x4] sm:$0xf]
      %v4610 = vld [vmem:[#allocation2] sm:$0xff]
      %v4611 = vld [vmem:[#allocation2 + $0x8] sm:$0xff]
      %v4612 = vld [vmem:[%s2] sm:$0xf]
      %v4613 = vld [vmem:[%s2 + $0x4] sm:$0xf]
      %v4614 = vld [vmem:[%s2 + $0x8] sm:$0xf]
      %v4615 = vld [vmem:[%s2 + $0xc] sm:$0xf]
      %v4616 = vld [vmem:[%s2 + $0x10] sm:$0xf]
      %v4617 = vld [vmem:[%s2 + $0x14] sm:$0xf]
      %v4618 = vld [vmem:[%s2 + $0x18] sm:$0xf]
      %v4619 = vld [vmem:[%s2 + $0x1c] sm:$0xf]
      %v4620 = vld [vmem:[%s2 + $0x20] sm:$0xf]
      %v4621 = vld [vmem:[%s2 + $0x24] sm:$0xf]
      %v4622 = vld [vmem:[%s2 + $0x28] sm:$0xf]
      %v4623 = vld [vmem:[%s2 + $0x2c] sm:$0xf]
      %v4624 = vld [vmem:[%s2 + $0x30] sm:$0xf]
      %v4625 = vld [vmem:[%s2 + $0x34] sm:$0xf]
      %v4626 = vld [vmem:[%s2 + $0x38] sm:$0xf]
      %v4627 = vld [vmem:[%s2 + $0x3c] sm:$0xf]
      %v4628 = vpack.c.bf16 %v4611, %v4610
      %v4629 = vld [vmem:[%s3] sm:$0xf]
      %v4630 = vld [vmem:[%s3 + $0x4] sm:$0xf]
      %v4631 = vld [vmem:[%s3 + $0x8] sm:$0xf]
      %v4632 = vld [vmem:[%s3 + $0xc] sm:$0xf]
      %v4633 = vld [vmem:[%s3 + $0x10] sm:$0xf]
      %v4634 = vld [vmem:[%s3 + $0x14] sm:$0xf]
      %v4635 = vld [vmem:[%s3 + $0x18] sm:$0xf]
      %v4636 = vld [vmem:[%s3 + $0x1c] sm:$0xf]
      %v4637 = vld [vmem:[%s3 + $0x20] sm:$0xf]
      %v4638 = vld [vmem:[%s3 + $0x24] sm:$0xf]
      %v4639 = vld [vmem:[%s3 + $0x28] sm:$0xf]
      %v4640 = vld [vmem:[%s3 + $0x2c] sm:$0xf]
      %v4641 = vld [vmem:[%s3 + $0x30] sm:$0xf]
      %v4642 = vld [vmem:[%s3 + $0x34] sm:$0xf]
      %v4643 = vld [vmem:[%s3 + $0x38] sm:$0xf]
      %v4644 = vld [vmem:[%s3 + $0x3c] sm:$0xf]
      %v4661 = vunpack.c.l.b16 %v4629
      %v4662 = vunpack.c.l.b16 %v4630
      %v4663 = vunpack.c.l.b16 %v4631
      %v4664 = vunpack.c.l.b16 %v4632
      %v4665 = vunpack.c.l.b16 %v4633
      %v4666 = vunpack.c.l.b16 %v4634
      %v4667 = vunpack.c.l.b16 %v4635
      %v4668 = vunpack.c.l.b16 %v4636
      %v4669 = vunpack.c.l.b16 %v4637
      %v4670 = vunpack.c.l.b16 %v4638
      %v4671 = vunpack.c.l.b16 %v4639
      %v4672 = vunpack.c.l.b16 %v4640
      %v4673 = vunpack.c.l.b16 %v4641
      %v4674 = vunpack.c.l.b16 %v4642
      %v4675 = vunpack.c.l.b16 %v4643
      %v4676 = vunpack.c.l.b16 %v4644
      %v4677 = vpack.c.b16 %v4662, %v4661
      %v4678 = vpack.c.b16 %v4664, %v4663
      %v4679 = vpack.c.b16 %v4666, %v4665
      %v4680 = vpack.c.b16 %v4668, %v4667
      %v4681 = vpack.c.b16 %v4670, %v4669
      %v4682 = vpack.c.b16 %v4672, %v4671
      %v4683 = vpack.c.b16 %v4674, %v4673
      %v4684 = vpack.c.b16 %v4676, %v4675
      %4693 = vmatprep.subr.bf16.mxu0 0
      %4694 = vmatpush1.bf16.msra.mxu0 %v4677
      %4695 = vmatprep.subr.bf16.mxu0 0
      %4696 = vmatpush1.bf16.msra.mxu0 %v4678
      %4697 = vmatprep.subr.bf16.mxu0 0
      %4698 = vmatpush1.bf16.msra.mxu0 %v4679
      %4699 = vmatprep.subr.bf16.mxu0 0
      %4700 = vmatpush1.bf16.msra.mxu0 %v4680
      %4701 = vmatprep.subr.bf16.mxu0 0
      %4702 = vmatpush1.bf16.msra.mxu0 %v4681
      %4703 = vmatprep.subr.bf16.mxu0 0
      %4704 = vmatpush1.bf16.msra.mxu0 %v4682
      %4705 = vmatprep.subr.bf16.mxu0 0
      %4706 = vmatpush1.bf16.msra.mxu0 %v4683
      %4707 = vmatprep.subr.bf16.mxu0 0
      %4708 = vmatpush1.bf16.msra.mxu0 %v4684
      %4709 = vmatprep.subr.bf16.mxu0 0
      %4710 = vmatpush1.bf16.msra.mxu0 0
      %4711 = vmatprep.subr.bf16.mxu0 0
      %4712 = vmatpush1.bf16.msra.mxu0 0
      %4713 = vmatprep.subr.bf16.mxu0 0
      %4714 = vmatpush1.bf16.msra.mxu0 0
      %4715 = vmatprep.subr.bf16.mxu0 0
      %4716 = vmatpush1.bf16.msra.mxu0 0
      %4717 = vmatprep.subr.bf16.mxu0 0
      %4718 = vmatpush1.bf16.msra.mxu0 0
      %4719 = vmatprep.subr.bf16.mxu0 0
      %4720 = vmatpush1.bf16.msra.mxu0 0
      %4721 = vmatprep.subr.bf16.mxu0 0
      %4722 = vmatpush1.bf16.msra.mxu0 0
      %4723 = vmatprep.subr.bf16.mxu0 0
      %4724 = vmatpush1.bf16.msra.mxu0 0
      %4725 = vmatprep.mubr.bf16.mxu0 0
      %4726 = vmatmul.mubr.bf16.gmra.mrb[0].mxu0 %v4628
      %v4727 = vpop.f32.mrb[0].mxu0
      %v4728 = vadd.f32 0.0, %v4727
      %v4729 = vpop.f32.mrb[0].mxu0
      %v4730 = vpop.f32.mrb[0].mxu0
      %v4731 = vadd.f32 0.0, %v4730
      %v4732 = vpop.f32.mrb[0].mxu0
      %4733 = vdwg.mxu0
      %v4736 = vunpack.c.l.b16 %v4608
      %v4737 = vunpack.c.l.b16 %v4609
      %v4738 = vpack.c.b16 %v4737, %v4736
      %v4756 = vunpack.c.l.b16 %v4612
      %v4757 = vunpack.c.l.b16 %v4613
      %v4758 = vunpack.c.l.b16 %v4614
      %v4759 = vunpack.c.l.b16 %v4615
      %v4760 = vunpack.c.l.b16 %v4616
      %v4761 = vunpack.c.l.b16 %v4617
      %v4762 = vunpack.c.l.b16 %v4618
      %v4763 = vunpack.c.l.b16 %v4619
      %v4764 = vunpack.c.l.b16 %v4620
      %v4765 = vunpack.c.l.b16 %v4621
      %v4766 = vunpack.c.l.b16 %v4622
      %v4767 = vunpack.c.l.b16 %v4623
      %v4768 = vunpack.c.l.b16 %v4624
      %v4769 = vunpack.c.l.b16 %v4625
      %v4770 = vunpack.c.l.b16 %v4626
      %v4771 = vunpack.c.l.b16 %v4627
      %v4772 = vpack.c.b16 %v4757, %v4756
      %v4773 = vpack.c.b16 %v4759, %v4758
      %v4774 = vpack.c.b16 %v4761, %v4760
      %v4775 = vpack.c.b16 %v4763, %v4762
      %v4776 = vpack.c.b16 %v4765, %v4764
      %v4777 = vpack.c.b16 %v4767, %v4766
      %v4778 = vpack.c.b16 %v4769, %v4768
      %v4779 = vpack.c.b16 %v4771, %v4770
      %4788 = vmatprep.subr.bf16.mxu0 0
      %4789 = vmatpush1.bf16.msra.mxu0 %v4772
      %4790 = vmatprep.subr.bf16.mxu0 0
      %4791 = vmatpush1.bf16.msra.mxu0 %v4773
      %4792 = vmatprep.subr.bf16.mxu0 0
      %4793 = vmatpush1.bf16.msra.mxu0 %v4774
      %4794 = vmatprep.subr.bf16.mxu0 0
      %4795 = vmatpush1.bf16.msra.mxu0 %v4775
      %4796 = vmatprep.subr.bf16.mxu0 0
      %4797 = vmatpush1.bf16.msra.mxu0 %v4776
      %4798 = vmatprep.subr.bf16.mxu0 0
      %4799 = vmatpush1.bf16.msra.mxu0 %v4777
      %4800 = vmatprep.subr.bf16.mxu0 0
      %4801 = vmatpush1.bf16.msra.mxu0 %v4778
      %4802 = vmatprep.subr.bf16.mxu0 0
      %4803 = vmatpush1.bf16.msra.mxu0 %v4779
      %4804 = vmatprep.subr.bf16.mxu0 0
      %4805 = vmatpush1.bf16.msra.mxu0 0
      %4806 = vmatprep.subr.bf16.mxu0 0
      %4807 = vmatpush1.bf16.msra.mxu0 0
      %4808 = vmatprep.subr.bf16.mxu0 0
      %4809 = vmatpush1.bf16.msra.mxu0 0
      %4810 = vmatprep.subr.bf16.mxu0 0
      %4811 = vmatpush1.bf16.msra.mxu0 0
      %4812 = vmatprep.subr.bf16.mxu0 0
      %4813 = vmatpush1.bf16.msra.mxu0 0
      %4814 = vmatprep.subr.bf16.mxu0 0
      %4815 = vmatpush1.bf16.msra.mxu0 0
      %4816 = vmatprep.subr.bf16.mxu0 0
      %4817 = vmatpush1.bf16.msra.mxu0 0
      %4818 = vmatprep.subr.bf16.mxu0 0
      %4819 = vmatpush1.bf16.msra.mxu0 0
      %4820 = vmatprep.mubr.bf16.mxu0 0
      %4821 = vmatmul.mubr.bf16.gmra.mrb[0].mxu0 %v4738
      %v4822 = vpop.f32.mrb[0].mxu0
      %v4823 = vadd.f32 %v4728, %v4822
      %v4824 = vpop.f32.mrb[0].mxu0
      %v4825 = vpop.f32.mrb[0].mxu0
      %v4826 = vadd.f32 %v4731, %v4825
      %v4827 = vpop.f32.mrb[0].mxu0
      %4828 = vdwg.mxu0
      %v4829 = vld [vmem:[%s4] sm:$0x1]
      %v4831 = vlaneseq
      %v4832 = vshrl.u32 %v4831, 7
      %v4833 = vsub.s32 0, %v4832
      %v4834 = vrot.slane %v4829, %v4833
      %v4836 = vadd.f32 %v4823, %v4834
      %v4837 = vadd.f32 %v4826, %v4834
      %v4838 = vtanh.pop %v4836
      %v4839 = vtanh.pop %v4837
      %4840 = vst [vmem:[#allocation2] sm:$0xff] %v4838
      %4841 = vst [vmem:[#allocation2 + $0x8] sm:$0xff] %v4839
      %v4842 = vld [vmem:[%s582] sm:$0xff]
      %v4843 = vld [vmem:[%s582 + $0x8] sm:$0xff]
      %v4844 = vpack.c.bf16 %v4839, %v4838
      %v4845 = vld [vmem:[%s586] sm:$0xf]
      %v4846 = vld [vmem:[%s586 + $0x4] sm:$0xf]
      %v4847 = vld [vmem:[%s586 + $0x8] sm:$0xf]
      %v4848 = vld [vmem:[%s586 + $0xc] sm:$0xf]
      %v4849 = vld [vmem:[%s586 + $0x10] sm:$0xf]
      %v4850 = vld [vmem:[%s586 + $0x14] sm:$0xf]
      %v4851 = vld [vmem:[%s586 + $0x18] sm:$0xf]
      %v4852 = vld [vmem:[%s586 + $0x1c] sm:$0xf]
      %v4853 = vld [vmem:[%s586 + $0x20] sm:$0xf]
      %v4854 = vld [vmem:[%s586 + $0x24] sm:$0xf]
      %v4855 = vld [vmem:[%s586 + $0x28] sm:$0xf]
      %v4856 = vld [vmem:[%s586 + $0x2c] sm:$0xf]
      %v4857 = vld [vmem:[%s586 + $0x30] sm:$0xf]
      %v4858 = vld [vmem:[%s586 + $0x34] sm:$0xf]
      %v4859 = vld [vmem:[%s586 + $0x38] sm:$0xf]
      %v4860 = vld [vmem:[%s586 + $0x3c] sm:$0xf]
      %v4861 = vpack.c.bf16 %v4843, %v4842
      %v4862 = vld [vmem:[%s604] sm:$0xf]
      %v4863 = vld [vmem:[%s604 + $0x4] sm:$0xf]
      %v4864 = vld [vmem:[%s604 + $0x8] sm:$0xf]
      %v4865 = vld [vmem:[%s604 + $0xc] sm:$0xf]
      %v4866 = vld [vmem:[%s604 + $0x10] sm:$0xf]
      %v4867 = vld [vmem:[%s604 + $0x14] sm:$0xf]
      %v4868 = vld [vmem:[%s604 + $0x18] sm:$0xf]
      %v4869 = vld [vmem:[%s604 + $0x1c] sm:$0xf]
      %v4870 = vld [vmem:[%s604 + $0x20] sm:$0xf]
      %v4871 = vld [vmem:[%s604 + $0x24] sm:$0xf]
      %v4872 = vld [vmem:[%s604 + $0x28] sm:$0xf]
      %v4873 = vld [vmem:[%s604 + $0x2c] sm:$0xf]
      %v4874 = vld [vmem:[%s604 + $0x30] sm:$0xf]
      %v4875 = vld [vmem:[%s604 + $0x34] sm:$0xf]
      %v4876 = vld [vmem:[%s604 + $0x38] sm:$0xf]
      %v4877 = vld [vmem:[%s604 + $0x3c] sm:$0xf]
      %v4894 = vunpack.c.l.b16 %v4862
      %v4895 = vunpack.c.l.b16 %v4863
      %v4896 = vunpack.c.l.b16 %v4864
      %v4897 = vunpack.c.l.b16 %v4865
      %v4898 = vunpack.c.l.b16 %v4866
      %v4899 = vunpack.c.l.b16 %v4867
      %v4900 = vunpack.c.l.b16 %v4868
      %v4901 = vunpack.c.l.b16 %v4869
      %v4902 = vunpack.c.l.b16 %v4870
      %v4903 = vunpack.c.l.b16 %v4871
      %v4904 = vunpack.c.l.b16 %v4872
      %v4905 = vunpack.c.l.b16 %v4873
      %v4906 = vunpack.c.l.b16 %v4874
      %v4907 = vunpack.c.l.b16 %v4875
      %v4908 = vunpack.c.l.b16 %v4876
      %v4909 = vunpack.c.l.b16 %v4877
      %v4910 = vpack.c.b16 %v4895, %v4894
      %v4911 = vpack.c.b16 %v4897, %v4896
      %v4912 = vpack.c.b16 %v4899, %v4898
      %v4913 = vpack.c.b16 %v4901, %v4900
      %v4914 = vpack.c.b16 %v4903, %v4902
      %v4915 = vpack.c.b16 %v4905, %v4904
      %v4916 = vpack.c.b16 %v4907, %v4906
      %v4917 = vpack.c.b16 %v4909, %v4908
      %4926 = vmatprep.subr.bf16.mxu0 0
      %4927 = vmatpush1.bf16.msra.mxu0 %v4910
      %4928 = vmatprep.subr.bf16.mxu0 0
      %4929 = vmatpush1.bf16.msra.mxu0 %v4911
      %4930 = vmatprep.subr.bf16.mxu0 0
      %4931 = vmatpush1.bf16.msra.mxu0 %v4912
      %4932 = vmatprep.subr.bf16.mxu0 0
      %4933 = vmatpush1.bf16.msra.mxu0 %v4913
      %4934 = vmatprep.subr.bf16.mxu0 0
      %4935 = vmatpush1.bf16.msra.mxu0 %v4914
      %4936 = vmatprep.subr.bf16.mxu0 0
      %4937 = vmatpush1.bf16.msra.mxu0 %v4915
      %4938 = vmatprep.subr.bf16.mxu0 0
      %4939 = vmatpush1.bf16.msra.mxu0 %v4916
      %4940 = vmatprep.subr.bf16.mxu0 0
      %4941 = vmatpush1.bf16.msra.mxu0 %v4917
      %4942 = vmatprep.subr.bf16.mxu0 0
      %4943 = vmatpush1.bf16.msra.mxu0 0
      %4944 = vmatprep.subr.bf16.mxu0 0
      %4945 = vmatpush1.bf16.msra.mxu0 0
      %4946 = vmatprep.subr.bf16.mxu0 0
      %4947 = vmatpush1.bf16.msra.mxu0 0
      %4948 = vmatprep.subr.bf16.mxu0 0
      %4949 = vmatpush1.bf16.msra.mxu0 0
      %4950 = vmatprep.subr.bf16.mxu0 0
      %4951 = vmatpush1.bf16.msra.mxu0 0
      %4952 = vmatprep.subr.bf16.mxu0 0
      %4953 = vmatpush1.bf16.msra.mxu0 0
      %4954 = vmatprep.subr.bf16.mxu0 0
      %4955 = vmatpush1.bf16.msra.mxu0 0
      %4956 = vmatprep.subr.bf16.mxu0 0
      %4957 = vmatpush1.bf16.msra.mxu0 0
      %4958 = vmatprep.mubr.bf16.mxu0 0
      %4959 = vmatmul.mubr.bf16.gmra.mrb[0].mxu0 %v4861
      %v4960 = vpop.f32.mrb[0].mxu0
      %v4961 = vadd.f32 0.0, %v4960
      %v4962 = vpop.f32.mrb[0].mxu0
      %v4963 = vpop.f32.mrb[0].mxu0
      %v4964 = vadd.f32 0.0, %v4963
      %v4965 = vpop.f32.mrb[0].mxu0
      %4966 = vdwg.mxu0
      %v4983 = vunpack.c.l.b16 %v4845
      %v4984 = vunpack.c.l.b16 %v4846
      %v4985 = vunpack.c.l.b16 %v4847
      %v4986 = vunpack.c.l.b16 %v4848
      %v4987 = vunpack.c.l.b16 %v4849
      %v4988 = vunpack.c.l.b16 %v4850
      %v4989 = vunpack.c.l.b16 %v4851
      %v4990 = vunpack.c.l.b16 %v4852
      %v4991 = vunpack.c.l.b16 %v4853
      %v4992 = vunpack.c.l.b16 %v4854
      %v4993 = vunpack.c.l.b16 %v4855
      %v4994 = vunpack.c.l.b16 %v4856
      %v4995 = vunpack.c.l.b16 %v4857
      %v4996 = vunpack.c.l.b16 %v4858
      %v4997 = vunpack.c.l.b16 %v4859
      %v4998 = vunpack.c.l.b16 %v4860
      %v4999 = vpack.c.b16 %v4984, %v4983
      %v5000 = vpack.c.b16 %v4986, %v4985
      %v5001 = vpack.c.b16 %v4988, %v4987
      %v5002 = vpack.c.b16 %v4990, %v4989
      %v5003 = vpack.c.b16 %v4992, %v4991
      %v5004 = vpack.c.b16 %v4994, %v4993
      %v5005 = vpack.c.b16 %v4996, %v4995
      %v5006 = vpack.c.b16 %v4998, %v4997
      %5015 = vmatprep.subr.bf16.mxu0 0
      %5016 = vmatpush1.bf16.msra.mxu0 %v4999
      %5017 = vmatprep.subr.bf16.mxu0 0
      %5018 = vmatpush1.bf16.msra.mxu0 %v5000
      %5019 = vmatprep.subr.bf16.mxu0 0
      %5020 = vmatpush1.bf16.msra.mxu0 %v5001
      %5021 = vmatprep.subr.bf16.mxu0 0
      %5022 = vmatpush1.bf16.msra.mxu0 %v5002
      %5023 = vmatprep.subr.bf16.mxu0 0
      %5024 = vmatpush1.bf16.msra.mxu0 %v5003
      %5025 = vmatprep.subr.bf16.mxu0 0
      %5026 = vmatpush1.bf16.msra.mxu0 %v5004
      %5027 = vmatprep.subr.bf16.mxu0 0
      %5028 = vmatpush1.bf16.msra.mxu0 %v5005
      %5029 = vmatprep.subr.bf16.mxu0 0
      %5030 = vmatpush1.bf16.msra.mxu0 %v5006
      %5031 = vmatprep.subr.bf16.mxu0 0
      %5032 = vmatpush1.bf16.msra.mxu0 0
      %5033 = vmatprep.subr.bf16.mxu0 0
      %5034 = vmatpush1.bf16.msra.mxu0 0
      %5035 = vmatprep.subr.bf16.mxu0 0
      %5036 = vmatpush1.bf16.msra.mxu0 0
      %5037 = vmatprep.subr.bf16.mxu0 0
      %5038 = vmatpush1.bf16.msra.mxu0 0
      %5039 = vmatprep.subr.bf16.mxu0 0
      %5040 = vmatpush1.bf16.msra.mxu0 0
      %5041 = vmatprep.subr.bf16.mxu0 0
      %5042 = vmatpush1.bf16.msra.mxu0 0
      %5043 = vmatprep.subr.bf16.mxu0 0
      %5044 = vmatpush1.bf16.msra.mxu0 0
      %5045 = vmatprep.subr.bf16.mxu0 0
      %5046 = vmatpush1.bf16.msra.mxu0 0
      %5047 = vmatprep.mubr.bf16.mxu0 0
      %5048 = vmatmul.mubr.bf16.gmra.mrb[0].mxu0 %v4844
      %v5049 = vpop.f32.mrb[0].mxu0
      %v5050 = vadd.f32 %v4961, %v5049
      %v5051 = vpop.f32.mrb[0].mxu0
      %v5052 = vpop.f32.mrb[0].mxu0
      %v5053 = vadd.f32 %v4964, %v5052
      %v5054 = vpop.f32.mrb[0].mxu0
      %5055 = vdwg.mxu0
      %v5056 = vld [vmem:[%s799] sm:$0x1]
      %v5058 = vlaneseq
      %v5059 = vshrl.u32 %v5058, 7
      %v5060 = vsub.s32 0, %v5059
      %v5061 = vrot.slane %v5056, %v5060
      %v5063 = vadd.f32 %v5050, %v5061
      %v5064 = vadd.f32 %v5053, %v5061
      %v5065 = vtanh.pop %v5063
      %v5066 = vtanh.pop %v5064
      %5067 = vst [vmem:[%s582] sm:$0xff] %v5065
      %5068 = vst [vmem:[%s582 + $0x8] sm:$0xff] %v5066
      %v5069 = vpack.c.bf16 %v5066, %v5065
      %v5071 = vunpack.c.l.b16 %v5069
      %v5072 = vunpack.c.h.b16 %v5069
      %v5073 = vpack.c.b16 %v5071, %v5071
      %v5074 = vpack.c.b16 %v5072, %v5072
      %s5077 = scalar_lea.vmem %s326, 72
      %5078 = vst [vmem:[%s5077] sm:$0xf] %v5073
      %5079 = vst [vmem:[%s5077 + $0x4] sm:$0xf] %v5074
      %s5080 = scalar_lea.vmem %s308, 80
      %v5081 = vld [vmem:[%s5080] sm:$0xf]
      %v5082 = vld [vmem:[%s5080 + $0x4] sm:$0xf]
      %v5083 = vld [vmem:[#allocation2] sm:$0xff]
      %v5084 = vld [vmem:[#allocation2 + $0x8] sm:$0xff]
      %v5085 = vld [vmem:[%s2] sm:$0xf]
      %v5086 = vld [vmem:[%s2 + $0x4] sm:$0xf]
      %v5087 = vld [vmem:[%s2 + $0x8] sm:$0xf]
      %v5088 = vld [vmem:[%s2 + $0xc] sm:$0xf]
      %v5089 = vld [vmem:[%s2 + $0x10] sm:$0xf]
      %v5090 = vld [vmem:[%s2 + $0x14] sm:$0xf]
      %v5091 = vld [vmem:[%s2 + $0x18] sm:$0xf]
      %v5092 = vld [vmem:[%s2 + $0x1c] sm:$0xf]
      %v5093 = vld [vmem:[%s2 + $0x20] sm:$0xf]
      %v5094 = vld [vmem:[%s2 + $0x24] sm:$0xf]
      %v5095 = vld [vmem:[%s2 + $0x28] sm:$0xf]
      %v5096 = vld [vmem:[%s2 + $0x2c] sm:$0xf]
      %v5097 = vld [vmem:[%s2 + $0x30] sm:$0xf]
      %v5098 = vld [vmem:[%s2 + $0x34] sm:$0xf]
      %v5099 = vld [vmem:[%s2 + $0x38] sm:$0xf]
      %v5100 = vld [vmem:[%s2 + $0x3c] sm:$0xf]
      %v5101 = vpack.c.bf16 %v5084, %v5083
      %v5102 = vld [vmem:[%s3] sm:$0xf]
      %v5103 = vld [vmem:[%s3 + $0x4] sm:$0xf]
      %v5104 = vld [vmem:[%s3 + $0x8] sm:$0xf]
      %v5105 = vld [vmem:[%s3 + $0xc] sm:$0xf]
      %v5106 = vld [vmem:[%s3 + $0x10] sm:$0xf]
      %v5107 = vld [vmem:[%s3 + $0x14] sm:$0xf]
      %v5108 = vld [vmem:[%s3 + $0x18] sm:$0xf]
      %v5109 = vld [vmem:[%s3 + $0x1c] sm:$0xf]
      %v5110 = vld [vmem:[%s3 + $0x20] sm:$0xf]
      %v5111 = vld [vmem:[%s3 + $0x24] sm:$0xf]
      %v5112 = vld [vmem:[%s3 + $0x28] sm:$0xf]
      %v5113 = vld [vmem:[%s3 + $0x2c] sm:$0xf]
      %v5114 = vld [vmem:[%s3 + $0x30] sm:$0xf]
      %v5115 = vld [vmem:[%s3 + $0x34] sm:$0xf]
      %v5116 = vld [vmem:[%s3 + $0x38] sm:$0xf]
      %v5117 = vld [vmem:[%s3 + $0x3c] sm:$0xf]
      %v5134 = vunpack.c.l.b16 %v5102
      %v5135 = vunpack.c.l.b16 %v5103
      %v5136 = vunpack.c.l.b16 %v5104
      %v5137 = vunpack.c.l.b16 %v5105
      %v5138 = vunpack.c.l.b16 %v5106
      %v5139 = vunpack.c.l.b16 %v5107
      %v5140 = vunpack.c.l.b16 %v5108
      %v5141 = vunpack.c.l.b16 %v5109
      %v5142 = vunpack.c.l.b16 %v5110
      %v5143 = vunpack.c.l.b16 %v5111
      %v5144 = vunpack.c.l.b16 %v5112
      %v5145 = vunpack.c.l.b16 %v5113
      %v5146 = vunpack.c.l.b16 %v5114
      %v5147 = vunpack.c.l.b16 %v5115
      %v5148 = vunpack.c.l.b16 %v5116
      %v5149 = vunpack.c.l.b16 %v5117
      %v5150 = vpack.c.b16 %v5135, %v5134
      %v5151 = vpack.c.b16 %v5137, %v5136
      %v5152 = vpack.c.b16 %v5139, %v5138
      %v5153 = vpack.c.b16 %v5141, %v5140
      %v5154 = vpack.c.b16 %v5143, %v5142
      %v5155 = vpack.c.b16 %v5145, %v5144
      %v5156 = vpack.c.b16 %v5147, %v5146
      %v5157 = vpack.c.b16 %v5149, %v5148
      %5166 = vmatprep.subr.bf16.mxu0 0
      %5167 = vmatpush1.bf16.msra.mxu0 %v5150
      %5168 = vmatprep.subr.bf16.mxu0 0
      %5169 = vmatpush1.bf16.msra.mxu0 %v5151
      %5170 = vmatprep.subr.bf16.mxu0 0
      %5171 = vmatpush1.bf16.msra.mxu0 %v5152
      %5172 = vmatprep.subr.bf16.mxu0 0
      %5173 = vmatpush1.bf16.msra.mxu0 %v5153
      %5174 = vmatprep.subr.bf16.mxu0 0
      %5175 = vmatpush1.bf16.msra.mxu0 %v5154
      %5176 = vmatprep.subr.bf16.mxu0 0
      %5177 = vmatpush1.bf16.msra.mxu0 %v5155
      %5178 = vmatprep.subr.bf16.mxu0 0
      %5179 = vmatpush1.bf16.msra.mxu0 %v5156
      %5180 = vmatprep.subr.bf16.mxu0 0
      %5181 = vmatpush1.bf16.msra.mxu0 %v5157
      %5182 = vmatprep.subr.bf16.mxu0 0
      %5183 = vmatpush1.bf16.msra.mxu0 0
      %5184 = vmatprep.subr.bf16.mxu0 0
      %5185 = vmatpush1.bf16.msra.mxu0 0
      %5186 = vmatprep.subr.bf16.mxu0 0
      %5187 = vmatpush1.bf16.msra.mxu0 0
      %5188 = vmatprep.subr.bf16.mxu0 0
      %5189 = vmatpush1.bf16.msra.mxu0 0
      %5190 = vmatprep.subr.bf16.mxu0 0
      %5191 = vmatpush1.bf16.msra.mxu0 0
      %5192 = vmatprep.subr.bf16.mxu0 0
      %5193 = vmatpush1.bf16.msra.mxu0 0
      %5194 = vmatprep.subr.bf16.mxu0 0
      %5195 = vmatpush1.bf16.msra.mxu0 0
      %5196 = vmatprep.subr.bf16.mxu0 0
      %5197 = vmatpush1.bf16.msra.mxu0 0
      %5198 = vmatprep.mubr.bf16.mxu0 0
      %5199 = vmatmul.mubr.bf16.gmra.mrb[0].mxu0 %v5101
      %v5200 = vpop.f32.mrb[0].mxu0
      %v5201 = vadd.f32 0.0, %v5200
      %v5202 = vpop.f32.mrb[0].mxu0
      %v5203 = vpop.f32.mrb[0].mxu0
      %v5204 = vadd.f32 0.0, %v5203
      %v5205 = vpop.f32.mrb[0].mxu0
      %5206 = vdwg.mxu0
      %v5209 = vunpack.c.l.b16 %v5081
      %v5210 = vunpack.c.l.b16 %v5082
      %v5211 = vpack.c.b16 %v5210, %v5209
      %v5229 = vunpack.c.l.b16 %v5085
      %v5230 = vunpack.c.l.b16 %v5086
      %v5231 = vunpack.c.l.b16 %v5087
      %v5232 = vunpack.c.l.b16 %v5088
      %v5233 = vunpack.c.l.b16 %v5089
      %v5234 = vunpack.c.l.b16 %v5090
      %v5235 = vunpack.c.l.b16 %v5091
      %v5236 = vunpack.c.l.b16 %v5092
      %v5237 = vunpack.c.l.b16 %v5093
      %v5238 = vunpack.c.l.b16 %v5094
      %v5239 = vunpack.c.l.b16 %v5095
      %v5240 = vunpack.c.l.b16 %v5096
      %v5241 = vunpack.c.l.b16 %v5097
      %v5242 = vunpack.c.l.b16 %v5098
      %v5243 = vunpack.c.l.b16 %v5099
      %v5244 = vunpack.c.l.b16 %v5100
      %v5245 = vpack.c.b16 %v5230, %v5229
      %v5246 = vpack.c.b16 %v5232, %v5231
      %v5247 = vpack.c.b16 %v5234, %v5233
      %v5248 = vpack.c.b16 %v5236, %v5235
      %v5249 = vpack.c.b16 %v5238, %v5237
      %v5250 = vpack.c.b16 %v5240, %v5239
      %v5251 = vpack.c.b16 %v5242, %v5241
      %v5252 = vpack.c.b16 %v5244, %v5243
      %5261 = vmatprep.subr.bf16.mxu0 0
      %5262 = vmatpush1.bf16.msra.mxu0 %v5245
      %5263 = vmatprep.subr.bf16.mxu0 0
      %5264 = vmatpush1.bf16.msra.mxu0 %v5246
      %5265 = vmatprep.subr.bf16.mxu0 0
      %5266 = vmatpush1.bf16.msra.mxu0 %v5247
      %5267 = vmatprep.subr.bf16.mxu0 0
      %5268 = vmatpush1.bf16.msra.mxu0 %v5248
      %5269 = vmatprep.subr.bf16.mxu0 0
      %5270 = vmatpush1.bf16.msra.mxu0 %v5249
      %5271 = vmatprep.subr.bf16.mxu0 0
      %5272 = vmatpush1.bf16.msra.mxu0 %v5250
      %5273 = vmatprep.subr.bf16.mxu0 0
      %5274 = vmatpush1.bf16.msra.mxu0 %v5251
      %5275 = vmatprep.subr.bf16.mxu0 0
      %5276 = vmatpush1.bf16.msra.mxu0 %v5252
      %5277 = vmatprep.subr.bf16.mxu0 0
      %5278 = vmatpush1.bf16.msra.mxu0 0
      %5279 = vmatprep.subr.bf16.mxu0 0
      %5280 = vmatpush1.bf16.msra.mxu0 0
      %5281 = vmatprep.subr.bf16.mxu0 0
      %5282 = vmatpush1.bf16.msra.mxu0 0
      %5283 = vmatprep.subr.bf16.mxu0 0
      %5284 = vmatpush1.bf16.msra.mxu0 0
      %5285 = vmatprep.subr.bf16.mxu0 0
      %5286 = vmatpush1.bf16.msra.mxu0 0
      %5287 = vmatprep.subr.bf16.mxu0 0
      %5288 = vmatpush1.bf16.msra.mxu0 0
      %5289 = vmatprep.subr.bf16.mxu0 0
      %5290 = vmatpush1.bf16.msra.mxu0 0
      %5291 = vmatprep.subr.bf16.mxu0 0
      %5292 = vmatpush1.bf16.msra.mxu0 0
      %5293 = vmatprep.mubr.bf16.mxu0 0
      %5294 = vmatmul.mubr.bf16.gmra.mrb[0].mxu0 %v5211
      %v5295 = vpop.f32.mrb[0].mxu0
      %v5296 = vadd.f32 %v5201, %v5295
      %v5297 = vpop.f32.mrb[0].mxu0
      %v5298 = vpop.f32.mrb[0].mxu0
      %v5299 = vadd.f32 %v5204, %v5298
      %v5300 = vpop.f32.mrb[0].mxu0
      %5301 = vdwg.mxu0
      %v5302 = vld [vmem:[%s4] sm:$0x1]
      %v5304 = vlaneseq
      %v5305 = vshrl.u32 %v5304, 7
      %v5306 = vsub.s32 0, %v5305
      %v5307 = vrot.slane %v5302, %v5306
      %v5309 = vadd.f32 %v5296, %v5307
      %v5310 = vadd.f32 %v5299, %v5307
      %v5311 = vtanh.pop %v5309
      %v5312 = vtanh.pop %v5310
      %5313 = vst [vmem:[#allocation2] sm:$0xff] %v5311
      %5314 = vst [vmem:[#allocation2 + $0x8] sm:$0xff] %v5312
      %v5315 = vld [vmem:[%s582] sm:$0xff]
      %v5316 = vld [vmem:[%s582 + $0x8] sm:$0xff]
      %v5317 = vpack.c.bf16 %v5312, %v5311
      %v5318 = vld [vmem:[%s586] sm:$0xf]
      %v5319 = vld [vmem:[%s586 + $0x4] sm:$0xf]
      %v5320 = vld [vmem:[%s586 + $0x8] sm:$0xf]
      %v5321 = vld [vmem:[%s586 + $0xc] sm:$0xf]
      %v5322 = vld [vmem:[%s586 + $0x10] sm:$0xf]
      %v5323 = vld [vmem:[%s586 + $0x14] sm:$0xf]
      %v5324 = vld [vmem:[%s586 + $0x18] sm:$0xf]
      %v5325 = vld [vmem:[%s586 + $0x1c] sm:$0xf]
      %v5326 = vld [vmem:[%s586 + $0x20] sm:$0xf]
      %v5327 = vld [vmem:[%s586 + $0x24] sm:$0xf]
      %v5328 = vld [vmem:[%s586 + $0x28] sm:$0xf]
      %v5329 = vld [vmem:[%s586 + $0x2c] sm:$0xf]
      %v5330 = vld [vmem:[%s586 + $0x30] sm:$0xf]
      %v5331 = vld [vmem:[%s586 + $0x34] sm:$0xf]
      %v5332 = vld [vmem:[%s586 + $0x38] sm:$0xf]
      %v5333 = vld [vmem:[%s586 + $0x3c] sm:$0xf]
      %v5334 = vpack.c.bf16 %v5316, %v5315
      %v5335 = vld [vmem:[%s604] sm:$0xf]
      %v5336 = vld [vmem:[%s604 + $0x4] sm:$0xf]
      %v5337 = vld [vmem:[%s604 + $0x8] sm:$0xf]
      %v5338 = vld [vmem:[%s604 + $0xc] sm:$0xf]
      %v5339 = vld [vmem:[%s604 + $0x10] sm:$0xf]
      %v5340 = vld [vmem:[%s604 + $0x14] sm:$0xf]
      %v5341 = vld [vmem:[%s604 + $0x18] sm:$0xf]
      %v5342 = vld [vmem:[%s604 + $0x1c] sm:$0xf]
      %v5343 = vld [vmem:[%s604 + $0x20] sm:$0xf]
      %v5344 = vld [vmem:[%s604 + $0x24] sm:$0xf]
      %v5345 = vld [vmem:[%s604 + $0x28] sm:$0xf]
      %v5346 = vld [vmem:[%s604 + $0x2c] sm:$0xf]
      %v5347 = vld [vmem:[%s604 + $0x30] sm:$0xf]
      %v5348 = vld [vmem:[%s604 + $0x34] sm:$0xf]
      %v5349 = vld [vmem:[%s604 + $0x38] sm:$0xf]
      %v5350 = vld [vmem:[%s604 + $0x3c] sm:$0xf]
      %v5367 = vunpack.c.l.b16 %v5335
      %v5368 = vunpack.c.l.b16 %v5336
      %v5369 = vunpack.c.l.b16 %v5337
      %v5370 = vunpack.c.l.b16 %v5338
      %v5371 = vunpack.c.l.b16 %v5339
      %v5372 = vunpack.c.l.b16 %v5340
      %v5373 = vunpack.c.l.b16 %v5341
      %v5374 = vunpack.c.l.b16 %v5342
      %v5375 = vunpack.c.l.b16 %v5343
      %v5376 = vunpack.c.l.b16 %v5344
      %v5377 = vunpack.c.l.b16 %v5345
      %v5378 = vunpack.c.l.b16 %v5346
      %v5379 = vunpack.c.l.b16 %v5347
      %v5380 = vunpack.c.l.b16 %v5348
      %v5381 = vunpack.c.l.b16 %v5349
      %v5382 = vunpack.c.l.b16 %v5350
      %v5383 = vpack.c.b16 %v5368, %v5367
      %v5384 = vpack.c.b16 %v5370, %v5369
      %v5385 = vpack.c.b16 %v5372, %v5371
      %v5386 = vpack.c.b16 %v5374, %v5373
      %v5387 = vpack.c.b16 %v5376, %v5375
      %v5388 = vpack.c.b16 %v5378, %v5377
      %v5389 = vpack.c.b16 %v5380, %v5379
      %v5390 = vpack.c.b16 %v5382, %v5381
      %5399 = vmatprep.subr.bf16.mxu0 0
      %5400 = vmatpush1.bf16.msra.mxu0 %v5383
      %5401 = vmatprep.subr.bf16.mxu0 0
      %5402 = vmatpush1.bf16.msra.mxu0 %v5384
      %5403 = vmatprep.subr.bf16.mxu0 0
      %5404 = vmatpush1.bf16.msra.mxu0 %v5385
      %5405 = vmatprep.subr.bf16.mxu0 0
      %5406 = vmatpush1.bf16.msra.mxu0 %v5386
      %5407 = vmatprep.subr.bf16.mxu0 0
      %5408 = vmatpush1.bf16.msra.mxu0 %v5387
      %5409 = vmatprep.subr.bf16.mxu0 0
      %5410 = vmatpush1.bf16.msra.mxu0 %v5388
      %5411 = vmatprep.subr.bf16.mxu0 0
      %5412 = vmatpush1.bf16.msra.mxu0 %v5389
      %5413 = vmatprep.subr.bf16.mxu0 0
      %5414 = vmatpush1.bf16.msra.mxu0 %v5390
      %5415 = vmatprep.subr.bf16.mxu0 0
      %5416 = vmatpush1.bf16.msra.mxu0 0
      %5417 = vmatprep.subr.bf16.mxu0 0
      %5418 = vmatpush1.bf16.msra.mxu0 0
      %5419 = vmatprep.subr.bf16.mxu0 0
      %5420 = vmatpush1.bf16.msra.mxu0 0
      %5421 = vmatprep.subr.bf16.mxu0 0
      %5422 = vmatpush1.bf16.msra.mxu0 0
      %5423 = vmatprep.subr.bf16.mxu0 0
      %5424 = vmatpush1.bf16.msra.mxu0 0
      %5425 = vmatprep.subr.bf16.mxu0 0
      %5426 = vmatpush1.bf16.msra.mxu0 0
      %5427 = vmatprep.subr.bf16.mxu0 0
      %5428 = vmatpush1.bf16.msra.mxu0 0
      %5429 = vmatprep.subr.bf16.mxu0 0
      %5430 = vmatpush1.bf16.msra.mxu0 0
      %5431 = vmatprep.mubr.bf16.mxu0 0
      %5432 = vmatmul.mubr.bf16.gmra.mrb[0].mxu0 %v5334
      %v5433 = vpop.f32.mrb[0].mxu0
      %v5434 = vadd.f32 0.0, %v5433
      %v5435 = vpop.f32.mrb[0].mxu0
      %v5436 = vpop.f32.mrb[0].mxu0
      %v5437 = vadd.f32 0.0, %v5436
      %v5438 = vpop.f32.mrb[0].mxu0
      %5439 = vdwg.mxu0
      %v5456 = vunpack.c.l.b16 %v5318
      %v5457 = vunpack.c.l.b16 %v5319
      %v5458 = vunpack.c.l.b16 %v5320
      %v5459 = vunpack.c.l.b16 %v5321
      %v5460 = vunpack.c.l.b16 %v5322
      %v5461 = vunpack.c.l.b16 %v5323
      %v5462 = vunpack.c.l.b16 %v5324
      %v5463 = vunpack.c.l.b16 %v5325
      %v5464 = vunpack.c.l.b16 %v5326
      %v5465 = vunpack.c.l.b16 %v5327
      %v5466 = vunpack.c.l.b16 %v5328
      %v5467 = vunpack.c.l.b16 %v5329
      %v5468 = vunpack.c.l.b16 %v5330
      %v5469 = vunpack.c.l.b16 %v5331
      %v5470 = vunpack.c.l.b16 %v5332
      %v5471 = vunpack.c.l.b16 %v5333
      %v5472 = vpack.c.b16 %v5457, %v5456
      %v5473 = vpack.c.b16 %v5459, %v5458
      %v5474 = vpack.c.b16 %v5461, %v5460
      %v5475 = vpack.c.b16 %v5463, %v5462
      %v5476 = vpack.c.b16 %v5465, %v5464
      %v5477 = vpack.c.b16 %v5467, %v5466
      %v5478 = vpack.c.b16 %v5469, %v5468
      %v5479 = vpack.c.b16 %v5471, %v5470
      %5488 = vmatprep.subr.bf16.mxu0 0
      %5489 = vmatpush1.bf16.msra.mxu0 %v5472
      %5490 = vmatprep.subr.bf16.mxu0 0
      %5491 = vmatpush1.bf16.msra.mxu0 %v5473
      %5492 = vmatprep.subr.bf16.mxu0 0
      %5493 = vmatpush1.bf16.msra.mxu0 %v5474
      %5494 = vmatprep.subr.bf16.mxu0 0
      %5495 = vmatpush1.bf16.msra.mxu0 %v5475
      %5496 = vmatprep.subr.bf16.mxu0 0
      %5497 = vmatpush1.bf16.msra.mxu0 %v5476
      %5498 = vmatprep.subr.bf16.mxu0 0
      %5499 = vmatpush1.bf16.msra.mxu0 %v5477
      %5500 = vmatprep.subr.bf16.mxu0 0
      %5501 = vmatpush1.bf16.msra.mxu0 %v5478
      %5502 = vmatprep.subr.bf16.mxu0 0
      %5503 = vmatpush1.bf16.msra.mxu0 %v5479
      %5504 = vmatprep.subr.bf16.mxu0 0
      %5505 = vmatpush1.bf16.msra.mxu0 0
      %5506 = vmatprep.subr.bf16.mxu0 0
      %5507 = vmatpush1.bf16.msra.mxu0 0
      %5508 = vmatprep.subr.bf16.mxu0 0
      %5509 = vmatpush1.bf16.msra.mxu0 0
      %5510 = vmatprep.subr.bf16.mxu0 0
      %5511 = vmatpush1.bf16.msra.mxu0 0
      %5512 = vmatprep.subr.bf16.mxu0 0
      %5513 = vmatpush1.bf16.msra.mxu0 0
      %5514 = vmatprep.subr.bf16.mxu0 0
      %5515 = vmatpush1.bf16.msra.mxu0 0
      %5516 = vmatprep.subr.bf16.mxu0 0
      %5517 = vmatpush1.bf16.msra.mxu0 0
      %5518 = vmatprep.subr.bf16.mxu0 0
      %5519 = vmatpush1.bf16.msra.mxu0 0
      %5520 = vmatprep.mubr.bf16.mxu0 0
      %5521 = vmatmul.mubr.bf16.gmra.mrb[0].mxu0 %v5317
      %v5522 = vpop.f32.mrb[0].mxu0
      %v5523 = vadd.f32 %v5434, %v5522
      %v5524 = vpop.f32.mrb[0].mxu0
      %v5525 = vpop.f32.mrb[0].mxu0
      %v5526 = vadd.f32 %v5437, %v5525
      %v5527 = vpop.f32.mrb[0].mxu0
      %5528 = vdwg.mxu0
      %v5529 = vld [vmem:[%s799] sm:$0x1]
      %v5531 = vlaneseq
      %v5532 = vshrl.u32 %v5531, 7
      %v5533 = vsub.s32 0, %v5532
      %v5534 = vrot.slane %v5529, %v5533
      %v5536 = vadd.f32 %v5523, %v5534
      %v5537 = vadd.f32 %v5526, %v5534
      %v5538 = vtanh.pop %v5536
      %v5539 = vtanh.pop %v5537
      %5540 = vst [vmem:[%s582] sm:$0xff] %v5538
      %5541 = vst [vmem:[%s582 + $0x8] sm:$0xff] %v5539
      %v5542 = vpack.c.bf16 %v5539, %v5538
      %v5544 = vunpack.c.l.b16 %v5542
      %v5545 = vunpack.c.h.b16 %v5542
      %v5546 = vpack.c.b16 %v5544, %v5544
      %v5547 = vpack.c.b16 %v5545, %v5545
      %s5550 = scalar_lea.vmem %s326, 80
      %5551 = vst [vmem:[%s5550] sm:$0xf] %v5546
      %5552 = vst [vmem:[%s5550 + $0x4] sm:$0xf] %v5547
      %s5553 = scalar_lea.vmem %s308, 88
      %v5554 = vld [vmem:[%s5553] sm:$0xf]
      %v5555 = vld [vmem:[%s5553 + $0x4] sm:$0xf]
      %v5556 = vld [vmem:[#allocation2] sm:$0xff]
      %v5557 = vld [vmem:[#allocation2 + $0x8] sm:$0xff]
      %v5558 = vld [vmem:[%s2] sm:$0xf]
      %v5559 = vld [vmem:[%s2 + $0x4] sm:$0xf]
      %v5560 = vld [vmem:[%s2 + $0x8] sm:$0xf]
      %v5561 = vld [vmem:[%s2 + $0xc] sm:$0xf]
      %v5562 = vld [vmem:[%s2 + $0x10] sm:$0xf]
      %v5563 = vld [vmem:[%s2 + $0x14] sm:$0xf]
      %v5564 = vld [vmem:[%s2 + $0x18] sm:$0xf]
      %v5565 = vld [vmem:[%s2 + $0x1c] sm:$0xf]
      %v5566 = vld [vmem:[%s2 + $0x20] sm:$0xf]
      %v5567 = vld [vmem:[%s2 + $0x24] sm:$0xf]
      %v5568 = vld [vmem:[%s2 + $0x28] sm:$0xf]
      %v5569 = vld [vmem:[%s2 + $0x2c] sm:$0xf]
      %v5570 = vld [vmem:[%s2 + $0x30] sm:$0xf]
      %v5571 = vld [vmem:[%s2 + $0x34] sm:$0xf]
      %v5572 = vld [vmem:[%s2 + $0x38] sm:$0xf]
      %v5573 = vld [vmem:[%s2 + $0x3c] sm:$0xf]
      %v5574 = vpack.c.bf16 %v5557, %v5556
      %v5575 = vld [vmem:[%s3] sm:$0xf]
      %v5576 = vld [vmem:[%s3 + $0x4] sm:$0xf]
      %v5577 = vld [vmem:[%s3 + $0x8] sm:$0xf]
      %v5578 = vld [vmem:[%s3 + $0xc] sm:$0xf]
      %v5579 = vld [vmem:[%s3 + $0x10] sm:$0xf]
      %v5580 = vld [vmem:[%s3 + $0x14] sm:$0xf]
      %v5581 = vld [vmem:[%s3 + $0x18] sm:$0xf]
      %v5582 = vld [vmem:[%s3 + $0x1c] sm:$0xf]
      %v5583 = vld [vmem:[%s3 + $0x20] sm:$0xf]
      %v5584 = vld [vmem:[%s3 + $0x24] sm:$0xf]
      %v5585 = vld [vmem:[%s3 + $0x28] sm:$0xf]
      %v5586 = vld [vmem:[%s3 + $0x2c] sm:$0xf]
      %v5587 = vld [vmem:[%s3 + $0x30] sm:$0xf]
      %v5588 = vld [vmem:[%s3 + $0x34] sm:$0xf]
      %v5589 = vld [vmem:[%s3 + $0x38] sm:$0xf]
      %v5590 = vld [vmem:[%s3 + $0x3c] sm:$0xf]
      %v5607 = vunpack.c.l.b16 %v5575
      %v5608 = vunpack.c.l.b16 %v5576
      %v5609 = vunpack.c.l.b16 %v5577
      %v5610 = vunpack.c.l.b16 %v5578
      %v5611 = vunpack.c.l.b16 %v5579
      %v5612 = vunpack.c.l.b16 %v5580
      %v5613 = vunpack.c.l.b16 %v5581
      %v5614 = vunpack.c.l.b16 %v5582
      %v5615 = vunpack.c.l.b16 %v5583
      %v5616 = vunpack.c.l.b16 %v5584
      %v5617 = vunpack.c.l.b16 %v5585
      %v5618 = vunpack.c.l.b16 %v5586
      %v5619 = vunpack.c.l.b16 %v5587
      %v5620 = vunpack.c.l.b16 %v5588
      %v5621 = vunpack.c.l.b16 %v5589
      %v5622 = vunpack.c.l.b16 %v5590
      %v5623 = vpack.c.b16 %v5608, %v5607
      %v5624 = vpack.c.b16 %v5610, %v5609
      %v5625 = vpack.c.b16 %v5612, %v5611
      %v5626 = vpack.c.b16 %v5614, %v5613
      %v5627 = vpack.c.b16 %v5616, %v5615
      %v5628 = vpack.c.b16 %v5618, %v5617
      %v5629 = vpack.c.b16 %v5620, %v5619
      %v5630 = vpack.c.b16 %v5622, %v5621
      %5639 = vmatprep.subr.bf16.mxu0 0
      %5640 = vmatpush1.bf16.msra.mxu0 %v5623
      %5641 = vmatprep.subr.bf16.mxu0 0
      %5642 = vmatpush1.bf16.msra.mxu0 %v5624
      %5643 = vmatprep.subr.bf16.mxu0 0
      %5644 = vmatpush1.bf16.msra.mxu0 %v5625
      %5645 = vmatprep.subr.bf16.mxu0 0
      %5646 = vmatpush1.bf16.msra.mxu0 %v5626
      %5647 = vmatprep.subr.bf16.mxu0 0
      %5648 = vmatpush1.bf16.msra.mxu0 %v5627
      %5649 = vmatprep.subr.bf16.mxu0 0
      %5650 = vmatpush1.bf16.msra.mxu0 %v5628
      %5651 = vmatprep.subr.bf16.mxu0 0
      %5652 = vmatpush1.bf16.msra.mxu0 %v5629
      %5653 = vmatprep.subr.bf16.mxu0 0
      %5654 = vmatpush1.bf16.msra.mxu0 %v5630
      %5655 = vmatprep.subr.bf16.mxu0 0
      %5656 = vmatpush1.bf16.msra.mxu0 0
      %5657 = vmatprep.subr.bf16.mxu0 0
      %5658 = vmatpush1.bf16.msra.mxu0 0
      %5659 = vmatprep.subr.bf16.mxu0 0
      %5660 = vmatpush1.bf16.msra.mxu0 0
      %5661 = vmatprep.subr.bf16.mxu0 0
      %5662 = vmatpush1.bf16.msra.mxu0 0
      %5663 = vmatprep.subr.bf16.mxu0 0
      %5664 = vmatpush1.bf16.msra.mxu0 0
      %5665 = vmatprep.subr.bf16.mxu0 0
      %5666 = vmatpush1.bf16.msra.mxu0 0
      %5667 = vmatprep.subr.bf16.mxu0 0
      %5668 = vmatpush1.bf16.msra.mxu0 0
      %5669 = vmatprep.subr.bf16.mxu0 0
      %5670 = vmatpush1.bf16.msra.mxu0 0
      %5671 = vmatprep.mubr.bf16.mxu0 0
      %5672 = vmatmul.mubr.bf16.gmra.mrb[0].mxu0 %v5574
      %v5673 = vpop.f32.mrb[0].mxu0
      %v5674 = vadd.f32 0.0, %v5673
      %v5675 = vpop.f32.mrb[0].mxu0
      %v5676 = vpop.f32.mrb[0].mxu0
      %v5677 = vadd.f32 0.0, %v5676
      %v5678 = vpop.f32.mrb[0].mxu0
      %5679 = vdwg.mxu0
      %v5682 = vunpack.c.l.b16 %v5554
      %v5683 = vunpack.c.l.b16 %v5555
      %v5684 = vpack.c.b16 %v5683, %v5682
      %v5702 = vunpack.c.l.b16 %v5558
      %v5703 = vunpack.c.l.b16 %v5559
      %v5704 = vunpack.c.l.b16 %v5560
      %v5705 = vunpack.c.l.b16 %v5561
      %v5706 = vunpack.c.l.b16 %v5562
      %v5707 = vunpack.c.l.b16 %v5563
      %v5708 = vunpack.c.l.b16 %v5564
      %v5709 = vunpack.c.l.b16 %v5565
      %v5710 = vunpack.c.l.b16 %v5566
      %v5711 = vunpack.c.l.b16 %v5567
      %v5712 = vunpack.c.l.b16 %v5568
      %v5713 = vunpack.c.l.b16 %v5569
      %v5714 = vunpack.c.l.b16 %v5570
      %v5715 = vunpack.c.l.b16 %v5571
      %v5716 = vunpack.c.l.b16 %v5572
      %v5717 = vunpack.c.l.b16 %v5573
      %v5718 = vpack.c.b16 %v5703, %v5702
      %v5719 = vpack.c.b16 %v5705, %v5704
      %v5720 = vpack.c.b16 %v5707, %v5706
      %v5721 = vpack.c.b16 %v5709, %v5708
      %v5722 = vpack.c.b16 %v5711, %v5710
      %v5723 = vpack.c.b16 %v5713, %v5712
      %v5724 = vpack.c.b16 %v5715, %v5714
      %v5725 = vpack.c.b16 %v5717, %v5716
      %5734 = vmatprep.subr.bf16.mxu0 0
      %5735 = vmatpush1.bf16.msra.mxu0 %v5718
      %5736 = vmatprep.subr.bf16.mxu0 0
      %5737 = vmatpush1.bf16.msra.mxu0 %v5719
      %5738 = vmatprep.subr.bf16.mxu0 0
      %5739 = vmatpush1.bf16.msra.mxu0 %v5720
      %5740 = vmatprep.subr.bf16.mxu0 0
      %5741 = vmatpush1.bf16.msra.mxu0 %v5721
      %5742 = vmatprep.subr.bf16.mxu0 0
      %5743 = vmatpush1.bf16.msra.mxu0 %v5722
      %5744 = vmatprep.subr.bf16.mxu0 0
      %5745 = vmatpush1.bf16.msra.mxu0 %v5723
      %5746 = vmatprep.subr.bf16.mxu0 0
      %5747 = vmatpush1.bf16.msra.mxu0 %v5724
      %5748 = vmatprep.subr.bf16.mxu0 0
      %5749 = vmatpush1.bf16.msra.mxu0 %v5725
      %5750 = vmatprep.subr.bf16.mxu0 0
      %5751 = vmatpush1.bf16.msra.mxu0 0
      %5752 = vmatprep.subr.bf16.mxu0 0
      %5753 = vmatpush1.bf16.msra.mxu0 0
      %5754 = vmatprep.subr.bf16.mxu0 0
      %5755 = vmatpush1.bf16.msra.mxu0 0
      %5756 = vmatprep.subr.bf16.mxu0 0
      %5757 = vmatpush1.bf16.msra.mxu0 0
      %5758 = vmatprep.subr.bf16.mxu0 0
      %5759 = vmatpush1.bf16.msra.mxu0 0
      %5760 = vmatprep.subr.bf16.mxu0 0
      %5761 = vmatpush1.bf16.msra.mxu0 0
      %5762 = vmatprep.subr.bf16.mxu0 0
      %5763 = vmatpush1.bf16.msra.mxu0 0
      %5764 = vmatprep.subr.bf16.mxu0 0
      %5765 = vmatpush1.bf16.msra.mxu0 0
      %5766 = vmatprep.mubr.bf16.mxu0 0
      %5767 = vmatmul.mubr.bf16.gmra.mrb[0].mxu0 %v5684
      %v5768 = vpop.f32.mrb[0].mxu0
      %v5769 = vadd.f32 %v5674, %v5768
      %v5770 = vpop.f32.mrb[0].mxu0
      %v5771 = vpop.f32.mrb[0].mxu0
      %v5772 = vadd.f32 %v5677, %v5771
      %v5773 = vpop.f32.mrb[0].mxu0
      %5774 = vdwg.mxu0
      %v5775 = vld [vmem:[%s4] sm:$0x1]
      %v5777 = vlaneseq
      %v5778 = vshrl.u32 %v5777, 7
      %v5779 = vsub.s32 0, %v5778
      %v5780 = vrot.slane %v5775, %v5779
      %v5782 = vadd.f32 %v5769, %v5780
      %v5783 = vadd.f32 %v5772, %v5780
      %v5784 = vtanh.pop %v5782
      %v5785 = vtanh.pop %v5783
      %5786 = vst [vmem:[#allocation2] sm:$0xff] %v5784
      %5787 = vst [vmem:[#allocation2 + $0x8] sm:$0xff] %v5785
      %v5788 = vld [vmem:[%s582] sm:$0xff]
      %v5789 = vld [vmem:[%s582 + $0x8] sm:$0xff]
      %v5790 = vpack.c.bf16 %v5785, %v5784
      %v5791 = vld [vmem:[%s586] sm:$0xf]
      %v5792 = vld [vmem:[%s586 + $0x4] sm:$0xf]
      %v5793 = vld [vmem:[%s586 + $0x8] sm:$0xf]
      %v5794 = vld [vmem:[%s586 + $0xc] sm:$0xf]
      %v5795 = vld [vmem:[%s586 + $0x10] sm:$0xf]
      %v5796 = vld [vmem:[%s586 + $0x14] sm:$0xf]
      %v5797 = vld [vmem:[%s586 + $0x18] sm:$0xf]
      %v5798 = vld [vmem:[%s586 + $0x1c] sm:$0xf]
      %v5799 = vld [vmem:[%s586 + $0x20] sm:$0xf]
      %v5800 = vld [vmem:[%s586 + $0x24] sm:$0xf]
      %v5801 = vld [vmem:[%s586 + $0x28] sm:$0xf]
      %v5802 = vld [vmem:[%s586 + $0x2c] sm:$0xf]
      %v5803 = vld [vmem:[%s586 + $0x30] sm:$0xf]
      %v5804 = vld [vmem:[%s586 + $0x34] sm:$0xf]
      %v5805 = vld [vmem:[%s586 + $0x38] sm:$0xf]
      %v5806 = vld [vmem:[%s586 + $0x3c] sm:$0xf]
      %v5807 = vpack.c.bf16 %v5789, %v5788
      %v5808 = vld [vmem:[%s604] sm:$0xf]
      %v5809 = vld [vmem:[%s604 + $0x4] sm:$0xf]
      %v5810 = vld [vmem:[%s604 + $0x8] sm:$0xf]
      %v5811 = vld [vmem:[%s604 + $0xc] sm:$0xf]
      %v5812 = vld [vmem:[%s604 + $0x10] sm:$0xf]
      %v5813 = vld [vmem:[%s604 + $0x14] sm:$0xf]
      %v5814 = vld [vmem:[%s604 + $0x18] sm:$0xf]
      %v5815 = vld [vmem:[%s604 + $0x1c] sm:$0xf]
      %v5816 = vld [vmem:[%s604 + $0x20] sm:$0xf]
      %v5817 = vld [vmem:[%s604 + $0x24] sm:$0xf]
      %v5818 = vld [vmem:[%s604 + $0x28] sm:$0xf]
      %v5819 = vld [vmem:[%s604 + $0x2c] sm:$0xf]
      %v5820 = vld [vmem:[%s604 + $0x30] sm:$0xf]
      %v5821 = vld [vmem:[%s604 + $0x34] sm:$0xf]
      %v5822 = vld [vmem:[%s604 + $0x38] sm:$0xf]
      %v5823 = vld [vmem:[%s604 + $0x3c] sm:$0xf]
      %v5840 = vunpack.c.l.b16 %v5808
      %v5841 = vunpack.c.l.b16 %v5809
      %v5842 = vunpack.c.l.b16 %v5810
      %v5843 = vunpack.c.l.b16 %v5811
      %v5844 = vunpack.c.l.b16 %v5812
      %v5845 = vunpack.c.l.b16 %v5813
      %v5846 = vunpack.c.l.b16 %v5814
      %v5847 = vunpack.c.l.b16 %v5815
      %v5848 = vunpack.c.l.b16 %v5816
      %v5849 = vunpack.c.l.b16 %v5817
      %v5850 = vunpack.c.l.b16 %v5818
      %v5851 = vunpack.c.l.b16 %v5819
      %v5852 = vunpack.c.l.b16 %v5820
      %v5853 = vunpack.c.l.b16 %v5821
      %v5854 = vunpack.c.l.b16 %v5822
      %v5855 = vunpack.c.l.b16 %v5823
      %v5856 = vpack.c.b16 %v5841, %v5840
      %v5857 = vpack.c.b16 %v5843, %v5842
      %v5858 = vpack.c.b16 %v5845, %v5844
      %v5859 = vpack.c.b16 %v5847, %v5846
      %v5860 = vpack.c.b16 %v5849, %v5848
      %v5861 = vpack.c.b16 %v5851, %v5850
      %v5862 = vpack.c.b16 %v5853, %v5852
      %v5863 = vpack.c.b16 %v5855, %v5854
      %5872 = vmatprep.subr.bf16.mxu0 0
      %5873 = vmatpush1.bf16.msra.mxu0 %v5856
      %5874 = vmatprep.subr.bf16.mxu0 0
      %5875 = vmatpush1.bf16.msra.mxu0 %v5857
      %5876 = vmatprep.subr.bf16.mxu0 0
      %5877 = vmatpush1.bf16.msra.mxu0 %v5858
      %5878 = vmatprep.subr.bf16.mxu0 0
      %5879 = vmatpush1.bf16.msra.mxu0 %v5859
      %5880 = vmatprep.subr.bf16.mxu0 0
      %5881 = vmatpush1.bf16.msra.mxu0 %v5860
      %5882 = vmatprep.subr.bf16.mxu0 0
      %5883 = vmatpush1.bf16.msra.mxu0 %v5861
      %5884 = vmatprep.subr.bf16.mxu0 0
      %5885 = vmatpush1.bf16.msra.mxu0 %v5862
      %5886 = vmatprep.subr.bf16.mxu0 0
      %5887 = vmatpush1.bf16.msra.mxu0 %v5863
      %5888 = vmatprep.subr.bf16.mxu0 0
      %5889 = vmatpush1.bf16.msra.mxu0 0
      %5890 = vmatprep.subr.bf16.mxu0 0
      %5891 = vmatpush1.bf16.msra.mxu0 0
      %5892 = vmatprep.subr.bf16.mxu0 0
      %5893 = vmatpush1.bf16.msra.mxu0 0
      %5894 = vmatprep.subr.bf16.mxu0 0
      %5895 = vmatpush1.bf16.msra.mxu0 0
      %5896 = vmatprep.subr.bf16.mxu0 0
      %5897 = vmatpush1.bf16.msra.mxu0 0
      %5898 = vmatprep.subr.bf16.mxu0 0
      %5899 = vmatpush1.bf16.msra.mxu0 0
      %5900 = vmatprep.subr.bf16.mxu0 0
      %5901 = vmatpush1.bf16.msra.mxu0 0
      %5902 = vmatprep.subr.bf16.mxu0 0
      %5903 = vmatpush1.bf16.msra.mxu0 0
      %5904 = vmatprep.mubr.bf16.mxu0 0
      %5905 = vmatmul.mubr.bf16.gmra.mrb[0].mxu0 %v5807
      %v5906 = vpop.f32.mrb[0].mxu0
      %v5907 = vadd.f32 0.0, %v5906
      %v5908 = vpop.f32.mrb[0].mxu0
      %v5909 = vpop.f32.mrb[0].mxu0
      %v5910 = vadd.f32 0.0, %v5909
      %v5911 = vpop.f32.mrb[0].mxu0
      %5912 = vdwg.mxu0
      %v5929 = vunpack.c.l.b16 %v5791
      %v5930 = vunpack.c.l.b16 %v5792
      %v5931 = vunpack.c.l.b16 %v5793
      %v5932 = vunpack.c.l.b16 %v5794
      %v5933 = vunpack.c.l.b16 %v5795
      %v5934 = vunpack.c.l.b16 %v5796
      %v5935 = vunpack.c.l.b16 %v5797
      %v5936 = vunpack.c.l.b16 %v5798
      %v5937 = vunpack.c.l.b16 %v5799
      %v5938 = vunpack.c.l.b16 %v5800
      %v5939 = vunpack.c.l.b16 %v5801
      %v5940 = vunpack.c.l.b16 %v5802
      %v5941 = vunpack.c.l.b16 %v5803
      %v5942 = vunpack.c.l.b16 %v5804
      %v5943 = vunpack.c.l.b16 %v5805
      %v5944 = vunpack.c.l.b16 %v5806
      %v5945 = vpack.c.b16 %v5930, %v5929
      %v5946 = vpack.c.b16 %v5932, %v5931
      %v5947 = vpack.c.b16 %v5934, %v5933
      %v5948 = vpack.c.b16 %v5936, %v5935
      %v5949 = vpack.c.b16 %v5938, %v5937
      %v5950 = vpack.c.b16 %v5940, %v5939
      %v5951 = vpack.c.b16 %v5942, %v5941
      %v5952 = vpack.c.b16 %v5944, %v5943
      %5961 = vmatprep.subr.bf16.mxu0 0
      %5962 = vmatpush1.bf16.msra.mxu0 %v5945
      %5963 = vmatprep.subr.bf16.mxu0 0
      %5964 = vmatpush1.bf16.msra.mxu0 %v5946
      %5965 = vmatprep.subr.bf16.mxu0 0
      %5966 = vmatpush1.bf16.msra.mxu0 %v5947
      %5967 = vmatprep.subr.bf16.mxu0 0
      %5968 = vmatpush1.bf16.msra.mxu0 %v5948
      %5969 = vmatprep.subr.bf16.mxu0 0
      %5970 = vmatpush1.bf16.msra.mxu0 %v5949
      %5971 = vmatprep.subr.bf16.mxu0 0
      %5972 = vmatpush1.bf16.msra.mxu0 %v5950
      %5973 = vmatprep.subr.bf16.mxu0 0
      %5974 = vmatpush1.bf16.msra.mxu0 %v5951
      %5975 = vmatprep.subr.bf16.mxu0 0
      %5976 = vmatpush1.bf16.msra.mxu0 %v5952
      %5977 = vmatprep.subr.bf16.mxu0 0
      %5978 = vmatpush1.bf16.msra.mxu0 0
      %5979 = vmatprep.subr.bf16.mxu0 0
      %5980 = vmatpush1.bf16.msra.mxu0 0
      %5981 = vmatprep.subr.bf16.mxu0 0
      %5982 = vmatpush1.bf16.msra.mxu0 0
      %5983 = vmatprep.subr.bf16.mxu0 0
      %5984 = vmatpush1.bf16.msra.mxu0 0
      %5985 = vmatprep.subr.bf16.mxu0 0
      %5986 = vmatpush1.bf16.msra.mxu0 0
      %5987 = vmatprep.subr.bf16.mxu0 0
      %5988 = vmatpush1.bf16.msra.mxu0 0
      %5989 = vmatprep.subr.bf16.mxu0 0
      %5990 = vmatpush1.bf16.msra.mxu0 0
      %5991 = vmatprep.subr.bf16.mxu0 0
      %5992 = vmatpush1.bf16.msra.mxu0 0
      %5993 = vmatprep.mubr.bf16.mxu0 0
      %5994 = vmatmul.mubr.bf16.gmra.mrb[0].mxu0 %v5790
      %v5995 = vpop.f32.mrb[0].mxu0
      %v5996 = vadd.f32 %v5907, %v5995
      %v5997 = vpop.f32.mrb[0].mxu0
      %v5998 = vpop.f32.mrb[0].mxu0
      %v5999 = vadd.f32 %v5910, %v5998
      %v6000 = vpop.f32.mrb[0].mxu0
      %6001 = vdwg.mxu0
      %v6002 = vld [vmem:[%s799] sm:$0x1]
      %v6004 = vlaneseq
      %v6005 = vshrl.u32 %v6004, 7
      %v6006 = vsub.s32 0, %v6005
      %v6007 = vrot.slane %v6002, %v6006
      %v6009 = vadd.f32 %v5996, %v6007
      %v6010 = vadd.f32 %v5999, %v6007
      %v6011 = vtanh.pop %v6009
      %v6012 = vtanh.pop %v6010
      %6013 = vst [vmem:[%s582] sm:$0xff] %v6011
      %6014 = vst [vmem:[%s582 + $0x8] sm:$0xff] %v6012
      %v6015 = vpack.c.bf16 %v6012, %v6011
      %v6017 = vunpack.c.l.b16 %v6015
      %v6018 = vunpack.c.h.b16 %v6015
      %v6019 = vpack.c.b16 %v6017, %v6017
      %v6020 = vpack.c.b16 %v6018, %v6018
      %s6023 = scalar_lea.vmem %s326, 88
      %6024 = vst [vmem:[%s6023] sm:$0xf] %v6019
      %6025 = vst [vmem:[%s6023 + $0x4] sm:$0xf] %v6020
      %p6026 = scmp.eq.s32.totalorder %s23, 1
      // Predicated region
      $region45: #{rnn_model_forward.3} parent=39 // pred_check
        %p6027 = pneg %p6026
      $region46: #{rnn_model_forward.3} parent=39 // pred_check_branch
        %6029 = sbr.rel (%p6027) target = $region48
      $region47: #{rnn_model_forward.3} parent=39 // pred_region
        %v6030 = vld [vmem:[#allocation2] sm:$0xff]
        %v6031 = vld [vmem:[#allocation2 + $0x8] sm:$0xff]
        %v6032 = vld [vmem:[#allocation2 + $0x10] sm:$0xff]
        %v6033 = vld [vmem:[#allocation2 + $0x18] sm:$0xff]
        %6034 = vst [vmem:[%s333] sm:$0xff] %v6030
        %6035 = vst [vmem:[%s333 + $0x8] sm:$0xff] %v6031
        %6036 = vst [vmem:[%s333 + $0x10] sm:$0xff] %v6032
        %6037 = vst [vmem:[%s333 + $0x18] sm:$0xff] %v6033
      $region48: #{rnn_model_forward.3} parent=39 // pred_fallthru
        _
      %s6038 = smul.u32 12, %s23
      %s6039 = smul.u32 2, %s22
      %p6040 = scmp.lt.s32.totalorder %s6038, 23
      %s6041 = scalar_select %p6040, %s6038, 23
      %p6042 = scmp.lt.s32.totalorder %s6039, 1
      %s6043 = scalar_select %p6042, %s6039, 1
      %s6044 = smul.addr %s6041, 2
      %s6045 = sadd.s32 %s6043, %s6044
      %s6046 = smul.addr %s6045, 4
      %s6047 = scalar_lea.vmem %s5, %s6046
      %s6048 = smul.u32 2, %s22
      %p6049 = scmp.lt.s32.totalorder %s6048, 1
      %s6050 = scalar_select %p6049, %s6048, 1
      %s6051 = smul.addr %s6050, 8
      %s6052 = scalar_lea.vmem %s6, %s6051
      // Predicated region
      $region49: #{rnn_model_forward.3} parent=39 // pred_check
        %p6053 = pneg %p167
      $region50: #{rnn_model_forward.3} parent=39 // pred_check_branch
        %6055 = sbr.rel (%p6053) target = $region52
      $region51: #{rnn_model_forward.3} parent=39 // pred_region
        %s6056 = smul.u32 12, %s23
        %s6057 = smul.u32 2, %s22
      $region52: #{rnn_model_forward.3} parent=39 // pred_fallthru
        _
      // Predicated region
      $region53: #{rnn_model_forward.3} parent=39 // pred_check
        %p6058 = pneg %p193
      $region54: #{rnn_model_forward.3} parent=39 // pred_check_branch
        %6060 = sbr.rel (%p6058) target = $region56
      $region55: #{rnn_model_forward.3} parent=39 // pred_region
        %s6061 = smul.u32 2, %s22
      $region56: #{rnn_model_forward.3} parent=39 // pred_fallthru
        _
      // Predicated region
      $region57: #{rnn_model_forward.3} parent=39 // pred_check
        %p6062 = pneg %p193
      $region58: #{rnn_model_forward.3} parent=39 // pred_check_branch
        %6064 = sbr.rel (%p6062) target = $region60
      $region59: #{rnn_model_forward.3} parent=39 // pred_region
        %s6065 = smul.u32 2, %s22
        %p6066 = scmp.lt.s32.totalorder %s6065, 1
        %s6067 = scalar_select %p6066, %s6065, 1
        %s6068 = smul.addr %s6067, 8
        %s6069 = scalar_lea.vmem %s6, %s6068
      $region60: #{rnn_model_forward.3} parent=39 // pred_fallthru
        _
    $region40: #{rnn_model_forward.3} parent=5 // pred_fallthru
      _
    %p6070 = scmp.le.s32.totalorder 2, %s13
    // Predicated region
    $region61: #{rnn_model_forward.3} parent=5 // pred_check
      %p6071 = pneg %p6070
    $region62: #{rnn_model_forward.3} parent=5 // pred_check_branch
      %6073 = sbr.rel (%p6071) target = $region64
    $region63: #{rnn_model_forward.3} parent=5 // pred_region
      %s6074 = ssub.s32 %s13, 2
      // Predicated region
      $region65: #{rnn_model_forward.3} parent=63 // pred_check
        %p6075 = pneg %p173
      $region66: #{rnn_model_forward.3} parent=63 // pred_check_branch
        %6077 = sbr.rel (%p6075) target = $region68
      $region67: #{rnn_model_forward.3} parent=63 // pred_region
        %s6078 = smul.u32 12, %s25
        %s6079 = smul.u32 2, %s24
        %p6080 = scmp.lt.s32.totalorder %s6078, 23
        %s6081 = scalar_select %p6080, %s6078, 23
        %p6082 = scmp.lt.s32.totalorder %s6079, 1
        %s6083 = scalar_select %p6082, %s6079, 1
        %s6084 = smul.addr %s6081, 2
        %s6085 = sadd.s32 %s6083, %s6084
        %s6086 = smul.addr %s6085, 4
        %s6087 = scalar_lea.vmem %s5, %s6086
      $region68: #{rnn_model_forward.3} parent=63 // pred_fallthru
        _
    $region64: #{rnn_model_forward.3} parent=5 // pred_fallthru
      _
  $region6: #{rnn_model_forward.3} parent=0 // loop_footer
    %s17 = sadd.s32 1, %s13
  $region7: #{rnn_model_forward.3} parent=0 // loop_footer_branch
    %12 = sbr.rel target = $region3
  $region8: #{rnn_model_forward.3} parent=0 // loop_exit
    _

</llo_original>
